<compile_context>
chip_gen: v6e
topology: v6e:2x2x1
jax: 0.10.0
libtpu: 0.0.40
codegen_flags: <defaults>
</compile_context>

<pallas_src>
import functools

import jax
import jax.numpy as jnp
import numpy as np
from jax.experimental import pallas as pl
from jax.experimental.pallas import tpu as pltpu


# ----------------------------------------------------------------------------
# Pallas kernels
# ----------------------------------------------------------------------------
def _conv3x3s2_kernel(x_ref, w_ref, b_ref, o_ref, *, Ws, Ho, use_mxu):
    """3x3 stride-2 conv expressed as a 2x2 stride-1 conv on space-to-depth input.

    x_ref : (1, R, K)  flattened (Hs*Ws row-major) s2d input, zero-padded rows.
    w_ref : (2, 2, K, Cout)  per-tap weight (bf16 when use_mxu, else f32).
    b_ref : (1, Cout) f32 bias.
    o_ref : (1, Ho*Ws, Cout) f32 output (rows with wo == Ws-1 are junk and are
            dropped by the caller).
    """
    rows = Ho * Ws
    cout = o_ref.shape[-1]
    k = x_ref.shape[-1]

    acc = jnp.zeros((rows, cout), jnp.float32)
    for ki in range(2):
        for kj in range(2):
            start = ki * Ws + kj
            patch = x_ref[0, start:start + rows, :]          # (rows, K) f32
            w_tap = w_ref[ki, kj]                            # (K, Cout)
            if use_mxu:
                acc = acc + jnp.dot(patch.astype(jnp.bfloat16), w_tap,
                                    preferred_element_type=jnp.float32)
            else:
                # degenerate K (conv1): broadcast-FMA taps on the VPU, all f32.
                for kk in range(k):
                    acc = acc + patch[:, kk:kk + 1] * w_tap[kk:kk + 1, :]
    acc = acc + b_ref[...]
    o_ref[0] = jnp.where(acc >= 0.0, acc, 0.2 * acc)         # LeakyReLU(0.2)


def _cbam_conv4_kernel(x_ref, w1_ref, w2_ref, wsp_ref, w4_ref, b4_ref,
                       o_ref, pad_ref, *, H, W):
    """Fused CBAM (channel + spatial attention) + conv4 (1x1, C->1, bias).

    x_ref  : (1, H, W, C) f32      w1_ref : (C, Cr)      w2_ref : (Cr, C)
    wsp_ref: (2, 49) f32 in SMEM   w4_ref : (1, C)       b4_ref : (1, 1) SMEM
    o_ref  : (1, H, W, 1) f32      pad_ref: (2, H+6, W+6, 1) VMEM scratch
    """
    x = x_ref[0]                                             # (H, W, C)

    # ---- channel attention: global max/avg pool -> shared MLP -> sigmoid ----
    gmax = jnp.max(jnp.max(x, axis=0), axis=0, keepdims=True)            # (1, C)
    gavg = jnp.sum(jnp.sum(x, axis=0), axis=0, keepdims=True) * (1.0 / (H * W))

    def mlp(v):                                              # (1, C) -> (1, C)
        h = jnp.maximum(
            jnp.dot(v, w1_ref[...], preferred_element_type=jnp.float32), 0.0)
        return jnp.dot(h, w2_ref[...], preferred_element_type=jnp.float32)

    z = mlp(gmax) + mlp(gavg)
    att = pl.reciprocal(1.0 + jnp.exp(-z), approx=True)      # sigmoid via EUP
    xs = x * att                                             # (H, W, C)

    # ---- spatial attention: 7x7 conv (pad 3) over [max_c, mean_c] maps ----
    # Narrow (lane-width 1) maps and the padded conv buffer never leave VMEM.
    mx = jnp.max(xs, axis=2, keepdims=True)                  # (H, W, 1)
    av = jnp.mean(xs, axis=2, keepdims=True)                 # (H, W, 1)
    pad_ref[...] = jnp.zeros((2, H + 6, W + 6, 1), jnp.float32)
    pad_ref[0, 3:3 + H, 3:3 + W, :] = mx
    pad_ref[1, 3:3 + H, 3:3 + W, :] = av

    sconv = jnp.zeros((H, W, 1), jnp.float32)
    for di in range(7):
        for dj in range(7):
            t = di * 7 + dj
            sconv = sconv + pad_ref[0, di:di + H, dj:dj + W, :] * wsp_ref[0, t]
            sconv = sconv + pad_ref[1, di:di + H, dj:dj + W, :] * wsp_ref[1, t]
    sp = pl.reciprocal(1.0 + jnp.exp(-sconv), approx=True)   # (H, W, 1)

    # ---- conv4 folded in:  out = sp * sum_c(xs * w4) + b4  (exact algebra) ----
    t4 = jnp.sum(xs * w4_ref[...], axis=2, keepdims=True)    # (H, W, 1)
    o_ref[0] = sp * t4 + b4_ref[0, 0]


# ----------------------------------------------------------------------------
# Wrappers (layout prep in JAX, compute in Pallas)
# ----------------------------------------------------------------------------
def conv3x3_s2_lrelu(x_nhwc, w_oihw, b):
    """Conv2d(k=3, s=2, p=1) + LeakyReLU(0.2) via a space-to-depth Pallas kernel."""
    N, H, W, cin = x_nhwc.shape
    cout = w_oihw.shape[0]
    assert H % 2 == 0 and W % 2 == 0
    hs, ws = (H + 2) // 2, (W + 2) // 2          # super-pixel grid of padded img
    ho, wo = hs - 1, ws - 1                      # conv output spatial size
    k = 4 * cin
    use_mxu = k >= 16                            # conv1 (k=4) stays on the VPU

    # space-to-depth of the padded input: pure relayout, no 9x im2col blow-up.
    xp = jnp.pad(x_nhwc, ((0, 0), (1, 1), (1, 1), (0, 0)))
    s2d = xp.reshape(N, hs, 2, ws, 2, cin).transpose(0, 1, 3, 2, 4, 5)
    s2d = s2d.reshape(N, hs * ws, k)
    rows_in = hs * ws
    r_pad = ((rows_in + 1 + 7) // 8) * 8         # 1 extra row keeps taps in-bounds
    s2d = jnp.pad(s2d, ((0, 0), (0, r_pad - rows_in), (0, 0)))

    # (Cout, Cin, 3, 3) -> (2, 2, 4*Cin, Cout) tap weights (zero-padded to 4x4).
    wp = jnp.pad(w_oihw, ((0, 0), (0, 0), (0, 1), (0, 1)))
    w_s2d = wp.reshape(cout, cin, 2, 2, 2, 2).transpose(2, 4, 3, 5, 1, 0)
    w_s2d = w_s2d.reshape(2, 2, k, cout)
    if use_mxu:
        w_s2d = w_s2d.astype(jnp.bfloat16)       # bf16 MXU operands, f32 accumulate

    rows_out = ho * ws
    flops = 2 * N * 4 * rows_out * k * cout
    bytes_acc = 4 * (s2d.size + cout + N * rows_out * cout) \
        + w_s2d.size * w_s2d.dtype.itemsize

    y = pl.pallas_call(
        functools.partial(_conv3x3s2_kernel, Ws=ws, Ho=ho, use_mxu=use_mxu),
        out_shape=jax.ShapeDtypeStruct((N, rows_out, cout), jnp.float32),
        grid=(N,),
        in_specs=[
            pl.BlockSpec((1, r_pad, k), lambda n: (n, 0, 0)),
            pl.BlockSpec((2, 2, k, cout), lambda n: (0, 0, 0, 0)),
            pl.BlockSpec((1, cout), lambda n: (0, 0)),
        ],
        out_specs=pl.BlockSpec((1, rows_out, cout), lambda n: (n, 0, 0)),
        compiler_params=pltpu.CompilerParams(
            dimension_semantics=("parallel",),
            vmem_limit_bytes=32 * 1024 * 1024),
        cost_estimate=pl.CostEstimate(flops=int(flops), transcendentals=0,
                                      bytes_accessed=int(bytes_acc)),
    )(s2d, w_s2d, b.reshape(1, cout))

    # drop the junk column (wo == ws-1 rows) introduced by the flat row trick.
    return y.reshape(N, ho, ws, cout)[:, :, :wo, :]


def cbam_conv4_fused(x3, p):
    """Single fused pallas_call: CBAM channel + spatial attention + conv4."""
    N, H, W, C = x3.shape
    cr = p["cw1"].shape[0]
    w1m = p["cw1"].reshape(cr, C).T              # (C, Cr)
    w2m = p["cw2"].reshape(C, cr).T              # (Cr, C)
    wsp = p["csp"].reshape(2, 49)                # [max_map, avg_map] x 7x7 taps
    w4c = p["w4"].reshape(1, C)
    b4 = p["b4"].reshape(1, 1)

    flops = N * (8 * C * cr + 9 * H * W * C + 4 * 49 * H * W)
    bytes_acc = 4 * (x3.size + N * H * W + w1m.size + w2m.size
                     + wsp.size + C + 1)

    return pl.pallas_call(
        functools.partial(_cbam_conv4_kernel, H=H, W=W),
        out_shape=jax.ShapeDtypeStruct((N, H, W, 1), jnp.float32),
        grid=(N,),
        in_specs=[
            pl.BlockSpec((1, H, W, C), lambda n: (n, 0, 0, 0)),
            pl.BlockSpec((C, cr), lambda n: (0, 0)),
            pl.BlockSpec((cr, C), lambda n: (0, 0)),
            pl.BlockSpec(memory_space=pltpu.MemorySpace.SMEM),   # wsp scalars
            pl.BlockSpec((1, C), lambda n: (0, 0)),
            pl.BlockSpec(memory_space=pltpu.MemorySpace.SMEM),   # b4 scalar
        ],
        out_specs=pl.BlockSpec((1, H, W, 1), lambda n: (n, 0, 0, 0)),
        scratch_shapes=[pltpu.VMEM((2, H + 6, W + 6, 1), jnp.float32)],
        compiler_params=pltpu.CompilerParams(
            dimension_semantics=("parallel",),
            vmem_limit_bytes=32 * 1024 * 1024),
        cost_estimate=pl.CostEstimate(flops=int(flops),
                                      transcendentals=int(N * (C + H * W)),
                                      bytes_accessed=int(bytes_acc)),
    )(x3, w1m, w2m, wsp, w4c, b4)


def pallas_forward(x_nchw, p):
    x = jnp.transpose(x_nchw, (0, 2, 3, 1))                  # NHWC
    x1 = conv3x3_s2_lrelu(x, p["w1"], p["b1"])
    x2 = conv3x3_s2_lrelu(x1, p["w2"], p["b2"])
    x3 = conv3x3_s2_lrelu(x2, p["w3"], p["b3"])
    out = cbam_conv4_fused(x3, p)                            # (N, H/8, W/8, 1)
    # NOTE: `self.classifier` is defined in __init__ but never used in forward.
    return jnp.transpose(out, (0, 3, 1, 2))                  # NCHW


# ----------------------------------------------------------------------------
# Pure-JAX reference (mirrors PyTorch semantics exactly) for validation
# ----------------------------------------------------------------------------
def _sigmoid_ref(v):
    return 1.0 / (1.0 + jnp.exp(-v))


def _ref_conv(x, w, b, stride, pad):
    y = jax.lax.conv_general_dilated(
        x, w, (stride, stride), [(pad, pad), (pad, pad)],
        dimension_numbers=("NCHW", "OIHW", "NCHW"))
    if b is not None:
        y = y + b[None, :, None, None]
    return y


def reference_forward(x, p):
    lrelu = lambda v: jnp.where(v >= 0, v, 0.2 * v)
    x1 = lrelu(_ref_conv(x, p["w1"], p["b1"], 2, 1))
    x2 = lrelu(_ref_conv(x1, p["w2"], p["b2"], 2, 1))
    x3 = lrelu(_ref_conv(x2, p["w3"], p["b3"], 2, 1))
    mx = jnp.max(x3, axis=(2, 3), keepdims=True)
    av = jnp.mean(x3, axis=(2, 3), keepdims=True)

    def mlp(v):
        h = jnp.maximum(_ref_conv(v, p["cw1"], None, 1, 0), 0.0)
        return _ref_conv(h, p["cw2"], None, 1, 0)

    att = _sigmoid_ref(mlp(mx) + mlp(av))
    xc = att * x3
    smax = jnp.max(xc, axis=1, keepdims=True)
    smean = jnp.mean(xc, axis=1, keepdims=True)
    sp = _sigmoid_ref(_ref_conv(jnp.concatenate([smax, smean], axis=1),
                                p["csp"], None, 1, 3))
    xb = sp * xc
    return _ref_conv(xb, p["w4"], p["b4"], 1, 0)


# ----------------------------------------------------------------------------
if __name__ == "__main__":
    ndf = 16
    key = jax.random.PRNGKey(0)
    ks = jax.random.split(key, 12)

    def rnd(k, shape, scale=0.1):
        return scale * jax.random.normal(k, shape, jnp.float32)

    p = {
        "w1": rnd(ks[0], (ndf, 1, 3, 3)),           "b1": rnd(ks[1], (ndf,)),
        "w2": rnd(ks[2], (2 * ndf, ndf, 3, 3)),     "b2": rnd(ks[3], (2 * ndf,)),
        "w3": rnd(ks[4], (4 * ndf, 2 * ndf, 3, 3)), "b3": rnd(ks[5], (4 * ndf,)),
        "w4": rnd(ks[6], (1, 4 * ndf, 1, 1)),       "b4": rnd(ks[7], (1,)),
        "cw1": rnd(ks[8], (4 * ndf // 16, 4 * ndf, 1, 1)),   # CBAM MLP (no bias)
        "cw2": rnd(ks[9], (4 * ndf, 4 * ndf // 16, 1, 1)),
        "csp": rnd(ks[10], (1, 2, 7, 7)),                    # CBAM spatial conv
    }

    x = jax.random.normal(ks[11], (2, 1, 32, 32), jnp.float32)   # NCHW input

    out = jax.jit(pallas_forward)(x, p)
    out = jax.block_until_ready(out)

    ref = reference_forward(x, p)
    assert out.shape == (2, 1, 4, 4), out.shape
    # bf16 MXU operands (f32 accumulate) + approx EUP reciprocal => slightly
    # looser tolerance than the all-f32 version.
    np.testing.assert_allclose(np.asarray(out), np.asarray(ref),
                               rtol=1e-2, atol=5e-3)
    print("KERNEL_OK")
</pallas_src>

<mosaic_0001>
module attributes {stable_mosaic.version = 11 : i64} {
  func.func @_conv3x3s2_kernel(%arg0: i32, %arg1: memref<1x296x4xf32, #tpu.memory_space<vmem>>, %arg2: memref<2x2x4x16xf32, #tpu.memory_space<vmem>>, %arg3: memref<1x16xf32, #tpu.memory_space<vmem>>, %arg4: memref<1x272x16xf32, #tpu.memory_space<vmem>>) attributes {dimension_semantics = [#tpu.dimension_semantics<parallel>], iteration_bounds = array<i64: 2>, scalar_prefetch = 0 : i64, scratch_operands = 0 : i64, tpu.core_type = #tpu.core_type<tc>, window_params = [{transform_indices = @transform_0, window_bounds = array<i64: 1, 296, 4>}, {pipeline_mode = #tpu.pipeline_mode<synchronous>, transform_indices = @transform_1, window_bounds = array<i64: 2, 2, 4, 16>}, {pipeline_mode = #tpu.pipeline_mode<synchronous>, transform_indices = @transform_2, window_bounds = array<i64: 1, 16>}, {transform_indices = @transform_3, window_bounds = array<i64: 1, 272, 16>}]} {
    %cst = arith.constant 0.000000e+00 : f32
    %0 = vector.broadcast %cst : f32 to vector<272x16xf32>
    %c0 = arith.constant 0 : index
    %c0_0 = arith.constant 0 : index
    %c0_1 = arith.constant 0 : index
    %1 = vector.load %arg1[%c0, %c0_0, %c0_1] : memref<1x296x4xf32, #tpu.memory_space<vmem>>, vector<1x272x4xf32>
    %2 = vector.shape_cast %1 : vector<1x272x4xf32> to vector<272x4xf32>
    %c0_2 = arith.constant 0 : index
    %c0_3 = arith.constant 0 : index
    %c0_4 = arith.constant 0 : index
    %c0_5 = arith.constant 0 : index
    %3 = vector.load %arg2[%c0_2, %c0_3, %c0_4, %c0_5] : memref<2x2x4x16xf32, #tpu.memory_space<vmem>>, vector<1x1x4x16xf32>
    %4 = vector.shape_cast %3 : vector<1x1x4x16xf32> to vector<4x16xf32>
    %5 = vector.extract_strided_slice %2 {offsets = [0, 0], sizes = [272, 1], strides = [1, 1]} : vector<272x4xf32> to vector<272x1xf32>
    %6 = vector.extract_strided_slice %4 {offsets = [0, 0], sizes = [1, 16], strides = [1, 1]} : vector<4x16xf32> to vector<1x16xf32>
    %7 = vector.broadcast %5 : vector<272x1xf32> to vector<272x16xf32>
    %8 = vector.broadcast %6 : vector<1x16xf32> to vector<272x16xf32>
    %9 = arith.mulf %7, %8 : vector<272x16xf32>
    %10 = arith.addf %0, %9 : vector<272x16xf32>
    %11 = vector.extract_strided_slice %2 {offsets = [0, 1], sizes = [272, 1], strides = [1, 1]} : vector<272x4xf32> to vector<272x1xf32>
    %12 = vector.extract_strided_slice %4 {offsets = [1, 0], sizes = [1, 16], strides = [1, 1]} : vector<4x16xf32> to vector<1x16xf32>
    %13 = vector.broadcast %11 : vector<272x1xf32> to vector<272x16xf32>
    %14 = vector.broadcast %12 : vector<1x16xf32> to vector<272x16xf32>
    %15 = arith.mulf %13, %14 : vector<272x16xf32>
    %16 = arith.addf %10, %15 : vector<272x16xf32>
    %17 = vector.extract_strided_slice %2 {offsets = [0, 2], sizes = [272, 1], strides = [1, 1]} : vector<272x4xf32> to vector<272x1xf32>
    %18 = vector.extract_strided_slice %4 {offsets = [2, 0], sizes = [1, 16], strides = [1, 1]} : vector<4x16xf32> to vector<1x16xf32>
    %19 = vector.broadcast %17 : vector<272x1xf32> to vector<272x16xf32>
    %20 = vector.broadcast %18 : vector<1x16xf32> to vector<272x16xf32>
    %21 = arith.mulf %19, %20 : vector<272x16xf32>
    %22 = arith.addf %16, %21 : vector<272x16xf32>
    %23 = vector.extract_strided_slice %2 {offsets = [0, 3], sizes = [272, 1], strides = [1, 1]} : vector<272x4xf32> to vector<272x1xf32>
    %24 = vector.extract_strided_slice %4 {offsets = [3, 0], sizes = [1, 16], strides = [1, 1]} : vector<4x16xf32> to vector<1x16xf32>
    %25 = vector.broadcast %23 : vector<272x1xf32> to vector<272x16xf32>
    %26 = vector.broadcast %24 : vector<1x16xf32> to vector<272x16xf32>
    %27 = arith.mulf %25, %26 : vector<272x16xf32>
    %28 = arith.addf %22, %27 : vector<272x16xf32>
    %c0_6 = arith.constant 0 : index
    %c1 = arith.constant 1 : index
    %c0_7 = arith.constant 0 : index
    %29 = vector.load %arg1[%c0_6, %c1, %c0_7] : memref<1x296x4xf32, #tpu.memory_space<vmem>>, vector<1x272x4xf32>
    %30 = vector.shape_cast %29 : vector<1x272x4xf32> to vector<272x4xf32>
    %c0_8 = arith.constant 0 : index
    %c1_9 = arith.constant 1 : index
    %c0_10 = arith.constant 0 : index
    %c0_11 = arith.constant 0 : index
    %31 = vector.load %arg2[%c0_8, %c1_9, %c0_10, %c0_11] : memref<2x2x4x16xf32, #tpu.memory_space<vmem>>, vector<1x1x4x16xf32>
    %32 = vector.shape_cast %31 : vector<1x1x4x16xf32> to vector<4x16xf32>
    %33 = vector.extract_strided_slice %30 {offsets = [0, 0], sizes = [272, 1], strides = [1, 1]} : vector<272x4xf32> to vector<272x1xf32>
    %34 = vector.extract_strided_slice %32 {offsets = [0, 0], sizes = [1, 16], strides = [1, 1]} : vector<4x16xf32> to vector<1x16xf32>
    %35 = vector.broadcast %33 : vector<272x1xf32> to vector<272x16xf32>
    %36 = vector.broadcast %34 : vector<1x16xf32> to vector<272x16xf32>
    %37 = arith.mulf %35, %36 : vector<272x16xf32>
    %38 = arith.addf %28, %37 : vector<272x16xf32>
    %39 = vector.extract_strided_slice %30 {offsets = [0, 1], sizes = [272, 1], strides = [1, 1]} : vector<272x4xf32> to vector<272x1xf32>
    %40 = vector.extract_strided_slice %32 {offsets = [1, 0], sizes = [1, 16], strides = [1, 1]} : vector<4x16xf32> to vector<1x16xf32>
    %41 = vector.broadcast %39 : vector<272x1xf32> to vector<272x16xf32>
    %42 = vector.broadcast %40 : vector<1x16xf32> to vector<272x16xf32>
    %43 = arith.mulf %41, %42 : vector<272x16xf32>
    %44 = arith.addf %38, %43 : vector<272x16xf32>
    %45 = vector.extract_strided_slice %30 {offsets = [0, 2], sizes = [272, 1], strides = [1, 1]} : vector<272x4xf32> to vector<272x1xf32>
    %46 = vector.extract_strided_slice %32 {offsets = [2, 0], sizes = [1, 16], strides = [1, 1]} : vector<4x16xf32> to vector<1x16xf32>
    %47 = vector.broadcast %45 : vector<272x1xf32> to vector<272x16xf32>
    %48 = vector.broadcast %46 : vector<1x16xf32> to vector<272x16xf32>
    %49 = arith.mulf %47, %48 : vector<272x16xf32>
    %50 = arith.addf %44, %49 : vector<272x16xf32>
    %51 = vector.extract_strided_slice %30 {offsets = [0, 3], sizes = [272, 1], strides = [1, 1]} : vector<272x4xf32> to vector<272x1xf32>
    %52 = vector.extract_strided_slice %32 {offsets = [3, 0], sizes = [1, 16], strides = [1, 1]} : vector<4x16xf32> to vector<1x16xf32>
    %53 = vector.broadcast %51 : vector<272x1xf32> to vector<272x16xf32>
    %54 = vector.broadcast %52 : vector<1x16xf32> to vector<272x16xf32>
    %55 = arith.mulf %53, %54 : vector<272x16xf32>
    %56 = arith.addf %50, %55 : vector<272x16xf32>
    %c0_12 = arith.constant 0 : index
    %c17 = arith.constant 17 : index
    %c0_13 = arith.constant 0 : index
    %57 = vector.load %arg1[%c0_12, %c17, %c0_13] : memref<1x296x4xf32, #tpu.memory_space<vmem>>, vector<1x272x4xf32>
    %58 = vector.shape_cast %57 : vector<1x272x4xf32> to vector<272x4xf32>
    %c1_14 = arith.constant 1 : index
    %c0_15 = arith.constant 0 : index
    %c0_16 = arith.constant 0 : index
    %c0_17 = arith.constant 0 : index
    %59 = vector.load %arg2[%c1_14, %c0_15, %c0_16, %c0_17] : memref<2x2x4x16xf32, #tpu.memory_space<vmem>>, vector<1x1x4x16xf32>
    %60 = vector.shape_cast %59 : vector<1x1x4x16xf32> to vector<4x16xf32>
    %61 = vector.extract_strided_slice %58 {offsets = [0, 0], sizes = [272, 1], strides = [1, 1]} : vector<272x4xf32> to vector<272x1xf32>
    %62 = vector.extract_strided_slice %60 {offsets = [0, 0], sizes = [1, 16], strides = [1, 1]} : vector<4x16xf32> to vector<1x16xf32>
    %63 = vector.broadcast %61 : vector<272x1xf32> to vector<272x16xf32>
    %64 = vector.broadcast %62 : vector<1x16xf32> to vector<272x16xf32>
    %65 = arith.mulf %63, %64 : vector<272x16xf32>
    %66 = arith.addf %56, %65 : vector<272x16xf32>
    %67 = vector.extract_strided_slice %58 {offsets = [0, 1], sizes = [272, 1], strides = [1, 1]} : vector<272x4xf32> to vector<272x1xf32>
    %68 = vector.extract_strided_slice %60 {offsets = [1, 0], sizes = [1, 16], strides = [1, 1]} : vector<4x16xf32> to vector<1x16xf32>
    %69 = vector.broadcast %67 : vector<272x1xf32> to vector<272x16xf32>
    %70 = vector.broadcast %68 : vector<1x16xf32> to vector<272x16xf32>
    %71 = arith.mulf %69, %70 : vector<272x16xf32>
    %72 = arith.addf %66, %71 : vector<272x16xf32>
    %73 = vector.extract_strided_slice %58 {offsets = [0, 2], sizes = [272, 1], strides = [1, 1]} : vector<272x4xf32> to vector<272x1xf32>
    %74 = vector.extract_strided_slice %60 {offsets = [2, 0], sizes = [1, 16], strides = [1, 1]} : vector<4x16xf32> to vector<1x16xf32>
    %75 = vector.broadcast %73 : vector<272x1xf32> to vector<272x16xf32>
    %76 = vector.broadcast %74 : vector<1x16xf32> to vector<272x16xf32>
    %77 = arith.mulf %75, %76 : vector<272x16xf32>
    %78 = arith.addf %72, %77 : vector<272x16xf32>
    %79 = vector.extract_strided_slice %58 {offsets = [0, 3], sizes = [272, 1], strides = [1, 1]} : vector<272x4xf32> to vector<272x1xf32>
    %80 = vector.extract_strided_slice %60 {offsets = [3, 0], sizes = [1, 16], strides = [1, 1]} : vector<4x16xf32> to vector<1x16xf32>
    %81 = vector.broadcast %79 : vector<272x1xf32> to vector<272x16xf32>
    %82 = vector.broadcast %80 : vector<1x16xf32> to vector<272x16xf32>
    %83 = arith.mulf %81, %82 : vector<272x16xf32>
    %84 = arith.addf %78, %83 : vector<272x16xf32>
    %c0_18 = arith.constant 0 : index
    %c18 = arith.constant 18 : index
    %c0_19 = arith.constant 0 : index
    %85 = vector.load %arg1[%c0_18, %c18, %c0_19] : memref<1x296x4xf32, #tpu.memory_space<vmem>>, vector<1x272x4xf32>
    %86 = vector.shape_cast %85 : vector<1x272x4xf32> to vector<272x4xf32>
    %c1_20 = arith.constant 1 : index
    %c1_21 = arith.constant 1 : index
    %c0_22 = arith.constant 0 : index
    %c0_23 = arith.constant 0 : index
    %87 = vector.load %arg2[%c1_20, %c1_21, %c0_22, %c0_23] : memref<2x2x4x16xf32, #tpu.memory_space<vmem>>, vector<1x1x4x16xf32>
    %88 = vector.shape_cast %87 : vector<1x1x4x16xf32> to vector<4x16xf32>
    %89 = vector.extract_strided_slice %86 {offsets = [0, 0], sizes = [272, 1], strides = [1, 1]} : vector<272x4xf32> to vector<272x1xf32>
    %90 = vector.extract_strided_slice %88 {offsets = [0, 0], sizes = [1, 16], strides = [1, 1]} : vector<4x16xf32> to vector<1x16xf32>
    %91 = vector.broadcast %89 : vector<272x1xf32> to vector<272x16xf32>
    %92 = vector.broadcast %90 : vector<1x16xf32> to vector<272x16xf32>
    %93 = arith.mulf %91, %92 : vector<272x16xf32>
    %94 = arith.addf %84, %93 : vector<272x16xf32>
    %95 = vector.extract_strided_slice %86 {offsets = [0, 1], sizes = [272, 1], strides = [1, 1]} : vector<272x4xf32> to vector<272x1xf32>
    %96 = vector.extract_strided_slice %88 {offsets = [1, 0], sizes = [1, 16], strides = [1, 1]} : vector<4x16xf32> to vector<1x16xf32>
    %97 = vector.broadcast %95 : vector<272x1xf32> to vector<272x16xf32>
    %98 = vector.broadcast %96 : vector<1x16xf32> to vector<272x16xf32>
    %99 = arith.mulf %97, %98 : vector<272x16xf32>
    %100 = arith.addf %94, %99 : vector<272x16xf32>
    %101 = vector.extract_strided_slice %86 {offsets = [0, 2], sizes = [272, 1], strides = [1, 1]} : vector<272x4xf32> to vector<272x1xf32>
    %102 = vector.extract_strided_slice %88 {offsets = [2, 0], sizes = [1, 16], strides = [1, 1]} : vector<4x16xf32> to vector<1x16xf32>
    %103 = vector.broadcast %101 : vector<272x1xf32> to vector<272x16xf32>
    %104 = vector.broadcast %102 : vector<1x16xf32> to vector<272x16xf32>
    %105 = arith.mulf %103, %104 : vector<272x16xf32>
    %106 = arith.addf %100, %105 : vector<272x16xf32>
    %107 = vector.extract_strided_slice %86 {offsets = [0, 3], sizes = [272, 1], strides = [1, 1]} : vector<272x4xf32> to vector<272x1xf32>
    %108 = vector.extract_strided_slice %88 {offsets = [3, 0], sizes = [1, 16], strides = [1, 1]} : vector<4x16xf32> to vector<1x16xf32>
    %109 = vector.broadcast %107 : vector<272x1xf32> to vector<272x16xf32>
    %110 = vector.broadcast %108 : vector<1x16xf32> to vector<272x16xf32>
    %111 = arith.mulf %109, %110 : vector<272x16xf32>
    %112 = arith.addf %106, %111 : vector<272x16xf32>
    %c0_24 = arith.constant 0 : index
    %c0_25 = arith.constant 0 : index
    %113 = vector.load %arg3[%c0_24, %c0_25] : memref<1x16xf32, #tpu.memory_space<vmem>>, vector<1x16xf32>
    %114 = vector.broadcast %113 : vector<1x16xf32> to vector<272x16xf32>
    %115 = arith.addf %112, %114 : vector<272x16xf32>
    %cst_26 = arith.constant 0.000000e+00 : f32
    %116 = vector.broadcast %cst_26 : f32 to vector<272x16xf32>
    %117 = arith.cmpf oge, %115, %116 : vector<272x16xf32>
    %cst_27 = arith.constant 2.000000e-01 : f32
    %118 = vector.broadcast %cst_27 : f32 to vector<272x16xf32>
    %119 = arith.mulf %118, %115 : vector<272x16xf32>
    %120 = arith.select %117, %115, %119 : vector<272x16xi1>, vector<272x16xf32>
    %c0_28 = arith.constant 0 : index
    %c0_29 = arith.constant 0 : index
    %c0_30 = arith.constant 0 : index
    %121 = vector.load %arg4[%c0_28, %c0_29, %c0_30] : memref<1x272x16xf32, #tpu.memory_space<vmem>>, vector<1x272x16xf32>
    %122 = vector.shape_cast %121 : vector<1x272x16xf32> to vector<272x16xf32>
    %123 = vector.shape_cast %120 : vector<272x16xf32> to vector<1x272x16xf32>
    tpu.vector_store %arg4[%c0_28, %c0_29, %c0_30], %123 {strides = array<i32>} : memref<1x272x16xf32, #tpu.memory_space<vmem>>, vector<1x272x16xf32>,
    return
  }
  func.func @transform_0(%arg0: i32) -> (i32, i32, i32) {
    %c0_i32 = arith.constant 0 : i32
    %c0_i32_0 = arith.constant 0 : i32
    %c0_i32_1 = arith.constant 0 : i32
    return %arg0, %c0_i32, %c0_i32_0 : i32, i32, i32
  }
  func.func @transform_1(%arg0: i32) -> (i32, i32, i32, i32) {
    %c0_i32 = arith.constant 0 : i32
    %c0_i32_0 = arith.constant 0 : i32
    %c0_i32_1 = arith.constant 0 : i32
    %c0_i32_2 = arith.constant 0 : i32
    %c0_i32_3 = arith.constant 0 : i32
    return %c0_i32, %c0_i32_0, %c0_i32_1, %c0_i32_2 : i32, i32, i32, i32
  }
  func.func @transform_2(%arg0: i32) -> (i32, i32) {
    %c0_i32 = arith.constant 0 : i32
    %c0_i32_0 = arith.constant 0 : i32
    %c0_i32_1 = arith.constant 0 : i32
    return %c0_i32, %c0_i32_0 : i32, i32
  }
  func.func @transform_3(%arg0: i32) -> (i32, i32, i32) {
    %c0_i32 = arith.constant 0 : i32
    %c0_i32_0 = arith.constant 0 : i32
    %c0_i32_1 = arith.constant 0 : i32
    return %arg0, %c0_i32, %c0_i32_0 : i32, i32, i32
  }
}

module attributes {stable_mosaic.version = 11 : i64} {
  func.func @_conv3x3s2_kernel(%arg0: i32, %arg1: memref<1x88x64xf32, #tpu.memory_space<vmem>>, %arg2: memref<2x2x64x32xbf16, #tpu.memory_space<vmem>>, %arg3: memref<1x32xf32, #tpu.memory_space<vmem>>, %arg4: memref<1x72x32xf32, #tpu.memory_space<vmem>>) attributes {dimension_semantics = [#tpu.dimension_semantics<parallel>], iteration_bounds = array<i64: 2>, scalar_prefetch = 0 : i64, scratch_operands = 0 : i64, tpu.core_type = #tpu.core_type<tc>, window_params = [{transform_indices = @transform_0, window_bounds = array<i64: 1, 88, 64>}, {pipeline_mode = #tpu.pipeline_mode<synchronous>, transform_indices = @transform_1, window_bounds = array<i64: 2, 2, 64, 32>}, {pipeline_mode = #tpu.pipeline_mode<synchronous>, transform_indices = @transform_2, window_bounds = array<i64: 1, 32>}, {transform_indices = @transform_3, window_bounds = array<i64: 1, 72, 32>}]} {
    %cst = arith.constant 0.000000e+00 : f32
    %0 = vector.broadcast %cst : f32 to vector<72x32xf32>
    %c0 = arith.constant 0 : index
    %c0_0 = arith.constant 0 : index
    %c0_1 = arith.constant 0 : index
    %1 = vector.load %arg1[%c0, %c0_0, %c0_1] : memref<1x88x64xf32, #tpu.memory_space<vmem>>, vector<1x72x64xf32>
    %2 = vector.shape_cast %1 : vector<1x72x64xf32> to vector<72x64xf32>
    %c0_2 = arith.constant 0 : index
    %c0_3 = arith.constant 0 : index
    %c0_4 = arith.constant 0 : index
    %c0_5 = arith.constant 0 : index
    %3 = vector.load %arg2[%c0_2, %c0_3, %c0_4, %c0_5] : memref<2x2x64x32xbf16, #tpu.memory_space<vmem>>, vector<1x1x64x32xbf16>
    %4 = vector.shape_cast %3 : vector<1x1x64x32xbf16> to vector<64x32xbf16>
    %5 = arith.truncf %2 : vector<72x64xf32> to vector<72x64xbf16>
    %cst_6 = arith.constant dense<0.000000e+00> : vector<72x32xf32>
    %6 = tpu.matmul %5, %4, %cst_6 {dimension_numbers = #tpu.dot_dimension_numbers<[1], [0], [0], [1], [0, 0, 1, 1], [], []>} : vector<72x64xbf16>, vector<64x32xbf16>, vector<72x32xf32> -> vector<72x32xf32>
    %7 = arith.addf %0, %6 : vector<72x32xf32>
    %c0_7 = arith.constant 0 : index
    %c1 = arith.constant 1 : index
    %c0_8 = arith.constant 0 : index
    %8 = vector.load %arg1[%c0_7, %c1, %c0_8] : memref<1x88x64xf32, #tpu.memory_space<vmem>>, vector<1x72x64xf32>
    %9 = vector.shape_cast %8 : vector<1x72x64xf32> to vector<72x64xf32>
    %c0_9 = arith.constant 0 : index
    %c1_10 = arith.constant 1 : index
    %c0_11 = arith.constant 0 : index
    %c0_12 = arith.constant 0 : index
    %10 = vector.load %arg2[%c0_9, %c1_10, %c0_11, %c0_12] : memref<2x2x64x32xbf16, #tpu.memory_space<vmem>>, vector<1x1x64x32xbf16>
    %11 = vector.shape_cast %10 : vector<1x1x64x32xbf16> to vector<64x32xbf16>
    %12 = arith.truncf %9 : vector<72x64xf32> to vector<72x64xbf16>
    %cst_13 = arith.constant dense<0.000000e+00> : vector<72x32xf32>
    %13 = tpu.matmul %12, %11, %cst_13 {dimension_numbers = #tpu.dot_dimension_numbers<[1], [0], [0], [1], [0, 0, 1, 1], [], []>} : vector<72x64xbf16>, vector<64x32xbf16>, vector<72x32xf32> -> vector<72x32xf32>
    %14 = arith.addf %7, %13 : vector<72x32xf32>
    %c0_14 = arith.constant 0 : index
    %c9 = arith.constant 9 : index
    %c0_15 = arith.constant 0 : index
    %15 = vector.load %arg1[%c0_14, %c9, %c0_15] : memref<1x88x64xf32, #tpu.memory_space<vmem>>, vector<1x72x64xf32>
    %16 = vector.shape_cast %15 : vector<1x72x64xf32> to vector<72x64xf32>
    %c1_16 = arith.constant 1 : index
    %c0_17 = arith.constant 0 : index
    %c0_18 = arith.constant 0 : index
    %c0_19 = arith.constant 0 : index
    %17 = vector.load %arg2[%c1_16, %c0_17, %c0_18, %c0_19] : memref<2x2x64x32xbf16, #tpu.memory_space<vmem>>, vector<1x1x64x32xbf16>
    %18 = vector.shape_cast %17 : vector<1x1x64x32xbf16> to vector<64x32xbf16>
    %19 = arith.truncf %16 : vector<72x64xf32> to vector<72x64xbf16>
    %cst_20 = arith.constant dense<0.000000e+00> : vector<72x32xf32>
    %20 = tpu.matmul %19, %18, %cst_20 {dimension_numbers = #tpu.dot_dimension_numbers<[1], [0], [0], [1], [0, 0, 1, 1], [], []>} : vector<72x64xbf16>, vector<64x32xbf16>, vector<72x32xf32> -> vector<72x32xf32>
    %21 = arith.addf %14, %20 : vector<72x32xf32>
    %c0_21 = arith.constant 0 : index
    %c10 = arith.constant 10 : index
    %c0_22 = arith.constant 0 : index
    %22 = vector.load %arg1[%c0_21, %c10, %c0_22] : memref<1x88x64xf32, #tpu.memory_space<vmem>>, vector<1x72x64xf32>
    %23 = vector.shape_cast %22 : vector<1x72x64xf32> to vector<72x64xf32>
    %c1_23 = arith.constant 1 : index
    %c1_24 = arith.constant 1 : index
    %c0_25 = arith.constant 0 : index
    %c0_26 = arith.constant 0 : index
    %24 = vector.load %arg2[%c1_23, %c1_24, %c0_25, %c0_26] : memref<2x2x64x32xbf16, #tpu.memory_space<vmem>>, vector<1x1x64x32xbf16>
    %25 = vector.shape_cast %24 : vector<1x1x64x32xbf16> to vector<64x32xbf16>
    %26 = arith.truncf %23 : vector<72x64xf32> to vector<72x64xbf16>
    %cst_27 = arith.constant dense<0.000000e+00> : vector<72x32xf32>
    %27 = tpu.matmul %26, %25, %cst_27 {dimension_numbers = #tpu.dot_dimension_numbers<[1], [0], [0], [1], [0, 0, 1, 1], [], []>} : vector<72x64xbf16>, vector<64x32xbf16>, vector<72x32xf32> -> vector<72x32xf32>
    %28 = arith.addf %21, %27 : vector<72x32xf32>
    %c0_28 = arith.constant 0 : index
    %c0_29 = arith.constant 0 : index
    %29 = vector.load %arg3[%c0_28, %c0_29] : memref<1x32xf32, #tpu.memory_space<vmem>>, vector<1x32xf32>
    %30 = vector.broadcast %29 : vector<1x32xf32> to vector<72x32xf32>
    %31 = arith.addf %28, %30 : vector<72x32xf32>
    %cst_30 = arith.constant 0.000000e+00 : f32
    %32 = vector.broadcast %cst_30 : f32 to vector<72x32xf32>
    %33 = arith.cmpf oge, %31, %32 : vector<72x32xf32>
    %cst_31 = arith.constant 2.000000e-01 : f32
    %34 = vector.broadcast %cst_31 : f32 to vector<72x32xf32>
    %35 = arith.mulf %34, %31 : vector<72x32xf32>
    %36 = arith.select %33, %31, %35 : vector<72x32xi1>, vector<72x32xf32>
    %c0_32 = arith.constant 0 : index
    %c0_33 = arith.constant 0 : index
    %c0_34 = arith.constant 0 : index
    %37 = vector.load %arg4[%c0_32, %c0_33, %c0_34] : memref<1x72x32xf32, #tpu.memory_space<vmem>>, vector<1x72x32xf32>
    %38 = vector.shape_cast %37 : vector<1x72x32xf32> to vector<72x32xf32>
    %39 = vector.shape_cast %36 : vector<72x32xf32> to vector<1x72x32xf32>
    tpu.vector_store %arg4[%c0_32, %c0_33, %c0_34], %39 {strides = array<i32>} : memref<1x72x32xf32, #tpu.memory_space<vmem>>, vector<1x72x32xf32>,
    return
  }
  func.func @transform_0(%arg0: i32) -> (i32, i32, i32) {
    %c0_i32 = arith.constant 0 : i32
    %c0_i32_0 = arith.constant 0 : i32
    %c0_i32_1 = arith.constant 0 : i32
    return %arg0, %c0_i32, %c0_i32_0 : i32, i32, i32
  }
  func.func @transform_1(%arg0: i32) -> (i32, i32, i32, i32) {
    %c0_i32 = arith.constant 0 : i32
    %c0_i32_0 = arith.constant 0 : i32
    %c0_i32_1 = arith.constant 0 : i32
    %c0_i32_2 = arith.constant 0 : i32
    %c0_i32_3 = arith.constant 0 : i32
    return %c0_i32, %c0_i32_0, %c0_i32_1, %c0_i32_2 : i32, i32, i32, i32
  }
  func.func @transform_2(%arg0: i32) -> (i32, i32) {
    %c0_i32 = arith.constant 0 : i32
    %c0_i32_0 = arith.constant 0 : i32
    %c0_i32_1 = arith.constant 0 : i32
    return %c0_i32, %c0_i32_0 : i32, i32
  }
  func.func @transform_3(%arg0: i32) -> (i32, i32, i32) {
    %c0_i32 = arith.constant 0 : i32
    %c0_i32_0 = arith.constant 0 : i32
    %c0_i32_1 = arith.constant 0 : i32
    return %arg0, %c0_i32, %c0_i32_0 : i32, i32, i32
  }
}

module attributes {stable_mosaic.version = 11 : i64} {
  func.func @_conv3x3s2_kernel(%arg0: i32, %arg1: memref<1x32x128xf32, #tpu.memory_space<vmem>>, %arg2: memref<2x2x128x64xbf16, #tpu.memory_space<vmem>>, %arg3: memref<1x64xf32, #tpu.memory_space<vmem>>, %arg4: memref<1x20x64xf32, #tpu.memory_space<vmem>>) attributes {dimension_semantics = [#tpu.dimension_semantics<parallel>], iteration_bounds = array<i64: 2>, scalar_prefetch = 0 : i64, scratch_operands = 0 : i64, tpu.core_type = #tpu.core_type<tc>, window_params = [{transform_indices = @transform_0, window_bounds = array<i64: 1, 32, 128>}, {pipeline_mode = #tpu.pipeline_mode<synchronous>, transform_indices = @transform_1, window_bounds = array<i64: 2, 2, 128, 64>}, {pipeline_mode = #tpu.pipeline_mode<synchronous>, transform_indices = @transform_2, window_bounds = array<i64: 1, 64>}, {transform_indices = @transform_3, window_bounds = array<i64: 1, 20, 64>}]} {
    %cst = arith.constant 0.000000e+00 : f32
    %0 = vector.broadcast %cst : f32 to vector<20x64xf32>
    %c0 = arith.constant 0 : index
    %c0_0 = arith.constant 0 : index
    %c0_1 = arith.constant 0 : index
    %1 = vector.load %arg1[%c0, %c0_0, %c0_1] : memref<1x32x128xf32, #tpu.memory_space<vmem>>, vector<1x20x128xf32>
    %2 = vector.shape_cast %1 : vector<1x20x128xf32> to vector<20x128xf32>
    %c0_2 = arith.constant 0 : index
    %c0_3 = arith.constant 0 : index
    %c0_4 = arith.constant 0 : index
    %c0_5 = arith.constant 0 : index
    %3 = vector.load %arg2[%c0_2, %c0_3, %c0_4, %c0_5] : memref<2x2x128x64xbf16, #tpu.memory_space<vmem>>, vector<1x1x128x64xbf16>
    %4 = vector.shape_cast %3 : vector<1x1x128x64xbf16> to vector<128x64xbf16>
    %5 = arith.truncf %2 : vector<20x128xf32> to vector<20x128xbf16>
    %cst_6 = arith.constant dense<0.000000e+00> : vector<20x64xf32>
    %6 = tpu.matmul %5, %4, %cst_6 {dimension_numbers = #tpu.dot_dimension_numbers<[1], [0], [0], [1], [0, 0, 1, 1], [], []>} : vector<20x128xbf16>, vector<128x64xbf16>, vector<20x64xf32> -> vector<20x64xf32>
    %7 = arith.addf %0, %6 : vector<20x64xf32>
    %c0_7 = arith.constant 0 : index
    %c1 = arith.constant 1 : index
    %c0_8 = arith.constant 0 : index
    %8 = vector.load %arg1[%c0_7, %c1, %c0_8] : memref<1x32x128xf32, #tpu.memory_space<vmem>>, vector<1x20x128xf32>
    %9 = vector.shape_cast %8 : vector<1x20x128xf32> to vector<20x128xf32>
    %c0_9 = arith.constant 0 : index
    %c1_10 = arith.constant 1 : index
    %c0_11 = arith.constant 0 : index
    %c0_12 = arith.constant 0 : index
    %10 = vector.load %arg2[%c0_9, %c1_10, %c0_11, %c0_12] : memref<2x2x128x64xbf16, #tpu.memory_space<vmem>>, vector<1x1x128x64xbf16>
    %11 = vector.shape_cast %10 : vector<1x1x128x64xbf16> to vector<128x64xbf16>
    %12 = arith.truncf %9 : vector<20x128xf32> to vector<20x128xbf16>
    %cst_13 = arith.constant dense<0.000000e+00> : vector<20x64xf32>
    %13 = tpu.matmul %12, %11, %cst_13 {dimension_numbers = #tpu.dot_dimension_numbers<[1], [0], [0], [1], [0, 0, 1, 1], [], []>} : vector<20x128xbf16>, vector<128x64xbf16>, vector<20x64xf32> -> vector<20x64xf32>
    %14 = arith.addf %7, %13 : vector<20x64xf32>
    %c0_14 = arith.constant 0 : index
    %c5 = arith.constant 5 : index
    %c0_15 = arith.constant 0 : index
    %15 = vector.load %arg1[%c0_14, %c5, %c0_15] : memref<1x32x128xf32, #tpu.memory_space<vmem>>, vector<1x20x128xf32>
    %16 = vector.shape_cast %15 : vector<1x20x128xf32> to vector<20x128xf32>
    %c1_16 = arith.constant 1 : index
    %c0_17 = arith.constant 0 : index
    %c0_18 = arith.constant 0 : index
    %c0_19 = arith.constant 0 : index
    %17 = vector.load %arg2[%c1_16, %c0_17, %c0_18, %c0_19] : memref<2x2x128x64xbf16, #tpu.memory_space<vmem>>, vector<1x1x128x64xbf16>
    %18 = vector.shape_cast %17 : vector<1x1x128x64xbf16> to vector<128x64xbf16>
    %19 = arith.truncf %16 : vector<20x128xf32> to vector<20x128xbf16>
    %cst_20 = arith.constant dense<0.000000e+00> : vector<20x64xf32>
    %20 = tpu.matmul %19, %18, %cst_20 {dimension_numbers = #tpu.dot_dimension_numbers<[1], [0], [0], [1], [0, 0, 1, 1], [], []>} : vector<20x128xbf16>, vector<128x64xbf16>, vector<20x64xf32> -> vector<20x64xf32>
    %21 = arith.addf %14, %20 : vector<20x64xf32>
    %c0_21 = arith.constant 0 : index
    %c6 = arith.constant 6 : index
    %c0_22 = arith.constant 0 : index
    %22 = vector.load %arg1[%c0_21, %c6, %c0_22] : memref<1x32x128xf32, #tpu.memory_space<vmem>>, vector<1x20x128xf32>
    %23 = vector.shape_cast %22 : vector<1x20x128xf32> to vector<20x128xf32>
    %c1_23 = arith.constant 1 : index
    %c1_24 = arith.constant 1 : index
    %c0_25 = arith.constant 0 : index
    %c0_26 = arith.constant 0 : index
    %24 = vector.load %arg2[%c1_23, %c1_24, %c0_25, %c0_26] : memref<2x2x128x64xbf16, #tpu.memory_space<vmem>>, vector<1x1x128x64xbf16>
    %25 = vector.shape_cast %24 : vector<1x1x128x64xbf16> to vector<128x64xbf16>
    %26 = arith.truncf %23 : vector<20x128xf32> to vector<20x128xbf16>
    %cst_27 = arith.constant dense<0.000000e+00> : vector<20x64xf32>
    %27 = tpu.matmul %26, %25, %cst_27 {dimension_numbers = #tpu.dot_dimension_numbers<[1], [0], [0], [1], [0, 0, 1, 1], [], []>} : vector<20x128xbf16>, vector<128x64xbf16>, vector<20x64xf32> -> vector<20x64xf32>
    %28 = arith.addf %21, %27 : vector<20x64xf32>
    %c0_28 = arith.constant 0 : index
    %c0_29 = arith.constant 0 : index
    %29 = vector.load %arg3[%c0_28, %c0_29] : memref<1x64xf32, #tpu.memory_space<vmem>>, vector<1x64xf32>
    %30 = vector.broadcast %29 : vector<1x64xf32> to vector<20x64xf32>
    %31 = arith.addf %28, %30 : vector<20x64xf32>
    %cst_30 = arith.constant 0.000000e+00 : f32
    %32 = vector.broadcast %cst_30 : f32 to vector<20x64xf32>
    %33 = arith.cmpf oge, %31, %32 : vector<20x64xf32>
    %cst_31 = arith.constant 2.000000e-01 : f32
    %34 = vector.broadcast %cst_31 : f32 to vector<20x64xf32>
    %35 = arith.mulf %34, %31 : vector<20x64xf32>
    %36 = arith.select %33, %31, %35 : vector<20x64xi1>, vector<20x64xf32>
    %c0_32 = arith.constant 0 : index
    %c0_33 = arith.constant 0 : index
    %c0_34 = arith.constant 0 : index
    %37 = vector.load %arg4[%c0_32, %c0_33, %c0_34] : memref<1x20x64xf32, #tpu.memory_space<vmem>>, vector<1x20x64xf32>
    %38 = vector.shape_cast %37 : vector<1x20x64xf32> to vector<20x64xf32>
    %39 = vector.shape_cast %36 : vector<20x64xf32> to vector<1x20x64xf32>
    tpu.vector_store %arg4[%c0_32, %c0_33, %c0_34], %39 {strides = array<i32>} : memref<1x20x64xf32, #tpu.memory_space<vmem>>, vector<1x20x64xf32>,
    return
  }
  func.func @transform_0(%arg0: i32) -> (i32, i32, i32) {
    %c0_i32 = arith.constant 0 : i32
    %c0_i32_0 = arith.constant 0 : i32
    %c0_i32_1 = arith.constant 0 : i32
    return %arg0, %c0_i32, %c0_i32_0 : i32, i32, i32
  }
  func.func @transform_1(%arg0: i32) -> (i32, i32, i32, i32) {
    %c0_i32 = arith.constant 0 : i32
    %c0_i32_0 = arith.constant 0 : i32
    %c0_i32_1 = arith.constant 0 : i32
    %c0_i32_2 = arith.constant 0 : i32
    %c0_i32_3 = arith.constant 0 : i32
    return %c0_i32, %c0_i32_0, %c0_i32_1, %c0_i32_2 : i32, i32, i32, i32
  }
  func.func @transform_2(%arg0: i32) -> (i32, i32) {
    %c0_i32 = arith.constant 0 : i32
    %c0_i32_0 = arith.constant 0 : i32
    %c0_i32_1 = arith.constant 0 : i32
    return %c0_i32, %c0_i32_0 : i32, i32
  }
  func.func @transform_3(%arg0: i32) -> (i32, i32, i32) {
    %c0_i32 = arith.constant 0 : i32
    %c0_i32_0 = arith.constant 0 : i32
    %c0_i32_1 = arith.constant 0 : i32
    return %arg0, %c0_i32, %c0_i32_0 : i32, i32, i32
  }
}

module attributes {stable_mosaic.version = 11 : i64} {
  func.func @_cbam_conv4_kernel(%arg0: i32, %arg1: memref<1x4x4x64xf32, #tpu.memory_space<vmem>>, %arg2: memref<64x4xf32, #tpu.memory_space<vmem>>, %arg3: memref<4x64xf32, #tpu.memory_space<vmem>>, %arg4: memref<2x49xf32, #tpu.memory_space<smem>>, %arg5: memref<1x64xf32, #tpu.memory_space<vmem>>, %arg6: memref<1x1xf32, #tpu.memory_space<smem>>, %arg7: memref<1x4x4x1xf32, #tpu.memory_space<vmem>>, %arg8: memref<2x10x10x1xf32, #tpu.memory_space<vmem>>) attributes {dimension_semantics = [#tpu.dimension_semantics<parallel>], iteration_bounds = array<i64: 2>, scalar_prefetch = 0 : i64, scratch_operands = 1 : i64, tpu.core_type = #tpu.core_type<tc>, window_params = [{transform_indices = @transform_0, window_bounds = array<i64: 1, 4, 4, 64>}, {pipeline_mode = #tpu.pipeline_mode<synchronous>, transform_indices = @transform_1, window_bounds = array<i64: 64, 4>}, {pipeline_mode = #tpu.pipeline_mode<synchronous>, transform_indices = @transform_2, window_bounds = array<i64: 4, 64>}, {transform_indices = @transform_3, window_bounds = array<i64: 2, 49>}, {pipeline_mode = #tpu.pipeline_mode<synchronous>, transform_indices = @transform_4, window_bounds = array<i64: 1, 64>}, {transform_indices = @transform_5, window_bounds = array<i64: 1, 1>}, {transform_indices = @transform_6, window_bounds = array<i64: 1, 4, 4, 1>}]} {
    %c0 = arith.constant 0 : index
    %c0_0 = arith.constant 0 : index
    %c0_1 = arith.constant 0 : index
    %c0_2 = arith.constant 0 : index
    %0 = vector.load %arg1[%c0, %c0_0, %c0_1, %c0_2] : memref<1x4x4x64xf32, #tpu.memory_space<vmem>>, vector<1x4x4x64xf32>
    %1 = vector.shape_cast %0 : vector<1x4x4x64xf32> to vector<4x4x64xf32>
    %cst = arith.constant dense<0xFF800000> : vector<4x64xf32>
    %2 = vector.multi_reduction <maximumf>, %1, %cst [0] : vector<4x4x64xf32> to vector<4x64xf32>
    %cst_3 = arith.constant dense<0xFF800000> : vector<64xf32>
    %3 = vector.multi_reduction <maximumf>, %2, %cst_3 [0] : vector<4x64xf32> to vector<64xf32>
    %4 = vector.shape_cast %3 : vector<64xf32> to vector<1x64xf32>
    %cst_4 = arith.constant dense<0.000000e+00> : vector<4x64xf32>
    %5 = vector.multi_reduction <add>, %1, %cst_4 [0] : vector<4x4x64xf32> to vector<4x64xf32>
    %cst_5 = arith.constant dense<0.000000e+00> : vector<64xf32>
    %6 = vector.multi_reduction <add>, %5, %cst_5 [0] : vector<4x64xf32> to vector<64xf32>
    %7 = vector.shape_cast %6 : vector<64xf32> to vector<1x64xf32>
    %cst_6 = arith.constant 6.250000e-02 : f32
    %8 = vector.broadcast %cst_6 : f32 to vector<1x64xf32>
    %9 = arith.mulf %7, %8 : vector<1x64xf32>
    %c0_7 = arith.constant 0 : index
    %c0_8 = arith.constant 0 : index
    %10 = vector.load %arg2[%c0_7, %c0_8] : memref<64x4xf32, #tpu.memory_space<vmem>>, vector<64x4xf32>
    %cst_9 = arith.constant dense<0.000000e+00> : vector<1x4xf32>
    %11 = tpu.matmul %4, %10, %cst_9 {dimension_numbers = #tpu.dot_dimension_numbers<[1], [0], [0], [1], [0, 0, 1, 1], [], []>} : vector<1x64xf32>, vector<64x4xf32>, vector<1x4xf32> -> vector<1x4xf32>
    %cst_10 = arith.constant 0.000000e+00 : f32
    %12 = vector.broadcast %cst_10 : f32 to vector<1x4xf32>
    %13 = arith.maximumf %11, %12 : vector<1x4xf32>
    %c0_11 = arith.constant 0 : index
    %c0_12 = arith.constant 0 : index
    %14 = vector.load %arg3[%c0_11, %c0_12] : memref<4x64xf32, #tpu.memory_space<vmem>>, vector<4x64xf32>
    %cst_13 = arith.constant dense<0.000000e+00> : vector<1x64xf32>
    %15 = tpu.matmul %13, %14, %cst_13 {dimension_numbers = #tpu.dot_dimension_numbers<[1], [0], [0], [1], [0, 0, 1, 1], [], []>} : vector<1x4xf32>, vector<4x64xf32>, vector<1x64xf32> -> vector<1x64xf32>
    %c0_14 = arith.constant 0 : index
    %c0_15 = arith.constant 0 : index
    %16 = vector.load %arg2[%c0_14, %c0_15] : memref<64x4xf32, #tpu.memory_space<vmem>>, vector<64x4xf32>
    %cst_16 = arith.constant dense<0.000000e+00> : vector<1x4xf32>
    %17 = tpu.matmul %9, %16, %cst_16 {dimension_numbers = #tpu.dot_dimension_numbers<[1], [0], [0], [1], [0, 0, 1, 1], [], []>} : vector<1x64xf32>, vector<64x4xf32>, vector<1x4xf32> -> vector<1x4xf32>
    %cst_17 = arith.constant 0.000000e+00 : f32
    %18 = vector.broadcast %cst_17 : f32 to vector<1x4xf32>
    %19 = arith.maximumf %17, %18 : vector<1x4xf32>
    %c0_18 = arith.constant 0 : index
    %c0_19 = arith.constant 0 : index
    %20 = vector.load %arg3[%c0_18, %c0_19] : memref<4x64xf32, #tpu.memory_space<vmem>>, vector<4x64xf32>
    %cst_20 = arith.constant dense<0.000000e+00> : vector<1x64xf32>
    %21 = tpu.matmul %19, %20, %cst_20 {dimension_numbers = #tpu.dot_dimension_numbers<[1], [0], [0], [1], [0, 0, 1, 1], [], []>} : vector<1x4xf32>, vector<4x64xf32>, vector<1x64xf32> -> vector<1x64xf32>
    %22 = arith.addf %15, %21 : vector<1x64xf32>
    %cst_21 = arith.constant 0.000000e+00 : f32
    %23 = vector.broadcast %cst_21 : f32 to vector<1x64xf32>
    %24 = arith.subf %23, %22 : vector<1x64xf32>
    %25 = math.exp %24 : vector<1x64xf32>
    %cst_22 = arith.constant 1.000000e+00 : f32
    %26 = vector.broadcast %cst_22 : f32 to vector<1x64xf32>
    %27 = arith.addf %26, %25 : vector<1x64xf32>
    %28 = tpu.reciprocal %27 {approx = true} : vector<1x64xf32> -> vector<1x64xf32>
    %29 = vector.shape_cast %28 : vector<1x64xf32> to vector<1x1x64xf32>
    %30 = vector.broadcast %29 : vector<1x1x64xf32> to vector<4x4x64xf32>
    %31 = arith.mulf %1, %30 : vector<4x4x64xf32>
    %cst_23 = arith.constant dense<0xFF800000> : vector<4x4xf32>
    %32 = vector.multi_reduction <maximumf>, %31, %cst_23 [2] : vector<4x4x64xf32> to vector<4x4xf32>
    %33 = vector.shape_cast %32 : vector<4x4xf32> to vector<4x4x1xf32>
    %cst_24 = arith.constant dense<0.000000e+00> : vector<4x4xf32>
    %34 = vector.multi_reduction <add>, %31, %cst_24 [2] : vector<4x4x64xf32> to vector<4x4xf32>
    %35 = vector.shape_cast %34 : vector<4x4xf32> to vector<4x4x1xf32>
    %cst_25 = arith.constant 6.400000e+01 : f32
    %36 = vector.broadcast %cst_25 : f32 to vector<4x4x1xf32>
    %37 = arith.divf %35, %36 : vector<4x4x1xf32>
    %cst_26 = arith.constant 0.000000e+00 : f32
    %38 = vector.broadcast %cst_26 : f32 to vector<2x10x10x1xf32>
    %c0_27 = arith.constant 0 : index
    %c0_28 = arith.constant 0 : index
    %c0_29 = arith.constant 0 : index
    %c0_30 = arith.constant 0 : index
    %39 = vector.load %arg8[%c0_27, %c0_28, %c0_29, %c0_30] : memref<2x10x10x1xf32, #tpu.memory_space<vmem>>, vector<2x10x10x1xf32>
    tpu.vector_store %arg8[%c0_27, %c0_28, %c0_29, %c0_30], %38 {strides = array<i32>} : memref<2x10x10x1xf32, #tpu.memory_space<vmem>>, vector<2x10x10x1xf32>,
    %c0_31 = arith.constant 0 : index
    %c3 = arith.constant 3 : index
    %c3_32 = arith.constant 3 : index
    %c0_33 = arith.constant 0 : index
    %40 = vector.load %arg8[%c0_31, %c3, %c3_32, %c0_33] : memref<2x10x10x1xf32, #tpu.memory_space<vmem>>, vector<1x4x4x1xf32>
    %41 = vector.shape_cast %40 : vector<1x4x4x1xf32> to vector<4x4x1xf32>
    %42 = vector.shape_cast %33 : vector<4x4x1xf32> to vector<1x4x4x1xf32>
    tpu.vector_store %arg8[%c0_31, %c3, %c3_32, %c0_33], %42 {strides = array<i32>} : memref<2x10x10x1xf32, #tpu.memory_space<vmem>>, vector<1x4x4x1xf32>,
    %c1 = arith.constant 1 : index
    %c3_34 = arith.constant 3 : index
    %c3_35 = arith.constant 3 : index
    %c0_36 = arith.constant 0 : index
    %43 = vector.load %arg8[%c1, %c3_34, %c3_35, %c0_36] : memref<2x10x10x1xf32, #tpu.memory_space<vmem>>, vector<1x4x4x1xf32>
    %44 = vector.shape_cast %43 : vector<1x4x4x1xf32> to vector<4x4x1xf32>
    %45 = vector.shape_cast %37 : vector<4x4x1xf32> to vector<1x4x4x1xf32>
    tpu.vector_store %arg8[%c1, %c3_34, %c3_35, %c0_36], %45 {strides = array<i32>} : memref<2x10x10x1xf32, #tpu.memory_space<vmem>>, vector<1x4x4x1xf32>,
    %cst_37 = arith.constant 0.000000e+00 : f32
    %46 = vector.broadcast %cst_37 : f32 to vector<4x4x1xf32>
    %c0_38 = arith.constant 0 : index
    %c0_39 = arith.constant 0 : index
    %c0_40 = arith.constant 0 : index
    %c0_41 = arith.constant 0 : index
    %47 = vector.load %arg8[%c0_38, %c0_39, %c0_40, %c0_41] : memref<2x10x10x1xf32, #tpu.memory_space<vmem>>, vector<1x4x4x1xf32>
    %48 = vector.shape_cast %47 : vector<1x4x4x1xf32> to vector<4x4x1xf32>
    %c0_42 = arith.constant 0 : index
    %c0_43 = arith.constant 0 : index
    %49 = memref.load %arg4[%c0_42, %c0_43] : memref<2x49xf32, #tpu.memory_space<smem>>
    %50 = vector.broadcast %49 : f32 to vector<4x4x1xf32>
    %51 = arith.mulf %48, %50 : vector<4x4x1xf32>
    %52 = arith.addf %46, %51 : vector<4x4x1xf32>
    %c1_44 = arith.constant 1 : index
    %c0_45 = arith.constant 0 : index
    %c0_46 = arith.constant 0 : index
    %c0_47 = arith.constant 0 : index
    %53 = vector.load %arg8[%c1_44, %c0_45, %c0_46, %c0_47] : memref<2x10x10x1xf32, #tpu.memory_space<vmem>>, vector<1x4x4x1xf32>
    %54 = vector.shape_cast %53 : vector<1x4x4x1xf32> to vector<4x4x1xf32>
    %c1_48 = arith.constant 1 : index
    %c0_49 = arith.constant 0 : index
    %55 = memref.load %arg4[%c1_48, %c0_49] : memref<2x49xf32, #tpu.memory_space<smem>>
    %56 = vector.broadcast %55 : f32 to vector<4x4x1xf32>
    %57 = arith.mulf %54, %56 : vector<4x4x1xf32>
    %58 = arith.addf %52, %57 : vector<4x4x1xf32>
    %c0_50 = arith.constant 0 : index
    %c0_51 = arith.constant 0 : index
    %c1_52 = arith.constant 1 : index
    %c0_53 = arith.constant 0 : index
    %59 = vector.load %arg8[%c0_50, %c0_51, %c1_52, %c0_53] : memref<2x10x10x1xf32, #tpu.memory_space<vmem>>, vector<1x4x4x1xf32>
    %60 = vector.shape_cast %59 : vector<1x4x4x1xf32> to vector<4x4x1xf32>
    %c0_54 = arith.constant 0 : index
    %c1_55 = arith.constant 1 : index
    %61 = memref.load %arg4[%c0_54, %c1_55] : memref<2x49xf32, #tpu.memory_space<smem>>
    %62 = vector.broadcast %61 : f32 to vector<4x4x1xf32>
    %63 = arith.mulf %60, %62 : vector<4x4x1xf32>
    %64 = arith.addf %58, %63 : vector<4x4x1xf32>
    %c1_56 = arith.constant 1 : index
    %c0_57 = arith.constant 0 : index
    %c1_58 = arith.constant 1 : index
    %c0_59 = arith.constant 0 : index
    %65 = vector.load %arg8[%c1_56, %c0_57, %c1_58, %c0_59] : memref<2x10x10x1xf32, #tpu.memory_space<vmem>>, vector<1x4x4x1xf32>
    %66 = vector.shape_cast %65 : vector<1x4x4x1xf32> to vector<4x4x1xf32>
    %c1_60 = arith.constant 1 : index
    %c1_61 = arith.constant 1 : index
    %67 = memref.load %arg4[%c1_60, %c1_61] : memref<2x49xf32, #tpu.memory_space<smem>>
    %68 = vector.broadcast %67 : f32 to vector<4x4x1xf32>
    %69 = arith.mulf %66, %68 : vector<4x4x1xf32>
    %70 = arith.addf %64, %69 : vector<4x4x1xf32>
    %c0_62 = arith.constant 0 : index
    %c0_63 = arith.constant 0 : index
    %c2 = arith.constant 2 : index
    %c0_64 = arith.constant 0 : index
    %71 = vector.load %arg8[%c0_62, %c0_63, %c2, %c0_64] : memref<2x10x10x1xf32, #tpu.memory_space<vmem>>, vector<1x4x4x1xf32>
    %72 = vector.shape_cast %71 : vector<1x4x4x1xf32> to vector<4x4x1xf32>
    %c0_65 = arith.constant 0 : index
    %c2_66 = arith.constant 2 : index
    %73 = memref.load %arg4[%c0_65, %c2_66] : memref<2x49xf32, #tpu.memory_space<smem>>
    %74 = vector.broadcast %73 : f32 to vector<4x4x1xf32>
    %75 = arith.mulf %72, %74 : vector<4x4x1xf32>
    %76 = arith.addf %70, %75 : vector<4x4x1xf32>
    %c1_67 = arith.constant 1 : index
    %c0_68 = arith.constant 0 : index
    %c2_69 = arith.constant 2 : index
    %c0_70 = arith.constant 0 : index
    %77 = vector.load %arg8[%c1_67, %c0_68, %c2_69, %c0_70] : memref<2x10x10x1xf32, #tpu.memory_space<vmem>>, vector<1x4x4x1xf32>
    %78 = vector.shape_cast %77 : vector<1x4x4x1xf32> to vector<4x4x1xf32>
    %c1_71 = arith.constant 1 : index
    %c2_72 = arith.constant 2 : index
    %79 = memref.load %arg4[%c1_71, %c2_72] : memref<2x49xf32, #tpu.memory_space<smem>>
    %80 = vector.broadcast %79 : f32 to vector<4x4x1xf32>
    %81 = arith.mulf %78, %80 : vector<4x4x1xf32>
    %82 = arith.addf %76, %81 : vector<4x4x1xf32>
    %c0_73 = arith.constant 0 : index
    %c0_74 = arith.constant 0 : index
    %c3_75 = arith.constant 3 : index
    %c0_76 = arith.constant 0 : index
    %83 = vector.load %arg8[%c0_73, %c0_74, %c3_75, %c0_76] : memref<2x10x10x1xf32, #tpu.memory_space<vmem>>, vector<1x4x4x1xf32>
    %84 = vector.shape_cast %83 : vector<1x4x4x1xf32> to vector<4x4x1xf32>
    %c0_77 = arith.constant 0 : index
    %c3_78 = arith.constant 3 : index
    %85 = memref.load %arg4[%c0_77, %c3_78] : memref<2x49xf32, #tpu.memory_space<smem>>
    %86 = vector.broadcast %85 : f32 to vector<4x4x1xf32>
    %87 = arith.mulf %84, %86 : vector<4x4x1xf32>
    %88 = arith.addf %82, %87 : vector<4x4x1xf32>
    %c1_79 = arith.constant 1 : index
    %c0_80 = arith.constant 0 : index
    %c3_81 = arith.constant 3 : index
    %c0_82 = arith.constant 0 : index
    %89 = vector.load %arg8[%c1_79, %c0_80, %c3_81, %c0_82] : memref<2x10x10x1xf32, #tpu.memory_space<vmem>>, vector<1x4x4x1xf32>
    %90 = vector.shape_cast %89 : vector<1x4x4x1xf32> to vector<4x4x1xf32>
    %c1_83 = arith.constant 1 : index
    %c3_84 = arith.constant 3 : index
    %91 = memref.load %arg4[%c1_83, %c3_84] : memref<2x49xf32, #tpu.memory_space<smem>>
    %92 = vector.broadcast %91 : f32 to vector<4x4x1xf32>
    %93 = arith.mulf %90, %92 : vector<4x4x1xf32>
    %94 = arith.addf %88, %93 : vector<4x4x1xf32>
    %c0_85 = arith.constant 0 : index
    %c0_86 = arith.constant 0 : index
    %c4 = arith.constant 4 : index
    %c0_87 = arith.constant 0 : index
    %95 = vector.load %arg8[%c0_85, %c0_86, %c4, %c0_87] : memref<2x10x10x1xf32, #tpu.memory_space<vmem>>, vector<1x4x4x1xf32>
    %96 = vector.shape_cast %95 : vector<1x4x4x1xf32> to vector<4x4x1xf32>
    %c0_88 = arith.constant 0 : index
    %c4_89 = arith.constant 4 : index
    %97 = memref.load %arg4[%c0_88, %c4_89] : memref<2x49xf32, #tpu.memory_space<smem>>
    %98 = vector.broadcast %97 : f32 to vector<4x4x1xf32>
    %99 = arith.mulf %96, %98 : vector<4x4x1xf32>
    %100 = arith.addf %94, %99 : vector<4x4x1xf32>
    %c1_90 = arith.constant 1 : index
    %c0_91 = arith.constant 0 : index
    %c4_92 = arith.constant 4 : index
    %c0_93 = arith.constant 0 : index
    %101 = vector.load %arg8[%c1_90, %c0_91, %c4_92, %c0_93] : memref<2x10x10x1xf32, #tpu.memory_space<vmem>>, vector<1x4x4x1xf32>
    %102 = vector.shape_cast %101 : vector<1x4x4x1xf32> to vector<4x4x1xf32>
    %c1_94 = arith.constant 1 : index
    %c4_95 = arith.constant 4 : index
    %103 = memref.load %arg4[%c1_94, %c4_95] : memref<2x49xf32, #tpu.memory_space<smem>>
    %104 = vector.broadcast %103 : f32 to vector<4x4x1xf32>
    %105 = arith.mulf %102, %104 : vector<4x4x1xf32>
    %106 = arith.addf %100, %105 : vector<4x4x1xf32>
    %c0_96 = arith.constant 0 : index
    %c0_97 = arith.constant 0 : index
    %c5 = arith.constant 5 : index
    %c0_98 = arith.constant 0 : index
    %107 = vector.load %arg8[%c0_96, %c0_97, %c5, %c0_98] : memref<2x10x10x1xf32, #tpu.memory_space<vmem>>, vector<1x4x4x1xf32>
    %108 = vector.shape_cast %107 : vector<1x4x4x1xf32> to vector<4x4x1xf32>
    %c0_99 = arith.constant 0 : index
    %c5_100 = arith.constant 5 : index
    %109 = memref.load %arg4[%c0_99, %c5_100] : memref<2x49xf32, #tpu.memory_space<smem>>
    %110 = vector.broadcast %109 : f32 to vector<4x4x1xf32>
    %111 = arith.mulf %108, %110 : vector<4x4x1xf32>
    %112 = arith.addf %106, %111 : vector<4x4x1xf32>
    %c1_101 = arith.constant 1 : index
    %c0_102 = arith.constant 0 : index
    %c5_103 = arith.constant 5 : index
    %c0_104 = arith.constant 0 : index
    %113 = vector.load %arg8[%c1_101, %c0_102, %c5_103, %c0_104] : memref<2x10x10x1xf32, #tpu.memory_space<vmem>>, vector<1x4x4x1xf32>
    %114 = vector.shape_cast %113 : vector<1x4x4x1xf32> to vector<4x4x1xf32>
    %c1_105 = arith.constant 1 : index
    %c5_106 = arith.constant 5 : index
    %115 = memref.load %arg4[%c1_105, %c5_106] : memref<2x49xf32, #tpu.memory_space<smem>>
    %116 = vector.broadcast %115 : f32 to vector<4x4x1xf32>
    %117 = arith.mulf %114, %116 : vector<4x4x1xf32>
    %118 = arith.addf %112, %117 : vector<4x4x1xf32>
    %c0_107 = arith.constant 0 : index
    %c0_108 = arith.constant 0 : index
    %c6 = arith.constant 6 : index
    %c0_109 = arith.constant 0 : index
    %119 = vector.load %arg8[%c0_107, %c0_108, %c6, %c0_109] : memref<2x10x10x1xf32, #tpu.memory_space<vmem>>, vector<1x4x4x1xf32>
    %120 = vector.shape_cast %119 : vector<1x4x4x1xf32> to vector<4x4x1xf32>
    %c0_110 = arith.constant 0 : index
    %c6_111 = arith.constant 6 : index
    %121 = memref.load %arg4[%c0_110, %c6_111] : memref<2x49xf32, #tpu.memory_space<smem>>
    %122 = vector.broadcast %121 : f32 to vector<4x4x1xf32>
    %123 = arith.mulf %120, %122 : vector<4x4x1xf32>
    %124 = arith.addf %118, %123 : vector<4x4x1xf32>
    %c1_112 = arith.constant 1 : index
    %c0_113 = arith.constant 0 : index
    %c6_114 = arith.constant 6 : index
    %c0_115 = arith.constant 0 : index
    %125 = vector.load %arg8[%c1_112, %c0_113, %c6_114, %c0_115] : memref<2x10x10x1xf32, #tpu.memory_space<vmem>>, vector<1x4x4x1xf32>
    %126 = vector.shape_cast %125 : vector<1x4x4x1xf32> to vector<4x4x1xf32>
    %c1_116 = arith.constant 1 : index
    %c6_117 = arith.constant 6 : index
    %127 = memref.load %arg4[%c1_116, %c6_117] : memref<2x49xf32, #tpu.memory_space<smem>>
    %128 = vector.broadcast %127 : f32 to vector<4x4x1xf32>
    %129 = arith.mulf %126, %128 : vector<4x4x1xf32>
    %130 = arith.addf %124, %129 : vector<4x4x1xf32>
    %c0_118 = arith.constant 0 : index
    %c1_119 = arith.constant 1 : index
    %c0_120 = arith.constant 0 : index
    %c0_121 = arith.constant 0 : index
    %131 = vector.load %arg8[%c0_118, %c1_119, %c0_120, %c0_121] : memref<2x10x10x1xf32, #tpu.memory_space<vmem>>, vector<1x4x4x1xf32>
    %132 = vector.shape_cast %131 : vector<1x4x4x1xf32> to vector<4x4x1xf32>
    %c0_122 = arith.constant 0 : index
    %c7 = arith.constant 7 : index
    %133 = memref.load %arg4[%c0_122, %c7] : memref<2x49xf32, #tpu.memory_space<smem>>
    %134 = vector.broadcast %133 : f32 to vector<4x4x1xf32>
    %135 = arith.mulf %132, %134 : vector<4x4x1xf32>
    %136 = arith.addf %130, %135 : vector<4x4x1xf32>
    %c1_123 = arith.constant 1 : index
    %c1_124 = arith.constant 1 : index
    %c0_125 = arith.constant 0 : index
    %c0_126 = arith.constant 0 : index
    %137 = vector.load %arg8[%c1_123, %c1_124, %c0_125, %c0_126] : memref<2x10x10x1xf32, #tpu.memory_space<vmem>>, vector<1x4x4x1xf32>
    %138 = vector.shape_cast %137 : vector<1x4x4x1xf32> to vector<4x4x1xf32>
    %c1_127 = arith.constant 1 : index
    %c7_128 = arith.constant 7 : index
    %139 = memref.load %arg4[%c1_127, %c7_128] : memref<2x49xf32, #tpu.memory_space<smem>>
    %140 = vector.broadcast %139 : f32 to vector<4x4x1xf32>
    %141 = arith.mulf %138, %140 : vector<4x4x1xf32>
    %142 = arith.addf %136, %141 : vector<4x4x1xf32>
    %c0_129 = arith.constant 0 : index
    %c1_130 = arith.constant 1 : index
    %c1_131 = arith.constant 1 : index
    %c0_132 = arith.constant 0 : index
    %143 = vector.load %arg8[%c0_129, %c1_130, %c1_131, %c0_132] : memref<2x10x10x1xf32, #tpu.memory_space<vmem>>, vector<1x4x4x1xf32>
    %144 = vector.shape_cast %143 : vector<1x4x4x1xf32> to vector<4x4x1xf32>
    %c0_133 = arith.constant 0 : index
    %c8 = arith.constant 8 : index
    %145 = memref.load %arg4[%c0_133, %c8] : memref<2x49xf32, #tpu.memory_space<smem>>
    %146 = vector.broadcast %145 : f32 to vector<4x4x1xf32>
    %147 = arith.mulf %144, %146 : vector<4x4x1xf32>
    %148 = arith.addf %142, %147 : vector<4x4x1xf32>
    %c1_134 = arith.constant 1 : index
    %c1_135 = arith.constant 1 : index
    %c1_136 = arith.constant 1 : index
    %c0_137 = arith.constant 0 : index
    %149 = vector.load %arg8[%c1_134, %c1_135, %c1_136, %c0_137] : memref<2x10x10x1xf32, #tpu.memory_space<vmem>>, vector<1x4x4x1xf32>
    %150 = vector.shape_cast %149 : vector<1x4x4x1xf32> to vector<4x4x1xf32>
    %c1_138 = arith.constant 1 : index
    %c8_139 = arith.constant 8 : index
    %151 = memref.load %arg4[%c1_138, %c8_139] : memref<2x49xf32, #tpu.memory_space<smem>>
    %152 = vector.broadcast %151 : f32 to vector<4x4x1xf32>
    %153 = arith.mulf %150, %152 : vector<4x4x1xf32>
    %154 = arith.addf %148, %153 : vector<4x4x1xf32>
    %c0_140 = arith.constant 0 : index
    %c1_141 = arith.constant 1 : index
    %c2_142 = arith.constant 2 : index
    %c0_143 = arith.constant 0 : index
    %155 = vector.load %arg8[%c0_140, %c1_141, %c2_142, %c0_143] : memref<2x10x10x1xf32, #tpu.memory_space<vmem>>, vector<1x4x4x1xf32>
    %156 = vector.shape_cast %155 : vector<1x4x4x1xf32> to vector<4x4x1xf32>
    %c0_144 = arith.constant 0 : index
    %c9 = arith.constant 9 : index
    %157 = memref.load %arg4[%c0_144, %c9] : memref<2x49xf32, #tpu.memory_space<smem>>
    %158 = vector.broadcast %157 : f32 to vector<4x4x1xf32>
    %159 = arith.mulf %156, %158 : vector<4x4x1xf32>
    %160 = arith.addf %154, %159 : vector<4x4x1xf32>
    %c1_145 = arith.constant 1 : index
    %c1_146 = arith.constant 1 : index
    %c2_147 = arith.constant 2 : index
    %c0_148 = arith.constant 0 : index
    %161 = vector.load %arg8[%c1_145, %c1_146, %c2_147, %c0_148] : memref<2x10x10x1xf32, #tpu.memory_space<vmem>>, vector<1x4x4x1xf32>
    %162 = vector.shape_cast %161 : vector<1x4x4x1xf32> to vector<4x4x1xf32>
    %c1_149 = arith.constant 1 : index
    %c9_150 = arith.constant 9 : index
    %163 = memref.load %arg4[%c1_149, %c9_150] : memref<2x49xf32, #tpu.memory_space<smem>>
    %164 = vector.broadcast %163 : f32 to vector<4x4x1xf32>
    %165 = arith.mulf %162, %164 : vector<4x4x1xf32>
    %166 = arith.addf %160, %165 : vector<4x4x1xf32>
    %c0_151 = arith.constant 0 : index
    %c1_152 = arith.constant 1 : index
    %c3_153 = arith.constant 3 : index
    %c0_154 = arith.constant 0 : index
    %167 = vector.load %arg8[%c0_151, %c1_152, %c3_153, %c0_154] : memref<2x10x10x1xf32, #tpu.memory_space<vmem>>, vector<1x4x4x1xf32>
    %168 = vector.shape_cast %167 : vector<1x4x4x1xf32> to vector<4x4x1xf32>
    %c0_155 = arith.constant 0 : index
    %c10 = arith.constant 10 : index
    %169 = memref.load %arg4[%c0_155, %c10] : memref<2x49xf32, #tpu.memory_space<smem>>
    %170 = vector.broadcast %169 : f32 to vector<4x4x1xf32>
    %171 = arith.mulf %168, %170 : vector<4x4x1xf32>
    %172 = arith.addf %166, %171 : vector<4x4x1xf32>
    %c1_156 = arith.constant 1 : index
    %c1_157 = arith.constant 1 : index
    %c3_158 = arith.constant 3 : index
    %c0_159 = arith.constant 0 : index
    %173 = vector.load %arg8[%c1_156, %c1_157, %c3_158, %c0_159] : memref<2x10x10x1xf32, #tpu.memory_space<vmem>>, vector<1x4x4x1xf32>
    %174 = vector.shape_cast %173 : vector<1x4x4x1xf32> to vector<4x4x1xf32>
    %c1_160 = arith.constant 1 : index
    %c10_161 = arith.constant 10 : index
    %175 = memref.load %arg4[%c1_160, %c10_161] : memref<2x49xf32, #tpu.memory_space<smem>>
    %176 = vector.broadcast %175 : f32 to vector<4x4x1xf32>
    %177 = arith.mulf %174, %176 : vector<4x4x1xf32>
    %178 = arith.addf %172, %177 : vector<4x4x1xf32>
    %c0_162 = arith.constant 0 : index
    %c1_163 = arith.constant 1 : index
    %c4_164 = arith.constant 4 : index
    %c0_165 = arith.constant 0 : index
    %179 = vector.load %arg8[%c0_162, %c1_163, %c4_164, %c0_165] : memref<2x10x10x1xf32, #tpu.memory_space<vmem>>, vector<1x4x4x1xf32>
    %180 = vector.shape_cast %179 : vector<1x4x4x1xf32> to vector<4x4x1xf32>
    %c0_166 = arith.constant 0 : index
    %c11 = arith.constant 11 : index
    %181 = memref.load %arg4[%c0_166, %c11] : memref<2x49xf32, #tpu.memory_space<smem>>
    %182 = vector.broadcast %181 : f32 to vector<4x4x1xf32>
    %183 = arith.mulf %180, %182 : vector<4x4x1xf32>
    %184 = arith.addf %178, %183 : vector<4x4x1xf32>
    %c1_167 = arith.constant 1 : index
    %c1_168 = arith.constant 1 : index
    %c4_169 = arith.constant 4 : index
    %c0_170 = arith.constant 0 : index
    %185 = vector.load %arg8[%c1_167, %c1_168, %c4_169, %c0_170] : memref<2x10x10x1xf32, #tpu.memory_space<vmem>>, vector<1x4x4x1xf32>
    %186 = vector.shape_cast %185 : vector<1x4x4x1xf32> to vector<4x4x1xf32>
    %c1_171 = arith.constant 1 : index
    %c11_172 = arith.constant 11 : index
    %187 = memref.load %arg4[%c1_171, %c11_172] : memref<2x49xf32, #tpu.memory_space<smem>>
    %188 = vector.broadcast %187 : f32 to vector<4x4x1xf32>
    %189 = arith.mulf %186, %188 : vector<4x4x1xf32>
    %190 = arith.addf %184, %189 : vector<4x4x1xf32>
    %c0_173 = arith.constant 0 : index
    %c1_174 = arith.constant 1 : index
    %c5_175 = arith.constant 5 : index
    %c0_176 = arith.constant 0 : index
    %191 = vector.load %arg8[%c0_173, %c1_174, %c5_175, %c0_176] : memref<2x10x10x1xf32, #tpu.memory_space<vmem>>, vector<1x4x4x1xf32>
    %192 = vector.shape_cast %191 : vector<1x4x4x1xf32> to vector<4x4x1xf32>
    %c0_177 = arith.constant 0 : index
    %c12 = arith.constant 12 : index
    %193 = memref.load %arg4[%c0_177, %c12] : memref<2x49xf32, #tpu.memory_space<smem>>
    %194 = vector.broadcast %193 : f32 to vector<4x4x1xf32>
    %195 = arith.mulf %192, %194 : vector<4x4x1xf32>
    %196 = arith.addf %190, %195 : vector<4x4x1xf32>
    %c1_178 = arith.constant 1 : index
    %c1_179 = arith.constant 1 : index
    %c5_180 = arith.constant 5 : index
    %c0_181 = arith.constant 0 : index
    %197 = vector.load %arg8[%c1_178, %c1_179, %c5_180, %c0_181] : memref<2x10x10x1xf32, #tpu.memory_space<vmem>>, vector<1x4x4x1xf32>
    %198 = vector.shape_cast %197 : vector<1x4x4x1xf32> to vector<4x4x1xf32>
    %c1_182 = arith.constant 1 : index
    %c12_183 = arith.constant 12 : index
    %199 = memref.load %arg4[%c1_182, %c12_183] : memref<2x49xf32, #tpu.memory_space<smem>>
    %200 = vector.broadcast %199 : f32 to vector<4x4x1xf32>
    %201 = arith.mulf %198, %200 : vector<4x4x1xf32>
    %202 = arith.addf %196, %201 : vector<4x4x1xf32>
    %c0_184 = arith.constant 0 : index
    %c1_185 = arith.constant 1 : index
    %c6_186 = arith.constant 6 : index
    %c0_187 = arith.constant 0 : index
    %203 = vector.load %arg8[%c0_184, %c1_185, %c6_186, %c0_187] : memref<2x10x10x1xf32, #tpu.memory_space<vmem>>, vector<1x4x4x1xf32>
    %204 = vector.shape_cast %203 : vector<1x4x4x1xf32> to vector<4x4x1xf32>
    %c0_188 = arith.constant 0 : index
    %c13 = arith.constant 13 : index
    %205 = memref.load %arg4[%c0_188, %c13] : memref<2x49xf32, #tpu.memory_space<smem>>
    %206 = vector.broadcast %205 : f32 to vector<4x4x1xf32>
    %207 = arith.mulf %204, %206 : vector<4x4x1xf32>
    %208 = arith.addf %202, %207 : vector<4x4x1xf32>
    %c1_189 = arith.constant 1 : index
    %c1_190 = arith.constant 1 : index
    %c6_191 = arith.constant 6 : index
    %c0_192 = arith.constant 0 : index
    %209 = vector.load %arg8[%c1_189, %c1_190, %c6_191, %c0_192] : memref<2x10x10x1xf32, #tpu.memory_space<vmem>>, vector<1x4x4x1xf32>
    %210 = vector.shape_cast %209 : vector<1x4x4x1xf32> to vector<4x4x1xf32>
    %c1_193 = arith.constant 1 : index
    %c13_194 = arith.constant 13 : index
    %211 = memref.load %arg4[%c1_193, %c13_194] : memref<2x49xf32, #tpu.memory_space<smem>>
    %212 = vector.broadcast %211 : f32 to vector<4x4x1xf32>
    %213 = arith.mulf %210, %212 : vector<4x4x1xf32>
    %214 = arith.addf %208, %213 : vector<4x4x1xf32>
    %c0_195 = arith.constant 0 : index
    %c2_196 = arith.constant 2 : index
    %c0_197 = arith.constant 0 : index
    %c0_198 = arith.constant 0 : index
    %215 = vector.load %arg8[%c0_195, %c2_196, %c0_197, %c0_198] : memref<2x10x10x1xf32, #tpu.memory_space<vmem>>, vector<1x4x4x1xf32>
    %216 = vector.shape_cast %215 : vector<1x4x4x1xf32> to vector<4x4x1xf32>
    %c0_199 = arith.constant 0 : index
    %c14 = arith.constant 14 : index
    %217 = memref.load %arg4[%c0_199, %c14] : memref<2x49xf32, #tpu.memory_space<smem>>
    %218 = vector.broadcast %217 : f32 to vector<4x4x1xf32>
    %219 = arith.mulf %216, %218 : vector<4x4x1xf32>
    %220 = arith.addf %214, %219 : vector<4x4x1xf32>
    %c1_200 = arith.constant 1 : index
    %c2_201 = arith.constant 2 : index
    %c0_202 = arith.constant 0 : index
    %c0_203 = arith.constant 0 : index
    %221 = vector.load %arg8[%c1_200, %c2_201, %c0_202, %c0_203] : memref<2x10x10x1xf32, #tpu.memory_space<vmem>>, vector<1x4x4x1xf32>
    %222 = vector.shape_cast %221 : vector<1x4x4x1xf32> to vector<4x4x1xf32>
    %c1_204 = arith.constant 1 : index
    %c14_205 = arith.constant 14 : index
    %223 = memref.load %arg4[%c1_204, %c14_205] : memref<2x49xf32, #tpu.memory_space<smem>>
    %224 = vector.broadcast %223 : f32 to vector<4x4x1xf32>
    %225 = arith.mulf %222, %224 : vector<4x4x1xf32>
    %226 = arith.addf %220, %225 : vector<4x4x1xf32>
    %c0_206 = arith.constant 0 : index
    %c2_207 = arith.constant 2 : index
    %c1_208 = arith.constant 1 : index
    %c0_209 = arith.constant 0 : index
    %227 = vector.load %arg8[%c0_206, %c2_207, %c1_208, %c0_209] : memref<2x10x10x1xf32, #tpu.memory_space<vmem>>, vector<1x4x4x1xf32>
    %228 = vector.shape_cast %227 : vector<1x4x4x1xf32> to vector<4x4x1xf32>
    %c0_210 = arith.constant 0 : index
    %c15 = arith.constant 15 : index
    %229 = memref.load %arg4[%c0_210, %c15] : memref<2x49xf32, #tpu.memory_space<smem>>
    %230 = vector.broadcast %229 : f32 to vector<4x4x1xf32>
    %231 = arith.mulf %228, %230 : vector<4x4x1xf32>
    %232 = arith.addf %226, %231 : vector<4x4x1xf32>
    %c1_211 = arith.constant 1 : index
    %c2_212 = arith.constant 2 : index
    %c1_213 = arith.constant 1 : index
    %c0_214 = arith.constant 0 : index
    %233 = vector.load %arg8[%c1_211, %c2_212, %c1_213, %c0_214] : memref<2x10x10x1xf32, #tpu.memory_space<vmem>>, vector<1x4x4x1xf32>
    %234 = vector.shape_cast %233 : vector<1x4x4x1xf32> to vector<4x4x1xf32>
    %c1_215 = arith.constant 1 : index
    %c15_216 = arith.constant 15 : index
    %235 = memref.load %arg4[%c1_215, %c15_216] : memref<2x49xf32, #tpu.memory_space<smem>>
    %236 = vector.broadcast %235 : f32 to vector<4x4x1xf32>
    %237 = arith.mulf %234, %236 : vector<4x4x1xf32>
    %238 = arith.addf %232, %237 : vector<4x4x1xf32>
    %c0_217 = arith.constant 0 : index
    %c2_218 = arith.constant 2 : index
    %c2_219 = arith.constant 2 : index
    %c0_220 = arith.constant 0 : index
    %239 = vector.load %arg8[%c0_217, %c2_218, %c2_219, %c0_220] : memref<2x10x10x1xf32, #tpu.memory_space<vmem>>, vector<1x4x4x1xf32>
    %240 = vector.shape_cast %239 : vector<1x4x4x1xf32> to vector<4x4x1xf32>
    %c0_221 = arith.constant 0 : index
    %c16 = arith.constant 16 : index
    %241 = memref.load %arg4[%c0_221, %c16] : memref<2x49xf32, #tpu.memory_space<smem>>
    %242 = vector.broadcast %241 : f32 to vector<4x4x1xf32>
    %243 = arith.mulf %240, %242 : vector<4x4x1xf32>
    %244 = arith.addf %238, %243 : vector<4x4x1xf32>
    %c1_222 = arith.constant 1 : index
    %c2_223 = arith.constant 2 : index
    %c2_224 = arith.constant 2 : index
    %c0_225 = arith.constant 0 : index
    %245 = vector.load %arg8[%c1_222, %c2_223, %c2_224, %c0_225] : memref<2x10x10x1xf32, #tpu.memory_space<vmem>>, vector<1x4x4x1xf32>
    %246 = vector.shape_cast %245 : vector<1x4x4x1xf32> to vector<4x4x1xf32>
    %c1_226 = arith.constant 1 : index
    %c16_227 = arith.constant 16 : index
    %247 = memref.load %arg4[%c1_226, %c16_227] : memref<2x49xf32, #tpu.memory_space<smem>>
    %248 = vector.broadcast %247 : f32 to vector<4x4x1xf32>
    %249 = arith.mulf %246, %248 : vector<4x4x1xf32>
    %250 = arith.addf %244, %249 : vector<4x4x1xf32>
    %c0_228 = arith.constant 0 : index
    %c2_229 = arith.constant 2 : index
    %c3_230 = arith.constant 3 : index
    %c0_231 = arith.constant 0 : index
    %251 = vector.load %arg8[%c0_228, %c2_229, %c3_230, %c0_231] : memref<2x10x10x1xf32, #tpu.memory_space<vmem>>, vector<1x4x4x1xf32>
    %252 = vector.shape_cast %251 : vector<1x4x4x1xf32> to vector<4x4x1xf32>
    %c0_232 = arith.constant 0 : index
    %c17 = arith.constant 17 : index
    %253 = memref.load %arg4[%c0_232, %c17] : memref<2x49xf32, #tpu.memory_space<smem>>
    %254 = vector.broadcast %253 : f32 to vector<4x4x1xf32>
    %255 = arith.mulf %252, %254 : vector<4x4x1xf32>
    %256 = arith.addf %250, %255 : vector<4x4x1xf32>
    %c1_233 = arith.constant 1 : index
    %c2_234 = arith.constant 2 : index
    %c3_235 = arith.constant 3 : index
    %c0_236 = arith.constant 0 : index
    %257 = vector.load %arg8[%c1_233, %c2_234, %c3_235, %c0_236] : memref<2x10x10x1xf32, #tpu.memory_space<vmem>>, vector<1x4x4x1xf32>
    %258 = vector.shape_cast %257 : vector<1x4x4x1xf32> to vector<4x4x1xf32>
    %c1_237 = arith.constant 1 : index
    %c17_238 = arith.constant 17 : index
    %259 = memref.load %arg4[%c1_237, %c17_238] : memref<2x49xf32, #tpu.memory_space<smem>>
    %260 = vector.broadcast %259 : f32 to vector<4x4x1xf32>
    %261 = arith.mulf %258, %260 : vector<4x4x1xf32>
    %262 = arith.addf %256, %261 : vector<4x4x1xf32>
    %c0_239 = arith.constant 0 : index
    %c2_240 = arith.constant 2 : index
    %c4_241 = arith.constant 4 : index
    %c0_242 = arith.constant 0 : index
    %263 = vector.load %arg8[%c0_239, %c2_240, %c4_241, %c0_242] : memref<2x10x10x1xf32, #tpu.memory_space<vmem>>, vector<1x4x4x1xf32>
    %264 = vector.shape_cast %263 : vector<1x4x4x1xf32> to vector<4x4x1xf32>
    %c0_243 = arith.constant 0 : index
    %c18 = arith.constant 18 : index
    %265 = memref.load %arg4[%c0_243, %c18] : memref<2x49xf32, #tpu.memory_space<smem>>
    %266 = vector.broadcast %265 : f32 to vector<4x4x1xf32>
    %267 = arith.mulf %264, %266 : vector<4x4x1xf32>
    %268 = arith.addf %262, %267 : vector<4x4x1xf32>
    %c1_244 = arith.constant 1 : index
    %c2_245 = arith.constant 2 : index
    %c4_246 = arith.constant 4 : index
    %c0_247 = arith.constant 0 : index
    %269 = vector.load %arg8[%c1_244, %c2_245, %c4_246, %c0_247] : memref<2x10x10x1xf32, #tpu.memory_space<vmem>>, vector<1x4x4x1xf32>
    %270 = vector.shape_cast %269 : vector<1x4x4x1xf32> to vector<4x4x1xf32>
    %c1_248 = arith.constant 1 : index
    %c18_249 = arith.constant 18 : index
    %271 = memref.load %arg4[%c1_248, %c18_249] : memref<2x49xf32, #tpu.memory_space<smem>>
    %272 = vector.broadcast %271 : f32 to vector<4x4x1xf32>
    %273 = arith.mulf %270, %272 : vector<4x4x1xf32>
    %274 = arith.addf %268, %273 : vector<4x4x1xf32>
    %c0_250 = arith.constant 0 : index
    %c2_251 = arith.constant 2 : index
    %c5_252 = arith.constant 5 : index
    %c0_253 = arith.constant 0 : index
    %275 = vector.load %arg8[%c0_250, %c2_251, %c5_252, %c0_253] : memref<2x10x10x1xf32, #tpu.memory_space<vmem>>, vector<1x4x4x1xf32>
    %276 = vector.shape_cast %275 : vector<1x4x4x1xf32> to vector<4x4x1xf32>
    %c0_254 = arith.constant 0 : index
    %c19 = arith.constant 19 : index
    %277 = memref.load %arg4[%c0_254, %c19] : memref<2x49xf32, #tpu.memory_space<smem>>
    %278 = vector.broadcast %277 : f32 to vector<4x4x1xf32>
    %279 = arith.mulf %276, %278 : vector<4x4x1xf32>
    %280 = arith.addf %274, %279 : vector<4x4x1xf32>
    %c1_255 = arith.constant 1 : index
    %c2_256 = arith.constant 2 : index
    %c5_257 = arith.constant 5 : index
    %c0_258 = arith.constant 0 : index
    %281 = vector.load %arg8[%c1_255, %c2_256, %c5_257, %c0_258] : memref<2x10x10x1xf32, #tpu.memory_space<vmem>>, vector<1x4x4x1xf32>
    %282 = vector.shape_cast %281 : vector<1x4x4x1xf32> to vector<4x4x1xf32>
    %c1_259 = arith.constant 1 : index
    %c19_260 = arith.constant 19 : index
    %283 = memref.load %arg4[%c1_259, %c19_260] : memref<2x49xf32, #tpu.memory_space<smem>>
    %284 = vector.broadcast %283 : f32 to vector<4x4x1xf32>
    %285 = arith.mulf %282, %284 : vector<4x4x1xf32>
    %286 = arith.addf %280, %285 : vector<4x4x1xf32>
    %c0_261 = arith.constant 0 : index
    %c2_262 = arith.constant 2 : index
    %c6_263 = arith.constant 6 : index
    %c0_264 = arith.constant 0 : index
    %287 = vector.load %arg8[%c0_261, %c2_262, %c6_263, %c0_264] : memref<2x10x10x1xf32, #tpu.memory_space<vmem>>, vector<1x4x4x1xf32>
    %288 = vector.shape_cast %287 : vector<1x4x4x1xf32> to vector<4x4x1xf32>
    %c0_265 = arith.constant 0 : index
    %c20 = arith.constant 20 : index
    %289 = memref.load %arg4[%c0_265, %c20] : memref<2x49xf32, #tpu.memory_space<smem>>
    %290 = vector.broadcast %289 : f32 to vector<4x4x1xf32>
    %291 = arith.mulf %288, %290 : vector<4x4x1xf32>
    %292 = arith.addf %286, %291 : vector<4x4x1xf32>
    %c1_266 = arith.constant 1 : index
    %c2_267 = arith.constant 2 : index
    %c6_268 = arith.constant 6 : index
    %c0_269 = arith.constant 0 : index
    %293 = vector.load %arg8[%c1_266, %c2_267, %c6_268, %c0_269] : memref<2x10x10x1xf32, #tpu.memory_space<vmem>>, vector<1x4x4x1xf32>
    %294 = vector.shape_cast %293 : vector<1x4x4x1xf32> to vector<4x4x1xf32>
    %c1_270 = arith.constant 1 : index
    %c20_271 = arith.constant 20 : index
    %295 = memref.load %arg4[%c1_270, %c20_271] : memref<2x49xf32, #tpu.memory_space<smem>>
    %296 = vector.broadcast %295 : f32 to vector<4x4x1xf32>
    %297 = arith.mulf %294, %296 : vector<4x4x1xf32>
    %298 = arith.addf %292, %297 : vector<4x4x1xf32>
    %c0_272 = arith.constant 0 : index
    %c3_273 = arith.constant 3 : index
    %c0_274 = arith.constant 0 : index
    %c0_275 = arith.constant 0 : index
    %299 = vector.load %arg8[%c0_272, %c3_273, %c0_274, %c0_275] : memref<2x10x10x1xf32, #tpu.memory_space<vmem>>, vector<1x4x4x1xf32>
    %300 = vector.shape_cast %299 : vector<1x4x4x1xf32> to vector<4x4x1xf32>
    %c0_276 = arith.constant 0 : index
    %c21 = arith.constant 21 : index
    %301 = memref.load %arg4[%c0_276, %c21] : memref<2x49xf32, #tpu.memory_space<smem>>
    %302 = vector.broadcast %301 : f32 to vector<4x4x1xf32>
    %303 = arith.mulf %300, %302 : vector<4x4x1xf32>
    %304 = arith.addf %298, %303 : vector<4x4x1xf32>
    %c1_277 = arith.constant 1 : index
    %c3_278 = arith.constant 3 : index
    %c0_279 = arith.constant 0 : index
    %c0_280 = arith.constant 0 : index
    %305 = vector.load %arg8[%c1_277, %c3_278, %c0_279, %c0_280] : memref<2x10x10x1xf32, #tpu.memory_space<vmem>>, vector<1x4x4x1xf32>
    %306 = vector.shape_cast %305 : vector<1x4x4x1xf32> to vector<4x4x1xf32>
    %c1_281 = arith.constant 1 : index
    %c21_282 = arith.constant 21 : index
    %307 = memref.load %arg4[%c1_281, %c21_282] : memref<2x49xf32, #tpu.memory_space<smem>>
    %308 = vector.broadcast %307 : f32 to vector<4x4x1xf32>
    %309 = arith.mulf %306, %308 : vector<4x4x1xf32>
    %310 = arith.addf %304, %309 : vector<4x4x1xf32>
    %c0_283 = arith.constant 0 : index
    %c3_284 = arith.constant 3 : index
    %c1_285 = arith.constant 1 : index
    %c0_286 = arith.constant 0 : index
    %311 = vector.load %arg8[%c0_283, %c3_284, %c1_285, %c0_286] : memref<2x10x10x1xf32, #tpu.memory_space<vmem>>, vector<1x4x4x1xf32>
    %312 = vector.shape_cast %311 : vector<1x4x4x1xf32> to vector<4x4x1xf32>
    %c0_287 = arith.constant 0 : index
    %c22 = arith.constant 22 : index
    %313 = memref.load %arg4[%c0_287, %c22] : memref<2x49xf32, #tpu.memory_space<smem>>
    %314 = vector.broadcast %313 : f32 to vector<4x4x1xf32>
    %315 = arith.mulf %312, %314 : vector<4x4x1xf32>
    %316 = arith.addf %310, %315 : vector<4x4x1xf32>
    %c1_288 = arith.constant 1 : index
    %c3_289 = arith.constant 3 : index
    %c1_290 = arith.constant 1 : index
    %c0_291 = arith.constant 0 : index
    %317 = vector.load %arg8[%c1_288, %c3_289, %c1_290, %c0_291] : memref<2x10x10x1xf32, #tpu.memory_space<vmem>>, vector<1x4x4x1xf32>
    %318 = vector.shape_cast %317 : vector<1x4x4x1xf32> to vector<4x4x1xf32>
    %c1_292 = arith.constant 1 : index
    %c22_293 = arith.constant 22 : index
    %319 = memref.load %arg4[%c1_292, %c22_293] : memref<2x49xf32, #tpu.memory_space<smem>>
    %320 = vector.broadcast %319 : f32 to vector<4x4x1xf32>
    %321 = arith.mulf %318, %320 : vector<4x4x1xf32>
    %322 = arith.addf %316, %321 : vector<4x4x1xf32>
    %c0_294 = arith.constant 0 : index
    %c3_295 = arith.constant 3 : index
    %c2_296 = arith.constant 2 : index
    %c0_297 = arith.constant 0 : index
    %323 = vector.load %arg8[%c0_294, %c3_295, %c2_296, %c0_297] : memref<2x10x10x1xf32, #tpu.memory_space<vmem>>, vector<1x4x4x1xf32>
    %324 = vector.shape_cast %323 : vector<1x4x4x1xf32> to vector<4x4x1xf32>
    %c0_298 = arith.constant 0 : index
    %c23 = arith.constant 23 : index
    %325 = memref.load %arg4[%c0_298, %c23] : memref<2x49xf32, #tpu.memory_space<smem>>
    %326 = vector.broadcast %325 : f32 to vector<4x4x1xf32>
    %327 = arith.mulf %324, %326 : vector<4x4x1xf32>
    %328 = arith.addf %322, %327 : vector<4x4x1xf32>
    %c1_299 = arith.constant 1 : index
    %c3_300 = arith.constant 3 : index
    %c2_301 = arith.constant 2 : index
    %c0_302 = arith.constant 0 : index
    %329 = vector.load %arg8[%c1_299, %c3_300, %c2_301, %c0_302] : memref<2x10x10x1xf32, #tpu.memory_space<vmem>>, vector<1x4x4x1xf32>
    %330 = vector.shape_cast %329 : vector<1x4x4x1xf32> to vector<4x4x1xf32>
    %c1_303 = arith.constant 1 : index
    %c23_304 = arith.constant 23 : index
    %331 = memref.load %arg4[%c1_303, %c23_304] : memref<2x49xf32, #tpu.memory_space<smem>>
    %332 = vector.broadcast %331 : f32 to vector<4x4x1xf32>
    %333 = arith.mulf %330, %332 : vector<4x4x1xf32>
    %334 = arith.addf %328, %333 : vector<4x4x1xf32>
    %c0_305 = arith.constant 0 : index
    %c3_306 = arith.constant 3 : index
    %c3_307 = arith.constant 3 : index
    %c0_308 = arith.constant 0 : index
    %335 = vector.load %arg8[%c0_305, %c3_306, %c3_307, %c0_308] : memref<2x10x10x1xf32, #tpu.memory_space<vmem>>, vector<1x4x4x1xf32>
    %336 = vector.shape_cast %335 : vector<1x4x4x1xf32> to vector<4x4x1xf32>
    %c0_309 = arith.constant 0 : index
    %c24 = arith.constant 24 : index
    %337 = memref.load %arg4[%c0_309, %c24] : memref<2x49xf32, #tpu.memory_space<smem>>
    %338 = vector.broadcast %337 : f32 to vector<4x4x1xf32>
    %339 = arith.mulf %336, %338 : vector<4x4x1xf32>
    %340 = arith.addf %334, %339 : vector<4x4x1xf32>
    %c1_310 = arith.constant 1 : index
    %c3_311 = arith.constant 3 : index
    %c3_312 = arith.constant 3 : index
    %c0_313 = arith.constant 0 : index
    %341 = vector.load %arg8[%c1_310, %c3_311, %c3_312, %c0_313] : memref<2x10x10x1xf32, #tpu.memory_space<vmem>>, vector<1x4x4x1xf32>
    %342 = vector.shape_cast %341 : vector<1x4x4x1xf32> to vector<4x4x1xf32>
    %c1_314 = arith.constant 1 : index
    %c24_315 = arith.constant 24 : index
    %343 = memref.load %arg4[%c1_314, %c24_315] : memref<2x49xf32, #tpu.memory_space<smem>>
    %344 = vector.broadcast %343 : f32 to vector<4x4x1xf32>
    %345 = arith.mulf %342, %344 : vector<4x4x1xf32>
    %346 = arith.addf %340, %345 : vector<4x4x1xf32>
    %c0_316 = arith.constant 0 : index
    %c3_317 = arith.constant 3 : index
    %c4_318 = arith.constant 4 : index
    %c0_319 = arith.constant 0 : index
    %347 = vector.load %arg8[%c0_316, %c3_317, %c4_318, %c0_319] : memref<2x10x10x1xf32, #tpu.memory_space<vmem>>, vector<1x4x4x1xf32>
    %348 = vector.shape_cast %347 : vector<1x4x4x1xf32> to vector<4x4x1xf32>
    %c0_320 = arith.constant 0 : index
    %c25 = arith.constant 25 : index
    %349 = memref.load %arg4[%c0_320, %c25] : memref<2x49xf32, #tpu.memory_space<smem>>
    %350 = vector.broadcast %349 : f32 to vector<4x4x1xf32>
    %351 = arith.mulf %348, %350 : vector<4x4x1xf32>
    %352 = arith.addf %346, %351 : vector<4x4x1xf32>
    %c1_321 = arith.constant 1 : index
    %c3_322 = arith.constant 3 : index
    %c4_323 = arith.constant 4 : index
    %c0_324 = arith.constant 0 : index
    %353 = vector.load %arg8[%c1_321, %c3_322, %c4_323, %c0_324] : memref<2x10x10x1xf32, #tpu.memory_space<vmem>>, vector<1x4x4x1xf32>
    %354 = vector.shape_cast %353 : vector<1x4x4x1xf32> to vector<4x4x1xf32>
    %c1_325 = arith.constant 1 : index
    %c25_326 = arith.constant 25 : index
    %355 = memref.load %arg4[%c1_325, %c25_326] : memref<2x49xf32, #tpu.memory_space<smem>>
    %356 = vector.broadcast %355 : f32 to vector<4x4x1xf32>
    %357 = arith.mulf %354, %356 : vector<4x4x1xf32>
    %358 = arith.addf %352, %357 : vector<4x4x1xf32>
    %c0_327 = arith.constant 0 : index
    %c3_328 = arith.constant 3 : index
    %c5_329 = arith.constant 5 : index
    %c0_330 = arith.constant 0 : index
    %359 = vector.load %arg8[%c0_327, %c3_328, %c5_329, %c0_330] : memref<2x10x10x1xf32, #tpu.memory_space<vmem>>, vector<1x4x4x1xf32>
    %360 = vector.shape_cast %359 : vector<1x4x4x1xf32> to vector<4x4x1xf32>
    %c0_331 = arith.constant 0 : index
    %c26 = arith.constant 26 : index
    %361 = memref.load %arg4[%c0_331, %c26] : memref<2x49xf32, #tpu.memory_space<smem>>
    %362 = vector.broadcast %361 : f32 to vector<4x4x1xf32>
    %363 = arith.mulf %360, %362 : vector<4x4x1xf32>
    %364 = arith.addf %358, %363 : vector<4x4x1xf32>
    %c1_332 = arith.constant 1 : index
    %c3_333 = arith.constant 3 : index
    %c5_334 = arith.constant 5 : index
    %c0_335 = arith.constant 0 : index
    %365 = vector.load %arg8[%c1_332, %c3_333, %c5_334, %c0_335] : memref<2x10x10x1xf32, #tpu.memory_space<vmem>>, vector<1x4x4x1xf32>
    %366 = vector.shape_cast %365 : vector<1x4x4x1xf32> to vector<4x4x1xf32>
    %c1_336 = arith.constant 1 : index
    %c26_337 = arith.constant 26 : index
    %367 = memref.load %arg4[%c1_336, %c26_337] : memref<2x49xf32, #tpu.memory_space<smem>>
    %368 = vector.broadcast %367 : f32 to vector<4x4x1xf32>
    %369 = arith.mulf %366, %368 : vector<4x4x1xf32>
    %370 = arith.addf %364, %369 : vector<4x4x1xf32>
    %c0_338 = arith.constant 0 : index
    %c3_339 = arith.constant 3 : index
    %c6_340 = arith.constant 6 : index
    %c0_341 = arith.constant 0 : index
    %371 = vector.load %arg8[%c0_338, %c3_339, %c6_340, %c0_341] : memref<2x10x10x1xf32, #tpu.memory_space<vmem>>, vector<1x4x4x1xf32>
    %372 = vector.shape_cast %371 : vector<1x4x4x1xf32> to vector<4x4x1xf32>
    %c0_342 = arith.constant 0 : index
    %c27 = arith.constant 27 : index
    %373 = memref.load %arg4[%c0_342, %c27] : memref<2x49xf32, #tpu.memory_space<smem>>
    %374 = vector.broadcast %373 : f32 to vector<4x4x1xf32>
    %375 = arith.mulf %372, %374 : vector<4x4x1xf32>
    %376 = arith.addf %370, %375 : vector<4x4x1xf32>
    %c1_343 = arith.constant 1 : index
    %c3_344 = arith.constant 3 : index
    %c6_345 = arith.constant 6 : index
    %c0_346 = arith.constant 0 : index
    %377 = vector.load %arg8[%c1_343, %c3_344, %c6_345, %c0_346] : memref<2x10x10x1xf32, #tpu.memory_space<vmem>>, vector<1x4x4x1xf32>
    %378 = vector.shape_cast %377 : vector<1x4x4x1xf32> to vector<4x4x1xf32>
    %c1_347 = arith.constant 1 : index
    %c27_348 = arith.constant 27 : index
    %379 = memref.load %arg4[%c1_347, %c27_348] : memref<2x49xf32, #tpu.memory_space<smem>>
    %380 = vector.broadcast %379 : f32 to vector<4x4x1xf32>
    %381 = arith.mulf %378, %380 : vector<4x4x1xf32>
    %382 = arith.addf %376, %381 : vector<4x4x1xf32>
    %c0_349 = arith.constant 0 : index
    %c4_350 = arith.constant 4 : index
    %c0_351 = arith.constant 0 : index
    %c0_352 = arith.constant 0 : index
    %383 = vector.load %arg8[%c0_349, %c4_350, %c0_351, %c0_352] : memref<2x10x10x1xf32, #tpu.memory_space<vmem>>, vector<1x4x4x1xf32>
    %384 = vector.shape_cast %383 : vector<1x4x4x1xf32> to vector<4x4x1xf32>
    %c0_353 = arith.constant 0 : index
    %c28 = arith.constant 28 : index
    %385 = memref.load %arg4[%c0_353, %c28] : memref<2x49xf32, #tpu.memory_space<smem>>
    %386 = vector.broadcast %385 : f32 to vector<4x4x1xf32>
    %387 = arith.mulf %384, %386 : vector<4x4x1xf32>
    %388 = arith.addf %382, %387 : vector<4x4x1xf32>
    %c1_354 = arith.constant 1 : index
    %c4_355 = arith.constant 4 : index
    %c0_356 = arith.constant 0 : index
    %c0_357 = arith.constant 0 : index
    %389 = vector.load %arg8[%c1_354, %c4_355, %c0_356, %c0_357] : memref<2x10x10x1xf32, #tpu.memory_space<vmem>>, vector<1x4x4x1xf32>
    %390 = vector.shape_cast %389 : vector<1x4x4x1xf32> to vector<4x4x1xf32>
    %c1_358 = arith.constant 1 : index
    %c28_359 = arith.constant 28 : index
    %391 = memref.load %arg4[%c1_358, %c28_359] : memref<2x49xf32, #tpu.memory_space<smem>>
    %392 = vector.broadcast %391 : f32 to vector<4x4x1xf32>
    %393 = arith.mulf %390, %392 : vector<4x4x1xf32>
    %394 = arith.addf %388, %393 : vector<4x4x1xf32>
    %c0_360 = arith.constant 0 : index
    %c4_361 = arith.constant 4 : index
    %c1_362 = arith.constant 1 : index
    %c0_363 = arith.constant 0 : index
    %395 = vector.load %arg8[%c0_360, %c4_361, %c1_362, %c0_363] : memref<2x10x10x1xf32, #tpu.memory_space<vmem>>, vector<1x4x4x1xf32>
    %396 = vector.shape_cast %395 : vector<1x4x4x1xf32> to vector<4x4x1xf32>
    %c0_364 = arith.constant 0 : index
    %c29 = arith.constant 29 : index
    %397 = memref.load %arg4[%c0_364, %c29] : memref<2x49xf32, #tpu.memory_space<smem>>
    %398 = vector.broadcast %397 : f32 to vector<4x4x1xf32>
    %399 = arith.mulf %396, %398 : vector<4x4x1xf32>
    %400 = arith.addf %394, %399 : vector<4x4x1xf32>
    %c1_365 = arith.constant 1 : index
    %c4_366 = arith.constant 4 : index
    %c1_367 = arith.constant 1 : index
    %c0_368 = arith.constant 0 : index
    %401 = vector.load %arg8[%c1_365, %c4_366, %c1_367, %c0_368] : memref<2x10x10x1xf32, #tpu.memory_space<vmem>>, vector<1x4x4x1xf32>
    %402 = vector.shape_cast %401 : vector<1x4x4x1xf32> to vector<4x4x1xf32>
    %c1_369 = arith.constant 1 : index
    %c29_370 = arith.constant 29 : index
    %403 = memref.load %arg4[%c1_369, %c29_370] : memref<2x49xf32, #tpu.memory_space<smem>>
    %404 = vector.broadcast %403 : f32 to vector<4x4x1xf32>
    %405 = arith.mulf %402, %404 : vector<4x4x1xf32>
    %406 = arith.addf %400, %405 : vector<4x4x1xf32>
    %c0_371 = arith.constant 0 : index
    %c4_372 = arith.constant 4 : index
    %c2_373 = arith.constant 2 : index
    %c0_374 = arith.constant 0 : index
    %407 = vector.load %arg8[%c0_371, %c4_372, %c2_373, %c0_374] : memref<2x10x10x1xf32, #tpu.memory_space<vmem>>, vector<1x4x4x1xf32>
    %408 = vector.shape_cast %407 : vector<1x4x4x1xf32> to vector<4x4x1xf32>
    %c0_375 = arith.constant 0 : index
    %c30 = arith.constant 30 : index
    %409 = memref.load %arg4[%c0_375, %c30] : memref<2x49xf32, #tpu.memory_space<smem>>
    %410 = vector.broadcast %409 : f32 to vector<4x4x1xf32>
    %411 = arith.mulf %408, %410 : vector<4x4x1xf32>
    %412 = arith.addf %406, %411 : vector<4x4x1xf32>
    %c1_376 = arith.constant 1 : index
    %c4_377 = arith.constant 4 : index
    %c2_378 = arith.constant 2 : index
    %c0_379 = arith.constant 0 : index
    %413 = vector.load %arg8[%c1_376, %c4_377, %c2_378, %c0_379] : memref<2x10x10x1xf32, #tpu.memory_space<vmem>>, vector<1x4x4x1xf32>
    %414 = vector.shape_cast %413 : vector<1x4x4x1xf32> to vector<4x4x1xf32>
    %c1_380 = arith.constant 1 : index
    %c30_381 = arith.constant 30 : index
    %415 = memref.load %arg4[%c1_380, %c30_381] : memref<2x49xf32, #tpu.memory_space<smem>>
    %416 = vector.broadcast %415 : f32 to vector<4x4x1xf32>
    %417 = arith.mulf %414, %416 : vector<4x4x1xf32>
    %418 = arith.addf %412, %417 : vector<4x4x1xf32>
    %c0_382 = arith.constant 0 : index
    %c4_383 = arith.constant 4 : index
    %c3_384 = arith.constant 3 : index
    %c0_385 = arith.constant 0 : index
    %419 = vector.load %arg8[%c0_382, %c4_383, %c3_384, %c0_385] : memref<2x10x10x1xf32, #tpu.memory_space<vmem>>, vector<1x4x4x1xf32>
    %420 = vector.shape_cast %419 : vector<1x4x4x1xf32> to vector<4x4x1xf32>
    %c0_386 = arith.constant 0 : index
    %c31 = arith.constant 31 : index
    %421 = memref.load %arg4[%c0_386, %c31] : memref<2x49xf32, #tpu.memory_space<smem>>
    %422 = vector.broadcast %421 : f32 to vector<4x4x1xf32>
    %423 = arith.mulf %420, %422 : vector<4x4x1xf32>
    %424 = arith.addf %418, %423 : vector<4x4x1xf32>
    %c1_387 = arith.constant 1 : index
    %c4_388 = arith.constant 4 : index
    %c3_389 = arith.constant 3 : index
    %c0_390 = arith.constant 0 : index
    %425 = vector.load %arg8[%c1_387, %c4_388, %c3_389, %c0_390] : memref<2x10x10x1xf32, #tpu.memory_space<vmem>>, vector<1x4x4x1xf32>
    %426 = vector.shape_cast %425 : vector<1x4x4x1xf32> to vector<4x4x1xf32>
    %c1_391 = arith.constant 1 : index
    %c31_392 = arith.constant 31 : index
    %427 = memref.load %arg4[%c1_391, %c31_392] : memref<2x49xf32, #tpu.memory_space<smem>>
    %428 = vector.broadcast %427 : f32 to vector<4x4x1xf32>
    %429 = arith.mulf %426, %428 : vector<4x4x1xf32>
    %430 = arith.addf %424, %429 : vector<4x4x1xf32>
    %c0_393 = arith.constant 0 : index
    %c4_394 = arith.constant 4 : index
    %c4_395 = arith.constant 4 : index
    %c0_396 = arith.constant 0 : index
    %431 = vector.load %arg8[%c0_393, %c4_394, %c4_395, %c0_396] : memref<2x10x10x1xf32, #tpu.memory_space<vmem>>, vector<1x4x4x1xf32>
    %432 = vector.shape_cast %431 : vector<1x4x4x1xf32> to vector<4x4x1xf32>
    %c0_397 = arith.constant 0 : index
    %c32 = arith.constant 32 : index
    %433 = memref.load %arg4[%c0_397, %c32] : memref<2x49xf32, #tpu.memory_space<smem>>
    %434 = vector.broadcast %433 : f32 to vector<4x4x1xf32>
    %435 = arith.mulf %432, %434 : vector<4x4x1xf32>
    %436 = arith.addf %430, %435 : vector<4x4x1xf32>
    %c1_398 = arith.constant 1 : index
    %c4_399 = arith.constant 4 : index
    %c4_400 = arith.constant 4 : index
    %c0_401 = arith.constant 0 : index
    %437 = vector.load %arg8[%c1_398, %c4_399, %c4_400, %c0_401] : memref<2x10x10x1xf32, #tpu.memory_space<vmem>>, vector<1x4x4x1xf32>
    %438 = vector.shape_cast %437 : vector<1x4x4x1xf32> to vector<4x4x1xf32>
    %c1_402 = arith.constant 1 : index
    %c32_403 = arith.constant 32 : index
    %439 = memref.load %arg4[%c1_402, %c32_403] : memref<2x49xf32, #tpu.memory_space<smem>>
    %440 = vector.broadcast %439 : f32 to vector<4x4x1xf32>
    %441 = arith.mulf %438, %440 : vector<4x4x1xf32>
    %442 = arith.addf %436, %441 : vector<4x4x1xf32>
    %c0_404 = arith.constant 0 : index
    %c4_405 = arith.constant 4 : index
    %c5_406 = arith.constant 5 : index
    %c0_407 = arith.constant 0 : index
    %443 = vector.load %arg8[%c0_404, %c4_405, %c5_406, %c0_407] : memref<2x10x10x1xf32, #tpu.memory_space<vmem>>, vector<1x4x4x1xf32>
    %444 = vector.shape_cast %443 : vector<1x4x4x1xf32> to vector<4x4x1xf32>
    %c0_408 = arith.constant 0 : index
    %c33 = arith.constant 33 : index
    %445 = memref.load %arg4[%c0_408, %c33] : memref<2x49xf32, #tpu.memory_space<smem>>
    %446 = vector.broadcast %445 : f32 to vector<4x4x1xf32>
    %447 = arith.mulf %444, %446 : vector<4x4x1xf32>
    %448 = arith.addf %442, %447 : vector<4x4x1xf32>
    %c1_409 = arith.constant 1 : index
    %c4_410 = arith.constant 4 : index
    %c5_411 = arith.constant 5 : index
    %c0_412 = arith.constant 0 : index
    %449 = vector.load %arg8[%c1_409, %c4_410, %c5_411, %c0_412] : memref<2x10x10x1xf32, #tpu.memory_space<vmem>>, vector<1x4x4x1xf32>
    %450 = vector.shape_cast %449 : vector<1x4x4x1xf32> to vector<4x4x1xf32>
    %c1_413 = arith.constant 1 : index
    %c33_414 = arith.constant 33 : index
    %451 = memref.load %arg4[%c1_413, %c33_414] : memref<2x49xf32, #tpu.memory_space<smem>>
    %452 = vector.broadcast %451 : f32 to vector<4x4x1xf32>
    %453 = arith.mulf %450, %452 : vector<4x4x1xf32>
    %454 = arith.addf %448, %453 : vector<4x4x1xf32>
    %c0_415 = arith.constant 0 : index
    %c4_416 = arith.constant 4 : index
    %c6_417 = arith.constant 6 : index
    %c0_418 = arith.constant 0 : index
    %455 = vector.load %arg8[%c0_415, %c4_416, %c6_417, %c0_418] : memref<2x10x10x1xf32, #tpu.memory_space<vmem>>, vector<1x4x4x1xf32>
    %456 = vector.shape_cast %455 : vector<1x4x4x1xf32> to vector<4x4x1xf32>
    %c0_419 = arith.constant 0 : index
    %c34 = arith.constant 34 : index
    %457 = memref.load %arg4[%c0_419, %c34] : memref<2x49xf32, #tpu.memory_space<smem>>
    %458 = vector.broadcast %457 : f32 to vector<4x4x1xf32>
    %459 = arith.mulf %456, %458 : vector<4x4x1xf32>
    %460 = arith.addf %454, %459 : vector<4x4x1xf32>
    %c1_420 = arith.constant 1 : index
    %c4_421 = arith.constant 4 : index
    %c6_422 = arith.constant 6 : index
    %c0_423 = arith.constant 0 : index
    %461 = vector.load %arg8[%c1_420, %c4_421, %c6_422, %c0_423] : memref<2x10x10x1xf32, #tpu.memory_space<vmem>>, vector<1x4x4x1xf32>
    %462 = vector.shape_cast %461 : vector<1x4x4x1xf32> to vector<4x4x1xf32>
    %c1_424 = arith.constant 1 : index
    %c34_425 = arith.constant 34 : index
    %463 = memref.load %arg4[%c1_424, %c34_425] : memref<2x49xf32, #tpu.memory_space<smem>>
    %464 = vector.broadcast %463 : f32 to vector<4x4x1xf32>
    %465 = arith.mulf %462, %464 : vector<4x4x1xf32>
    %466 = arith.addf %460, %465 : vector<4x4x1xf32>
    %c0_426 = arith.constant 0 : index
    %c5_427 = arith.constant 5 : index
    %c0_428 = arith.constant 0 : index
    %c0_429 = arith.constant 0 : index
    %467 = vector.load %arg8[%c0_426, %c5_427, %c0_428, %c0_429] : memref<2x10x10x1xf32, #tpu.memory_space<vmem>>, vector<1x4x4x1xf32>
    %468 = vector.shape_cast %467 : vector<1x4x4x1xf32> to vector<4x4x1xf32>
    %c0_430 = arith.constant 0 : index
    %c35 = arith.constant 35 : index
    %469 = memref.load %arg4[%c0_430, %c35] : memref<2x49xf32, #tpu.memory_space<smem>>
    %470 = vector.broadcast %469 : f32 to vector<4x4x1xf32>
    %471 = arith.mulf %468, %470 : vector<4x4x1xf32>
    %472 = arith.addf %466, %471 : vector<4x4x1xf32>
    %c1_431 = arith.constant 1 : index
    %c5_432 = arith.constant 5 : index
    %c0_433 = arith.constant 0 : index
    %c0_434 = arith.constant 0 : index
    %473 = vector.load %arg8[%c1_431, %c5_432, %c0_433, %c0_434] : memref<2x10x10x1xf32, #tpu.memory_space<vmem>>, vector<1x4x4x1xf32>
    %474 = vector.shape_cast %473 : vector<1x4x4x1xf32> to vector<4x4x1xf32>
    %c1_435 = arith.constant 1 : index
    %c35_436 = arith.constant 35 : index
    %475 = memref.load %arg4[%c1_435, %c35_436] : memref<2x49xf32, #tpu.memory_space<smem>>
    %476 = vector.broadcast %475 : f32 to vector<4x4x1xf32>
    %477 = arith.mulf %474, %476 : vector<4x4x1xf32>
    %478 = arith.addf %472, %477 : vector<4x4x1xf32>
    %c0_437 = arith.constant 0 : index
    %c5_438 = arith.constant 5 : index
    %c1_439 = arith.constant 1 : index
    %c0_440 = arith.constant 0 : index
    %479 = vector.load %arg8[%c0_437, %c5_438, %c1_439, %c0_440] : memref<2x10x10x1xf32, #tpu.memory_space<vmem>>, vector<1x4x4x1xf32>
    %480 = vector.shape_cast %479 : vector<1x4x4x1xf32> to vector<4x4x1xf32>
    %c0_441 = arith.constant 0 : index
    %c36 = arith.constant 36 : index
    %481 = memref.load %arg4[%c0_441, %c36] : memref<2x49xf32, #tpu.memory_space<smem>>
    %482 = vector.broadcast %481 : f32 to vector<4x4x1xf32>
    %483 = arith.mulf %480, %482 : vector<4x4x1xf32>
    %484 = arith.addf %478, %483 : vector<4x4x1xf32>
    %c1_442 = arith.constant 1 : index
    %c5_443 = arith.constant 5 : index
    %c1_444 = arith.constant 1 : index
    %c0_445 = arith.constant 0 : index
    %485 = vector.load %arg8[%c1_442, %c5_443, %c1_444, %c0_445] : memref<2x10x10x1xf32, #tpu.memory_space<vmem>>, vector<1x4x4x1xf32>
    %486 = vector.shape_cast %485 : vector<1x4x4x1xf32> to vector<4x4x1xf32>
    %c1_446 = arith.constant 1 : index
    %c36_447 = arith.constant 36 : index
    %487 = memref.load %arg4[%c1_446, %c36_447] : memref<2x49xf32, #tpu.memory_space<smem>>
    %488 = vector.broadcast %487 : f32 to vector<4x4x1xf32>
    %489 = arith.mulf %486, %488 : vector<4x4x1xf32>
    %490 = arith.addf %484, %489 : vector<4x4x1xf32>
    %c0_448 = arith.constant 0 : index
    %c5_449 = arith.constant 5 : index
    %c2_450 = arith.constant 2 : index
    %c0_451 = arith.constant 0 : index
    %491 = vector.load %arg8[%c0_448, %c5_449, %c2_450, %c0_451] : memref<2x10x10x1xf32, #tpu.memory_space<vmem>>, vector<1x4x4x1xf32>
    %492 = vector.shape_cast %491 : vector<1x4x4x1xf32> to vector<4x4x1xf32>
    %c0_452 = arith.constant 0 : index
    %c37 = arith.constant 37 : index
    %493 = memref.load %arg4[%c0_452, %c37] : memref<2x49xf32, #tpu.memory_space<smem>>
    %494 = vector.broadcast %493 : f32 to vector<4x4x1xf32>
    %495 = arith.mulf %492, %494 : vector<4x4x1xf32>
    %496 = arith.addf %490, %495 : vector<4x4x1xf32>
    %c1_453 = arith.constant 1 : index
    %c5_454 = arith.constant 5 : index
    %c2_455 = arith.constant 2 : index
    %c0_456 = arith.constant 0 : index
    %497 = vector.load %arg8[%c1_453, %c5_454, %c2_455, %c0_456] : memref<2x10x10x1xf32, #tpu.memory_space<vmem>>, vector<1x4x4x1xf32>
    %498 = vector.shape_cast %497 : vector<1x4x4x1xf32> to vector<4x4x1xf32>
    %c1_457 = arith.constant 1 : index
    %c37_458 = arith.constant 37 : index
    %499 = memref.load %arg4[%c1_457, %c37_458] : memref<2x49xf32, #tpu.memory_space<smem>>
    %500 = vector.broadcast %499 : f32 to vector<4x4x1xf32>
    %501 = arith.mulf %498, %500 : vector<4x4x1xf32>
    %502 = arith.addf %496, %501 : vector<4x4x1xf32>
    %c0_459 = arith.constant 0 : index
    %c5_460 = arith.constant 5 : index
    %c3_461 = arith.constant 3 : index
    %c0_462 = arith.constant 0 : index
    %503 = vector.load %arg8[%c0_459, %c5_460, %c3_461, %c0_462] : memref<2x10x10x1xf32, #tpu.memory_space<vmem>>, vector<1x4x4x1xf32>
    %504 = vector.shape_cast %503 : vector<1x4x4x1xf32> to vector<4x4x1xf32>
    %c0_463 = arith.constant 0 : index
    %c38 = arith.constant 38 : index
    %505 = memref.load %arg4[%c0_463, %c38] : memref<2x49xf32, #tpu.memory_space<smem>>
    %506 = vector.broadcast %505 : f32 to vector<4x4x1xf32>
    %507 = arith.mulf %504, %506 : vector<4x4x1xf32>
    %508 = arith.addf %502, %507 : vector<4x4x1xf32>
    %c1_464 = arith.constant 1 : index
    %c5_465 = arith.constant 5 : index
    %c3_466 = arith.constant 3 : index
    %c0_467 = arith.constant 0 : index
    %509 = vector.load %arg8[%c1_464, %c5_465, %c3_466, %c0_467] : memref<2x10x10x1xf32, #tpu.memory_space<vmem>>, vector<1x4x4x1xf32>
    %510 = vector.shape_cast %509 : vector<1x4x4x1xf32> to vector<4x4x1xf32>
    %c1_468 = arith.constant 1 : index
    %c38_469 = arith.constant 38 : index
    %511 = memref.load %arg4[%c1_468, %c38_469] : memref<2x49xf32, #tpu.memory_space<smem>>
    %512 = vector.broadcast %511 : f32 to vector<4x4x1xf32>
    %513 = arith.mulf %510, %512 : vector<4x4x1xf32>
    %514 = arith.addf %508, %513 : vector<4x4x1xf32>
    %c0_470 = arith.constant 0 : index
    %c5_471 = arith.constant 5 : index
    %c4_472 = arith.constant 4 : index
    %c0_473 = arith.constant 0 : index
    %515 = vector.load %arg8[%c0_470, %c5_471, %c4_472, %c0_473] : memref<2x10x10x1xf32, #tpu.memory_space<vmem>>, vector<1x4x4x1xf32>
    %516 = vector.shape_cast %515 : vector<1x4x4x1xf32> to vector<4x4x1xf32>
    %c0_474 = arith.constant 0 : index
    %c39 = arith.constant 39 : index
    %517 = memref.load %arg4[%c0_474, %c39] : memref<2x49xf32, #tpu.memory_space<smem>>
    %518 = vector.broadcast %517 : f32 to vector<4x4x1xf32>
    %519 = arith.mulf %516, %518 : vector<4x4x1xf32>
    %520 = arith.addf %514, %519 : vector<4x4x1xf32>
    %c1_475 = arith.constant 1 : index
    %c5_476 = arith.constant 5 : index
    %c4_477 = arith.constant 4 : index
    %c0_478 = arith.constant 0 : index
    %521 = vector.load %arg8[%c1_475, %c5_476, %c4_477, %c0_478] : memref<2x10x10x1xf32, #tpu.memory_space<vmem>>, vector<1x4x4x1xf32>
    %522 = vector.shape_cast %521 : vector<1x4x4x1xf32> to vector<4x4x1xf32>
    %c1_479 = arith.constant 1 : index
    %c39_480 = arith.constant 39 : index
    %523 = memref.load %arg4[%c1_479, %c39_480] : memref<2x49xf32, #tpu.memory_space<smem>>
    %524 = vector.broadcast %523 : f32 to vector<4x4x1xf32>
    %525 = arith.mulf %522, %524 : vector<4x4x1xf32>
    %526 = arith.addf %520, %525 : vector<4x4x1xf32>
    %c0_481 = arith.constant 0 : index
    %c5_482 = arith.constant 5 : index
    %c5_483 = arith.constant 5 : index
    %c0_484 = arith.constant 0 : index
    %527 = vector.load %arg8[%c0_481, %c5_482, %c5_483, %c0_484] : memref<2x10x10x1xf32, #tpu.memory_space<vmem>>, vector<1x4x4x1xf32>
    %528 = vector.shape_cast %527 : vector<1x4x4x1xf32> to vector<4x4x1xf32>
    %c0_485 = arith.constant 0 : index
    %c40 = arith.constant 40 : index
    %529 = memref.load %arg4[%c0_485, %c40] : memref<2x49xf32, #tpu.memory_space<smem>>
    %530 = vector.broadcast %529 : f32 to vector<4x4x1xf32>
    %531 = arith.mulf %528, %530 : vector<4x4x1xf32>
    %532 = arith.addf %526, %531 : vector<4x4x1xf32>
    %c1_486 = arith.constant 1 : index
    %c5_487 = arith.constant 5 : index
    %c5_488 = arith.constant 5 : index
    %c0_489 = arith.constant 0 : index
    %533 = vector.load %arg8[%c1_486, %c5_487, %c5_488, %c0_489] : memref<2x10x10x1xf32, #tpu.memory_space<vmem>>, vector<1x4x4x1xf32>
    %534 = vector.shape_cast %533 : vector<1x4x4x1xf32> to vector<4x4x1xf32>
    %c1_490 = arith.constant 1 : index
    %c40_491 = arith.constant 40 : index
    %535 = memref.load %arg4[%c1_490, %c40_491] : memref<2x49xf32, #tpu.memory_space<smem>>
    %536 = vector.broadcast %535 : f32 to vector<4x4x1xf32>
    %537 = arith.mulf %534, %536 : vector<4x4x1xf32>
    %538 = arith.addf %532, %537 : vector<4x4x1xf32>
    %c0_492 = arith.constant 0 : index
    %c5_493 = arith.constant 5 : index
    %c6_494 = arith.constant 6 : index
    %c0_495 = arith.constant 0 : index
    %539 = vector.load %arg8[%c0_492, %c5_493, %c6_494, %c0_495] : memref<2x10x10x1xf32, #tpu.memory_space<vmem>>, vector<1x4x4x1xf32>
    %540 = vector.shape_cast %539 : vector<1x4x4x1xf32> to vector<4x4x1xf32>
    %c0_496 = arith.constant 0 : index
    %c41 = arith.constant 41 : index
    %541 = memref.load %arg4[%c0_496, %c41] : memref<2x49xf32, #tpu.memory_space<smem>>
    %542 = vector.broadcast %541 : f32 to vector<4x4x1xf32>
    %543 = arith.mulf %540, %542 : vector<4x4x1xf32>
    %544 = arith.addf %538, %543 : vector<4x4x1xf32>
    %c1_497 = arith.constant 1 : index
    %c5_498 = arith.constant 5 : index
    %c6_499 = arith.constant 6 : index
    %c0_500 = arith.constant 0 : index
    %545 = vector.load %arg8[%c1_497, %c5_498, %c6_499, %c0_500] : memref<2x10x10x1xf32, #tpu.memory_space<vmem>>, vector<1x4x4x1xf32>
    %546 = vector.shape_cast %545 : vector<1x4x4x1xf32> to vector<4x4x1xf32>
    %c1_501 = arith.constant 1 : index
    %c41_502 = arith.constant 41 : index
    %547 = memref.load %arg4[%c1_501, %c41_502] : memref<2x49xf32, #tpu.memory_space<smem>>
    %548 = vector.broadcast %547 : f32 to vector<4x4x1xf32>
    %549 = arith.mulf %546, %548 : vector<4x4x1xf32>
    %550 = arith.addf %544, %549 : vector<4x4x1xf32>
    %c0_503 = arith.constant 0 : index
    %c6_504 = arith.constant 6 : index
    %c0_505 = arith.constant 0 : index
    %c0_506 = arith.constant 0 : index
    %551 = vector.load %arg8[%c0_503, %c6_504, %c0_505, %c0_506] : memref<2x10x10x1xf32, #tpu.memory_space<vmem>>, vector<1x4x4x1xf32>
    %552 = vector.shape_cast %551 : vector<1x4x4x1xf32> to vector<4x4x1xf32>
    %c0_507 = arith.constant 0 : index
    %c42 = arith.constant 42 : index
    %553 = memref.load %arg4[%c0_507, %c42] : memref<2x49xf32, #tpu.memory_space<smem>>
    %554 = vector.broadcast %553 : f32 to vector<4x4x1xf32>
    %555 = arith.mulf %552, %554 : vector<4x4x1xf32>
    %556 = arith.addf %550, %555 : vector<4x4x1xf32>
    %c1_508 = arith.constant 1 : index
    %c6_509 = arith.constant 6 : index
    %c0_510 = arith.constant 0 : index
    %c0_511 = arith.constant 0 : index
    %557 = vector.load %arg8[%c1_508, %c6_509, %c0_510, %c0_511] : memref<2x10x10x1xf32, #tpu.memory_space<vmem>>, vector<1x4x4x1xf32>
    %558 = vector.shape_cast %557 : vector<1x4x4x1xf32> to vector<4x4x1xf32>
    %c1_512 = arith.constant 1 : index
    %c42_513 = arith.constant 42 : index
    %559 = memref.load %arg4[%c1_512, %c42_513] : memref<2x49xf32, #tpu.memory_space<smem>>
    %560 = vector.broadcast %559 : f32 to vector<4x4x1xf32>
    %561 = arith.mulf %558, %560 : vector<4x4x1xf32>
    %562 = arith.addf %556, %561 : vector<4x4x1xf32>
    %c0_514 = arith.constant 0 : index
    %c6_515 = arith.constant 6 : index
    %c1_516 = arith.constant 1 : index
    %c0_517 = arith.constant 0 : index
    %563 = vector.load %arg8[%c0_514, %c6_515, %c1_516, %c0_517] : memref<2x10x10x1xf32, #tpu.memory_space<vmem>>, vector<1x4x4x1xf32>
    %564 = vector.shape_cast %563 : vector<1x4x4x1xf32> to vector<4x4x1xf32>
    %c0_518 = arith.constant 0 : index
    %c43 = arith.constant 43 : index
    %565 = memref.load %arg4[%c0_518, %c43] : memref<2x49xf32, #tpu.memory_space<smem>>
    %566 = vector.broadcast %565 : f32 to vector<4x4x1xf32>
    %567 = arith.mulf %564, %566 : vector<4x4x1xf32>
    %568 = arith.addf %562, %567 : vector<4x4x1xf32>
    %c1_519 = arith.constant 1 : index
    %c6_520 = arith.constant 6 : index
    %c1_521 = arith.constant 1 : index
    %c0_522 = arith.constant 0 : index
    %569 = vector.load %arg8[%c1_519, %c6_520, %c1_521, %c0_522] : memref<2x10x10x1xf32, #tpu.memory_space<vmem>>, vector<1x4x4x1xf32>
    %570 = vector.shape_cast %569 : vector<1x4x4x1xf32> to vector<4x4x1xf32>
    %c1_523 = arith.constant 1 : index
    %c43_524 = arith.constant 43 : index
    %571 = memref.load %arg4[%c1_523, %c43_524] : memref<2x49xf32, #tpu.memory_space<smem>>
    %572 = vector.broadcast %571 : f32 to vector<4x4x1xf32>
    %573 = arith.mulf %570, %572 : vector<4x4x1xf32>
    %574 = arith.addf %568, %573 : vector<4x4x1xf32>
    %c0_525 = arith.constant 0 : index
    %c6_526 = arith.constant 6 : index
    %c2_527 = arith.constant 2 : index
    %c0_528 = arith.constant 0 : index
    %575 = vector.load %arg8[%c0_525, %c6_526, %c2_527, %c0_528] : memref<2x10x10x1xf32, #tpu.memory_space<vmem>>, vector<1x4x4x1xf32>
    %576 = vector.shape_cast %575 : vector<1x4x4x1xf32> to vector<4x4x1xf32>
    %c0_529 = arith.constant 0 : index
    %c44 = arith.constant 44 : index
    %577 = memref.load %arg4[%c0_529, %c44] : memref<2x49xf32, #tpu.memory_space<smem>>
    %578 = vector.broadcast %577 : f32 to vector<4x4x1xf32>
    %579 = arith.mulf %576, %578 : vector<4x4x1xf32>
    %580 = arith.addf %574, %579 : vector<4x4x1xf32>
    %c1_530 = arith.constant 1 : index
    %c6_531 = arith.constant 6 : index
    %c2_532 = arith.constant 2 : index
    %c0_533 = arith.constant 0 : index
    %581 = vector.load %arg8[%c1_530, %c6_531, %c2_532, %c0_533] : memref<2x10x10x1xf32, #tpu.memory_space<vmem>>, vector<1x4x4x1xf32>
    %582 = vector.shape_cast %581 : vector<1x4x4x1xf32> to vector<4x4x1xf32>
    %c1_534 = arith.constant 1 : index
    %c44_535 = arith.constant 44 : index
    %583 = memref.load %arg4[%c1_534, %c44_535] : memref<2x49xf32, #tpu.memory_space<smem>>
    %584 = vector.broadcast %583 : f32 to vector<4x4x1xf32>
    %585 = arith.mulf %582, %584 : vector<4x4x1xf32>
    %586 = arith.addf %580, %585 : vector<4x4x1xf32>
    %c0_536 = arith.constant 0 : index
    %c6_537 = arith.constant 6 : index
    %c3_538 = arith.constant 3 : index
    %c0_539 = arith.constant 0 : index
    %587 = vector.load %arg8[%c0_536, %c6_537, %c3_538, %c0_539] : memref<2x10x10x1xf32, #tpu.memory_space<vmem>>, vector<1x4x4x1xf32>
    %588 = vector.shape_cast %587 : vector<1x4x4x1xf32> to vector<4x4x1xf32>
    %c0_540 = arith.constant 0 : index
    %c45 = arith.constant 45 : index
    %589 = memref.load %arg4[%c0_540, %c45] : memref<2x49xf32, #tpu.memory_space<smem>>
    %590 = vector.broadcast %589 : f32 to vector<4x4x1xf32>
    %591 = arith.mulf %588, %590 : vector<4x4x1xf32>
    %592 = arith.addf %586, %591 : vector<4x4x1xf32>
    %c1_541 = arith.constant 1 : index
    %c6_542 = arith.constant 6 : index
    %c3_543 = arith.constant 3 : index
    %c0_544 = arith.constant 0 : index
    %593 = vector.load %arg8[%c1_541, %c6_542, %c3_543, %c0_544] : memref<2x10x10x1xf32, #tpu.memory_space<vmem>>, vector<1x4x4x1xf32>
    %594 = vector.shape_cast %593 : vector<1x4x4x1xf32> to vector<4x4x1xf32>
    %c1_545 = arith.constant 1 : index
    %c45_546 = arith.constant 45 : index
    %595 = memref.load %arg4[%c1_545, %c45_546] : memref<2x49xf32, #tpu.memory_space<smem>>
    %596 = vector.broadcast %595 : f32 to vector<4x4x1xf32>
    %597 = arith.mulf %594, %596 : vector<4x4x1xf32>
    %598 = arith.addf %592, %597 : vector<4x4x1xf32>
    %c0_547 = arith.constant 0 : index
    %c6_548 = arith.constant 6 : index
    %c4_549 = arith.constant 4 : index
    %c0_550 = arith.constant 0 : index
    %599 = vector.load %arg8[%c0_547, %c6_548, %c4_549, %c0_550] : memref<2x10x10x1xf32, #tpu.memory_space<vmem>>, vector<1x4x4x1xf32>
    %600 = vector.shape_cast %599 : vector<1x4x4x1xf32> to vector<4x4x1xf32>
    %c0_551 = arith.constant 0 : index
    %c46 = arith.constant 46 : index
    %601 = memref.load %arg4[%c0_551, %c46] : memref<2x49xf32, #tpu.memory_space<smem>>
    %602 = vector.broadcast %601 : f32 to vector<4x4x1xf32>
    %603 = arith.mulf %600, %602 : vector<4x4x1xf32>
    %604 = arith.addf %598, %603 : vector<4x4x1xf32>
    %c1_552 = arith.constant 1 : index
    %c6_553 = arith.constant 6 : index
    %c4_554 = arith.constant 4 : index
    %c0_555 = arith.constant 0 : index
    %605 = vector.load %arg8[%c1_552, %c6_553, %c4_554, %c0_555] : memref<2x10x10x1xf32, #tpu.memory_space<vmem>>, vector<1x4x4x1xf32>
    %606 = vector.shape_cast %605 : vector<1x4x4x1xf32> to vector<4x4x1xf32>
    %c1_556 = arith.constant 1 : index
    %c46_557 = arith.constant 46 : index
    %607 = memref.load %arg4[%c1_556, %c46_557] : memref<2x49xf32, #tpu.memory_space<smem>>
    %608 = vector.broadcast %607 : f32 to vector<4x4x1xf32>
    %609 = arith.mulf %606, %608 : vector<4x4x1xf32>
    %610 = arith.addf %604, %609 : vector<4x4x1xf32>
    %c0_558 = arith.constant 0 : index
    %c6_559 = arith.constant 6 : index
    %c5_560 = arith.constant 5 : index
    %c0_561 = arith.constant 0 : index
    %611 = vector.load %arg8[%c0_558, %c6_559, %c5_560, %c0_561] : memref<2x10x10x1xf32, #tpu.memory_space<vmem>>, vector<1x4x4x1xf32>
    %612 = vector.shape_cast %611 : vector<1x4x4x1xf32> to vector<4x4x1xf32>
    %c0_562 = arith.constant 0 : index
    %c47 = arith.constant 47 : index
    %613 = memref.load %arg4[%c0_562, %c47] : memref<2x49xf32, #tpu.memory_space<smem>>
    %614 = vector.broadcast %613 : f32 to vector<4x4x1xf32>
    %615 = arith.mulf %612, %614 : vector<4x4x1xf32>
    %616 = arith.addf %610, %615 : vector<4x4x1xf32>
    %c1_563 = arith.constant 1 : index
    %c6_564 = arith.constant 6 : index
    %c5_565 = arith.constant 5 : index
    %c0_566 = arith.constant 0 : index
    %617 = vector.load %arg8[%c1_563, %c6_564, %c5_565, %c0_566] : memref<2x10x10x1xf32, #tpu.memory_space<vmem>>, vector<1x4x4x1xf32>
    %618 = vector.shape_cast %617 : vector<1x4x4x1xf32> to vector<4x4x1xf32>
    %c1_567 = arith.constant 1 : index
    %c47_568 = arith.constant 47 : index
    %619 = memref.load %arg4[%c1_567, %c47_568] : memref<2x49xf32, #tpu.memory_space<smem>>
    %620 = vector.broadcast %619 : f32 to vector<4x4x1xf32>
    %621 = arith.mulf %618, %620 : vector<4x4x1xf32>
    %622 = arith.addf %616, %621 : vector<4x4x1xf32>
    %c0_569 = arith.constant 0 : index
    %c6_570 = arith.constant 6 : index
    %c6_571 = arith.constant 6 : index
    %c0_572 = arith.constant 0 : index
    %623 = vector.load %arg8[%c0_569, %c6_570, %c6_571, %c0_572] : memref<2x10x10x1xf32, #tpu.memory_space<vmem>>, vector<1x4x4x1xf32>
    %624 = vector.shape_cast %623 : vector<1x4x4x1xf32> to vector<4x4x1xf32>
    %c0_573 = arith.constant 0 : index
    %c48 = arith.constant 48 : index
    %625 = memref.load %arg4[%c0_573, %c48] : memref<2x49xf32, #tpu.memory_space<smem>>
    %626 = vector.broadcast %625 : f32 to vector<4x4x1xf32>
    %627 = arith.mulf %624, %626 : vector<4x4x1xf32>
    %628 = arith.addf %622, %627 : vector<4x4x1xf32>
    %c1_574 = arith.constant 1 : index
    %c6_575 = arith.constant 6 : index
    %c6_576 = arith.constant 6 : index
    %c0_577 = arith.constant 0 : index
    %629 = vector.load %arg8[%c1_574, %c6_575, %c6_576, %c0_577] : memref<2x10x10x1xf32, #tpu.memory_space<vmem>>, vector<1x4x4x1xf32>
    %630 = vector.shape_cast %629 : vector<1x4x4x1xf32> to vector<4x4x1xf32>
    %c1_578 = arith.constant 1 : index
    %c48_579 = arith.constant 48 : index
    %631 = memref.load %arg4[%c1_578, %c48_579] : memref<2x49xf32, #tpu.memory_space<smem>>
    %632 = vector.broadcast %631 : f32 to vector<4x4x1xf32>
    %633 = arith.mulf %630, %632 : vector<4x4x1xf32>
    %634 = arith.addf %628, %633 : vector<4x4x1xf32>
    %cst_580 = arith.constant 0.000000e+00 : f32
    %635 = vector.broadcast %cst_580 : f32 to vector<4x4x1xf32>
    %636 = arith.subf %635, %634 : vector<4x4x1xf32>
    %637 = math.exp %636 : vector<4x4x1xf32>
    %cst_581 = arith.constant 1.000000e+00 : f32
    %638 = vector.broadcast %cst_581 : f32 to vector<4x4x1xf32>
    %639 = arith.addf %638, %637 : vector<4x4x1xf32>
    %640 = tpu.reciprocal %639 {approx = true} : vector<4x4x1xf32> -> vector<4x4x1xf32>
    %c0_582 = arith.constant 0 : index
    %c0_583 = arith.constant 0 : index
    %641 = vector.load %arg5[%c0_582, %c0_583] : memref<1x64xf32, #tpu.memory_space<vmem>>, vector<1x64xf32>
    %642 = vector.shape_cast %641 : vector<1x64xf32> to vector<1x1x64xf32>
    %643 = vector.broadcast %642 : vector<1x1x64xf32> to vector<4x4x64xf32>
    %644 = arith.mulf %31, %643 : vector<4x4x64xf32>
    %cst_584 = arith.constant dense<0.000000e+00> : vector<4x4xf32>
    %645 = vector.multi_reduction <add>, %644, %cst_584 [2] : vector<4x4x64xf32> to vector<4x4xf32>
    %646 = vector.shape_cast %645 : vector<4x4xf32> to vector<4x4x1xf32>
    %647 = arith.mulf %640, %646 : vector<4x4x1xf32>
    %c0_585 = arith.constant 0 : index
    %c0_586 = arith.constant 0 : index
    %648 = memref.load %arg6[%c0_585, %c0_586] : memref<1x1xf32, #tpu.memory_space<smem>>
    %649 = vector.broadcast %648 : f32 to vector<4x4x1xf32>
    %650 = arith.addf %647, %649 : vector<4x4x1xf32>
    %c0_587 = arith.constant 0 : index
    %c0_588 = arith.constant 0 : index
    %c0_589 = arith.constant 0 : index
    %c0_590 = arith.constant 0 : index
    %651 = vector.load %arg7[%c0_587, %c0_588, %c0_589, %c0_590] : memref<1x4x4x1xf32, #tpu.memory_space<vmem>>, vector<1x4x4x1xf32>
    %652 = vector.shape_cast %651 : vector<1x4x4x1xf32> to vector<4x4x1xf32>
    %653 = vector.shape_cast %650 : vector<4x4x1xf32> to vector<1x4x4x1xf32>
    tpu.vector_store %arg7[%c0_587, %c0_588, %c0_589, %c0_590], %653 {strides = array<i32>} : memref<1x4x4x1xf32, #tpu.memory_space<vmem>>, vector<1x4x4x1xf32>,
    return
  }
  func.func @transform_0(%arg0: i32) -> (i32, i32, i32, i32) {
    %c0_i32 = arith.constant 0 : i32
    %c0_i32_0 = arith.constant 0 : i32
    %c0_i32_1 = arith.constant 0 : i32
    %c0_i32_2 = arith.constant 0 : i32
    return %arg0, %c0_i32, %c0_i32_0, %c0_i32_1 : i32, i32, i32, i32
  }
  func.func @transform_1(%arg0: i32) -> (i32, i32) {
    %c0_i32 = arith.constant 0 : i32
    %c0_i32_0 = arith.constant 0 : i32
    %c0_i32_1 = arith.constant 0 : i32
    return %c0_i32, %c0_i32_0 : i32, i32
  }
  func.func @transform_2(%arg0: i32) -> (i32, i32) {
    %c0_i32 = arith.constant 0 : i32
    %c0_i32_0 = arith.constant 0 : i32
    %c0_i32_1 = arith.constant 0 : i32
    return %c0_i32, %c0_i32_0 : i32, i32
  }
  func.func @transform_3(%arg0: i32) -> (i32, i32) {
    %c0_i32 = arith.constant 0 : i32
    %c0_i32_0 = arith.constant 0 : i32
    %c0_i32_1 = arith.constant 0 : i32
    return %c0_i32, %c0_i32_0 : i32, i32
  }
  func.func @transform_4(%arg0: i32) -> (i32, i32) {
    %c0_i32 = arith.constant 0 : i32
    %c0_i32_0 = arith.constant 0 : i32
    %c0_i32_1 = arith.constant 0 : i32
    return %c0_i32, %c0_i32_0 : i32, i32
  }
  func.func @transform_5(%arg0: i32) -> (i32, i32) {
    %c0_i32 = arith.constant 0 : i32
    %c0_i32_0 = arith.constant 0 : i32
    %c0_i32_1 = arith.constant 0 : i32
    return %c0_i32, %c0_i32_0 : i32, i32
  }
  func.func @transform_6(%arg0: i32) -> (i32, i32, i32, i32) {
    %c0_i32 = arith.constant 0 : i32
    %c0_i32_0 = arith.constant 0 : i32
    %c0_i32_1 = arith.constant 0 : i32
    %c0_i32_2 = arith.constant 0 : i32
    return %arg0, %c0_i32, %c0_i32_0, %c0_i32_1 : i32, i32, i32, i32
  }
}

</mosaic_0001>

<llo_original>
// kernel: pallas_forward.4
$region0: #{pallas_forward.4}
  #allocation0 [shape = 'u32[]', space=smem, size = 0x4, offset = 0x4, fixed_abs, tag = 'smem constant byte address 0x4 - core index']
  #allocation1 [shape = 'u32[144,128]{1,0:T(1,128)}', space=vmem, size = 0x12000, scoped, tag = 'internal scratch']
  %s0 = inlined_call_operand.vmem [shape: f32[2,296,4], index: 0, kind: input, shape index: {}]
  %s1 = inlined_call_operand.vmem [shape: f32[2,2,4,16], index: 1, kind: input, shape index: {}]
  %s2 = inlined_call_operand.vmem [shape: f32[1,16], index: 2, kind: input, shape index: {}]
  %s3 = inlined_call_operand.vmem [shape: f32[2,272,16], index: 3, kind: output, shape index: {}]
  %s4 = sld [smem:[#allocation0]]
  $region45: #{pallas_forward.4} parent=0
    _
  %s6 = ssub.s32 1, %s4
  %s7 = scalar_select 0, %s6, %s4
  loop: start=0, step=1, limit=4
  $region2: #{pallas_forward.4} parent=0 // loop_pre_header
    _
  $region3: #{pallas_forward.4} parent=0 // loop_header
    %s9 = sphi 0, %s13
    %p10 = scmp.ge.s32.totalorder %s9, 4
    %s19 = sphi 0, %s21
    %s22 = sphi 0, %s19
    %s23 = sphi 0, %s22
    %s39 = sphi 0, %s23
    %s43 = sphi 0, %s43
    %s45 = sphi 0, %s43
    %s46 = sphi 0, %s45
    %s60 = sphi 0, %s46
    %s64 = sphi 0, %s64
    %s66 = sphi 0, %s64
    %s67 = sphi 0, %s66
    %s81 = sphi 0, %s67
    %s87 = sphi 0, %s89
    %s90 = sphi 0, %s87
    %s91 = sphi 0, %s90
    %s107 = sphi 0, %s91
  $region4: #{pallas_forward.4} parent=0 // loop_header_branch
    %12 = sbr.rel (%p10) target = $region8
  $region5: #{pallas_forward.4} parent=0 // loop_body
    %s14 = ssub.s32 %s9, 1
    %s15 = ssub.s32 %s9, 2
    %s16 = sadd.s32 %s9, 1
    %s17 = ssub.s32 %s9, %s16
    %p18 = scmp.eq.s32.totalorder %s17, 0
    %s20 = sadd.s32 %s19, 1
    %s21 = scalar_select %p18, %s19, %s20
    %p24 = pneg %p18
    %p25 = scmp.eq.s32.totalorder %s9, 1
    %p26 = por %p24, %p25
    %p27 = scmp.ne.s32.totalorder %s19, %s22
    %p28 = scmp.eq.s32.totalorder %s9, 0
    %p29 = por %p27, %p28
    %p30 = scmp.ne.s32.totalorder %s19, %s22
    %p31 = scmp.eq.s32.totalorder %s14, 1
    %p32 = por %p30, %p31
    %p33 = scmp.ne.s32.totalorder %s22, %s23
    %p34 = scmp.eq.s32.totalorder %s14, 0
    %p35 = por %p33, %p34
    %p36 = scmp.ne.s32.totalorder %s22, %s23
    %p37 = scmp.eq.s32.totalorder %s15, 1
    %p38 = por %p36, %p37
    %p40 = scmp.ne.s32.totalorder %s23, %s39
    %p41 = scmp.eq.s32.totalorder %s15, 0
    %p42 = por %p40, %p41
    %s44 = sadd.s32 %s43, 1
    %p47 = scmp.eq.s32.totalorder %s9, 1
    %p48 = scmp.ne.s32.totalorder %s43, %s45
    %p49 = scmp.eq.s32.totalorder %s9, 0
    %p50 = por %p48, %p49
    %p51 = scmp.ne.s32.totalorder %s43, %s45
    %p52 = scmp.eq.s32.totalorder %s14, 1
    %p53 = por %p51, %p52
    %p54 = scmp.ne.s32.totalorder %s45, %s46
    %p55 = scmp.eq.s32.totalorder %s14, 0
    %p56 = por %p54, %p55
    %p57 = scmp.ne.s32.totalorder %s45, %s46
    %p58 = scmp.eq.s32.totalorder %s15, 1
    %p59 = por %p57, %p58
    %p61 = scmp.ne.s32.totalorder %s46, %s60
    %p62 = scmp.eq.s32.totalorder %s15, 0
    %p63 = por %p61, %p62
    %s65 = sadd.s32 %s64, 1
    %p68 = scmp.eq.s32.totalorder %s9, 1
    %p69 = scmp.ne.s32.totalorder %s64, %s66
    %p70 = scmp.eq.s32.totalorder %s9, 0
    %p71 = por %p69, %p70
    %p72 = scmp.ne.s32.totalorder %s64, %s66
    %p73 = scmp.eq.s32.totalorder %s14, 1
    %p74 = por %p72, %p73
    %p75 = scmp.ne.s32.totalorder %s66, %s67
    %p76 = scmp.eq.s32.totalorder %s14, 0
    %p77 = por %p75, %p76
    %p78 = scmp.ne.s32.totalorder %s66, %s67
    %p79 = scmp.eq.s32.totalorder %s15, 1
    %p80 = por %p78, %p79
    %p82 = scmp.ne.s32.totalorder %s67, %s81
    %p83 = scmp.eq.s32.totalorder %s15, 0
    %p84 = por %p82, %p83
    %s85 = ssub.s32 %s9, %s16
    %p86 = scmp.eq.s32.totalorder %s85, 0
    %s88 = sadd.s32 %s87, 1
    %s89 = scalar_select %p86, %s87, %s88
    %p92 = pneg %p86
    %p93 = scmp.eq.s32.totalorder %s9, 1
    %p94 = por %p92, %p93
    %p95 = scmp.ne.s32.totalorder %s87, %s90
    %p96 = scmp.eq.s32.totalorder %s9, 0
    %p97 = por %p95, %p96
    %p98 = scmp.ne.s32.totalorder %s87, %s90
    %p99 = scmp.eq.s32.totalorder %s14, 1
    %p100 = por %p98, %p99
    %p101 = scmp.ne.s32.totalorder %s90, %s91
    %p102 = scmp.eq.s32.totalorder %s14, 0
    %p103 = por %p101, %p102
    %p104 = scmp.ne.s32.totalorder %s90, %s91
    %p105 = scmp.eq.s32.totalorder %s15, 1
    %p106 = por %p104, %p105
    %p108 = scmp.ne.s32.totalorder %s91, %s107
    %p109 = scmp.eq.s32.totalorder %s15, 0
    %p110 = por %p108, %p109
    %p111 = scmp.le.s32.totalorder 1, %s9
    %p112 = scmp.lt.s32.totalorder %s9, 3
    %p113 = pnand %p111, %p112
    %p114 = pneg %p113
    // Predicated region
    $region9: #{pallas_forward.4} parent=5 // pred_check
      _
    $region10: #{pallas_forward.4} parent=5 // pred_check_branch
      %116 = sbr.rel (%p113) target = $region12
    $region11: #{pallas_forward.4} parent=5 // pred_region
      %s117 = ssub.s32 %s9, 1
      // Predicated region
      $region13: #{pallas_forward.4} parent=11 // pred_check
        %p118 = pneg %p56
      $region14: #{pallas_forward.4} parent=11 // pred_check_branch
        %120 = sbr.rel (%p118) target = $region16
      $region15: #{pallas_forward.4} parent=11 // pred_region
        _
      $region16: #{pallas_forward.4} parent=11 // pred_fallthru
        _
      // Predicated region
      $region17: #{pallas_forward.4} parent=11 // pred_check
        %p121 = pneg %p77
      $region18: #{pallas_forward.4} parent=11 // pred_check_branch
        %123 = sbr.rel (%p121) target = $region20
      $region19: #{pallas_forward.4} parent=11 // pred_region
        _
      $region20: #{pallas_forward.4} parent=11 // pred_fallthru
        _
    $region12: #{pallas_forward.4} parent=5 // pred_fallthru
      _
    %p124 = scmp.lt.s32.totalorder %s9, 2
    // Predicated region
    $region21: #{pallas_forward.4} parent=5 // pred_check
      %p125 = pneg %p124
    $region22: #{pallas_forward.4} parent=5 // pred_check_branch
      %127 = sbr.rel (%p125) target = $region24
    $region23: #{pallas_forward.4} parent=5 // pred_region
      // Predicated region
      $region25: #{pallas_forward.4} parent=23 // pred_check
        %p128 = pneg %p29
      $region26: #{pallas_forward.4} parent=23 // pred_check_branch
        %130 = sbr.rel (%p128) target = $region28
      $region27: #{pallas_forward.4} parent=23 // pred_region
        %p131 = scmp.lt.s32.totalorder %s9, 1
        %s132 = scalar_select %p131, %s9, 1
        %s133 = smul.addr %s132, 37
        %s134 = smul.addr %s133, 8
        %s135 = scalar_lea.vmem %s0, %s134
      $region28: #{pallas_forward.4} parent=23 // pred_fallthru
        _
    $region24: #{pallas_forward.4} parent=5 // pred_fallthru
      _
    %p136 = scmp.le.s32.totalorder 1, %s9
    %p137 = scmp.lt.s32.totalorder %s9, 3
    %p138 = pnand %p136, %p137
    %p139 = pneg %p138
    // Predicated region
    $region29: #{pallas_forward.4} parent=5 // pred_check
      _
    $region30: #{pallas_forward.4} parent=5 // pred_check_branch
      %141 = sbr.rel (%p138) target = $region32
    $region31: #{pallas_forward.4} parent=5 // pred_region
      %s142 = ssub.s32 %s9, 1
      %p143 = scmp.lt.s32.totalorder %s14, 1
      %s144 = scalar_select %p143, %s14, 1
      %s145 = smul.addr %s144, 37
      %s146 = smul.addr %s145, 8
      %s147 = scalar_lea.vmem %s0, %s146
      %p148 = pneg %p35
      %p149 = pneg %p32
      %p150 = pneg %p56
      %p151 = pneg %p53
      %p152 = pneg %p77
      %p153 = pneg %p74
      %p154 = pneg %p103
      %p155 = pneg %p100
      %p156 = scmp.lt.s32.totalorder %s14, 1
      %s157 = scalar_select %p156, %s14, 1
      %s158 = smul.addr %s157, 34
      %s159 = smul.addr %s158, 8
      %s160 = scalar_lea.vmem %s3, %s159
      %p161 = scmp.lt.s32.totalorder %s14, 1
      %s162 = scalar_select %p161, %s14, 1
      %s163 = smul.addr %s162, 37
      %s164 = smul.addr %s163, 8
      %s165 = scalar_lea.vmem %s0, %s164
      %p166 = scmp.lt.s32.totalorder %s14, 1
      %s167 = scalar_select %p166, %s14, 1
      %s168 = smul.addr %s167, 34
      %s169 = smul.addr %s168, 8
      %s170 = scalar_lea.vmem %s3, %s169
      %v171 = vld [vmem:[%s165] sm:$0xff]
      %v172 = vld [vmem:[%s165 + $0x8] sm:$0xff]
      %v173 = vld [vmem:[%s165 + $0x10] sm:$0xff]
      %v174 = vld [vmem:[%s165 + $0x18] sm:$0xff]
      %v175 = vld [vmem:[%s165 + $0x20] sm:$0xff]
      %v176 = vld [vmem:[%s165 + $0x28] sm:$0xff]
      %v177 = vld [vmem:[%s165 + $0x30] sm:$0xff]
      %v178 = vld [vmem:[%s165 + $0x38] sm:$0xff]
      %v179 = vld [vmem:[%s165 + $0x40] sm:$0xff]
      %v180 = vld [vmem:[%s165 + $0x48] sm:$0xff]
      %v181 = vld [vmem:[%s165 + $0x50] sm:$0xff]
      %v182 = vld [vmem:[%s165 + $0x58] sm:$0xff]
      %v183 = vld [vmem:[%s165 + $0x60] sm:$0xff]
      %v184 = vld [vmem:[%s165 + $0x68] sm:$0xff]
      %v185 = vld [vmem:[%s165 + $0x70] sm:$0xff]
      %v186 = vld [vmem:[%s165 + $0x78] sm:$0xff]
      %v187 = vld [vmem:[%s165 + $0x80] sm:$0xff]
      %v188 = vld [vmem:[%s165 + $0x88] sm:$0xff]
      %v189 = vld [vmem:[%s165 + $0x90] sm:$0xff]
      %v190 = vld [vmem:[%s165 + $0x98] sm:$0xff]
      %v191 = vld [vmem:[%s165 + $0xa0] sm:$0xff]
      %v192 = vld [vmem:[%s165 + $0xa8] sm:$0xff]
      %v193 = vld [vmem:[%s165 + $0xb0] sm:$0xff]
      %v194 = vld [vmem:[%s165 + $0xb8] sm:$0xff]
      %v195 = vld [vmem:[%s165 + $0xc0] sm:$0xff]
      %v196 = vld [vmem:[%s165 + $0xc8] sm:$0xff]
      %v197 = vld [vmem:[%s165 + $0xd0] sm:$0xff]
      %v198 = vld [vmem:[%s165 + $0xd8] sm:$0xff]
      %v199 = vld [vmem:[%s165 + $0xe0] sm:$0xff]
      %v200 = vld [vmem:[%s165 + $0xe8] sm:$0xff]
      %v201 = vld [vmem:[%s165 + $0xf0] sm:$0xff]
      %v202 = vld [vmem:[%s165 + $0xf8] sm:$0xff]
      %v203 = vld [vmem:[%s165 + $0x100] sm:$0xff]
      %v204 = vld [vmem:[%s165 + $0x108] sm:$0xff]
      %v205 = vld [vmem:[%s1] sm:$0xf]
      %207 = vset.pattern.permute.xlu0 0
      %208 = vperm.xlu0 %207, %v171
      %v209 = vpop.permute.xlu0 %208
      %212 = vset.pattern.permute.xlu0 0
      %213 = vperm.xlu0 %212, %v172
      %v214 = vpop.permute.xlu0 %213
      %217 = vset.pattern.permute.xlu0 0
      %218 = vperm.xlu0 %217, %v173
      %v219 = vpop.permute.xlu0 %218
      %222 = vset.pattern.permute.xlu0 0
      %223 = vperm.xlu0 %222, %v174
      %v224 = vpop.permute.xlu0 %223
      %227 = vset.pattern.permute.xlu0 0
      %228 = vperm.xlu0 %227, %v175
      %v229 = vpop.permute.xlu0 %228
      %232 = vset.pattern.permute.xlu0 0
      %233 = vperm.xlu0 %232, %v176
      %v234 = vpop.permute.xlu0 %233
      %237 = vset.pattern.permute.xlu0 0
      %238 = vperm.xlu0 %237, %v177
      %v239 = vpop.permute.xlu0 %238
      %242 = vset.pattern.permute.xlu0 0
      %243 = vperm.xlu0 %242, %v178
      %v244 = vpop.permute.xlu0 %243
      %247 = vset.pattern.permute.xlu0 0
      %248 = vperm.xlu0 %247, %v179
      %v249 = vpop.permute.xlu0 %248
      %252 = vset.pattern.permute.xlu0 0
      %253 = vperm.xlu0 %252, %v180
      %v254 = vpop.permute.xlu0 %253
      %257 = vset.pattern.permute.xlu0 0
      %258 = vperm.xlu0 %257, %v181
      %v259 = vpop.permute.xlu0 %258
      %262 = vset.pattern.permute.xlu0 0
      %263 = vperm.xlu0 %262, %v182
      %v264 = vpop.permute.xlu0 %263
      %267 = vset.pattern.permute.xlu0 0
      %268 = vperm.xlu0 %267, %v183
      %v269 = vpop.permute.xlu0 %268
      %272 = vset.pattern.permute.xlu0 0
      %273 = vperm.xlu0 %272, %v184
      %v274 = vpop.permute.xlu0 %273
      %277 = vset.pattern.permute.xlu0 0
      %278 = vperm.xlu0 %277, %v185
      %v279 = vpop.permute.xlu0 %278
      %282 = vset.pattern.permute.xlu0 0
      %283 = vperm.xlu0 %282, %v186
      %v284 = vpop.permute.xlu0 %283
      %287 = vset.pattern.permute.xlu0 0
      %288 = vperm.xlu0 %287, %v187
      %v289 = vpop.permute.xlu0 %288
      %292 = vset.pattern.permute.xlu0 0
      %293 = vperm.xlu0 %292, %v188
      %v294 = vpop.permute.xlu0 %293
      %297 = vset.pattern.permute.xlu0 0
      %298 = vperm.xlu0 %297, %v189
      %v299 = vpop.permute.xlu0 %298
      %302 = vset.pattern.permute.xlu0 0
      %303 = vperm.xlu0 %302, %v190
      %v304 = vpop.permute.xlu0 %303
      %307 = vset.pattern.permute.xlu0 0
      %308 = vperm.xlu0 %307, %v191
      %v309 = vpop.permute.xlu0 %308
      %312 = vset.pattern.permute.xlu0 0
      %313 = vperm.xlu0 %312, %v192
      %v314 = vpop.permute.xlu0 %313
      %317 = vset.pattern.permute.xlu0 0
      %318 = vperm.xlu0 %317, %v193
      %v319 = vpop.permute.xlu0 %318
      %322 = vset.pattern.permute.xlu0 0
      %323 = vperm.xlu0 %322, %v194
      %v324 = vpop.permute.xlu0 %323
      %327 = vset.pattern.permute.xlu0 0
      %328 = vperm.xlu0 %327, %v195
      %v329 = vpop.permute.xlu0 %328
      %332 = vset.pattern.permute.xlu0 0
      %333 = vperm.xlu0 %332, %v196
      %v334 = vpop.permute.xlu0 %333
      %337 = vset.pattern.permute.xlu0 0
      %338 = vperm.xlu0 %337, %v197
      %v339 = vpop.permute.xlu0 %338
      %342 = vset.pattern.permute.xlu0 0
      %343 = vperm.xlu0 %342, %v198
      %v344 = vpop.permute.xlu0 %343
      %347 = vset.pattern.permute.xlu0 0
      %348 = vperm.xlu0 %347, %v199
      %v349 = vpop.permute.xlu0 %348
      %352 = vset.pattern.permute.xlu0 0
      %353 = vperm.xlu0 %352, %v200
      %v354 = vpop.permute.xlu0 %353
      %357 = vset.pattern.permute.xlu0 0
      %358 = vperm.xlu0 %357, %v201
      %v359 = vpop.permute.xlu0 %358
      %362 = vset.pattern.permute.xlu0 0
      %363 = vperm.xlu0 %362, %v202
      %v364 = vpop.permute.xlu0 %363
      %367 = vset.pattern.permute.xlu0 0
      %368 = vperm.xlu0 %367, %v203
      %v369 = vpop.permute.xlu0 %368
      %372 = vset.pattern.permute.xlu0 0
      %373 = vperm.xlu0 %372, %v204
      %v374 = vpop.permute.xlu0 %373
      %v376 = vlaneseq
      %v377 = vshrl.u32 %v376, 7
      %v378 = vsub.s32 0, %v377
      %v379 = vrot.slane %v205, %v378
      %v380 = vmul.f32 %v209, %v379
      %v381 = vmul.f32 %v214, %v379
      %v382 = vmul.f32 %v219, %v379
      %v383 = vmul.f32 %v224, %v379
      %v384 = vmul.f32 %v229, %v379
      %v385 = vmul.f32 %v234, %v379
      %v386 = vmul.f32 %v239, %v379
      %v387 = vmul.f32 %v244, %v379
      %v388 = vmul.f32 %v249, %v379
      %v389 = vmul.f32 %v254, %v379
      %v390 = vmul.f32 %v259, %v379
      %v391 = vmul.f32 %v264, %v379
      %v392 = vmul.f32 %v269, %v379
      %v393 = vmul.f32 %v274, %v379
      %v394 = vmul.f32 %v279, %v379
      %v395 = vmul.f32 %v284, %v379
      %v396 = vmul.f32 %v289, %v379
      %v397 = vmul.f32 %v294, %v379
      %v398 = vmul.f32 %v299, %v379
      %v399 = vmul.f32 %v304, %v379
      %v400 = vmul.f32 %v309, %v379
      %v401 = vmul.f32 %v314, %v379
      %v402 = vmul.f32 %v319, %v379
      %v403 = vmul.f32 %v324, %v379
      %v404 = vmul.f32 %v329, %v379
      %v405 = vmul.f32 %v334, %v379
      %v406 = vmul.f32 %v339, %v379
      %v407 = vmul.f32 %v344, %v379
      %v408 = vmul.f32 %v349, %v379
      %v409 = vmul.f32 %v354, %v379
      %v410 = vmul.f32 %v359, %v379
      %v411 = vmul.f32 %v364, %v379
      %v412 = vmul.f32 %v369, %v379
      %v413 = vmul.f32 %v374, %v379
      %v414 = vadd.f32 %v380, 0.0
      %v415 = vadd.f32 %v381, 0.0
      %v416 = vadd.f32 %v382, 0.0
      %v417 = vadd.f32 %v383, 0.0
      %v418 = vadd.f32 %v384, 0.0
      %v419 = vadd.f32 %v385, 0.0
      %v420 = vadd.f32 %v386, 0.0
      %v421 = vadd.f32 %v387, 0.0
      %v422 = vadd.f32 %v388, 0.0
      %v423 = vadd.f32 %v389, 0.0
      %v424 = vadd.f32 %v390, 0.0
      %v425 = vadd.f32 %v391, 0.0
      %v426 = vadd.f32 %v392, 0.0
      %v427 = vadd.f32 %v393, 0.0
      %v428 = vadd.f32 %v394, 0.0
      %v429 = vadd.f32 %v395, 0.0
      %v430 = vadd.f32 %v396, 0.0
      %v431 = vadd.f32 %v397, 0.0
      %v432 = vadd.f32 %v398, 0.0
      %v433 = vadd.f32 %v399, 0.0
      %v434 = vadd.f32 %v400, 0.0
      %v435 = vadd.f32 %v401, 0.0
      %v436 = vadd.f32 %v402, 0.0
      %v437 = vadd.f32 %v403, 0.0
      %v438 = vadd.f32 %v404, 0.0
      %v439 = vadd.f32 %v405, 0.0
      %v440 = vadd.f32 %v406, 0.0
      %v441 = vadd.f32 %v407, 0.0
      %v442 = vadd.f32 %v408, 0.0
      %v443 = vadd.f32 %v409, 0.0
      %v444 = vadd.f32 %v410, 0.0
      %v445 = vadd.f32 %v411, 0.0
      %v446 = vadd.f32 %v412, 0.0
      %v447 = vadd.f32 %v413, 0.0
      %448 = vset.pattern.permute.xlu0 1
      %449 = vperm.xlu0 %448, %v171
      %v450 = vpop.permute.xlu0 %449
      %452 = vset.pattern.permute.xlu0 1
      %453 = vperm.xlu0 %452, %v172
      %v454 = vpop.permute.xlu0 %453
      %456 = vset.pattern.permute.xlu0 1
      %457 = vperm.xlu0 %456, %v173
      %v458 = vpop.permute.xlu0 %457
      %460 = vset.pattern.permute.xlu0 1
      %461 = vperm.xlu0 %460, %v174
      %v462 = vpop.permute.xlu0 %461
      %464 = vset.pattern.permute.xlu0 1
      %465 = vperm.xlu0 %464, %v175
      %v466 = vpop.permute.xlu0 %465
      %468 = vset.pattern.permute.xlu0 1
      %469 = vperm.xlu0 %468, %v176
      %v470 = vpop.permute.xlu0 %469
      %472 = vset.pattern.permute.xlu0 1
      %473 = vperm.xlu0 %472, %v177
      %v474 = vpop.permute.xlu0 %473
      %476 = vset.pattern.permute.xlu0 1
      %477 = vperm.xlu0 %476, %v178
      %v478 = vpop.permute.xlu0 %477
      %480 = vset.pattern.permute.xlu0 1
      %481 = vperm.xlu0 %480, %v179
      %v482 = vpop.permute.xlu0 %481
      %484 = vset.pattern.permute.xlu0 1
      %485 = vperm.xlu0 %484, %v180
      %v486 = vpop.permute.xlu0 %485
      %488 = vset.pattern.permute.xlu0 1
      %489 = vperm.xlu0 %488, %v181
      %v490 = vpop.permute.xlu0 %489
      %492 = vset.pattern.permute.xlu0 1
      %493 = vperm.xlu0 %492, %v182
      %v494 = vpop.permute.xlu0 %493
      %496 = vset.pattern.permute.xlu0 1
      %497 = vperm.xlu0 %496, %v183
      %v498 = vpop.permute.xlu0 %497
      %500 = vset.pattern.permute.xlu0 1
      %501 = vperm.xlu0 %500, %v184
      %v502 = vpop.permute.xlu0 %501
      %504 = vset.pattern.permute.xlu0 1
      %505 = vperm.xlu0 %504, %v185
      %v506 = vpop.permute.xlu0 %505
      %508 = vset.pattern.permute.xlu0 1
      %509 = vperm.xlu0 %508, %v186
      %v510 = vpop.permute.xlu0 %509
      %512 = vset.pattern.permute.xlu0 1
      %513 = vperm.xlu0 %512, %v187
      %v514 = vpop.permute.xlu0 %513
      %516 = vset.pattern.permute.xlu0 1
      %517 = vperm.xlu0 %516, %v188
      %v518 = vpop.permute.xlu0 %517
      %520 = vset.pattern.permute.xlu0 1
      %521 = vperm.xlu0 %520, %v189
      %v522 = vpop.permute.xlu0 %521
      %524 = vset.pattern.permute.xlu0 1
      %525 = vperm.xlu0 %524, %v190
      %v526 = vpop.permute.xlu0 %525
      %528 = vset.pattern.permute.xlu0 1
      %529 = vperm.xlu0 %528, %v191
      %v530 = vpop.permute.xlu0 %529
      %532 = vset.pattern.permute.xlu0 1
      %533 = vperm.xlu0 %532, %v192
      %v534 = vpop.permute.xlu0 %533
      %536 = vset.pattern.permute.xlu0 1
      %537 = vperm.xlu0 %536, %v193
      %v538 = vpop.permute.xlu0 %537
      %540 = vset.pattern.permute.xlu0 1
      %541 = vperm.xlu0 %540, %v194
      %v542 = vpop.permute.xlu0 %541
      %544 = vset.pattern.permute.xlu0 1
      %545 = vperm.xlu0 %544, %v195
      %v546 = vpop.permute.xlu0 %545
      %548 = vset.pattern.permute.xlu0 1
      %549 = vperm.xlu0 %548, %v196
      %v550 = vpop.permute.xlu0 %549
      %552 = vset.pattern.permute.xlu0 1
      %553 = vperm.xlu0 %552, %v197
      %v554 = vpop.permute.xlu0 %553
      %556 = vset.pattern.permute.xlu0 1
      %557 = vperm.xlu0 %556, %v198
      %v558 = vpop.permute.xlu0 %557
      %560 = vset.pattern.permute.xlu0 1
      %561 = vperm.xlu0 %560, %v199
      %v562 = vpop.permute.xlu0 %561
      %564 = vset.pattern.permute.xlu0 1
      %565 = vperm.xlu0 %564, %v200
      %v566 = vpop.permute.xlu0 %565
      %568 = vset.pattern.permute.xlu0 1
      %569 = vperm.xlu0 %568, %v201
      %v570 = vpop.permute.xlu0 %569
      %572 = vset.pattern.permute.xlu0 1
      %573 = vperm.xlu0 %572, %v202
      %v574 = vpop.permute.xlu0 %573
      %576 = vset.pattern.permute.xlu0 1
      %577 = vperm.xlu0 %576, %v203
      %v578 = vpop.permute.xlu0 %577
      %580 = vset.pattern.permute.xlu0 1
      %581 = vperm.xlu0 %580, %v204
      %v582 = vpop.permute.xlu0 %581
      %v584 = vlaneseq
      %v585 = vshrl.u32 %v584, 7
      %v586 = vsub.s32 1, %v585
      %v587 = vrot.slane %v205, %v586
      %v588 = vmul.f32 %v450, %v587
      %v589 = vmul.f32 %v454, %v587
      %v590 = vmul.f32 %v458, %v587
      %v591 = vmul.f32 %v462, %v587
      %v592 = vmul.f32 %v466, %v587
      %v593 = vmul.f32 %v470, %v587
      %v594 = vmul.f32 %v474, %v587
      %v595 = vmul.f32 %v478, %v587
      %v596 = vmul.f32 %v482, %v587
      %v597 = vmul.f32 %v486, %v587
      %v598 = vmul.f32 %v490, %v587
      %v599 = vmul.f32 %v494, %v587
      %v600 = vmul.f32 %v498, %v587
      %v601 = vmul.f32 %v502, %v587
      %v602 = vmul.f32 %v506, %v587
      %v603 = vmul.f32 %v510, %v587
      %v604 = vmul.f32 %v514, %v587
      %v605 = vmul.f32 %v518, %v587
      %v606 = vmul.f32 %v522, %v587
      %v607 = vmul.f32 %v526, %v587
      %v608 = vmul.f32 %v530, %v587
      %v609 = vmul.f32 %v534, %v587
      %v610 = vmul.f32 %v538, %v587
      %v611 = vmul.f32 %v542, %v587
      %v612 = vmul.f32 %v546, %v587
      %v613 = vmul.f32 %v550, %v587
      %v614 = vmul.f32 %v554, %v587
      %v615 = vmul.f32 %v558, %v587
      %v616 = vmul.f32 %v562, %v587
      %v617 = vmul.f32 %v566, %v587
      %v618 = vmul.f32 %v570, %v587
      %v619 = vmul.f32 %v574, %v587
      %v620 = vmul.f32 %v578, %v587
      %v621 = vmul.f32 %v582, %v587
      %v622 = vadd.f32 %v414, %v588
      %v623 = vadd.f32 %v415, %v589
      %v624 = vadd.f32 %v416, %v590
      %v625 = vadd.f32 %v417, %v591
      %v626 = vadd.f32 %v418, %v592
      %v627 = vadd.f32 %v419, %v593
      %v628 = vadd.f32 %v420, %v594
      %v629 = vadd.f32 %v421, %v595
      %v630 = vadd.f32 %v422, %v596
      %v631 = vadd.f32 %v423, %v597
      %v632 = vadd.f32 %v424, %v598
      %v633 = vadd.f32 %v425, %v599
      %v634 = vadd.f32 %v426, %v600
      %v635 = vadd.f32 %v427, %v601
      %v636 = vadd.f32 %v428, %v602
      %v637 = vadd.f32 %v429, %v603
      %v638 = vadd.f32 %v430, %v604
      %v639 = vadd.f32 %v431, %v605
      %v640 = vadd.f32 %v432, %v606
      %v641 = vadd.f32 %v433, %v607
      %v642 = vadd.f32 %v434, %v608
      %v643 = vadd.f32 %v435, %v609
      %v644 = vadd.f32 %v436, %v610
      %v645 = vadd.f32 %v437, %v611
      %v646 = vadd.f32 %v438, %v612
      %v647 = vadd.f32 %v439, %v613
      %v648 = vadd.f32 %v440, %v614
      %v649 = vadd.f32 %v441, %v615
      %v650 = vadd.f32 %v442, %v616
      %v651 = vadd.f32 %v443, %v617
      %v652 = vadd.f32 %v444, %v618
      %v653 = vadd.f32 %v445, %v619
      %v654 = vadd.f32 %v446, %v620
      %v655 = vadd.f32 %v447, %v621
      %656 = vset.pattern.permute.xlu0 2
      %657 = vperm.xlu0 %656, %v171
      %v658 = vpop.permute.xlu0 %657
      %660 = vset.pattern.permute.xlu0 2
      %661 = vperm.xlu0 %660, %v172
      %v662 = vpop.permute.xlu0 %661
      %664 = vset.pattern.permute.xlu0 2
      %665 = vperm.xlu0 %664, %v173
      %v666 = vpop.permute.xlu0 %665
      %668 = vset.pattern.permute.xlu0 2
      %669 = vperm.xlu0 %668, %v174
      %v670 = vpop.permute.xlu0 %669
      %672 = vset.pattern.permute.xlu0 2
      %673 = vperm.xlu0 %672, %v175
      %v674 = vpop.permute.xlu0 %673
      %676 = vset.pattern.permute.xlu0 2
      %677 = vperm.xlu0 %676, %v176
      %v678 = vpop.permute.xlu0 %677
      %680 = vset.pattern.permute.xlu0 2
      %681 = vperm.xlu0 %680, %v177
      %v682 = vpop.permute.xlu0 %681
      %684 = vset.pattern.permute.xlu0 2
      %685 = vperm.xlu0 %684, %v178
      %v686 = vpop.permute.xlu0 %685
      %688 = vset.pattern.permute.xlu0 2
      %689 = vperm.xlu0 %688, %v179
      %v690 = vpop.permute.xlu0 %689
      %692 = vset.pattern.permute.xlu0 2
      %693 = vperm.xlu0 %692, %v180
      %v694 = vpop.permute.xlu0 %693
      %696 = vset.pattern.permute.xlu0 2
      %697 = vperm.xlu0 %696, %v181
      %v698 = vpop.permute.xlu0 %697
      %700 = vset.pattern.permute.xlu0 2
      %701 = vperm.xlu0 %700, %v182
      %v702 = vpop.permute.xlu0 %701
      %704 = vset.pattern.permute.xlu0 2
      %705 = vperm.xlu0 %704, %v183
      %v706 = vpop.permute.xlu0 %705
      %708 = vset.pattern.permute.xlu0 2
      %709 = vperm.xlu0 %708, %v184
      %v710 = vpop.permute.xlu0 %709
      %712 = vset.pattern.permute.xlu0 2
      %713 = vperm.xlu0 %712, %v185
      %v714 = vpop.permute.xlu0 %713
      %716 = vset.pattern.permute.xlu0 2
      %717 = vperm.xlu0 %716, %v186
      %v718 = vpop.permute.xlu0 %717
      %720 = vset.pattern.permute.xlu0 2
      %721 = vperm.xlu0 %720, %v187
      %v722 = vpop.permute.xlu0 %721
      %724 = vset.pattern.permute.xlu0 2
      %725 = vperm.xlu0 %724, %v188
      %v726 = vpop.permute.xlu0 %725
      %728 = vset.pattern.permute.xlu0 2
      %729 = vperm.xlu0 %728, %v189
      %v730 = vpop.permute.xlu0 %729
      %732 = vset.pattern.permute.xlu0 2
      %733 = vperm.xlu0 %732, %v190
      %v734 = vpop.permute.xlu0 %733
      %736 = vset.pattern.permute.xlu0 2
      %737 = vperm.xlu0 %736, %v191
      %v738 = vpop.permute.xlu0 %737
      %740 = vset.pattern.permute.xlu0 2
      %741 = vperm.xlu0 %740, %v192
      %v742 = vpop.permute.xlu0 %741
      %744 = vset.pattern.permute.xlu0 2
      %745 = vperm.xlu0 %744, %v193
      %v746 = vpop.permute.xlu0 %745
      %748 = vset.pattern.permute.xlu0 2
      %749 = vperm.xlu0 %748, %v194
      %v750 = vpop.permute.xlu0 %749
      %752 = vset.pattern.permute.xlu0 2
      %753 = vperm.xlu0 %752, %v195
      %v754 = vpop.permute.xlu0 %753
      %756 = vset.pattern.permute.xlu0 2
      %757 = vperm.xlu0 %756, %v196
      %v758 = vpop.permute.xlu0 %757
      %760 = vset.pattern.permute.xlu0 2
      %761 = vperm.xlu0 %760, %v197
      %v762 = vpop.permute.xlu0 %761
      %764 = vset.pattern.permute.xlu0 2
      %765 = vperm.xlu0 %764, %v198
      %v766 = vpop.permute.xlu0 %765
      %768 = vset.pattern.permute.xlu0 2
      %769 = vperm.xlu0 %768, %v199
      %v770 = vpop.permute.xlu0 %769
      %772 = vset.pattern.permute.xlu0 2
      %773 = vperm.xlu0 %772, %v200
      %v774 = vpop.permute.xlu0 %773
      %776 = vset.pattern.permute.xlu0 2
      %777 = vperm.xlu0 %776, %v201
      %v778 = vpop.permute.xlu0 %777
      %780 = vset.pattern.permute.xlu0 2
      %781 = vperm.xlu0 %780, %v202
      %v782 = vpop.permute.xlu0 %781
      %784 = vset.pattern.permute.xlu0 2
      %785 = vperm.xlu0 %784, %v203
      %v786 = vpop.permute.xlu0 %785
      %788 = vset.pattern.permute.xlu0 2
      %789 = vperm.xlu0 %788, %v204
      %v790 = vpop.permute.xlu0 %789
      %v792 = vlaneseq
      %v793 = vshrl.u32 %v792, 7
      %v794 = vsub.s32 2, %v793
      %v795 = vrot.slane %v205, %v794
      %v796 = vmul.f32 %v658, %v795
      %v797 = vmul.f32 %v662, %v795
      %v798 = vmul.f32 %v666, %v795
      %v799 = vmul.f32 %v670, %v795
      %v800 = vmul.f32 %v674, %v795
      %v801 = vmul.f32 %v678, %v795
      %v802 = vmul.f32 %v682, %v795
      %v803 = vmul.f32 %v686, %v795
      %v804 = vmul.f32 %v690, %v795
      %v805 = vmul.f32 %v694, %v795
      %v806 = vmul.f32 %v698, %v795
      %v807 = vmul.f32 %v702, %v795
      %v808 = vmul.f32 %v706, %v795
      %v809 = vmul.f32 %v710, %v795
      %v810 = vmul.f32 %v714, %v795
      %v811 = vmul.f32 %v718, %v795
      %v812 = vmul.f32 %v722, %v795
      %v813 = vmul.f32 %v726, %v795
      %v814 = vmul.f32 %v730, %v795
      %v815 = vmul.f32 %v734, %v795
      %v816 = vmul.f32 %v738, %v795
      %v817 = vmul.f32 %v742, %v795
      %v818 = vmul.f32 %v746, %v795
      %v819 = vmul.f32 %v750, %v795
      %v820 = vmul.f32 %v754, %v795
      %v821 = vmul.f32 %v758, %v795
      %v822 = vmul.f32 %v762, %v795
      %v823 = vmul.f32 %v766, %v795
      %v824 = vmul.f32 %v770, %v795
      %v825 = vmul.f32 %v774, %v795
      %v826 = vmul.f32 %v778, %v795
      %v827 = vmul.f32 %v782, %v795
      %v828 = vmul.f32 %v786, %v795
      %v829 = vmul.f32 %v790, %v795
      %v830 = vadd.f32 %v622, %v796
      %v831 = vadd.f32 %v623, %v797
      %v832 = vadd.f32 %v624, %v798
      %v833 = vadd.f32 %v625, %v799
      %v834 = vadd.f32 %v626, %v800
      %v835 = vadd.f32 %v627, %v801
      %v836 = vadd.f32 %v628, %v802
      %v837 = vadd.f32 %v629, %v803
      %v838 = vadd.f32 %v630, %v804
      %v839 = vadd.f32 %v631, %v805
      %v840 = vadd.f32 %v632, %v806
      %v841 = vadd.f32 %v633, %v807
      %v842 = vadd.f32 %v634, %v808
      %v843 = vadd.f32 %v635, %v809
      %v844 = vadd.f32 %v636, %v810
      %v845 = vadd.f32 %v637, %v811
      %v846 = vadd.f32 %v638, %v812
      %v847 = vadd.f32 %v639, %v813
      %v848 = vadd.f32 %v640, %v814
      %v849 = vadd.f32 %v641, %v815
      %v850 = vadd.f32 %v642, %v816
      %v851 = vadd.f32 %v643, %v817
      %v852 = vadd.f32 %v644, %v818
      %v853 = vadd.f32 %v645, %v819
      %v854 = vadd.f32 %v646, %v820
      %v855 = vadd.f32 %v647, %v821
      %v856 = vadd.f32 %v648, %v822
      %v857 = vadd.f32 %v649, %v823
      %v858 = vadd.f32 %v650, %v824
      %v859 = vadd.f32 %v651, %v825
      %v860 = vadd.f32 %v652, %v826
      %v861 = vadd.f32 %v653, %v827
      %v862 = vadd.f32 %v654, %v828
      %v863 = vadd.f32 %v655, %v829
      %864 = vset.pattern.permute.xlu0 3
      %865 = vperm.xlu0 %864, %v171
      %v866 = vpop.permute.xlu0 %865
      %868 = vset.pattern.permute.xlu0 3
      %869 = vperm.xlu0 %868, %v172
      %v870 = vpop.permute.xlu0 %869
      %872 = vset.pattern.permute.xlu0 3
      %873 = vperm.xlu0 %872, %v173
      %v874 = vpop.permute.xlu0 %873
      %876 = vset.pattern.permute.xlu0 3
      %877 = vperm.xlu0 %876, %v174
      %v878 = vpop.permute.xlu0 %877
      %880 = vset.pattern.permute.xlu0 3
      %881 = vperm.xlu0 %880, %v175
      %v882 = vpop.permute.xlu0 %881
      %884 = vset.pattern.permute.xlu0 3
      %885 = vperm.xlu0 %884, %v176
      %v886 = vpop.permute.xlu0 %885
      %888 = vset.pattern.permute.xlu0 3
      %889 = vperm.xlu0 %888, %v177
      %v890 = vpop.permute.xlu0 %889
      %892 = vset.pattern.permute.xlu0 3
      %893 = vperm.xlu0 %892, %v178
      %v894 = vpop.permute.xlu0 %893
      %896 = vset.pattern.permute.xlu0 3
      %897 = vperm.xlu0 %896, %v179
      %v898 = vpop.permute.xlu0 %897
      %900 = vset.pattern.permute.xlu0 3
      %901 = vperm.xlu0 %900, %v180
      %v902 = vpop.permute.xlu0 %901
      %904 = vset.pattern.permute.xlu0 3
      %905 = vperm.xlu0 %904, %v181
      %v906 = vpop.permute.xlu0 %905
      %908 = vset.pattern.permute.xlu0 3
      %909 = vperm.xlu0 %908, %v182
      %v910 = vpop.permute.xlu0 %909
      %912 = vset.pattern.permute.xlu0 3
      %913 = vperm.xlu0 %912, %v183
      %v914 = vpop.permute.xlu0 %913
      %916 = vset.pattern.permute.xlu0 3
      %917 = vperm.xlu0 %916, %v184
      %v918 = vpop.permute.xlu0 %917
      %920 = vset.pattern.permute.xlu0 3
      %921 = vperm.xlu0 %920, %v185
      %v922 = vpop.permute.xlu0 %921
      %924 = vset.pattern.permute.xlu0 3
      %925 = vperm.xlu0 %924, %v186
      %v926 = vpop.permute.xlu0 %925
      %928 = vset.pattern.permute.xlu0 3
      %929 = vperm.xlu0 %928, %v187
      %v930 = vpop.permute.xlu0 %929
      %932 = vset.pattern.permute.xlu0 3
      %933 = vperm.xlu0 %932, %v188
      %v934 = vpop.permute.xlu0 %933
      %936 = vset.pattern.permute.xlu0 3
      %937 = vperm.xlu0 %936, %v189
      %v938 = vpop.permute.xlu0 %937
      %940 = vset.pattern.permute.xlu0 3
      %941 = vperm.xlu0 %940, %v190
      %v942 = vpop.permute.xlu0 %941
      %944 = vset.pattern.permute.xlu0 3
      %945 = vperm.xlu0 %944, %v191
      %v946 = vpop.permute.xlu0 %945
      %948 = vset.pattern.permute.xlu0 3
      %949 = vperm.xlu0 %948, %v192
      %v950 = vpop.permute.xlu0 %949
      %952 = vset.pattern.permute.xlu0 3
      %953 = vperm.xlu0 %952, %v193
      %v954 = vpop.permute.xlu0 %953
      %956 = vset.pattern.permute.xlu0 3
      %957 = vperm.xlu0 %956, %v194
      %v958 = vpop.permute.xlu0 %957
      %960 = vset.pattern.permute.xlu0 3
      %961 = vperm.xlu0 %960, %v195
      %v962 = vpop.permute.xlu0 %961
      %964 = vset.pattern.permute.xlu0 3
      %965 = vperm.xlu0 %964, %v196
      %v966 = vpop.permute.xlu0 %965
      %968 = vset.pattern.permute.xlu0 3
      %969 = vperm.xlu0 %968, %v197
      %v970 = vpop.permute.xlu0 %969
      %972 = vset.pattern.permute.xlu0 3
      %973 = vperm.xlu0 %972, %v198
      %v974 = vpop.permute.xlu0 %973
      %976 = vset.pattern.permute.xlu0 3
      %977 = vperm.xlu0 %976, %v199
      %v978 = vpop.permute.xlu0 %977
      %980 = vset.pattern.permute.xlu0 3
      %981 = vperm.xlu0 %980, %v200
      %v982 = vpop.permute.xlu0 %981
      %984 = vset.pattern.permute.xlu0 3
      %985 = vperm.xlu0 %984, %v201
      %v986 = vpop.permute.xlu0 %985
      %988 = vset.pattern.permute.xlu0 3
      %989 = vperm.xlu0 %988, %v202
      %v990 = vpop.permute.xlu0 %989
      %992 = vset.pattern.permute.xlu0 3
      %993 = vperm.xlu0 %992, %v203
      %v994 = vpop.permute.xlu0 %993
      %996 = vset.pattern.permute.xlu0 3
      %997 = vperm.xlu0 %996, %v204
      %v998 = vpop.permute.xlu0 %997
      %v1000 = vlaneseq
      %v1001 = vshrl.u32 %v1000, 7
      %v1002 = vsub.s32 3, %v1001
      %v1003 = vrot.slane %v205, %v1002
      %v1004 = vmul.f32 %v866, %v1003
      %v1005 = vmul.f32 %v870, %v1003
      %v1006 = vmul.f32 %v874, %v1003
      %v1007 = vmul.f32 %v878, %v1003
      %v1008 = vmul.f32 %v882, %v1003
      %v1009 = vmul.f32 %v886, %v1003
      %v1010 = vmul.f32 %v890, %v1003
      %v1011 = vmul.f32 %v894, %v1003
      %v1012 = vmul.f32 %v898, %v1003
      %v1013 = vmul.f32 %v902, %v1003
      %v1014 = vmul.f32 %v906, %v1003
      %v1015 = vmul.f32 %v910, %v1003
      %v1016 = vmul.f32 %v914, %v1003
      %v1017 = vmul.f32 %v918, %v1003
      %v1018 = vmul.f32 %v922, %v1003
      %v1019 = vmul.f32 %v926, %v1003
      %v1020 = vmul.f32 %v930, %v1003
      %v1021 = vmul.f32 %v934, %v1003
      %v1022 = vmul.f32 %v938, %v1003
      %v1023 = vmul.f32 %v942, %v1003
      %v1024 = vmul.f32 %v946, %v1003
      %v1025 = vmul.f32 %v950, %v1003
      %v1026 = vmul.f32 %v954, %v1003
      %v1027 = vmul.f32 %v958, %v1003
      %v1028 = vmul.f32 %v962, %v1003
      %v1029 = vmul.f32 %v966, %v1003
      %v1030 = vmul.f32 %v970, %v1003
      %v1031 = vmul.f32 %v974, %v1003
      %v1032 = vmul.f32 %v978, %v1003
      %v1033 = vmul.f32 %v982, %v1003
      %v1034 = vmul.f32 %v986, %v1003
      %v1035 = vmul.f32 %v990, %v1003
      %v1036 = vmul.f32 %v994, %v1003
      %v1037 = vmul.f32 %v998, %v1003
      %v1038 = vadd.f32 %v830, %v1004
      %v1039 = vadd.f32 %v831, %v1005
      %v1040 = vadd.f32 %v832, %v1006
      %v1041 = vadd.f32 %v833, %v1007
      %v1042 = vadd.f32 %v834, %v1008
      %v1043 = vadd.f32 %v835, %v1009
      %v1044 = vadd.f32 %v836, %v1010
      %v1045 = vadd.f32 %v837, %v1011
      %v1046 = vadd.f32 %v838, %v1012
      %v1047 = vadd.f32 %v839, %v1013
      %v1048 = vadd.f32 %v840, %v1014
      %v1049 = vadd.f32 %v841, %v1015
      %v1050 = vadd.f32 %v842, %v1016
      %v1051 = vadd.f32 %v843, %v1017
      %v1052 = vadd.f32 %v844, %v1018
      %v1053 = vadd.f32 %v845, %v1019
      %v1054 = vadd.f32 %v846, %v1020
      %v1055 = vadd.f32 %v847, %v1021
      %v1056 = vadd.f32 %v848, %v1022
      %v1057 = vadd.f32 %v849, %v1023
      %v1058 = vadd.f32 %v850, %v1024
      %v1059 = vadd.f32 %v851, %v1025
      %v1060 = vadd.f32 %v852, %v1026
      %v1061 = vadd.f32 %v853, %v1027
      %v1062 = vadd.f32 %v854, %v1028
      %v1063 = vadd.f32 %v855, %v1029
      %v1064 = vadd.f32 %v856, %v1030
      %v1065 = vadd.f32 %v857, %v1031
      %v1066 = vadd.f32 %v858, %v1032
      %v1067 = vadd.f32 %v859, %v1033
      %v1068 = vadd.f32 %v860, %v1034
      %v1069 = vadd.f32 %v861, %v1035
      %v1070 = vadd.f32 %v862, %v1036
      %v1071 = vadd.f32 %v863, %v1037
      %v1072 = vld [vmem:[%s165 + $0x1] sm:$0xff]
      %v1073 = vld [vmem:[%s165 + $0x9] sm:$0xff]
      %v1074 = vld [vmem:[%s165 + $0x11] sm:$0xff]
      %v1075 = vld [vmem:[%s165 + $0x19] sm:$0xff]
      %v1076 = vld [vmem:[%s165 + $0x21] sm:$0xff]
      %v1077 = vld [vmem:[%s165 + $0x29] sm:$0xff]
      %v1078 = vld [vmem:[%s165 + $0x31] sm:$0xff]
      %v1079 = vld [vmem:[%s165 + $0x39] sm:$0xff]
      %v1080 = vld [vmem:[%s165 + $0x41] sm:$0xff]
      %v1081 = vld [vmem:[%s165 + $0x49] sm:$0xff]
      %v1082 = vld [vmem:[%s165 + $0x51] sm:$0xff]
      %v1083 = vld [vmem:[%s165 + $0x59] sm:$0xff]
      %v1084 = vld [vmem:[%s165 + $0x61] sm:$0xff]
      %v1085 = vld [vmem:[%s165 + $0x69] sm:$0xff]
      %v1086 = vld [vmem:[%s165 + $0x71] sm:$0xff]
      %v1087 = vld [vmem:[%s165 + $0x79] sm:$0xff]
      %v1088 = vld [vmem:[%s165 + $0x81] sm:$0xff]
      %v1089 = vld [vmem:[%s165 + $0x89] sm:$0xff]
      %v1090 = vld [vmem:[%s165 + $0x91] sm:$0xff]
      %v1091 = vld [vmem:[%s165 + $0x99] sm:$0xff]
      %v1092 = vld [vmem:[%s165 + $0xa1] sm:$0xff]
      %v1093 = vld [vmem:[%s165 + $0xa9] sm:$0xff]
      %v1094 = vld [vmem:[%s165 + $0xb1] sm:$0xff]
      %v1095 = vld [vmem:[%s165 + $0xb9] sm:$0xff]
      %v1096 = vld [vmem:[%s165 + $0xc1] sm:$0xff]
      %v1097 = vld [vmem:[%s165 + $0xc9] sm:$0xff]
      %v1098 = vld [vmem:[%s165 + $0xd1] sm:$0xff]
      %v1099 = vld [vmem:[%s165 + $0xd9] sm:$0xff]
      %v1100 = vld [vmem:[%s165 + $0xe1] sm:$0xff]
      %v1101 = vld [vmem:[%s165 + $0xe9] sm:$0xff]
      %v1102 = vld [vmem:[%s165 + $0xf1] sm:$0xff]
      %v1103 = vld [vmem:[%s165 + $0xf9] sm:$0xff]
      %v1104 = vld [vmem:[%s165 + $0x101] sm:$0xff]
      %v1105 = vld [vmem:[%s165 + $0x109] sm:$0xff]
      %s1106 = scalar_lea.vmem %s1, 4
      %v1107 = vld [vmem:[%s1106] sm:$0xf]
      %1109 = vset.pattern.permute.xlu0 0
      %1110 = vperm.xlu0 %1109, %v1072
      %v1111 = vpop.permute.xlu0 %1110
      %1114 = vset.pattern.permute.xlu0 0
      %1115 = vperm.xlu0 %1114, %v1073
      %v1116 = vpop.permute.xlu0 %1115
      %1119 = vset.pattern.permute.xlu0 0
      %1120 = vperm.xlu0 %1119, %v1074
      %v1121 = vpop.permute.xlu0 %1120
      %1124 = vset.pattern.permute.xlu0 0
      %1125 = vperm.xlu0 %1124, %v1075
      %v1126 = vpop.permute.xlu0 %1125
      %1129 = vset.pattern.permute.xlu0 0
      %1130 = vperm.xlu0 %1129, %v1076
      %v1131 = vpop.permute.xlu0 %1130
      %1134 = vset.pattern.permute.xlu0 0
      %1135 = vperm.xlu0 %1134, %v1077
      %v1136 = vpop.permute.xlu0 %1135
      %1139 = vset.pattern.permute.xlu0 0
      %1140 = vperm.xlu0 %1139, %v1078
      %v1141 = vpop.permute.xlu0 %1140
      %1144 = vset.pattern.permute.xlu0 0
      %1145 = vperm.xlu0 %1144, %v1079
      %v1146 = vpop.permute.xlu0 %1145
      %1149 = vset.pattern.permute.xlu0 0
      %1150 = vperm.xlu0 %1149, %v1080
      %v1151 = vpop.permute.xlu0 %1150
      %1154 = vset.pattern.permute.xlu0 0
      %1155 = vperm.xlu0 %1154, %v1081
      %v1156 = vpop.permute.xlu0 %1155
      %1159 = vset.pattern.permute.xlu0 0
      %1160 = vperm.xlu0 %1159, %v1082
      %v1161 = vpop.permute.xlu0 %1160
      %1164 = vset.pattern.permute.xlu0 0
      %1165 = vperm.xlu0 %1164, %v1083
      %v1166 = vpop.permute.xlu0 %1165
      %1169 = vset.pattern.permute.xlu0 0
      %1170 = vperm.xlu0 %1169, %v1084
      %v1171 = vpop.permute.xlu0 %1170
      %1174 = vset.pattern.permute.xlu0 0
      %1175 = vperm.xlu0 %1174, %v1085
      %v1176 = vpop.permute.xlu0 %1175
      %1179 = vset.pattern.permute.xlu0 0
      %1180 = vperm.xlu0 %1179, %v1086
      %v1181 = vpop.permute.xlu0 %1180
      %1184 = vset.pattern.permute.xlu0 0
      %1185 = vperm.xlu0 %1184, %v1087
      %v1186 = vpop.permute.xlu0 %1185
      %1189 = vset.pattern.permute.xlu0 0
      %1190 = vperm.xlu0 %1189, %v1088
      %v1191 = vpop.permute.xlu0 %1190
      %1194 = vset.pattern.permute.xlu0 0
      %1195 = vperm.xlu0 %1194, %v1089
      %v1196 = vpop.permute.xlu0 %1195
      %1199 = vset.pattern.permute.xlu0 0
      %1200 = vperm.xlu0 %1199, %v1090
      %v1201 = vpop.permute.xlu0 %1200
      %1204 = vset.pattern.permute.xlu0 0
      %1205 = vperm.xlu0 %1204, %v1091
      %v1206 = vpop.permute.xlu0 %1205
      %1209 = vset.pattern.permute.xlu0 0
      %1210 = vperm.xlu0 %1209, %v1092
      %v1211 = vpop.permute.xlu0 %1210
      %1214 = vset.pattern.permute.xlu0 0
      %1215 = vperm.xlu0 %1214, %v1093
      %v1216 = vpop.permute.xlu0 %1215
      %1219 = vset.pattern.permute.xlu0 0
      %1220 = vperm.xlu0 %1219, %v1094
      %v1221 = vpop.permute.xlu0 %1220
      %1224 = vset.pattern.permute.xlu0 0
      %1225 = vperm.xlu0 %1224, %v1095
      %v1226 = vpop.permute.xlu0 %1225
      %1229 = vset.pattern.permute.xlu0 0
      %1230 = vperm.xlu0 %1229, %v1096
      %v1231 = vpop.permute.xlu0 %1230
      %1234 = vset.pattern.permute.xlu0 0
      %1235 = vperm.xlu0 %1234, %v1097
      %v1236 = vpop.permute.xlu0 %1235
      %1239 = vset.pattern.permute.xlu0 0
      %1240 = vperm.xlu0 %1239, %v1098
      %v1241 = vpop.permute.xlu0 %1240
      %1244 = vset.pattern.permute.xlu0 0
      %1245 = vperm.xlu0 %1244, %v1099
      %v1246 = vpop.permute.xlu0 %1245
      %1249 = vset.pattern.permute.xlu0 0
      %1250 = vperm.xlu0 %1249, %v1100
      %v1251 = vpop.permute.xlu0 %1250
      %1254 = vset.pattern.permute.xlu0 0
      %1255 = vperm.xlu0 %1254, %v1101
      %v1256 = vpop.permute.xlu0 %1255
      %1259 = vset.pattern.permute.xlu0 0
      %1260 = vperm.xlu0 %1259, %v1102
      %v1261 = vpop.permute.xlu0 %1260
      %1264 = vset.pattern.permute.xlu0 0
      %1265 = vperm.xlu0 %1264, %v1103
      %v1266 = vpop.permute.xlu0 %1265
      %1269 = vset.pattern.permute.xlu0 0
      %1270 = vperm.xlu0 %1269, %v1104
      %v1271 = vpop.permute.xlu0 %1270
      %1274 = vset.pattern.permute.xlu0 0
      %1275 = vperm.xlu0 %1274, %v1105
      %v1276 = vpop.permute.xlu0 %1275
      %v1278 = vlaneseq
      %v1279 = vshrl.u32 %v1278, 7
      %v1280 = vsub.s32 0, %v1279
      %v1281 = vrot.slane %v1107, %v1280
      %v1282 = vmul.f32 %v1111, %v1281
      %v1283 = vmul.f32 %v1116, %v1281
      %v1284 = vmul.f32 %v1121, %v1281
      %v1285 = vmul.f32 %v1126, %v1281
      %v1286 = vmul.f32 %v1131, %v1281
      %v1287 = vmul.f32 %v1136, %v1281
      %v1288 = vmul.f32 %v1141, %v1281
      %v1289 = vmul.f32 %v1146, %v1281
      %v1290 = vmul.f32 %v1151, %v1281
      %v1291 = vmul.f32 %v1156, %v1281
      %v1292 = vmul.f32 %v1161, %v1281
      %v1293 = vmul.f32 %v1166, %v1281
      %v1294 = vmul.f32 %v1171, %v1281
      %v1295 = vmul.f32 %v1176, %v1281
      %v1296 = vmul.f32 %v1181, %v1281
      %v1297 = vmul.f32 %v1186, %v1281
      %v1298 = vmul.f32 %v1191, %v1281
      %v1299 = vmul.f32 %v1196, %v1281
      %v1300 = vmul.f32 %v1201, %v1281
      %v1301 = vmul.f32 %v1206, %v1281
      %v1302 = vmul.f32 %v1211, %v1281
      %v1303 = vmul.f32 %v1216, %v1281
      %v1304 = vmul.f32 %v1221, %v1281
      %v1305 = vmul.f32 %v1226, %v1281
      %v1306 = vmul.f32 %v1231, %v1281
      %v1307 = vmul.f32 %v1236, %v1281
      %v1308 = vmul.f32 %v1241, %v1281
      %v1309 = vmul.f32 %v1246, %v1281
      %v1310 = vmul.f32 %v1251, %v1281
      %v1311 = vmul.f32 %v1256, %v1281
      %v1312 = vmul.f32 %v1261, %v1281
      %v1313 = vmul.f32 %v1266, %v1281
      %v1314 = vmul.f32 %v1271, %v1281
      %v1315 = vmul.f32 %v1276, %v1281
      %v1316 = vadd.f32 %v1038, %v1282
      %v1317 = vadd.f32 %v1039, %v1283
      %v1318 = vadd.f32 %v1040, %v1284
      %v1319 = vadd.f32 %v1041, %v1285
      %v1320 = vadd.f32 %v1042, %v1286
      %v1321 = vadd.f32 %v1043, %v1287
      %v1322 = vadd.f32 %v1044, %v1288
      %v1323 = vadd.f32 %v1045, %v1289
      %v1324 = vadd.f32 %v1046, %v1290
      %v1325 = vadd.f32 %v1047, %v1291
      %v1326 = vadd.f32 %v1048, %v1292
      %v1327 = vadd.f32 %v1049, %v1293
      %v1328 = vadd.f32 %v1050, %v1294
      %v1329 = vadd.f32 %v1051, %v1295
      %v1330 = vadd.f32 %v1052, %v1296
      %v1331 = vadd.f32 %v1053, %v1297
      %v1332 = vadd.f32 %v1054, %v1298
      %v1333 = vadd.f32 %v1055, %v1299
      %v1334 = vadd.f32 %v1056, %v1300
      %v1335 = vadd.f32 %v1057, %v1301
      %v1336 = vadd.f32 %v1058, %v1302
      %v1337 = vadd.f32 %v1059, %v1303
      %v1338 = vadd.f32 %v1060, %v1304
      %v1339 = vadd.f32 %v1061, %v1305
      %v1340 = vadd.f32 %v1062, %v1306
      %v1341 = vadd.f32 %v1063, %v1307
      %v1342 = vadd.f32 %v1064, %v1308
      %v1343 = vadd.f32 %v1065, %v1309
      %v1344 = vadd.f32 %v1066, %v1310
      %v1345 = vadd.f32 %v1067, %v1311
      %v1346 = vadd.f32 %v1068, %v1312
      %v1347 = vadd.f32 %v1069, %v1313
      %v1348 = vadd.f32 %v1070, %v1314
      %v1349 = vadd.f32 %v1071, %v1315
      %1350 = vset.pattern.permute.xlu0 1
      %1351 = vperm.xlu0 %1350, %v1072
      %v1352 = vpop.permute.xlu0 %1351
      %1354 = vset.pattern.permute.xlu0 1
      %1355 = vperm.xlu0 %1354, %v1073
      %v1356 = vpop.permute.xlu0 %1355
      %1358 = vset.pattern.permute.xlu0 1
      %1359 = vperm.xlu0 %1358, %v1074
      %v1360 = vpop.permute.xlu0 %1359
      %1362 = vset.pattern.permute.xlu0 1
      %1363 = vperm.xlu0 %1362, %v1075
      %v1364 = vpop.permute.xlu0 %1363
      %1366 = vset.pattern.permute.xlu0 1
      %1367 = vperm.xlu0 %1366, %v1076
      %v1368 = vpop.permute.xlu0 %1367
      %1370 = vset.pattern.permute.xlu0 1
      %1371 = vperm.xlu0 %1370, %v1077
      %v1372 = vpop.permute.xlu0 %1371
      %1374 = vset.pattern.permute.xlu0 1
      %1375 = vperm.xlu0 %1374, %v1078
      %v1376 = vpop.permute.xlu0 %1375
      %1378 = vset.pattern.permute.xlu0 1
      %1379 = vperm.xlu0 %1378, %v1079
      %v1380 = vpop.permute.xlu0 %1379
      %1382 = vset.pattern.permute.xlu0 1
      %1383 = vperm.xlu0 %1382, %v1080
      %v1384 = vpop.permute.xlu0 %1383
      %1386 = vset.pattern.permute.xlu0 1
      %1387 = vperm.xlu0 %1386, %v1081
      %v1388 = vpop.permute.xlu0 %1387
      %1390 = vset.pattern.permute.xlu0 1
      %1391 = vperm.xlu0 %1390, %v1082
      %v1392 = vpop.permute.xlu0 %1391
      %1394 = vset.pattern.permute.xlu0 1
      %1395 = vperm.xlu0 %1394, %v1083
      %v1396 = vpop.permute.xlu0 %1395
      %1398 = vset.pattern.permute.xlu0 1
      %1399 = vperm.xlu0 %1398, %v1084
      %v1400 = vpop.permute.xlu0 %1399
      %1402 = vset.pattern.permute.xlu0 1
      %1403 = vperm.xlu0 %1402, %v1085
      %v1404 = vpop.permute.xlu0 %1403
      %1406 = vset.pattern.permute.xlu0 1
      %1407 = vperm.xlu0 %1406, %v1086
      %v1408 = vpop.permute.xlu0 %1407
      %1410 = vset.pattern.permute.xlu0 1
      %1411 = vperm.xlu0 %1410, %v1087
      %v1412 = vpop.permute.xlu0 %1411
      %1414 = vset.pattern.permute.xlu0 1
      %1415 = vperm.xlu0 %1414, %v1088
      %v1416 = vpop.permute.xlu0 %1415
      %1418 = vset.pattern.permute.xlu0 1
      %1419 = vperm.xlu0 %1418, %v1089
      %v1420 = vpop.permute.xlu0 %1419
      %1422 = vset.pattern.permute.xlu0 1
      %1423 = vperm.xlu0 %1422, %v1090
      %v1424 = vpop.permute.xlu0 %1423
      %1426 = vset.pattern.permute.xlu0 1
      %1427 = vperm.xlu0 %1426, %v1091
      %v1428 = vpop.permute.xlu0 %1427
      %1430 = vset.pattern.permute.xlu0 1
      %1431 = vperm.xlu0 %1430, %v1092
      %v1432 = vpop.permute.xlu0 %1431
      %1434 = vset.pattern.permute.xlu0 1
      %1435 = vperm.xlu0 %1434, %v1093
      %v1436 = vpop.permute.xlu0 %1435
      %1438 = vset.pattern.permute.xlu0 1
      %1439 = vperm.xlu0 %1438, %v1094
      %v1440 = vpop.permute.xlu0 %1439
      %1442 = vset.pattern.permute.xlu0 1
      %1443 = vperm.xlu0 %1442, %v1095
      %v1444 = vpop.permute.xlu0 %1443
      %1446 = vset.pattern.permute.xlu0 1
      %1447 = vperm.xlu0 %1446, %v1096
      %v1448 = vpop.permute.xlu0 %1447
      %1450 = vset.pattern.permute.xlu0 1
      %1451 = vperm.xlu0 %1450, %v1097
      %v1452 = vpop.permute.xlu0 %1451
      %1454 = vset.pattern.permute.xlu0 1
      %1455 = vperm.xlu0 %1454, %v1098
      %v1456 = vpop.permute.xlu0 %1455
      %1458 = vset.pattern.permute.xlu0 1
      %1459 = vperm.xlu0 %1458, %v1099
      %v1460 = vpop.permute.xlu0 %1459
      %1462 = vset.pattern.permute.xlu0 1
      %1463 = vperm.xlu0 %1462, %v1100
      %v1464 = vpop.permute.xlu0 %1463
      %1466 = vset.pattern.permute.xlu0 1
      %1467 = vperm.xlu0 %1466, %v1101
      %v1468 = vpop.permute.xlu0 %1467
      %1470 = vset.pattern.permute.xlu0 1
      %1471 = vperm.xlu0 %1470, %v1102
      %v1472 = vpop.permute.xlu0 %1471
      %1474 = vset.pattern.permute.xlu0 1
      %1475 = vperm.xlu0 %1474, %v1103
      %v1476 = vpop.permute.xlu0 %1475
      %1478 = vset.pattern.permute.xlu0 1
      %1479 = vperm.xlu0 %1478, %v1104
      %v1480 = vpop.permute.xlu0 %1479
      %1482 = vset.pattern.permute.xlu0 1
      %1483 = vperm.xlu0 %1482, %v1105
      %v1484 = vpop.permute.xlu0 %1483
      %v1486 = vlaneseq
      %v1487 = vshrl.u32 %v1486, 7
      %v1488 = vsub.s32 1, %v1487
      %v1489 = vrot.slane %v1107, %v1488
      %v1490 = vmul.f32 %v1352, %v1489
      %v1491 = vmul.f32 %v1356, %v1489
      %v1492 = vmul.f32 %v1360, %v1489
      %v1493 = vmul.f32 %v1364, %v1489
      %v1494 = vmul.f32 %v1368, %v1489
      %v1495 = vmul.f32 %v1372, %v1489
      %v1496 = vmul.f32 %v1376, %v1489
      %v1497 = vmul.f32 %v1380, %v1489
      %v1498 = vmul.f32 %v1384, %v1489
      %v1499 = vmul.f32 %v1388, %v1489
      %v1500 = vmul.f32 %v1392, %v1489
      %v1501 = vmul.f32 %v1396, %v1489
      %v1502 = vmul.f32 %v1400, %v1489
      %v1503 = vmul.f32 %v1404, %v1489
      %v1504 = vmul.f32 %v1408, %v1489
      %v1505 = vmul.f32 %v1412, %v1489
      %v1506 = vmul.f32 %v1416, %v1489
      %v1507 = vmul.f32 %v1420, %v1489
      %v1508 = vmul.f32 %v1424, %v1489
      %v1509 = vmul.f32 %v1428, %v1489
      %v1510 = vmul.f32 %v1432, %v1489
      %v1511 = vmul.f32 %v1436, %v1489
      %v1512 = vmul.f32 %v1440, %v1489
      %v1513 = vmul.f32 %v1444, %v1489
      %v1514 = vmul.f32 %v1448, %v1489
      %v1515 = vmul.f32 %v1452, %v1489
      %v1516 = vmul.f32 %v1456, %v1489
      %v1517 = vmul.f32 %v1460, %v1489
      %v1518 = vmul.f32 %v1464, %v1489
      %v1519 = vmul.f32 %v1468, %v1489
      %v1520 = vmul.f32 %v1472, %v1489
      %v1521 = vmul.f32 %v1476, %v1489
      %v1522 = vmul.f32 %v1480, %v1489
      %v1523 = vmul.f32 %v1484, %v1489
      %v1524 = vadd.f32 %v1316, %v1490
      %v1525 = vadd.f32 %v1317, %v1491
      %v1526 = vadd.f32 %v1318, %v1492
      %v1527 = vadd.f32 %v1319, %v1493
      %v1528 = vadd.f32 %v1320, %v1494
      %v1529 = vadd.f32 %v1321, %v1495
      %v1530 = vadd.f32 %v1322, %v1496
      %v1531 = vadd.f32 %v1323, %v1497
      %v1532 = vadd.f32 %v1324, %v1498
      %v1533 = vadd.f32 %v1325, %v1499
      %v1534 = vadd.f32 %v1326, %v1500
      %v1535 = vadd.f32 %v1327, %v1501
      %v1536 = vadd.f32 %v1328, %v1502
      %v1537 = vadd.f32 %v1329, %v1503
      %v1538 = vadd.f32 %v1330, %v1504
      %v1539 = vadd.f32 %v1331, %v1505
      %v1540 = vadd.f32 %v1332, %v1506
      %v1541 = vadd.f32 %v1333, %v1507
      %v1542 = vadd.f32 %v1334, %v1508
      %v1543 = vadd.f32 %v1335, %v1509
      %v1544 = vadd.f32 %v1336, %v1510
      %v1545 = vadd.f32 %v1337, %v1511
      %v1546 = vadd.f32 %v1338, %v1512
      %v1547 = vadd.f32 %v1339, %v1513
      %v1548 = vadd.f32 %v1340, %v1514
      %v1549 = vadd.f32 %v1341, %v1515
      %v1550 = vadd.f32 %v1342, %v1516
      %v1551 = vadd.f32 %v1343, %v1517
      %v1552 = vadd.f32 %v1344, %v1518
      %v1553 = vadd.f32 %v1345, %v1519
      %v1554 = vadd.f32 %v1346, %v1520
      %v1555 = vadd.f32 %v1347, %v1521
      %v1556 = vadd.f32 %v1348, %v1522
      %v1557 = vadd.f32 %v1349, %v1523
      %1558 = vset.pattern.permute.xlu0 2
      %1559 = vperm.xlu0 %1558, %v1072
      %v1560 = vpop.permute.xlu0 %1559
      %1562 = vset.pattern.permute.xlu0 2
      %1563 = vperm.xlu0 %1562, %v1073
      %v1564 = vpop.permute.xlu0 %1563
      %1566 = vset.pattern.permute.xlu0 2
      %1567 = vperm.xlu0 %1566, %v1074
      %v1568 = vpop.permute.xlu0 %1567
      %1570 = vset.pattern.permute.xlu0 2
      %1571 = vperm.xlu0 %1570, %v1075
      %v1572 = vpop.permute.xlu0 %1571
      %1574 = vset.pattern.permute.xlu0 2
      %1575 = vperm.xlu0 %1574, %v1076
      %v1576 = vpop.permute.xlu0 %1575
      %1578 = vset.pattern.permute.xlu0 2
      %1579 = vperm.xlu0 %1578, %v1077
      %v1580 = vpop.permute.xlu0 %1579
      %1582 = vset.pattern.permute.xlu0 2
      %1583 = vperm.xlu0 %1582, %v1078
      %v1584 = vpop.permute.xlu0 %1583
      %1586 = vset.pattern.permute.xlu0 2
      %1587 = vperm.xlu0 %1586, %v1079
      %v1588 = vpop.permute.xlu0 %1587
      %1590 = vset.pattern.permute.xlu0 2
      %1591 = vperm.xlu0 %1590, %v1080
      %v1592 = vpop.permute.xlu0 %1591
      %1594 = vset.pattern.permute.xlu0 2
      %1595 = vperm.xlu0 %1594, %v1081
      %v1596 = vpop.permute.xlu0 %1595
      %1598 = vset.pattern.permute.xlu0 2
      %1599 = vperm.xlu0 %1598, %v1082
      %v1600 = vpop.permute.xlu0 %1599
      %1602 = vset.pattern.permute.xlu0 2
      %1603 = vperm.xlu0 %1602, %v1083
      %v1604 = vpop.permute.xlu0 %1603
      %1606 = vset.pattern.permute.xlu0 2
      %1607 = vperm.xlu0 %1606, %v1084
      %v1608 = vpop.permute.xlu0 %1607
      %1610 = vset.pattern.permute.xlu0 2
      %1611 = vperm.xlu0 %1610, %v1085
      %v1612 = vpop.permute.xlu0 %1611
      %1614 = vset.pattern.permute.xlu0 2
      %1615 = vperm.xlu0 %1614, %v1086
      %v1616 = vpop.permute.xlu0 %1615
      %1618 = vset.pattern.permute.xlu0 2
      %1619 = vperm.xlu0 %1618, %v1087
      %v1620 = vpop.permute.xlu0 %1619
      %1622 = vset.pattern.permute.xlu0 2
      %1623 = vperm.xlu0 %1622, %v1088
      %v1624 = vpop.permute.xlu0 %1623
      %1626 = vset.pattern.permute.xlu0 2
      %1627 = vperm.xlu0 %1626, %v1089
      %v1628 = vpop.permute.xlu0 %1627
      %1630 = vset.pattern.permute.xlu0 2
      %1631 = vperm.xlu0 %1630, %v1090
      %v1632 = vpop.permute.xlu0 %1631
      %1634 = vset.pattern.permute.xlu0 2
      %1635 = vperm.xlu0 %1634, %v1091
      %v1636 = vpop.permute.xlu0 %1635
      %1638 = vset.pattern.permute.xlu0 2
      %1639 = vperm.xlu0 %1638, %v1092
      %v1640 = vpop.permute.xlu0 %1639
      %1642 = vset.pattern.permute.xlu0 2
      %1643 = vperm.xlu0 %1642, %v1093
      %v1644 = vpop.permute.xlu0 %1643
      %1646 = vset.pattern.permute.xlu0 2
      %1647 = vperm.xlu0 %1646, %v1094
      %v1648 = vpop.permute.xlu0 %1647
      %1650 = vset.pattern.permute.xlu0 2
      %1651 = vperm.xlu0 %1650, %v1095
      %v1652 = vpop.permute.xlu0 %1651
      %1654 = vset.pattern.permute.xlu0 2
      %1655 = vperm.xlu0 %1654, %v1096
      %v1656 = vpop.permute.xlu0 %1655
      %1658 = vset.pattern.permute.xlu0 2
      %1659 = vperm.xlu0 %1658, %v1097
      %v1660 = vpop.permute.xlu0 %1659
      %1662 = vset.pattern.permute.xlu0 2
      %1663 = vperm.xlu0 %1662, %v1098
      %v1664 = vpop.permute.xlu0 %1663
      %1666 = vset.pattern.permute.xlu0 2
      %1667 = vperm.xlu0 %1666, %v1099
      %v1668 = vpop.permute.xlu0 %1667
      %1670 = vset.pattern.permute.xlu0 2
      %1671 = vperm.xlu0 %1670, %v1100
      %v1672 = vpop.permute.xlu0 %1671
      %1674 = vset.pattern.permute.xlu0 2
      %1675 = vperm.xlu0 %1674, %v1101
      %v1676 = vpop.permute.xlu0 %1675
      %1678 = vset.pattern.permute.xlu0 2
      %1679 = vperm.xlu0 %1678, %v1102
      %v1680 = vpop.permute.xlu0 %1679
      %1682 = vset.pattern.permute.xlu0 2
      %1683 = vperm.xlu0 %1682, %v1103
      %v1684 = vpop.permute.xlu0 %1683
      %1686 = vset.pattern.permute.xlu0 2
      %1687 = vperm.xlu0 %1686, %v1104
      %v1688 = vpop.permute.xlu0 %1687
      %1690 = vset.pattern.permute.xlu0 2
      %1691 = vperm.xlu0 %1690, %v1105
      %v1692 = vpop.permute.xlu0 %1691
      %v1694 = vlaneseq
      %v1695 = vshrl.u32 %v1694, 7
      %v1696 = vsub.s32 2, %v1695
      %v1697 = vrot.slane %v1107, %v1696
      %v1698 = vmul.f32 %v1560, %v1697
      %v1699 = vmul.f32 %v1564, %v1697
      %v1700 = vmul.f32 %v1568, %v1697
      %v1701 = vmul.f32 %v1572, %v1697
      %v1702 = vmul.f32 %v1576, %v1697
      %v1703 = vmul.f32 %v1580, %v1697
      %v1704 = vmul.f32 %v1584, %v1697
      %v1705 = vmul.f32 %v1588, %v1697
      %v1706 = vmul.f32 %v1592, %v1697
      %v1707 = vmul.f32 %v1596, %v1697
      %v1708 = vmul.f32 %v1600, %v1697
      %v1709 = vmul.f32 %v1604, %v1697
      %v1710 = vmul.f32 %v1608, %v1697
      %v1711 = vmul.f32 %v1612, %v1697
      %v1712 = vmul.f32 %v1616, %v1697
      %v1713 = vmul.f32 %v1620, %v1697
      %v1714 = vmul.f32 %v1624, %v1697
      %v1715 = vmul.f32 %v1628, %v1697
      %v1716 = vmul.f32 %v1632, %v1697
      %v1717 = vmul.f32 %v1636, %v1697
      %v1718 = vmul.f32 %v1640, %v1697
      %v1719 = vmul.f32 %v1644, %v1697
      %v1720 = vmul.f32 %v1648, %v1697
      %v1721 = vmul.f32 %v1652, %v1697
      %v1722 = vmul.f32 %v1656, %v1697
      %v1723 = vmul.f32 %v1660, %v1697
      %v1724 = vmul.f32 %v1664, %v1697
      %v1725 = vmul.f32 %v1668, %v1697
      %v1726 = vmul.f32 %v1672, %v1697
      %v1727 = vmul.f32 %v1676, %v1697
      %v1728 = vmul.f32 %v1680, %v1697
      %v1729 = vmul.f32 %v1684, %v1697
      %v1730 = vmul.f32 %v1688, %v1697
      %v1731 = vmul.f32 %v1692, %v1697
      %v1732 = vadd.f32 %v1524, %v1698
      %v1733 = vadd.f32 %v1525, %v1699
      %v1734 = vadd.f32 %v1526, %v1700
      %v1735 = vadd.f32 %v1527, %v1701
      %v1736 = vadd.f32 %v1528, %v1702
      %v1737 = vadd.f32 %v1529, %v1703
      %v1738 = vadd.f32 %v1530, %v1704
      %v1739 = vadd.f32 %v1531, %v1705
      %v1740 = vadd.f32 %v1532, %v1706
      %v1741 = vadd.f32 %v1533, %v1707
      %v1742 = vadd.f32 %v1534, %v1708
      %v1743 = vadd.f32 %v1535, %v1709
      %v1744 = vadd.f32 %v1536, %v1710
      %v1745 = vadd.f32 %v1537, %v1711
      %v1746 = vadd.f32 %v1538, %v1712
      %v1747 = vadd.f32 %v1539, %v1713
      %v1748 = vadd.f32 %v1540, %v1714
      %v1749 = vadd.f32 %v1541, %v1715
      %v1750 = vadd.f32 %v1542, %v1716
      %v1751 = vadd.f32 %v1543, %v1717
      %v1752 = vadd.f32 %v1544, %v1718
      %v1753 = vadd.f32 %v1545, %v1719
      %v1754 = vadd.f32 %v1546, %v1720
      %v1755 = vadd.f32 %v1547, %v1721
      %v1756 = vadd.f32 %v1548, %v1722
      %v1757 = vadd.f32 %v1549, %v1723
      %v1758 = vadd.f32 %v1550, %v1724
      %v1759 = vadd.f32 %v1551, %v1725
      %v1760 = vadd.f32 %v1552, %v1726
      %v1761 = vadd.f32 %v1553, %v1727
      %v1762 = vadd.f32 %v1554, %v1728
      %v1763 = vadd.f32 %v1555, %v1729
      %v1764 = vadd.f32 %v1556, %v1730
      %v1765 = vadd.f32 %v1557, %v1731
      %1766 = vset.pattern.permute.xlu0 3
      %1767 = vperm.xlu0 %1766, %v1072
      %v1768 = vpop.permute.xlu0 %1767
      %1770 = vset.pattern.permute.xlu0 3
      %1771 = vperm.xlu0 %1770, %v1073
      %v1772 = vpop.permute.xlu0 %1771
      %1774 = vset.pattern.permute.xlu0 3
      %1775 = vperm.xlu0 %1774, %v1074
      %v1776 = vpop.permute.xlu0 %1775
      %1778 = vset.pattern.permute.xlu0 3
      %1779 = vperm.xlu0 %1778, %v1075
      %v1780 = vpop.permute.xlu0 %1779
      %1782 = vset.pattern.permute.xlu0 3
      %1783 = vperm.xlu0 %1782, %v1076
      %v1784 = vpop.permute.xlu0 %1783
      %1786 = vset.pattern.permute.xlu0 3
      %1787 = vperm.xlu0 %1786, %v1077
      %v1788 = vpop.permute.xlu0 %1787
      %1790 = vset.pattern.permute.xlu0 3
      %1791 = vperm.xlu0 %1790, %v1078
      %v1792 = vpop.permute.xlu0 %1791
      %1794 = vset.pattern.permute.xlu0 3
      %1795 = vperm.xlu0 %1794, %v1079
      %v1796 = vpop.permute.xlu0 %1795
      %1798 = vset.pattern.permute.xlu0 3
      %1799 = vperm.xlu0 %1798, %v1080
      %v1800 = vpop.permute.xlu0 %1799
      %1802 = vset.pattern.permute.xlu0 3
      %1803 = vperm.xlu0 %1802, %v1081
      %v1804 = vpop.permute.xlu0 %1803
      %1806 = vset.pattern.permute.xlu0 3
      %1807 = vperm.xlu0 %1806, %v1082
      %v1808 = vpop.permute.xlu0 %1807
      %1810 = vset.pattern.permute.xlu0 3
      %1811 = vperm.xlu0 %1810, %v1083
      %v1812 = vpop.permute.xlu0 %1811
      %1814 = vset.pattern.permute.xlu0 3
      %1815 = vperm.xlu0 %1814, %v1084
      %v1816 = vpop.permute.xlu0 %1815
      %1818 = vset.pattern.permute.xlu0 3
      %1819 = vperm.xlu0 %1818, %v1085
      %v1820 = vpop.permute.xlu0 %1819
      %1822 = vset.pattern.permute.xlu0 3
      %1823 = vperm.xlu0 %1822, %v1086
      %v1824 = vpop.permute.xlu0 %1823
      %1826 = vset.pattern.permute.xlu0 3
      %1827 = vperm.xlu0 %1826, %v1087
      %v1828 = vpop.permute.xlu0 %1827
      %1830 = vset.pattern.permute.xlu0 3
      %1831 = vperm.xlu0 %1830, %v1088
      %v1832 = vpop.permute.xlu0 %1831
      %1834 = vset.pattern.permute.xlu0 3
      %1835 = vperm.xlu0 %1834, %v1089
      %v1836 = vpop.permute.xlu0 %1835
      %1838 = vset.pattern.permute.xlu0 3
      %1839 = vperm.xlu0 %1838, %v1090
      %v1840 = vpop.permute.xlu0 %1839
      %1842 = vset.pattern.permute.xlu0 3
      %1843 = vperm.xlu0 %1842, %v1091
      %v1844 = vpop.permute.xlu0 %1843
      %1846 = vset.pattern.permute.xlu0 3
      %1847 = vperm.xlu0 %1846, %v1092
      %v1848 = vpop.permute.xlu0 %1847
      %1850 = vset.pattern.permute.xlu0 3
      %1851 = vperm.xlu0 %1850, %v1093
      %v1852 = vpop.permute.xlu0 %1851
      %1854 = vset.pattern.permute.xlu0 3
      %1855 = vperm.xlu0 %1854, %v1094
      %v1856 = vpop.permute.xlu0 %1855
      %1858 = vset.pattern.permute.xlu0 3
      %1859 = vperm.xlu0 %1858, %v1095
      %v1860 = vpop.permute.xlu0 %1859
      %1862 = vset.pattern.permute.xlu0 3
      %1863 = vperm.xlu0 %1862, %v1096
      %v1864 = vpop.permute.xlu0 %1863
      %1866 = vset.pattern.permute.xlu0 3
      %1867 = vperm.xlu0 %1866, %v1097
      %v1868 = vpop.permute.xlu0 %1867
      %1870 = vset.pattern.permute.xlu0 3
      %1871 = vperm.xlu0 %1870, %v1098
      %v1872 = vpop.permute.xlu0 %1871
      %1874 = vset.pattern.permute.xlu0 3
      %1875 = vperm.xlu0 %1874, %v1099
      %v1876 = vpop.permute.xlu0 %1875
      %1878 = vset.pattern.permute.xlu0 3
      %1879 = vperm.xlu0 %1878, %v1100
      %v1880 = vpop.permute.xlu0 %1879
      %1882 = vset.pattern.permute.xlu0 3
      %1883 = vperm.xlu0 %1882, %v1101
      %v1884 = vpop.permute.xlu0 %1883
      %1886 = vset.pattern.permute.xlu0 3
      %1887 = vperm.xlu0 %1886, %v1102
      %v1888 = vpop.permute.xlu0 %1887
      %1890 = vset.pattern.permute.xlu0 3
      %1891 = vperm.xlu0 %1890, %v1103
      %v1892 = vpop.permute.xlu0 %1891
      %1894 = vset.pattern.permute.xlu0 3
      %1895 = vperm.xlu0 %1894, %v1104
      %v1896 = vpop.permute.xlu0 %1895
      %1898 = vset.pattern.permute.xlu0 3
      %1899 = vperm.xlu0 %1898, %v1105
      %v1900 = vpop.permute.xlu0 %1899
      %v1902 = vlaneseq
      %v1903 = vshrl.u32 %v1902, 7
      %v1904 = vsub.s32 3, %v1903
      %v1905 = vrot.slane %v1107, %v1904
      %v1906 = vmul.f32 %v1768, %v1905
      %v1907 = vmul.f32 %v1772, %v1905
      %v1908 = vmul.f32 %v1776, %v1905
      %v1909 = vmul.f32 %v1780, %v1905
      %v1910 = vmul.f32 %v1784, %v1905
      %v1911 = vmul.f32 %v1788, %v1905
      %v1912 = vmul.f32 %v1792, %v1905
      %v1913 = vmul.f32 %v1796, %v1905
      %v1914 = vmul.f32 %v1800, %v1905
      %v1915 = vmul.f32 %v1804, %v1905
      %v1916 = vmul.f32 %v1808, %v1905
      %v1917 = vmul.f32 %v1812, %v1905
      %v1918 = vmul.f32 %v1816, %v1905
      %v1919 = vmul.f32 %v1820, %v1905
      %v1920 = vmul.f32 %v1824, %v1905
      %v1921 = vmul.f32 %v1828, %v1905
      %v1922 = vmul.f32 %v1832, %v1905
      %v1923 = vmul.f32 %v1836, %v1905
      %v1924 = vmul.f32 %v1840, %v1905
      %v1925 = vmul.f32 %v1844, %v1905
      %v1926 = vmul.f32 %v1848, %v1905
      %v1927 = vmul.f32 %v1852, %v1905
      %v1928 = vmul.f32 %v1856, %v1905
      %v1929 = vmul.f32 %v1860, %v1905
      %v1930 = vmul.f32 %v1864, %v1905
      %v1931 = vmul.f32 %v1868, %v1905
      %v1932 = vmul.f32 %v1872, %v1905
      %v1933 = vmul.f32 %v1876, %v1905
      %v1934 = vmul.f32 %v1880, %v1905
      %v1935 = vmul.f32 %v1884, %v1905
      %v1936 = vmul.f32 %v1888, %v1905
      %v1937 = vmul.f32 %v1892, %v1905
      %v1938 = vmul.f32 %v1896, %v1905
      %v1939 = vmul.f32 %v1900, %v1905
      %v1940 = vadd.f32 %v1732, %v1906
      %v1941 = vadd.f32 %v1733, %v1907
      %v1942 = vadd.f32 %v1734, %v1908
      %v1943 = vadd.f32 %v1735, %v1909
      %v1944 = vadd.f32 %v1736, %v1910
      %v1945 = vadd.f32 %v1737, %v1911
      %v1946 = vadd.f32 %v1738, %v1912
      %v1947 = vadd.f32 %v1739, %v1913
      %v1948 = vadd.f32 %v1740, %v1914
      %v1949 = vadd.f32 %v1741, %v1915
      %v1950 = vadd.f32 %v1742, %v1916
      %v1951 = vadd.f32 %v1743, %v1917
      %v1952 = vadd.f32 %v1744, %v1918
      %v1953 = vadd.f32 %v1745, %v1919
      %v1954 = vadd.f32 %v1746, %v1920
      %v1955 = vadd.f32 %v1747, %v1921
      %v1956 = vadd.f32 %v1748, %v1922
      %v1957 = vadd.f32 %v1749, %v1923
      %v1958 = vadd.f32 %v1750, %v1924
      %v1959 = vadd.f32 %v1751, %v1925
      %v1960 = vadd.f32 %v1752, %v1926
      %v1961 = vadd.f32 %v1753, %v1927
      %v1962 = vadd.f32 %v1754, %v1928
      %v1963 = vadd.f32 %v1755, %v1929
      %v1964 = vadd.f32 %v1756, %v1930
      %v1965 = vadd.f32 %v1757, %v1931
      %v1966 = vadd.f32 %v1758, %v1932
      %v1967 = vadd.f32 %v1759, %v1933
      %v1968 = vadd.f32 %v1760, %v1934
      %v1969 = vadd.f32 %v1761, %v1935
      %v1970 = vadd.f32 %v1762, %v1936
      %v1971 = vadd.f32 %v1763, %v1937
      %v1972 = vadd.f32 %v1764, %v1938
      %v1973 = vadd.f32 %v1765, %v1939
      %v1974 = vld [vmem:[%s165 + $0x11] sm:$0xff]
      %v1975 = vld [vmem:[%s165 + $0x19] sm:$0xff]
      %v1976 = vld [vmem:[%s165 + $0x21] sm:$0xff]
      %v1977 = vld [vmem:[%s165 + $0x29] sm:$0xff]
      %v1978 = vld [vmem:[%s165 + $0x31] sm:$0xff]
      %v1979 = vld [vmem:[%s165 + $0x39] sm:$0xff]
      %v1980 = vld [vmem:[%s165 + $0x41] sm:$0xff]
      %v1981 = vld [vmem:[%s165 + $0x49] sm:$0xff]
      %v1982 = vld [vmem:[%s165 + $0x51] sm:$0xff]
      %v1983 = vld [vmem:[%s165 + $0x59] sm:$0xff]
      %v1984 = vld [vmem:[%s165 + $0x61] sm:$0xff]
      %v1985 = vld [vmem:[%s165 + $0x69] sm:$0xff]
      %v1986 = vld [vmem:[%s165 + $0x71] sm:$0xff]
      %v1987 = vld [vmem:[%s165 + $0x79] sm:$0xff]
      %v1988 = vld [vmem:[%s165 + $0x81] sm:$0xff]
      %v1989 = vld [vmem:[%s165 + $0x89] sm:$0xff]
      %v1990 = vld [vmem:[%s165 + $0x91] sm:$0xff]
      %v1991 = vld [vmem:[%s165 + $0x99] sm:$0xff]
      %v1992 = vld [vmem:[%s165 + $0xa1] sm:$0xff]
      %v1993 = vld [vmem:[%s165 + $0xa9] sm:$0xff]
      %v1994 = vld [vmem:[%s165 + $0xb1] sm:$0xff]
      %v1995 = vld [vmem:[%s165 + $0xb9] sm:$0xff]
      %v1996 = vld [vmem:[%s165 + $0xc1] sm:$0xff]
      %v1997 = vld [vmem:[%s165 + $0xc9] sm:$0xff]
      %v1998 = vld [vmem:[%s165 + $0xd1] sm:$0xff]
      %v1999 = vld [vmem:[%s165 + $0xd9] sm:$0xff]
      %v2000 = vld [vmem:[%s165 + $0xe1] sm:$0xff]
      %v2001 = vld [vmem:[%s165 + $0xe9] sm:$0xff]
      %v2002 = vld [vmem:[%s165 + $0xf1] sm:$0xff]
      %v2003 = vld [vmem:[%s165 + $0xf9] sm:$0xff]
      %v2004 = vld [vmem:[%s165 + $0x101] sm:$0xff]
      %v2005 = vld [vmem:[%s165 + $0x109] sm:$0xff]
      %v2006 = vld [vmem:[%s165 + $0x111] sm:$0xff]
      %v2007 = vld [vmem:[%s165 + $0x119] sm:$0xff]
      %s2008 = scalar_lea.vmem %s1, 8
      %v2009 = vld [vmem:[%s2008] sm:$0xf]
      %2011 = vset.pattern.permute.xlu0 0
      %2012 = vperm.xlu0 %2011, %v1974
      %v2013 = vpop.permute.xlu0 %2012
      %2016 = vset.pattern.permute.xlu0 0
      %2017 = vperm.xlu0 %2016, %v1975
      %v2018 = vpop.permute.xlu0 %2017
      %2021 = vset.pattern.permute.xlu0 0
      %2022 = vperm.xlu0 %2021, %v1976
      %v2023 = vpop.permute.xlu0 %2022
      %2026 = vset.pattern.permute.xlu0 0
      %2027 = vperm.xlu0 %2026, %v1977
      %v2028 = vpop.permute.xlu0 %2027
      %2031 = vset.pattern.permute.xlu0 0
      %2032 = vperm.xlu0 %2031, %v1978
      %v2033 = vpop.permute.xlu0 %2032
      %2036 = vset.pattern.permute.xlu0 0
      %2037 = vperm.xlu0 %2036, %v1979
      %v2038 = vpop.permute.xlu0 %2037
      %2041 = vset.pattern.permute.xlu0 0
      %2042 = vperm.xlu0 %2041, %v1980
      %v2043 = vpop.permute.xlu0 %2042
      %2046 = vset.pattern.permute.xlu0 0
      %2047 = vperm.xlu0 %2046, %v1981
      %v2048 = vpop.permute.xlu0 %2047
      %2051 = vset.pattern.permute.xlu0 0
      %2052 = vperm.xlu0 %2051, %v1982
      %v2053 = vpop.permute.xlu0 %2052
      %2056 = vset.pattern.permute.xlu0 0
      %2057 = vperm.xlu0 %2056, %v1983
      %v2058 = vpop.permute.xlu0 %2057
      %2061 = vset.pattern.permute.xlu0 0
      %2062 = vperm.xlu0 %2061, %v1984
      %v2063 = vpop.permute.xlu0 %2062
      %2066 = vset.pattern.permute.xlu0 0
      %2067 = vperm.xlu0 %2066, %v1985
      %v2068 = vpop.permute.xlu0 %2067
      %2071 = vset.pattern.permute.xlu0 0
      %2072 = vperm.xlu0 %2071, %v1986
      %v2073 = vpop.permute.xlu0 %2072
      %2076 = vset.pattern.permute.xlu0 0
      %2077 = vperm.xlu0 %2076, %v1987
      %v2078 = vpop.permute.xlu0 %2077
      %2081 = vset.pattern.permute.xlu0 0
      %2082 = vperm.xlu0 %2081, %v1988
      %v2083 = vpop.permute.xlu0 %2082
      %2086 = vset.pattern.permute.xlu0 0
      %2087 = vperm.xlu0 %2086, %v1989
      %v2088 = vpop.permute.xlu0 %2087
      %2091 = vset.pattern.permute.xlu0 0
      %2092 = vperm.xlu0 %2091, %v1990
      %v2093 = vpop.permute.xlu0 %2092
      %2096 = vset.pattern.permute.xlu0 0
      %2097 = vperm.xlu0 %2096, %v1991
      %v2098 = vpop.permute.xlu0 %2097
      %2101 = vset.pattern.permute.xlu0 0
      %2102 = vperm.xlu0 %2101, %v1992
      %v2103 = vpop.permute.xlu0 %2102
      %2106 = vset.pattern.permute.xlu0 0
      %2107 = vperm.xlu0 %2106, %v1993
      %v2108 = vpop.permute.xlu0 %2107
      %2111 = vset.pattern.permute.xlu0 0
      %2112 = vperm.xlu0 %2111, %v1994
      %v2113 = vpop.permute.xlu0 %2112
      %2116 = vset.pattern.permute.xlu0 0
      %2117 = vperm.xlu0 %2116, %v1995
      %v2118 = vpop.permute.xlu0 %2117
      %2121 = vset.pattern.permute.xlu0 0
      %2122 = vperm.xlu0 %2121, %v1996
      %v2123 = vpop.permute.xlu0 %2122
      %2126 = vset.pattern.permute.xlu0 0
      %2127 = vperm.xlu0 %2126, %v1997
      %v2128 = vpop.permute.xlu0 %2127
      %2131 = vset.pattern.permute.xlu0 0
      %2132 = vperm.xlu0 %2131, %v1998
      %v2133 = vpop.permute.xlu0 %2132
      %2136 = vset.pattern.permute.xlu0 0
      %2137 = vperm.xlu0 %2136, %v1999
      %v2138 = vpop.permute.xlu0 %2137
      %2141 = vset.pattern.permute.xlu0 0
      %2142 = vperm.xlu0 %2141, %v2000
      %v2143 = vpop.permute.xlu0 %2142
      %2146 = vset.pattern.permute.xlu0 0
      %2147 = vperm.xlu0 %2146, %v2001
      %v2148 = vpop.permute.xlu0 %2147
      %2151 = vset.pattern.permute.xlu0 0
      %2152 = vperm.xlu0 %2151, %v2002
      %v2153 = vpop.permute.xlu0 %2152
      %2156 = vset.pattern.permute.xlu0 0
      %2157 = vperm.xlu0 %2156, %v2003
      %v2158 = vpop.permute.xlu0 %2157
      %2161 = vset.pattern.permute.xlu0 0
      %2162 = vperm.xlu0 %2161, %v2004
      %v2163 = vpop.permute.xlu0 %2162
      %2166 = vset.pattern.permute.xlu0 0
      %2167 = vperm.xlu0 %2166, %v2005
      %v2168 = vpop.permute.xlu0 %2167
      %2171 = vset.pattern.permute.xlu0 0
      %2172 = vperm.xlu0 %2171, %v2006
      %v2173 = vpop.permute.xlu0 %2172
      %2176 = vset.pattern.permute.xlu0 0
      %2177 = vperm.xlu0 %2176, %v2007
      %v2178 = vpop.permute.xlu0 %2177
      %v2180 = vlaneseq
      %v2181 = vshrl.u32 %v2180, 7
      %v2182 = vsub.s32 0, %v2181
      %v2183 = vrot.slane %v2009, %v2182
      %v2184 = vmul.f32 %v2013, %v2183
      %v2185 = vmul.f32 %v2018, %v2183
      %v2186 = vmul.f32 %v2023, %v2183
      %v2187 = vmul.f32 %v2028, %v2183
      %v2188 = vmul.f32 %v2033, %v2183
      %v2189 = vmul.f32 %v2038, %v2183
      %v2190 = vmul.f32 %v2043, %v2183
      %v2191 = vmul.f32 %v2048, %v2183
      %v2192 = vmul.f32 %v2053, %v2183
      %v2193 = vmul.f32 %v2058, %v2183
      %v2194 = vmul.f32 %v2063, %v2183
      %v2195 = vmul.f32 %v2068, %v2183
      %v2196 = vmul.f32 %v2073, %v2183
      %v2197 = vmul.f32 %v2078, %v2183
      %v2198 = vmul.f32 %v2083, %v2183
      %v2199 = vmul.f32 %v2088, %v2183
      %v2200 = vmul.f32 %v2093, %v2183
      %v2201 = vmul.f32 %v2098, %v2183
      %v2202 = vmul.f32 %v2103, %v2183
      %v2203 = vmul.f32 %v2108, %v2183
      %v2204 = vmul.f32 %v2113, %v2183
      %v2205 = vmul.f32 %v2118, %v2183
      %v2206 = vmul.f32 %v2123, %v2183
      %v2207 = vmul.f32 %v2128, %v2183
      %v2208 = vmul.f32 %v2133, %v2183
      %v2209 = vmul.f32 %v2138, %v2183
      %v2210 = vmul.f32 %v2143, %v2183
      %v2211 = vmul.f32 %v2148, %v2183
      %v2212 = vmul.f32 %v2153, %v2183
      %v2213 = vmul.f32 %v2158, %v2183
      %v2214 = vmul.f32 %v2163, %v2183
      %v2215 = vmul.f32 %v2168, %v2183
      %v2216 = vmul.f32 %v2173, %v2183
      %v2217 = vmul.f32 %v2178, %v2183
      %v2218 = vadd.f32 %v1940, %v2184
      %v2219 = vadd.f32 %v1941, %v2185
      %v2220 = vadd.f32 %v1942, %v2186
      %v2221 = vadd.f32 %v1943, %v2187
      %v2222 = vadd.f32 %v1944, %v2188
      %v2223 = vadd.f32 %v1945, %v2189
      %v2224 = vadd.f32 %v1946, %v2190
      %v2225 = vadd.f32 %v1947, %v2191
      %v2226 = vadd.f32 %v1948, %v2192
      %v2227 = vadd.f32 %v1949, %v2193
      %v2228 = vadd.f32 %v1950, %v2194
      %v2229 = vadd.f32 %v1951, %v2195
      %v2230 = vadd.f32 %v1952, %v2196
      %v2231 = vadd.f32 %v1953, %v2197
      %v2232 = vadd.f32 %v1954, %v2198
      %v2233 = vadd.f32 %v1955, %v2199
      %v2234 = vadd.f32 %v1956, %v2200
      %v2235 = vadd.f32 %v1957, %v2201
      %v2236 = vadd.f32 %v1958, %v2202
      %v2237 = vadd.f32 %v1959, %v2203
      %v2238 = vadd.f32 %v1960, %v2204
      %v2239 = vadd.f32 %v1961, %v2205
      %v2240 = vadd.f32 %v1962, %v2206
      %v2241 = vadd.f32 %v1963, %v2207
      %v2242 = vadd.f32 %v1964, %v2208
      %v2243 = vadd.f32 %v1965, %v2209
      %v2244 = vadd.f32 %v1966, %v2210
      %v2245 = vadd.f32 %v1967, %v2211
      %v2246 = vadd.f32 %v1968, %v2212
      %v2247 = vadd.f32 %v1969, %v2213
      %v2248 = vadd.f32 %v1970, %v2214
      %v2249 = vadd.f32 %v1971, %v2215
      %v2250 = vadd.f32 %v1972, %v2216
      %v2251 = vadd.f32 %v1973, %v2217
      %2252 = vset.pattern.permute.xlu0 1
      %2253 = vperm.xlu0 %2252, %v1974
      %v2254 = vpop.permute.xlu0 %2253
      %2256 = vset.pattern.permute.xlu0 1
      %2257 = vperm.xlu0 %2256, %v1975
      %v2258 = vpop.permute.xlu0 %2257
      %2260 = vset.pattern.permute.xlu0 1
      %2261 = vperm.xlu0 %2260, %v1976
      %v2262 = vpop.permute.xlu0 %2261
      %2264 = vset.pattern.permute.xlu0 1
      %2265 = vperm.xlu0 %2264, %v1977
      %v2266 = vpop.permute.xlu0 %2265
      %2268 = vset.pattern.permute.xlu0 1
      %2269 = vperm.xlu0 %2268, %v1978
      %v2270 = vpop.permute.xlu0 %2269
      %2272 = vset.pattern.permute.xlu0 1
      %2273 = vperm.xlu0 %2272, %v1979
      %v2274 = vpop.permute.xlu0 %2273
      %2276 = vset.pattern.permute.xlu0 1
      %2277 = vperm.xlu0 %2276, %v1980
      %v2278 = vpop.permute.xlu0 %2277
      %2280 = vset.pattern.permute.xlu0 1
      %2281 = vperm.xlu0 %2280, %v1981
      %v2282 = vpop.permute.xlu0 %2281
      %2284 = vset.pattern.permute.xlu0 1
      %2285 = vperm.xlu0 %2284, %v1982
      %v2286 = vpop.permute.xlu0 %2285
      %2288 = vset.pattern.permute.xlu0 1
      %2289 = vperm.xlu0 %2288, %v1983
      %v2290 = vpop.permute.xlu0 %2289
      %2292 = vset.pattern.permute.xlu0 1
      %2293 = vperm.xlu0 %2292, %v1984
      %v2294 = vpop.permute.xlu0 %2293
      %2296 = vset.pattern.permute.xlu0 1
      %2297 = vperm.xlu0 %2296, %v1985
      %v2298 = vpop.permute.xlu0 %2297
      %2300 = vset.pattern.permute.xlu0 1
      %2301 = vperm.xlu0 %2300, %v1986
      %v2302 = vpop.permute.xlu0 %2301
      %2304 = vset.pattern.permute.xlu0 1
      %2305 = vperm.xlu0 %2304, %v1987
      %v2306 = vpop.permute.xlu0 %2305
      %2308 = vset.pattern.permute.xlu0 1
      %2309 = vperm.xlu0 %2308, %v1988
      %v2310 = vpop.permute.xlu0 %2309
      %2312 = vset.pattern.permute.xlu0 1
      %2313 = vperm.xlu0 %2312, %v1989
      %v2314 = vpop.permute.xlu0 %2313
      %2316 = vset.pattern.permute.xlu0 1
      %2317 = vperm.xlu0 %2316, %v1990
      %v2318 = vpop.permute.xlu0 %2317
      %2320 = vset.pattern.permute.xlu0 1
      %2321 = vperm.xlu0 %2320, %v1991
      %v2322 = vpop.permute.xlu0 %2321
      %2324 = vset.pattern.permute.xlu0 1
      %2325 = vperm.xlu0 %2324, %v1992
      %v2326 = vpop.permute.xlu0 %2325
      %2328 = vset.pattern.permute.xlu0 1
      %2329 = vperm.xlu0 %2328, %v1993
      %v2330 = vpop.permute.xlu0 %2329
      %2332 = vset.pattern.permute.xlu0 1
      %2333 = vperm.xlu0 %2332, %v1994
      %v2334 = vpop.permute.xlu0 %2333
      %2336 = vset.pattern.permute.xlu0 1
      %2337 = vperm.xlu0 %2336, %v1995
      %v2338 = vpop.permute.xlu0 %2337
      %2340 = vset.pattern.permute.xlu0 1
      %2341 = vperm.xlu0 %2340, %v1996
      %v2342 = vpop.permute.xlu0 %2341
      %2344 = vset.pattern.permute.xlu0 1
      %2345 = vperm.xlu0 %2344, %v1997
      %v2346 = vpop.permute.xlu0 %2345
      %2348 = vset.pattern.permute.xlu0 1
      %2349 = vperm.xlu0 %2348, %v1998
      %v2350 = vpop.permute.xlu0 %2349
      %2352 = vset.pattern.permute.xlu0 1
      %2353 = vperm.xlu0 %2352, %v1999
      %v2354 = vpop.permute.xlu0 %2353
      %2356 = vset.pattern.permute.xlu0 1
      %2357 = vperm.xlu0 %2356, %v2000
      %v2358 = vpop.permute.xlu0 %2357
      %2360 = vset.pattern.permute.xlu0 1
      %2361 = vperm.xlu0 %2360, %v2001
      %v2362 = vpop.permute.xlu0 %2361
      %2364 = vset.pattern.permute.xlu0 1
      %2365 = vperm.xlu0 %2364, %v2002
      %v2366 = vpop.permute.xlu0 %2365
      %2368 = vset.pattern.permute.xlu0 1
      %2369 = vperm.xlu0 %2368, %v2003
      %v2370 = vpop.permute.xlu0 %2369
      %2372 = vset.pattern.permute.xlu0 1
      %2373 = vperm.xlu0 %2372, %v2004
      %v2374 = vpop.permute.xlu0 %2373
      %2376 = vset.pattern.permute.xlu0 1
      %2377 = vperm.xlu0 %2376, %v2005
      %v2378 = vpop.permute.xlu0 %2377
      %2380 = vset.pattern.permute.xlu0 1
      %2381 = vperm.xlu0 %2380, %v2006
      %v2382 = vpop.permute.xlu0 %2381
      %2384 = vset.pattern.permute.xlu0 1
      %2385 = vperm.xlu0 %2384, %v2007
      %v2386 = vpop.permute.xlu0 %2385
      %v2388 = vlaneseq
      %v2389 = vshrl.u32 %v2388, 7
      %v2390 = vsub.s32 1, %v2389
      %v2391 = vrot.slane %v2009, %v2390
      %v2392 = vmul.f32 %v2254, %v2391
      %v2393 = vmul.f32 %v2258, %v2391
      %v2394 = vmul.f32 %v2262, %v2391
      %v2395 = vmul.f32 %v2266, %v2391
      %v2396 = vmul.f32 %v2270, %v2391
      %v2397 = vmul.f32 %v2274, %v2391
      %v2398 = vmul.f32 %v2278, %v2391
      %v2399 = vmul.f32 %v2282, %v2391
      %v2400 = vmul.f32 %v2286, %v2391
      %v2401 = vmul.f32 %v2290, %v2391
      %v2402 = vmul.f32 %v2294, %v2391
      %v2403 = vmul.f32 %v2298, %v2391
      %v2404 = vmul.f32 %v2302, %v2391
      %v2405 = vmul.f32 %v2306, %v2391
      %v2406 = vmul.f32 %v2310, %v2391
      %v2407 = vmul.f32 %v2314, %v2391
      %v2408 = vmul.f32 %v2318, %v2391
      %v2409 = vmul.f32 %v2322, %v2391
      %v2410 = vmul.f32 %v2326, %v2391
      %v2411 = vmul.f32 %v2330, %v2391
      %v2412 = vmul.f32 %v2334, %v2391
      %v2413 = vmul.f32 %v2338, %v2391
      %v2414 = vmul.f32 %v2342, %v2391
      %v2415 = vmul.f32 %v2346, %v2391
      %v2416 = vmul.f32 %v2350, %v2391
      %v2417 = vmul.f32 %v2354, %v2391
      %v2418 = vmul.f32 %v2358, %v2391
      %v2419 = vmul.f32 %v2362, %v2391
      %v2420 = vmul.f32 %v2366, %v2391
      %v2421 = vmul.f32 %v2370, %v2391
      %v2422 = vmul.f32 %v2374, %v2391
      %v2423 = vmul.f32 %v2378, %v2391
      %v2424 = vmul.f32 %v2382, %v2391
      %v2425 = vmul.f32 %v2386, %v2391
      %v2426 = vadd.f32 %v2218, %v2392
      %v2427 = vadd.f32 %v2219, %v2393
      %v2428 = vadd.f32 %v2220, %v2394
      %v2429 = vadd.f32 %v2221, %v2395
      %v2430 = vadd.f32 %v2222, %v2396
      %v2431 = vadd.f32 %v2223, %v2397
      %v2432 = vadd.f32 %v2224, %v2398
      %v2433 = vadd.f32 %v2225, %v2399
      %v2434 = vadd.f32 %v2226, %v2400
      %v2435 = vadd.f32 %v2227, %v2401
      %v2436 = vadd.f32 %v2228, %v2402
      %v2437 = vadd.f32 %v2229, %v2403
      %v2438 = vadd.f32 %v2230, %v2404
      %v2439 = vadd.f32 %v2231, %v2405
      %v2440 = vadd.f32 %v2232, %v2406
      %v2441 = vadd.f32 %v2233, %v2407
      %v2442 = vadd.f32 %v2234, %v2408
      %v2443 = vadd.f32 %v2235, %v2409
      %v2444 = vadd.f32 %v2236, %v2410
      %v2445 = vadd.f32 %v2237, %v2411
      %v2446 = vadd.f32 %v2238, %v2412
      %v2447 = vadd.f32 %v2239, %v2413
      %v2448 = vadd.f32 %v2240, %v2414
      %v2449 = vadd.f32 %v2241, %v2415
      %v2450 = vadd.f32 %v2242, %v2416
      %v2451 = vadd.f32 %v2243, %v2417
      %v2452 = vadd.f32 %v2244, %v2418
      %v2453 = vadd.f32 %v2245, %v2419
      %v2454 = vadd.f32 %v2246, %v2420
      %v2455 = vadd.f32 %v2247, %v2421
      %v2456 = vadd.f32 %v2248, %v2422
      %v2457 = vadd.f32 %v2249, %v2423
      %v2458 = vadd.f32 %v2250, %v2424
      %v2459 = vadd.f32 %v2251, %v2425
      %2460 = vset.pattern.permute.xlu0 2
      %2461 = vperm.xlu0 %2460, %v1974
      %v2462 = vpop.permute.xlu0 %2461
      %2464 = vset.pattern.permute.xlu0 2
      %2465 = vperm.xlu0 %2464, %v1975
      %v2466 = vpop.permute.xlu0 %2465
      %2468 = vset.pattern.permute.xlu0 2
      %2469 = vperm.xlu0 %2468, %v1976
      %v2470 = vpop.permute.xlu0 %2469
      %2472 = vset.pattern.permute.xlu0 2
      %2473 = vperm.xlu0 %2472, %v1977
      %v2474 = vpop.permute.xlu0 %2473
      %2476 = vset.pattern.permute.xlu0 2
      %2477 = vperm.xlu0 %2476, %v1978
      %v2478 = vpop.permute.xlu0 %2477
      %2480 = vset.pattern.permute.xlu0 2
      %2481 = vperm.xlu0 %2480, %v1979
      %v2482 = vpop.permute.xlu0 %2481
      %2484 = vset.pattern.permute.xlu0 2
      %2485 = vperm.xlu0 %2484, %v1980
      %v2486 = vpop.permute.xlu0 %2485
      %2488 = vset.pattern.permute.xlu0 2
      %2489 = vperm.xlu0 %2488, %v1981
      %v2490 = vpop.permute.xlu0 %2489
      %2492 = vset.pattern.permute.xlu0 2
      %2493 = vperm.xlu0 %2492, %v1982
      %v2494 = vpop.permute.xlu0 %2493
      %2496 = vset.pattern.permute.xlu0 2
      %2497 = vperm.xlu0 %2496, %v1983
      %v2498 = vpop.permute.xlu0 %2497
      %2500 = vset.pattern.permute.xlu0 2
      %2501 = vperm.xlu0 %2500, %v1984
      %v2502 = vpop.permute.xlu0 %2501
      %2504 = vset.pattern.permute.xlu0 2
      %2505 = vperm.xlu0 %2504, %v1985
      %v2506 = vpop.permute.xlu0 %2505
      %2508 = vset.pattern.permute.xlu0 2
      %2509 = vperm.xlu0 %2508, %v1986
      %v2510 = vpop.permute.xlu0 %2509
      %2512 = vset.pattern.permute.xlu0 2
      %2513 = vperm.xlu0 %2512, %v1987
      %v2514 = vpop.permute.xlu0 %2513
      %2516 = vset.pattern.permute.xlu0 2
      %2517 = vperm.xlu0 %2516, %v1988
      %v2518 = vpop.permute.xlu0 %2517
      %2520 = vset.pattern.permute.xlu0 2
      %2521 = vperm.xlu0 %2520, %v1989
      %v2522 = vpop.permute.xlu0 %2521
      %2524 = vset.pattern.permute.xlu0 2
      %2525 = vperm.xlu0 %2524, %v1990
      %v2526 = vpop.permute.xlu0 %2525
      %2528 = vset.pattern.permute.xlu0 2
      %2529 = vperm.xlu0 %2528, %v1991
      %v2530 = vpop.permute.xlu0 %2529
      %2532 = vset.pattern.permute.xlu0 2
      %2533 = vperm.xlu0 %2532, %v1992
      %v2534 = vpop.permute.xlu0 %2533
      %2536 = vset.pattern.permute.xlu0 2
      %2537 = vperm.xlu0 %2536, %v1993
      %v2538 = vpop.permute.xlu0 %2537
      %2540 = vset.pattern.permute.xlu0 2
      %2541 = vperm.xlu0 %2540, %v1994
      %v2542 = vpop.permute.xlu0 %2541
      %2544 = vset.pattern.permute.xlu0 2
      %2545 = vperm.xlu0 %2544, %v1995
      %v2546 = vpop.permute.xlu0 %2545
      %2548 = vset.pattern.permute.xlu0 2
      %2549 = vperm.xlu0 %2548, %v1996
      %v2550 = vpop.permute.xlu0 %2549
      %2552 = vset.pattern.permute.xlu0 2
      %2553 = vperm.xlu0 %2552, %v1997
      %v2554 = vpop.permute.xlu0 %2553
      %2556 = vset.pattern.permute.xlu0 2
      %2557 = vperm.xlu0 %2556, %v1998
      %v2558 = vpop.permute.xlu0 %2557
      %2560 = vset.pattern.permute.xlu0 2
      %2561 = vperm.xlu0 %2560, %v1999
      %v2562 = vpop.permute.xlu0 %2561
      %2564 = vset.pattern.permute.xlu0 2
      %2565 = vperm.xlu0 %2564, %v2000
      %v2566 = vpop.permute.xlu0 %2565
      %2568 = vset.pattern.permute.xlu0 2
      %2569 = vperm.xlu0 %2568, %v2001
      %v2570 = vpop.permute.xlu0 %2569
      %2572 = vset.pattern.permute.xlu0 2
      %2573 = vperm.xlu0 %2572, %v2002
      %v2574 = vpop.permute.xlu0 %2573
      %2576 = vset.pattern.permute.xlu0 2
      %2577 = vperm.xlu0 %2576, %v2003
      %v2578 = vpop.permute.xlu0 %2577
      %2580 = vset.pattern.permute.xlu0 2
      %2581 = vperm.xlu0 %2580, %v2004
      %v2582 = vpop.permute.xlu0 %2581
      %2584 = vset.pattern.permute.xlu0 2
      %2585 = vperm.xlu0 %2584, %v2005
      %v2586 = vpop.permute.xlu0 %2585
      %2588 = vset.pattern.permute.xlu0 2
      %2589 = vperm.xlu0 %2588, %v2006
      %v2590 = vpop.permute.xlu0 %2589
      %2592 = vset.pattern.permute.xlu0 2
      %2593 = vperm.xlu0 %2592, %v2007
      %v2594 = vpop.permute.xlu0 %2593
      %v2596 = vlaneseq
      %v2597 = vshrl.u32 %v2596, 7
      %v2598 = vsub.s32 2, %v2597
      %v2599 = vrot.slane %v2009, %v2598
      %v2600 = vmul.f32 %v2462, %v2599
      %v2601 = vmul.f32 %v2466, %v2599
      %v2602 = vmul.f32 %v2470, %v2599
      %v2603 = vmul.f32 %v2474, %v2599
      %v2604 = vmul.f32 %v2478, %v2599
      %v2605 = vmul.f32 %v2482, %v2599
      %v2606 = vmul.f32 %v2486, %v2599
      %v2607 = vmul.f32 %v2490, %v2599
      %v2608 = vmul.f32 %v2494, %v2599
      %v2609 = vmul.f32 %v2498, %v2599
      %v2610 = vmul.f32 %v2502, %v2599
      %v2611 = vmul.f32 %v2506, %v2599
      %v2612 = vmul.f32 %v2510, %v2599
      %v2613 = vmul.f32 %v2514, %v2599
      %v2614 = vmul.f32 %v2518, %v2599
      %v2615 = vmul.f32 %v2522, %v2599
      %v2616 = vmul.f32 %v2526, %v2599
      %v2617 = vmul.f32 %v2530, %v2599
      %v2618 = vmul.f32 %v2534, %v2599
      %v2619 = vmul.f32 %v2538, %v2599
      %v2620 = vmul.f32 %v2542, %v2599
      %v2621 = vmul.f32 %v2546, %v2599
      %v2622 = vmul.f32 %v2550, %v2599
      %v2623 = vmul.f32 %v2554, %v2599
      %v2624 = vmul.f32 %v2558, %v2599
      %v2625 = vmul.f32 %v2562, %v2599
      %v2626 = vmul.f32 %v2566, %v2599
      %v2627 = vmul.f32 %v2570, %v2599
      %v2628 = vmul.f32 %v2574, %v2599
      %v2629 = vmul.f32 %v2578, %v2599
      %v2630 = vmul.f32 %v2582, %v2599
      %v2631 = vmul.f32 %v2586, %v2599
      %v2632 = vmul.f32 %v2590, %v2599
      %v2633 = vmul.f32 %v2594, %v2599
      %v2634 = vadd.f32 %v2426, %v2600
      %v2635 = vadd.f32 %v2427, %v2601
      %v2636 = vadd.f32 %v2428, %v2602
      %v2637 = vadd.f32 %v2429, %v2603
      %v2638 = vadd.f32 %v2430, %v2604
      %v2639 = vadd.f32 %v2431, %v2605
      %v2640 = vadd.f32 %v2432, %v2606
      %v2641 = vadd.f32 %v2433, %v2607
      %v2642 = vadd.f32 %v2434, %v2608
      %v2643 = vadd.f32 %v2435, %v2609
      %v2644 = vadd.f32 %v2436, %v2610
      %v2645 = vadd.f32 %v2437, %v2611
      %v2646 = vadd.f32 %v2438, %v2612
      %v2647 = vadd.f32 %v2439, %v2613
      %v2648 = vadd.f32 %v2440, %v2614
      %v2649 = vadd.f32 %v2441, %v2615
      %v2650 = vadd.f32 %v2442, %v2616
      %v2651 = vadd.f32 %v2443, %v2617
      %v2652 = vadd.f32 %v2444, %v2618
      %v2653 = vadd.f32 %v2445, %v2619
      %v2654 = vadd.f32 %v2446, %v2620
      %v2655 = vadd.f32 %v2447, %v2621
      %v2656 = vadd.f32 %v2448, %v2622
      %v2657 = vadd.f32 %v2449, %v2623
      %v2658 = vadd.f32 %v2450, %v2624
      %v2659 = vadd.f32 %v2451, %v2625
      %v2660 = vadd.f32 %v2452, %v2626
      %v2661 = vadd.f32 %v2453, %v2627
      %v2662 = vadd.f32 %v2454, %v2628
      %v2663 = vadd.f32 %v2455, %v2629
      %v2664 = vadd.f32 %v2456, %v2630
      %v2665 = vadd.f32 %v2457, %v2631
      %v2666 = vadd.f32 %v2458, %v2632
      %v2667 = vadd.f32 %v2459, %v2633
      %2668 = vset.pattern.permute.xlu0 3
      %2669 = vperm.xlu0 %2668, %v1974
      %v2670 = vpop.permute.xlu0 %2669
      %2672 = vset.pattern.permute.xlu0 3
      %2673 = vperm.xlu0 %2672, %v1975
      %v2674 = vpop.permute.xlu0 %2673
      %2676 = vset.pattern.permute.xlu0 3
      %2677 = vperm.xlu0 %2676, %v1976
      %v2678 = vpop.permute.xlu0 %2677
      %2680 = vset.pattern.permute.xlu0 3
      %2681 = vperm.xlu0 %2680, %v1977
      %v2682 = vpop.permute.xlu0 %2681
      %2684 = vset.pattern.permute.xlu0 3
      %2685 = vperm.xlu0 %2684, %v1978
      %v2686 = vpop.permute.xlu0 %2685
      %2688 = vset.pattern.permute.xlu0 3
      %2689 = vperm.xlu0 %2688, %v1979
      %v2690 = vpop.permute.xlu0 %2689
      %2692 = vset.pattern.permute.xlu0 3
      %2693 = vperm.xlu0 %2692, %v1980
      %v2694 = vpop.permute.xlu0 %2693
      %2696 = vset.pattern.permute.xlu0 3
      %2697 = vperm.xlu0 %2696, %v1981
      %v2698 = vpop.permute.xlu0 %2697
      %2700 = vset.pattern.permute.xlu0 3
      %2701 = vperm.xlu0 %2700, %v1982
      %v2702 = vpop.permute.xlu0 %2701
      %2704 = vset.pattern.permute.xlu0 3
      %2705 = vperm.xlu0 %2704, %v1983
      %v2706 = vpop.permute.xlu0 %2705
      %2708 = vset.pattern.permute.xlu0 3
      %2709 = vperm.xlu0 %2708, %v1984
      %v2710 = vpop.permute.xlu0 %2709
      %2712 = vset.pattern.permute.xlu0 3
      %2713 = vperm.xlu0 %2712, %v1985
      %v2714 = vpop.permute.xlu0 %2713
      %2716 = vset.pattern.permute.xlu0 3
      %2717 = vperm.xlu0 %2716, %v1986
      %v2718 = vpop.permute.xlu0 %2717
      %2720 = vset.pattern.permute.xlu0 3
      %2721 = vperm.xlu0 %2720, %v1987
      %v2722 = vpop.permute.xlu0 %2721
      %2724 = vset.pattern.permute.xlu0 3
      %2725 = vperm.xlu0 %2724, %v1988
      %v2726 = vpop.permute.xlu0 %2725
      %2728 = vset.pattern.permute.xlu0 3
      %2729 = vperm.xlu0 %2728, %v1989
      %v2730 = vpop.permute.xlu0 %2729
      %2732 = vset.pattern.permute.xlu0 3
      %2733 = vperm.xlu0 %2732, %v1990
      %v2734 = vpop.permute.xlu0 %2733
      %2736 = vset.pattern.permute.xlu0 3
      %2737 = vperm.xlu0 %2736, %v1991
      %v2738 = vpop.permute.xlu0 %2737
      %2740 = vset.pattern.permute.xlu0 3
      %2741 = vperm.xlu0 %2740, %v1992
      %v2742 = vpop.permute.xlu0 %2741
      %2744 = vset.pattern.permute.xlu0 3
      %2745 = vperm.xlu0 %2744, %v1993
      %v2746 = vpop.permute.xlu0 %2745
      %2748 = vset.pattern.permute.xlu0 3
      %2749 = vperm.xlu0 %2748, %v1994
      %v2750 = vpop.permute.xlu0 %2749
      %2752 = vset.pattern.permute.xlu0 3
      %2753 = vperm.xlu0 %2752, %v1995
      %v2754 = vpop.permute.xlu0 %2753
      %2756 = vset.pattern.permute.xlu0 3
      %2757 = vperm.xlu0 %2756, %v1996
      %v2758 = vpop.permute.xlu0 %2757
      %2760 = vset.pattern.permute.xlu0 3
      %2761 = vperm.xlu0 %2760, %v1997
      %v2762 = vpop.permute.xlu0 %2761
      %2764 = vset.pattern.permute.xlu0 3
      %2765 = vperm.xlu0 %2764, %v1998
      %v2766 = vpop.permute.xlu0 %2765
      %2768 = vset.pattern.permute.xlu0 3
      %2769 = vperm.xlu0 %2768, %v1999
      %v2770 = vpop.permute.xlu0 %2769
      %2772 = vset.pattern.permute.xlu0 3
      %2773 = vperm.xlu0 %2772, %v2000
      %v2774 = vpop.permute.xlu0 %2773
      %2776 = vset.pattern.permute.xlu0 3
      %2777 = vperm.xlu0 %2776, %v2001
      %v2778 = vpop.permute.xlu0 %2777
      %2780 = vset.pattern.permute.xlu0 3
      %2781 = vperm.xlu0 %2780, %v2002
      %v2782 = vpop.permute.xlu0 %2781
      %2784 = vset.pattern.permute.xlu0 3
      %2785 = vperm.xlu0 %2784, %v2003
      %v2786 = vpop.permute.xlu0 %2785
      %2788 = vset.pattern.permute.xlu0 3
      %2789 = vperm.xlu0 %2788, %v2004
      %v2790 = vpop.permute.xlu0 %2789
      %2792 = vset.pattern.permute.xlu0 3
      %2793 = vperm.xlu0 %2792, %v2005
      %v2794 = vpop.permute.xlu0 %2793
      %2796 = vset.pattern.permute.xlu0 3
      %2797 = vperm.xlu0 %2796, %v2006
      %v2798 = vpop.permute.xlu0 %2797
      %2800 = vset.pattern.permute.xlu0 3
      %2801 = vperm.xlu0 %2800, %v2007
      %v2802 = vpop.permute.xlu0 %2801
      %v2804 = vlaneseq
      %v2805 = vshrl.u32 %v2804, 7
      %v2806 = vsub.s32 3, %v2805
      %v2807 = vrot.slane %v2009, %v2806
      %v2808 = vmul.f32 %v2670, %v2807
      %v2809 = vmul.f32 %v2674, %v2807
      %v2810 = vmul.f32 %v2678, %v2807
      %v2811 = vmul.f32 %v2682, %v2807
      %v2812 = vmul.f32 %v2686, %v2807
      %v2813 = vmul.f32 %v2690, %v2807
      %v2814 = vmul.f32 %v2694, %v2807
      %v2815 = vmul.f32 %v2698, %v2807
      %v2816 = vmul.f32 %v2702, %v2807
      %v2817 = vmul.f32 %v2706, %v2807
      %v2818 = vmul.f32 %v2710, %v2807
      %v2819 = vmul.f32 %v2714, %v2807
      %v2820 = vmul.f32 %v2718, %v2807
      %v2821 = vmul.f32 %v2722, %v2807
      %v2822 = vmul.f32 %v2726, %v2807
      %v2823 = vmul.f32 %v2730, %v2807
      %v2824 = vmul.f32 %v2734, %v2807
      %v2825 = vmul.f32 %v2738, %v2807
      %v2826 = vmul.f32 %v2742, %v2807
      %v2827 = vmul.f32 %v2746, %v2807
      %v2828 = vmul.f32 %v2750, %v2807
      %v2829 = vmul.f32 %v2754, %v2807
      %v2830 = vmul.f32 %v2758, %v2807
      %v2831 = vmul.f32 %v2762, %v2807
      %v2832 = vmul.f32 %v2766, %v2807
      %v2833 = vmul.f32 %v2770, %v2807
      %v2834 = vmul.f32 %v2774, %v2807
      %v2835 = vmul.f32 %v2778, %v2807
      %v2836 = vmul.f32 %v2782, %v2807
      %v2837 = vmul.f32 %v2786, %v2807
      %v2838 = vmul.f32 %v2790, %v2807
      %v2839 = vmul.f32 %v2794, %v2807
      %v2840 = vmul.f32 %v2798, %v2807
      %v2841 = vmul.f32 %v2802, %v2807
      %v2842 = vadd.f32 %v2634, %v2808
      %v2843 = vadd.f32 %v2635, %v2809
      %v2844 = vadd.f32 %v2636, %v2810
      %v2845 = vadd.f32 %v2637, %v2811
      %v2846 = vadd.f32 %v2638, %v2812
      %v2847 = vadd.f32 %v2639, %v2813
      %v2848 = vadd.f32 %v2640, %v2814
      %v2849 = vadd.f32 %v2641, %v2815
      %v2850 = vadd.f32 %v2642, %v2816
      %v2851 = vadd.f32 %v2643, %v2817
      %v2852 = vadd.f32 %v2644, %v2818
      %v2853 = vadd.f32 %v2645, %v2819
      %v2854 = vadd.f32 %v2646, %v2820
      %v2855 = vadd.f32 %v2647, %v2821
      %v2856 = vadd.f32 %v2648, %v2822
      %v2857 = vadd.f32 %v2649, %v2823
      %v2858 = vadd.f32 %v2650, %v2824
      %v2859 = vadd.f32 %v2651, %v2825
      %v2860 = vadd.f32 %v2652, %v2826
      %v2861 = vadd.f32 %v2653, %v2827
      %v2862 = vadd.f32 %v2654, %v2828
      %v2863 = vadd.f32 %v2655, %v2829
      %v2864 = vadd.f32 %v2656, %v2830
      %v2865 = vadd.f32 %v2657, %v2831
      %v2866 = vadd.f32 %v2658, %v2832
      %v2867 = vadd.f32 %v2659, %v2833
      %v2868 = vadd.f32 %v2660, %v2834
      %v2869 = vadd.f32 %v2661, %v2835
      %v2870 = vadd.f32 %v2662, %v2836
      %v2871 = vadd.f32 %v2663, %v2837
      %v2872 = vadd.f32 %v2664, %v2838
      %v2873 = vadd.f32 %v2665, %v2839
      %v2874 = vadd.f32 %v2666, %v2840
      %v2875 = vadd.f32 %v2667, %v2841
      %v2876 = vld [vmem:[%s165 + $0x12] sm:$0xff]
      %v2877 = vld [vmem:[%s165 + $0x1a] sm:$0xff]
      %v2878 = vld [vmem:[%s165 + $0x22] sm:$0xff]
      %v2879 = vld [vmem:[%s165 + $0x2a] sm:$0xff]
      %v2880 = vld [vmem:[%s165 + $0x32] sm:$0xff]
      %v2881 = vld [vmem:[%s165 + $0x3a] sm:$0xff]
      %v2882 = vld [vmem:[%s165 + $0x42] sm:$0xff]
      %v2883 = vld [vmem:[%s165 + $0x4a] sm:$0xff]
      %v2884 = vld [vmem:[%s165 + $0x52] sm:$0xff]
      %v2885 = vld [vmem:[%s165 + $0x5a] sm:$0xff]
      %v2886 = vld [vmem:[%s165 + $0x62] sm:$0xff]
      %v2887 = vld [vmem:[%s165 + $0x6a] sm:$0xff]
      %v2888 = vld [vmem:[%s165 + $0x72] sm:$0xff]
      %v2889 = vld [vmem:[%s165 + $0x7a] sm:$0xff]
      %v2890 = vld [vmem:[%s165 + $0x82] sm:$0xff]
      %v2891 = vld [vmem:[%s165 + $0x8a] sm:$0xff]
      %v2892 = vld [vmem:[%s165 + $0x92] sm:$0xff]
      %v2893 = vld [vmem:[%s165 + $0x9a] sm:$0xff]
      %v2894 = vld [vmem:[%s165 + $0xa2] sm:$0xff]
      %v2895 = vld [vmem:[%s165 + $0xaa] sm:$0xff]
      %v2896 = vld [vmem:[%s165 + $0xb2] sm:$0xff]
      %v2897 = vld [vmem:[%s165 + $0xba] sm:$0xff]
      %v2898 = vld [vmem:[%s165 + $0xc2] sm:$0xff]
      %v2899 = vld [vmem:[%s165 + $0xca] sm:$0xff]
      %v2900 = vld [vmem:[%s165 + $0xd2] sm:$0xff]
      %v2901 = vld [vmem:[%s165 + $0xda] sm:$0xff]
      %v2902 = vld [vmem:[%s165 + $0xe2] sm:$0xff]
      %v2903 = vld [vmem:[%s165 + $0xea] sm:$0xff]
      %v2904 = vld [vmem:[%s165 + $0xf2] sm:$0xff]
      %v2905 = vld [vmem:[%s165 + $0xfa] sm:$0xff]
      %v2906 = vld [vmem:[%s165 + $0x102] sm:$0xff]
      %v2907 = vld [vmem:[%s165 + $0x10a] sm:$0xff]
      %v2908 = vld [vmem:[%s165 + $0x112] sm:$0xff]
      %v2909 = vld [vmem:[%s165 + $0x11a] sm:$0xff]
      %s2910 = scalar_lea.vmem %s1, 12
      %v2911 = vld [vmem:[%s2910] sm:$0xf]
      %2913 = vset.pattern.permute.xlu0 0
      %2914 = vperm.xlu0 %2913, %v2876
      %v2915 = vpop.permute.xlu0 %2914
      %2918 = vset.pattern.permute.xlu0 0
      %2919 = vperm.xlu0 %2918, %v2877
      %v2920 = vpop.permute.xlu0 %2919
      %2923 = vset.pattern.permute.xlu0 0
      %2924 = vperm.xlu0 %2923, %v2878
      %v2925 = vpop.permute.xlu0 %2924
      %2928 = vset.pattern.permute.xlu0 0
      %2929 = vperm.xlu0 %2928, %v2879
      %v2930 = vpop.permute.xlu0 %2929
      %2933 = vset.pattern.permute.xlu0 0
      %2934 = vperm.xlu0 %2933, %v2880
      %v2935 = vpop.permute.xlu0 %2934
      %2938 = vset.pattern.permute.xlu0 0
      %2939 = vperm.xlu0 %2938, %v2881
      %v2940 = vpop.permute.xlu0 %2939
      %2943 = vset.pattern.permute.xlu0 0
      %2944 = vperm.xlu0 %2943, %v2882
      %v2945 = vpop.permute.xlu0 %2944
      %2948 = vset.pattern.permute.xlu0 0
      %2949 = vperm.xlu0 %2948, %v2883
      %v2950 = vpop.permute.xlu0 %2949
      %2953 = vset.pattern.permute.xlu0 0
      %2954 = vperm.xlu0 %2953, %v2884
      %v2955 = vpop.permute.xlu0 %2954
      %2958 = vset.pattern.permute.xlu0 0
      %2959 = vperm.xlu0 %2958, %v2885
      %v2960 = vpop.permute.xlu0 %2959
      %2963 = vset.pattern.permute.xlu0 0
      %2964 = vperm.xlu0 %2963, %v2886
      %v2965 = vpop.permute.xlu0 %2964
      %2968 = vset.pattern.permute.xlu0 0
      %2969 = vperm.xlu0 %2968, %v2887
      %v2970 = vpop.permute.xlu0 %2969
      %2973 = vset.pattern.permute.xlu0 0
      %2974 = vperm.xlu0 %2973, %v2888
      %v2975 = vpop.permute.xlu0 %2974
      %2978 = vset.pattern.permute.xlu0 0
      %2979 = vperm.xlu0 %2978, %v2889
      %v2980 = vpop.permute.xlu0 %2979
      %2983 = vset.pattern.permute.xlu0 0
      %2984 = vperm.xlu0 %2983, %v2890
      %v2985 = vpop.permute.xlu0 %2984
      %2988 = vset.pattern.permute.xlu0 0
      %2989 = vperm.xlu0 %2988, %v2891
      %v2990 = vpop.permute.xlu0 %2989
      %2993 = vset.pattern.permute.xlu0 0
      %2994 = vperm.xlu0 %2993, %v2892
      %v2995 = vpop.permute.xlu0 %2994
      %2998 = vset.pattern.permute.xlu0 0
      %2999 = vperm.xlu0 %2998, %v2893
      %v3000 = vpop.permute.xlu0 %2999
      %3003 = vset.pattern.permute.xlu0 0
      %3004 = vperm.xlu0 %3003, %v2894
      %v3005 = vpop.permute.xlu0 %3004
      %3008 = vset.pattern.permute.xlu0 0
      %3009 = vperm.xlu0 %3008, %v2895
      %v3010 = vpop.permute.xlu0 %3009
      %3013 = vset.pattern.permute.xlu0 0
      %3014 = vperm.xlu0 %3013, %v2896
      %v3015 = vpop.permute.xlu0 %3014
      %3018 = vset.pattern.permute.xlu0 0
      %3019 = vperm.xlu0 %3018, %v2897
      %v3020 = vpop.permute.xlu0 %3019
      %3023 = vset.pattern.permute.xlu0 0
      %3024 = vperm.xlu0 %3023, %v2898
      %v3025 = vpop.permute.xlu0 %3024
      %3028 = vset.pattern.permute.xlu0 0
      %3029 = vperm.xlu0 %3028, %v2899
      %v3030 = vpop.permute.xlu0 %3029
      %3033 = vset.pattern.permute.xlu0 0
      %3034 = vperm.xlu0 %3033, %v2900
      %v3035 = vpop.permute.xlu0 %3034
      %3038 = vset.pattern.permute.xlu0 0
      %3039 = vperm.xlu0 %3038, %v2901
      %v3040 = vpop.permute.xlu0 %3039
      %3043 = vset.pattern.permute.xlu0 0
      %3044 = vperm.xlu0 %3043, %v2902
      %v3045 = vpop.permute.xlu0 %3044
      %3048 = vset.pattern.permute.xlu0 0
      %3049 = vperm.xlu0 %3048, %v2903
      %v3050 = vpop.permute.xlu0 %3049
      %3053 = vset.pattern.permute.xlu0 0
      %3054 = vperm.xlu0 %3053, %v2904
      %v3055 = vpop.permute.xlu0 %3054
      %3058 = vset.pattern.permute.xlu0 0
      %3059 = vperm.xlu0 %3058, %v2905
      %v3060 = vpop.permute.xlu0 %3059
      %3063 = vset.pattern.permute.xlu0 0
      %3064 = vperm.xlu0 %3063, %v2906
      %v3065 = vpop.permute.xlu0 %3064
      %3068 = vset.pattern.permute.xlu0 0
      %3069 = vperm.xlu0 %3068, %v2907
      %v3070 = vpop.permute.xlu0 %3069
      %3073 = vset.pattern.permute.xlu0 0
      %3074 = vperm.xlu0 %3073, %v2908
      %v3075 = vpop.permute.xlu0 %3074
      %3078 = vset.pattern.permute.xlu0 0
      %3079 = vperm.xlu0 %3078, %v2909
      %v3080 = vpop.permute.xlu0 %3079
      %v3082 = vlaneseq
      %v3083 = vshrl.u32 %v3082, 7
      %v3084 = vsub.s32 0, %v3083
      %v3085 = vrot.slane %v2911, %v3084
      %v3086 = vmul.f32 %v2915, %v3085
      %v3087 = vmul.f32 %v2920, %v3085
      %v3088 = vmul.f32 %v2925, %v3085
      %v3089 = vmul.f32 %v2930, %v3085
      %v3090 = vmul.f32 %v2935, %v3085
      %v3091 = vmul.f32 %v2940, %v3085
      %v3092 = vmul.f32 %v2945, %v3085
      %v3093 = vmul.f32 %v2950, %v3085
      %v3094 = vmul.f32 %v2955, %v3085
      %v3095 = vmul.f32 %v2960, %v3085
      %v3096 = vmul.f32 %v2965, %v3085
      %v3097 = vmul.f32 %v2970, %v3085
      %v3098 = vmul.f32 %v2975, %v3085
      %v3099 = vmul.f32 %v2980, %v3085
      %v3100 = vmul.f32 %v2985, %v3085
      %v3101 = vmul.f32 %v2990, %v3085
      %v3102 = vmul.f32 %v2995, %v3085
      %v3103 = vmul.f32 %v3000, %v3085
      %v3104 = vmul.f32 %v3005, %v3085
      %v3105 = vmul.f32 %v3010, %v3085
      %v3106 = vmul.f32 %v3015, %v3085
      %v3107 = vmul.f32 %v3020, %v3085
      %v3108 = vmul.f32 %v3025, %v3085
      %v3109 = vmul.f32 %v3030, %v3085
      %v3110 = vmul.f32 %v3035, %v3085
      %v3111 = vmul.f32 %v3040, %v3085
      %v3112 = vmul.f32 %v3045, %v3085
      %v3113 = vmul.f32 %v3050, %v3085
      %v3114 = vmul.f32 %v3055, %v3085
      %v3115 = vmul.f32 %v3060, %v3085
      %v3116 = vmul.f32 %v3065, %v3085
      %v3117 = vmul.f32 %v3070, %v3085
      %v3118 = vmul.f32 %v3075, %v3085
      %v3119 = vmul.f32 %v3080, %v3085
      %v3120 = vadd.f32 %v2842, %v3086
      %v3121 = vadd.f32 %v2843, %v3087
      %v3122 = vadd.f32 %v2844, %v3088
      %v3123 = vadd.f32 %v2845, %v3089
      %v3124 = vadd.f32 %v2846, %v3090
      %v3125 = vadd.f32 %v2847, %v3091
      %v3126 = vadd.f32 %v2848, %v3092
      %v3127 = vadd.f32 %v2849, %v3093
      %v3128 = vadd.f32 %v2850, %v3094
      %v3129 = vadd.f32 %v2851, %v3095
      %v3130 = vadd.f32 %v2852, %v3096
      %v3131 = vadd.f32 %v2853, %v3097
      %v3132 = vadd.f32 %v2854, %v3098
      %v3133 = vadd.f32 %v2855, %v3099
      %v3134 = vadd.f32 %v2856, %v3100
      %v3135 = vadd.f32 %v2857, %v3101
      %v3136 = vadd.f32 %v2858, %v3102
      %v3137 = vadd.f32 %v2859, %v3103
      %v3138 = vadd.f32 %v2860, %v3104
      %v3139 = vadd.f32 %v2861, %v3105
      %v3140 = vadd.f32 %v2862, %v3106
      %v3141 = vadd.f32 %v2863, %v3107
      %v3142 = vadd.f32 %v2864, %v3108
      %v3143 = vadd.f32 %v2865, %v3109
      %v3144 = vadd.f32 %v2866, %v3110
      %v3145 = vadd.f32 %v2867, %v3111
      %v3146 = vadd.f32 %v2868, %v3112
      %v3147 = vadd.f32 %v2869, %v3113
      %v3148 = vadd.f32 %v2870, %v3114
      %v3149 = vadd.f32 %v2871, %v3115
      %v3150 = vadd.f32 %v2872, %v3116
      %v3151 = vadd.f32 %v2873, %v3117
      %v3152 = vadd.f32 %v2874, %v3118
      %v3153 = vadd.f32 %v2875, %v3119
      %3154 = vset.pattern.permute.xlu0 1
      %3155 = vperm.xlu0 %3154, %v2876
      %v3156 = vpop.permute.xlu0 %3155
      %3158 = vset.pattern.permute.xlu0 1
      %3159 = vperm.xlu0 %3158, %v2877
      %v3160 = vpop.permute.xlu0 %3159
      %3162 = vset.pattern.permute.xlu0 1
      %3163 = vperm.xlu0 %3162, %v2878
      %v3164 = vpop.permute.xlu0 %3163
      %3166 = vset.pattern.permute.xlu0 1
      %3167 = vperm.xlu0 %3166, %v2879
      %v3168 = vpop.permute.xlu0 %3167
      %3170 = vset.pattern.permute.xlu0 1
      %3171 = vperm.xlu0 %3170, %v2880
      %v3172 = vpop.permute.xlu0 %3171
      %3174 = vset.pattern.permute.xlu0 1
      %3175 = vperm.xlu0 %3174, %v2881
      %v3176 = vpop.permute.xlu0 %3175
      %3178 = vset.pattern.permute.xlu0 1
      %3179 = vperm.xlu0 %3178, %v2882
      %v3180 = vpop.permute.xlu0 %3179
      %3182 = vset.pattern.permute.xlu0 1
      %3183 = vperm.xlu0 %3182, %v2883
      %v3184 = vpop.permute.xlu0 %3183
      %3186 = vset.pattern.permute.xlu0 1
      %3187 = vperm.xlu0 %3186, %v2884
      %v3188 = vpop.permute.xlu0 %3187
      %3190 = vset.pattern.permute.xlu0 1
      %3191 = vperm.xlu0 %3190, %v2885
      %v3192 = vpop.permute.xlu0 %3191
      %3194 = vset.pattern.permute.xlu0 1
      %3195 = vperm.xlu0 %3194, %v2886
      %v3196 = vpop.permute.xlu0 %3195
      %3198 = vset.pattern.permute.xlu0 1
      %3199 = vperm.xlu0 %3198, %v2887
      %v3200 = vpop.permute.xlu0 %3199
      %3202 = vset.pattern.permute.xlu0 1
      %3203 = vperm.xlu0 %3202, %v2888
      %v3204 = vpop.permute.xlu0 %3203
      %3206 = vset.pattern.permute.xlu0 1
      %3207 = vperm.xlu0 %3206, %v2889
      %v3208 = vpop.permute.xlu0 %3207
      %3210 = vset.pattern.permute.xlu0 1
      %3211 = vperm.xlu0 %3210, %v2890
      %v3212 = vpop.permute.xlu0 %3211
      %3214 = vset.pattern.permute.xlu0 1
      %3215 = vperm.xlu0 %3214, %v2891
      %v3216 = vpop.permute.xlu0 %3215
      %3218 = vset.pattern.permute.xlu0 1
      %3219 = vperm.xlu0 %3218, %v2892
      %v3220 = vpop.permute.xlu0 %3219
      %3222 = vset.pattern.permute.xlu0 1
      %3223 = vperm.xlu0 %3222, %v2893
      %v3224 = vpop.permute.xlu0 %3223
      %3226 = vset.pattern.permute.xlu0 1
      %3227 = vperm.xlu0 %3226, %v2894
      %v3228 = vpop.permute.xlu0 %3227
      %3230 = vset.pattern.permute.xlu0 1
      %3231 = vperm.xlu0 %3230, %v2895
      %v3232 = vpop.permute.xlu0 %3231
      %3234 = vset.pattern.permute.xlu0 1
      %3235 = vperm.xlu0 %3234, %v2896
      %v3236 = vpop.permute.xlu0 %3235
      %3238 = vset.pattern.permute.xlu0 1
      %3239 = vperm.xlu0 %3238, %v2897
      %v3240 = vpop.permute.xlu0 %3239
      %3242 = vset.pattern.permute.xlu0 1
      %3243 = vperm.xlu0 %3242, %v2898
      %v3244 = vpop.permute.xlu0 %3243
      %3246 = vset.pattern.permute.xlu0 1
      %3247 = vperm.xlu0 %3246, %v2899
      %v3248 = vpop.permute.xlu0 %3247
      %3250 = vset.pattern.permute.xlu0 1
      %3251 = vperm.xlu0 %3250, %v2900
      %v3252 = vpop.permute.xlu0 %3251
      %3254 = vset.pattern.permute.xlu0 1
      %3255 = vperm.xlu0 %3254, %v2901
      %v3256 = vpop.permute.xlu0 %3255
      %3258 = vset.pattern.permute.xlu0 1
      %3259 = vperm.xlu0 %3258, %v2902
      %v3260 = vpop.permute.xlu0 %3259
      %3262 = vset.pattern.permute.xlu0 1
      %3263 = vperm.xlu0 %3262, %v2903
      %v3264 = vpop.permute.xlu0 %3263
      %3266 = vset.pattern.permute.xlu0 1
      %3267 = vperm.xlu0 %3266, %v2904
      %v3268 = vpop.permute.xlu0 %3267
      %3270 = vset.pattern.permute.xlu0 1
      %3271 = vperm.xlu0 %3270, %v2905
      %v3272 = vpop.permute.xlu0 %3271
      %3274 = vset.pattern.permute.xlu0 1
      %3275 = vperm.xlu0 %3274, %v2906
      %v3276 = vpop.permute.xlu0 %3275
      %3278 = vset.pattern.permute.xlu0 1
      %3279 = vperm.xlu0 %3278, %v2907
      %v3280 = vpop.permute.xlu0 %3279
      %3282 = vset.pattern.permute.xlu0 1
      %3283 = vperm.xlu0 %3282, %v2908
      %v3284 = vpop.permute.xlu0 %3283
      %3286 = vset.pattern.permute.xlu0 1
      %3287 = vperm.xlu0 %3286, %v2909
      %v3288 = vpop.permute.xlu0 %3287
      %v3290 = vlaneseq
      %v3291 = vshrl.u32 %v3290, 7
      %v3292 = vsub.s32 1, %v3291
      %v3293 = vrot.slane %v2911, %v3292
      %v3294 = vmul.f32 %v3156, %v3293
      %v3295 = vmul.f32 %v3160, %v3293
      %v3296 = vmul.f32 %v3164, %v3293
      %v3297 = vmul.f32 %v3168, %v3293
      %v3298 = vmul.f32 %v3172, %v3293
      %v3299 = vmul.f32 %v3176, %v3293
      %v3300 = vmul.f32 %v3180, %v3293
      %v3301 = vmul.f32 %v3184, %v3293
      %v3302 = vmul.f32 %v3188, %v3293
      %v3303 = vmul.f32 %v3192, %v3293
      %v3304 = vmul.f32 %v3196, %v3293
      %v3305 = vmul.f32 %v3200, %v3293
      %v3306 = vmul.f32 %v3204, %v3293
      %v3307 = vmul.f32 %v3208, %v3293
      %v3308 = vmul.f32 %v3212, %v3293
      %v3309 = vmul.f32 %v3216, %v3293
      %v3310 = vmul.f32 %v3220, %v3293
      %v3311 = vmul.f32 %v3224, %v3293
      %v3312 = vmul.f32 %v3228, %v3293
      %v3313 = vmul.f32 %v3232, %v3293
      %v3314 = vmul.f32 %v3236, %v3293
      %v3315 = vmul.f32 %v3240, %v3293
      %v3316 = vmul.f32 %v3244, %v3293
      %v3317 = vmul.f32 %v3248, %v3293
      %v3318 = vmul.f32 %v3252, %v3293
      %v3319 = vmul.f32 %v3256, %v3293
      %v3320 = vmul.f32 %v3260, %v3293
      %v3321 = vmul.f32 %v3264, %v3293
      %v3322 = vmul.f32 %v3268, %v3293
      %v3323 = vmul.f32 %v3272, %v3293
      %v3324 = vmul.f32 %v3276, %v3293
      %v3325 = vmul.f32 %v3280, %v3293
      %v3326 = vmul.f32 %v3284, %v3293
      %v3327 = vmul.f32 %v3288, %v3293
      %v3328 = vadd.f32 %v3120, %v3294
      %v3329 = vadd.f32 %v3121, %v3295
      %v3330 = vadd.f32 %v3122, %v3296
      %v3331 = vadd.f32 %v3123, %v3297
      %v3332 = vadd.f32 %v3124, %v3298
      %v3333 = vadd.f32 %v3125, %v3299
      %v3334 = vadd.f32 %v3126, %v3300
      %v3335 = vadd.f32 %v3127, %v3301
      %v3336 = vadd.f32 %v3128, %v3302
      %v3337 = vadd.f32 %v3129, %v3303
      %v3338 = vadd.f32 %v3130, %v3304
      %v3339 = vadd.f32 %v3131, %v3305
      %v3340 = vadd.f32 %v3132, %v3306
      %v3341 = vadd.f32 %v3133, %v3307
      %v3342 = vadd.f32 %v3134, %v3308
      %v3343 = vadd.f32 %v3135, %v3309
      %v3344 = vadd.f32 %v3136, %v3310
      %v3345 = vadd.f32 %v3137, %v3311
      %v3346 = vadd.f32 %v3138, %v3312
      %v3347 = vadd.f32 %v3139, %v3313
      %v3348 = vadd.f32 %v3140, %v3314
      %v3349 = vadd.f32 %v3141, %v3315
      %v3350 = vadd.f32 %v3142, %v3316
      %v3351 = vadd.f32 %v3143, %v3317
      %v3352 = vadd.f32 %v3144, %v3318
      %v3353 = vadd.f32 %v3145, %v3319
      %v3354 = vadd.f32 %v3146, %v3320
      %v3355 = vadd.f32 %v3147, %v3321
      %v3356 = vadd.f32 %v3148, %v3322
      %v3357 = vadd.f32 %v3149, %v3323
      %v3358 = vadd.f32 %v3150, %v3324
      %v3359 = vadd.f32 %v3151, %v3325
      %v3360 = vadd.f32 %v3152, %v3326
      %v3361 = vadd.f32 %v3153, %v3327
      %3362 = vset.pattern.permute.xlu0 2
      %3363 = vperm.xlu0 %3362, %v2876
      %v3364 = vpop.permute.xlu0 %3363
      %3366 = vset.pattern.permute.xlu0 2
      %3367 = vperm.xlu0 %3366, %v2877
      %v3368 = vpop.permute.xlu0 %3367
      %3370 = vset.pattern.permute.xlu0 2
      %3371 = vperm.xlu0 %3370, %v2878
      %v3372 = vpop.permute.xlu0 %3371
      %3374 = vset.pattern.permute.xlu0 2
      %3375 = vperm.xlu0 %3374, %v2879
      %v3376 = vpop.permute.xlu0 %3375
      %3378 = vset.pattern.permute.xlu0 2
      %3379 = vperm.xlu0 %3378, %v2880
      %v3380 = vpop.permute.xlu0 %3379
      %3382 = vset.pattern.permute.xlu0 2
      %3383 = vperm.xlu0 %3382, %v2881
      %v3384 = vpop.permute.xlu0 %3383
      %3386 = vset.pattern.permute.xlu0 2
      %3387 = vperm.xlu0 %3386, %v2882
      %v3388 = vpop.permute.xlu0 %3387
      %3390 = vset.pattern.permute.xlu0 2
      %3391 = vperm.xlu0 %3390, %v2883
      %v3392 = vpop.permute.xlu0 %3391
      %3394 = vset.pattern.permute.xlu0 2
      %3395 = vperm.xlu0 %3394, %v2884
      %v3396 = vpop.permute.xlu0 %3395
      %3398 = vset.pattern.permute.xlu0 2
      %3399 = vperm.xlu0 %3398, %v2885
      %v3400 = vpop.permute.xlu0 %3399
      %3402 = vset.pattern.permute.xlu0 2
      %3403 = vperm.xlu0 %3402, %v2886
      %v3404 = vpop.permute.xlu0 %3403
      %3406 = vset.pattern.permute.xlu0 2
      %3407 = vperm.xlu0 %3406, %v2887
      %v3408 = vpop.permute.xlu0 %3407
      %3410 = vset.pattern.permute.xlu0 2
      %3411 = vperm.xlu0 %3410, %v2888
      %v3412 = vpop.permute.xlu0 %3411
      %3414 = vset.pattern.permute.xlu0 2
      %3415 = vperm.xlu0 %3414, %v2889
      %v3416 = vpop.permute.xlu0 %3415
      %3418 = vset.pattern.permute.xlu0 2
      %3419 = vperm.xlu0 %3418, %v2890
      %v3420 = vpop.permute.xlu0 %3419
      %3422 = vset.pattern.permute.xlu0 2
      %3423 = vperm.xlu0 %3422, %v2891
      %v3424 = vpop.permute.xlu0 %3423
      %3426 = vset.pattern.permute.xlu0 2
      %3427 = vperm.xlu0 %3426, %v2892
      %v3428 = vpop.permute.xlu0 %3427
      %3430 = vset.pattern.permute.xlu0 2
      %3431 = vperm.xlu0 %3430, %v2893
      %v3432 = vpop.permute.xlu0 %3431
      %3434 = vset.pattern.permute.xlu0 2
      %3435 = vperm.xlu0 %3434, %v2894
      %v3436 = vpop.permute.xlu0 %3435
      %3438 = vset.pattern.permute.xlu0 2
      %3439 = vperm.xlu0 %3438, %v2895
      %v3440 = vpop.permute.xlu0 %3439
      %3442 = vset.pattern.permute.xlu0 2
      %3443 = vperm.xlu0 %3442, %v2896
      %v3444 = vpop.permute.xlu0 %3443
      %3446 = vset.pattern.permute.xlu0 2
      %3447 = vperm.xlu0 %3446, %v2897
      %v3448 = vpop.permute.xlu0 %3447
      %3450 = vset.pattern.permute.xlu0 2
      %3451 = vperm.xlu0 %3450, %v2898
      %v3452 = vpop.permute.xlu0 %3451
      %3454 = vset.pattern.permute.xlu0 2
      %3455 = vperm.xlu0 %3454, %v2899
      %v3456 = vpop.permute.xlu0 %3455
      %3458 = vset.pattern.permute.xlu0 2
      %3459 = vperm.xlu0 %3458, %v2900
      %v3460 = vpop.permute.xlu0 %3459
      %3462 = vset.pattern.permute.xlu0 2
      %3463 = vperm.xlu0 %3462, %v2901
      %v3464 = vpop.permute.xlu0 %3463
      %3466 = vset.pattern.permute.xlu0 2
      %3467 = vperm.xlu0 %3466, %v2902
      %v3468 = vpop.permute.xlu0 %3467
      %3470 = vset.pattern.permute.xlu0 2
      %3471 = vperm.xlu0 %3470, %v2903
      %v3472 = vpop.permute.xlu0 %3471
      %3474 = vset.pattern.permute.xlu0 2
      %3475 = vperm.xlu0 %3474, %v2904
      %v3476 = vpop.permute.xlu0 %3475
      %3478 = vset.pattern.permute.xlu0 2
      %3479 = vperm.xlu0 %3478, %v2905
      %v3480 = vpop.permute.xlu0 %3479
      %3482 = vset.pattern.permute.xlu0 2
      %3483 = vperm.xlu0 %3482, %v2906
      %v3484 = vpop.permute.xlu0 %3483
      %3486 = vset.pattern.permute.xlu0 2
      %3487 = vperm.xlu0 %3486, %v2907
      %v3488 = vpop.permute.xlu0 %3487
      %3490 = vset.pattern.permute.xlu0 2
      %3491 = vperm.xlu0 %3490, %v2908
      %v3492 = vpop.permute.xlu0 %3491
      %3494 = vset.pattern.permute.xlu0 2
      %3495 = vperm.xlu0 %3494, %v2909
      %v3496 = vpop.permute.xlu0 %3495
      %v3498 = vlaneseq
      %v3499 = vshrl.u32 %v3498, 7
      %v3500 = vsub.s32 2, %v3499
      %v3501 = vrot.slane %v2911, %v3500
      %v3502 = vmul.f32 %v3364, %v3501
      %v3503 = vmul.f32 %v3368, %v3501
      %v3504 = vmul.f32 %v3372, %v3501
      %v3505 = vmul.f32 %v3376, %v3501
      %v3506 = vmul.f32 %v3380, %v3501
      %v3507 = vmul.f32 %v3384, %v3501
      %v3508 = vmul.f32 %v3388, %v3501
      %v3509 = vmul.f32 %v3392, %v3501
      %v3510 = vmul.f32 %v3396, %v3501
      %v3511 = vmul.f32 %v3400, %v3501
      %v3512 = vmul.f32 %v3404, %v3501
      %v3513 = vmul.f32 %v3408, %v3501
      %v3514 = vmul.f32 %v3412, %v3501
      %v3515 = vmul.f32 %v3416, %v3501
      %v3516 = vmul.f32 %v3420, %v3501
      %v3517 = vmul.f32 %v3424, %v3501
      %v3518 = vmul.f32 %v3428, %v3501
      %v3519 = vmul.f32 %v3432, %v3501
      %v3520 = vmul.f32 %v3436, %v3501
      %v3521 = vmul.f32 %v3440, %v3501
      %v3522 = vmul.f32 %v3444, %v3501
      %v3523 = vmul.f32 %v3448, %v3501
      %v3524 = vmul.f32 %v3452, %v3501
      %v3525 = vmul.f32 %v3456, %v3501
      %v3526 = vmul.f32 %v3460, %v3501
      %v3527 = vmul.f32 %v3464, %v3501
      %v3528 = vmul.f32 %v3468, %v3501
      %v3529 = vmul.f32 %v3472, %v3501
      %v3530 = vmul.f32 %v3476, %v3501
      %v3531 = vmul.f32 %v3480, %v3501
      %v3532 = vmul.f32 %v3484, %v3501
      %v3533 = vmul.f32 %v3488, %v3501
      %v3534 = vmul.f32 %v3492, %v3501
      %v3535 = vmul.f32 %v3496, %v3501
      %v3536 = vadd.f32 %v3328, %v3502
      %v3537 = vadd.f32 %v3329, %v3503
      %v3538 = vadd.f32 %v3330, %v3504
      %v3539 = vadd.f32 %v3331, %v3505
      %v3540 = vadd.f32 %v3332, %v3506
      %v3541 = vadd.f32 %v3333, %v3507
      %v3542 = vadd.f32 %v3334, %v3508
      %v3543 = vadd.f32 %v3335, %v3509
      %v3544 = vadd.f32 %v3336, %v3510
      %v3545 = vadd.f32 %v3337, %v3511
      %v3546 = vadd.f32 %v3338, %v3512
      %v3547 = vadd.f32 %v3339, %v3513
      %v3548 = vadd.f32 %v3340, %v3514
      %v3549 = vadd.f32 %v3341, %v3515
      %v3550 = vadd.f32 %v3342, %v3516
      %v3551 = vadd.f32 %v3343, %v3517
      %v3552 = vadd.f32 %v3344, %v3518
      %v3553 = vadd.f32 %v3345, %v3519
      %v3554 = vadd.f32 %v3346, %v3520
      %v3555 = vadd.f32 %v3347, %v3521
      %v3556 = vadd.f32 %v3348, %v3522
      %v3557 = vadd.f32 %v3349, %v3523
      %v3558 = vadd.f32 %v3350, %v3524
      %v3559 = vadd.f32 %v3351, %v3525
      %v3560 = vadd.f32 %v3352, %v3526
      %v3561 = vadd.f32 %v3353, %v3527
      %v3562 = vadd.f32 %v3354, %v3528
      %v3563 = vadd.f32 %v3355, %v3529
      %v3564 = vadd.f32 %v3356, %v3530
      %v3565 = vadd.f32 %v3357, %v3531
      %v3566 = vadd.f32 %v3358, %v3532
      %v3567 = vadd.f32 %v3359, %v3533
      %v3568 = vadd.f32 %v3360, %v3534
      %v3569 = vadd.f32 %v3361, %v3535
      %3570 = vset.pattern.permute.xlu0 3
      %3571 = vperm.xlu0 %3570, %v2876
      %v3572 = vpop.permute.xlu0 %3571
      %3574 = vset.pattern.permute.xlu0 3
      %3575 = vperm.xlu0 %3574, %v2877
      %v3576 = vpop.permute.xlu0 %3575
      %3578 = vset.pattern.permute.xlu0 3
      %3579 = vperm.xlu0 %3578, %v2878
      %v3580 = vpop.permute.xlu0 %3579
      %3582 = vset.pattern.permute.xlu0 3
      %3583 = vperm.xlu0 %3582, %v2879
      %v3584 = vpop.permute.xlu0 %3583
      %3586 = vset.pattern.permute.xlu0 3
      %3587 = vperm.xlu0 %3586, %v2880
      %v3588 = vpop.permute.xlu0 %3587
      %3590 = vset.pattern.permute.xlu0 3
      %3591 = vperm.xlu0 %3590, %v2881
      %v3592 = vpop.permute.xlu0 %3591
      %3594 = vset.pattern.permute.xlu0 3
      %3595 = vperm.xlu0 %3594, %v2882
      %v3596 = vpop.permute.xlu0 %3595
      %3598 = vset.pattern.permute.xlu0 3
      %3599 = vperm.xlu0 %3598, %v2883
      %v3600 = vpop.permute.xlu0 %3599
      %3602 = vset.pattern.permute.xlu0 3
      %3603 = vperm.xlu0 %3602, %v2884
      %v3604 = vpop.permute.xlu0 %3603
      %3606 = vset.pattern.permute.xlu0 3
      %3607 = vperm.xlu0 %3606, %v2885
      %v3608 = vpop.permute.xlu0 %3607
      %3610 = vset.pattern.permute.xlu0 3
      %3611 = vperm.xlu0 %3610, %v2886
      %v3612 = vpop.permute.xlu0 %3611
      %3614 = vset.pattern.permute.xlu0 3
      %3615 = vperm.xlu0 %3614, %v2887
      %v3616 = vpop.permute.xlu0 %3615
      %3618 = vset.pattern.permute.xlu0 3
      %3619 = vperm.xlu0 %3618, %v2888
      %v3620 = vpop.permute.xlu0 %3619
      %3622 = vset.pattern.permute.xlu0 3
      %3623 = vperm.xlu0 %3622, %v2889
      %v3624 = vpop.permute.xlu0 %3623
      %3626 = vset.pattern.permute.xlu0 3
      %3627 = vperm.xlu0 %3626, %v2890
      %v3628 = vpop.permute.xlu0 %3627
      %3630 = vset.pattern.permute.xlu0 3
      %3631 = vperm.xlu0 %3630, %v2891
      %v3632 = vpop.permute.xlu0 %3631
      %3634 = vset.pattern.permute.xlu0 3
      %3635 = vperm.xlu0 %3634, %v2892
      %v3636 = vpop.permute.xlu0 %3635
      %3638 = vset.pattern.permute.xlu0 3
      %3639 = vperm.xlu0 %3638, %v2893
      %v3640 = vpop.permute.xlu0 %3639
      %3642 = vset.pattern.permute.xlu0 3
      %3643 = vperm.xlu0 %3642, %v2894
      %v3644 = vpop.permute.xlu0 %3643
      %3646 = vset.pattern.permute.xlu0 3
      %3647 = vperm.xlu0 %3646, %v2895
      %v3648 = vpop.permute.xlu0 %3647
      %3650 = vset.pattern.permute.xlu0 3
      %3651 = vperm.xlu0 %3650, %v2896
      %v3652 = vpop.permute.xlu0 %3651
      %3654 = vset.pattern.permute.xlu0 3
      %3655 = vperm.xlu0 %3654, %v2897
      %v3656 = vpop.permute.xlu0 %3655
      %3658 = vset.pattern.permute.xlu0 3
      %3659 = vperm.xlu0 %3658, %v2898
      %v3660 = vpop.permute.xlu0 %3659
      %3662 = vset.pattern.permute.xlu0 3
      %3663 = vperm.xlu0 %3662, %v2899
      %v3664 = vpop.permute.xlu0 %3663
      %3666 = vset.pattern.permute.xlu0 3
      %3667 = vperm.xlu0 %3666, %v2900
      %v3668 = vpop.permute.xlu0 %3667
      %3670 = vset.pattern.permute.xlu0 3
      %3671 = vperm.xlu0 %3670, %v2901
      %v3672 = vpop.permute.xlu0 %3671
      %3674 = vset.pattern.permute.xlu0 3
      %3675 = vperm.xlu0 %3674, %v2902
      %v3676 = vpop.permute.xlu0 %3675
      %3678 = vset.pattern.permute.xlu0 3
      %3679 = vperm.xlu0 %3678, %v2903
      %v3680 = vpop.permute.xlu0 %3679
      %3682 = vset.pattern.permute.xlu0 3
      %3683 = vperm.xlu0 %3682, %v2904
      %v3684 = vpop.permute.xlu0 %3683
      %3686 = vset.pattern.permute.xlu0 3
      %3687 = vperm.xlu0 %3686, %v2905
      %v3688 = vpop.permute.xlu0 %3687
      %3690 = vset.pattern.permute.xlu0 3
      %3691 = vperm.xlu0 %3690, %v2906
      %v3692 = vpop.permute.xlu0 %3691
      %3694 = vset.pattern.permute.xlu0 3
      %3695 = vperm.xlu0 %3694, %v2907
      %v3696 = vpop.permute.xlu0 %3695
      %3698 = vset.pattern.permute.xlu0 3
      %3699 = vperm.xlu0 %3698, %v2908
      %v3700 = vpop.permute.xlu0 %3699
      %3702 = vset.pattern.permute.xlu0 3
      %3703 = vperm.xlu0 %3702, %v2909
      %v3704 = vpop.permute.xlu0 %3703
      %v3706 = vlaneseq
      %v3707 = vshrl.u32 %v3706, 7
      %v3708 = vsub.s32 3, %v3707
      %v3709 = vrot.slane %v2911, %v3708
      %v3710 = vmul.f32 %v3572, %v3709
      %v3711 = vmul.f32 %v3576, %v3709
      %v3712 = vmul.f32 %v3580, %v3709
      %v3713 = vmul.f32 %v3584, %v3709
      %v3714 = vmul.f32 %v3588, %v3709
      %v3715 = vmul.f32 %v3592, %v3709
      %v3716 = vmul.f32 %v3596, %v3709
      %v3717 = vmul.f32 %v3600, %v3709
      %v3718 = vmul.f32 %v3604, %v3709
      %v3719 = vmul.f32 %v3608, %v3709
      %v3720 = vmul.f32 %v3612, %v3709
      %v3721 = vmul.f32 %v3616, %v3709
      %v3722 = vmul.f32 %v3620, %v3709
      %v3723 = vmul.f32 %v3624, %v3709
      %v3724 = vmul.f32 %v3628, %v3709
      %v3725 = vmul.f32 %v3632, %v3709
      %v3726 = vmul.f32 %v3636, %v3709
      %v3727 = vmul.f32 %v3640, %v3709
      %v3728 = vmul.f32 %v3644, %v3709
      %v3729 = vmul.f32 %v3648, %v3709
      %v3730 = vmul.f32 %v3652, %v3709
      %v3731 = vmul.f32 %v3656, %v3709
      %v3732 = vmul.f32 %v3660, %v3709
      %v3733 = vmul.f32 %v3664, %v3709
      %v3734 = vmul.f32 %v3668, %v3709
      %v3735 = vmul.f32 %v3672, %v3709
      %v3736 = vmul.f32 %v3676, %v3709
      %v3737 = vmul.f32 %v3680, %v3709
      %v3738 = vmul.f32 %v3684, %v3709
      %v3739 = vmul.f32 %v3688, %v3709
      %v3740 = vmul.f32 %v3692, %v3709
      %v3741 = vmul.f32 %v3696, %v3709
      %v3742 = vmul.f32 %v3700, %v3709
      %v3743 = vmul.f32 %v3704, %v3709
      %v3744 = vadd.f32 %v3536, %v3710
      %v3745 = vadd.f32 %v3537, %v3711
      %v3746 = vadd.f32 %v3538, %v3712
      %v3747 = vadd.f32 %v3539, %v3713
      %v3748 = vadd.f32 %v3540, %v3714
      %v3749 = vadd.f32 %v3541, %v3715
      %v3750 = vadd.f32 %v3542, %v3716
      %v3751 = vadd.f32 %v3543, %v3717
      %v3752 = vadd.f32 %v3544, %v3718
      %v3753 = vadd.f32 %v3545, %v3719
      %v3754 = vadd.f32 %v3546, %v3720
      %v3755 = vadd.f32 %v3547, %v3721
      %v3756 = vadd.f32 %v3548, %v3722
      %v3757 = vadd.f32 %v3549, %v3723
      %v3758 = vadd.f32 %v3550, %v3724
      %v3759 = vadd.f32 %v3551, %v3725
      %v3760 = vadd.f32 %v3552, %v3726
      %v3761 = vadd.f32 %v3553, %v3727
      %v3762 = vadd.f32 %v3554, %v3728
      %v3763 = vadd.f32 %v3555, %v3729
      %v3764 = vadd.f32 %v3556, %v3730
      %v3765 = vadd.f32 %v3557, %v3731
      %v3766 = vadd.f32 %v3558, %v3732
      %v3767 = vadd.f32 %v3559, %v3733
      %v3768 = vadd.f32 %v3560, %v3734
      %v3769 = vadd.f32 %v3561, %v3735
      %v3770 = vadd.f32 %v3562, %v3736
      %v3771 = vadd.f32 %v3563, %v3737
      %v3772 = vadd.f32 %v3564, %v3738
      %v3773 = vadd.f32 %v3565, %v3739
      %v3774 = vadd.f32 %v3566, %v3740
      %v3775 = vadd.f32 %v3567, %v3741
      %v3776 = vadd.f32 %v3568, %v3742
      %v3777 = vadd.f32 %v3569, %v3743
      %v3778 = vld [vmem:[%s2] sm:$0x1]
      %v3780 = vlaneseq
      %v3781 = vshrl.u32 %v3780, 7
      %v3782 = vsub.s32 0, %v3781
      %v3783 = vrot.slane %v3778, %v3782
      %v3785 = vadd.f32 %v3744, %v3783
      %v3786 = vadd.f32 %v3745, %v3783
      %v3787 = vadd.f32 %v3746, %v3783
      %v3788 = vadd.f32 %v3747, %v3783
      %v3789 = vadd.f32 %v3748, %v3783
      %v3790 = vadd.f32 %v3749, %v3783
      %v3791 = vadd.f32 %v3750, %v3783
      %v3792 = vadd.f32 %v3751, %v3783
      %v3793 = vadd.f32 %v3752, %v3783
      %v3794 = vadd.f32 %v3753, %v3783
      %v3795 = vadd.f32 %v3754, %v3783
      %v3796 = vadd.f32 %v3755, %v3783
      %v3797 = vadd.f32 %v3756, %v3783
      %v3798 = vadd.f32 %v3757, %v3783
      %v3799 = vadd.f32 %v3758, %v3783
      %v3800 = vadd.f32 %v3759, %v3783
      %v3801 = vadd.f32 %v3760, %v3783
      %v3802 = vadd.f32 %v3761, %v3783
      %v3803 = vadd.f32 %v3762, %v3783
      %v3804 = vadd.f32 %v3763, %v3783
      %v3805 = vadd.f32 %v3764, %v3783
      %v3806 = vadd.f32 %v3765, %v3783
      %v3807 = vadd.f32 %v3766, %v3783
      %v3808 = vadd.f32 %v3767, %v3783
      %v3809 = vadd.f32 %v3768, %v3783
      %v3810 = vadd.f32 %v3769, %v3783
      %v3811 = vadd.f32 %v3770, %v3783
      %v3812 = vadd.f32 %v3771, %v3783
      %v3813 = vadd.f32 %v3772, %v3783
      %v3814 = vadd.f32 %v3773, %v3783
      %v3815 = vadd.f32 %v3774, %v3783
      %v3816 = vadd.f32 %v3775, %v3783
      %v3817 = vadd.f32 %v3776, %v3783
      %v3818 = vadd.f32 %v3777, %v3783
      %vm3819 = vcmp.ge.f32.partialorder %v3785, 0.0
      %vm3820 = vcmp.ge.f32.partialorder %v3786, 0.0
      %vm3821 = vcmp.ge.f32.partialorder %v3787, 0.0
      %vm3822 = vcmp.ge.f32.partialorder %v3788, 0.0
      %vm3823 = vcmp.ge.f32.partialorder %v3789, 0.0
      %vm3824 = vcmp.ge.f32.partialorder %v3790, 0.0
      %vm3825 = vcmp.ge.f32.partialorder %v3791, 0.0
      %vm3826 = vcmp.ge.f32.partialorder %v3792, 0.0
      %vm3827 = vcmp.ge.f32.partialorder %v3793, 0.0
      %vm3828 = vcmp.ge.f32.partialorder %v3794, 0.0
      %vm3829 = vcmp.ge.f32.partialorder %v3795, 0.0
      %vm3830 = vcmp.ge.f32.partialorder %v3796, 0.0
      %vm3831 = vcmp.ge.f32.partialorder %v3797, 0.0
      %vm3832 = vcmp.ge.f32.partialorder %v3798, 0.0
      %vm3833 = vcmp.ge.f32.partialorder %v3799, 0.0
      %vm3834 = vcmp.ge.f32.partialorder %v3800, 0.0
      %vm3835 = vcmp.ge.f32.partialorder %v3801, 0.0
      %vm3836 = vcmp.ge.f32.partialorder %v3802, 0.0
      %vm3837 = vcmp.ge.f32.partialorder %v3803, 0.0
      %vm3838 = vcmp.ge.f32.partialorder %v3804, 0.0
      %vm3839 = vcmp.ge.f32.partialorder %v3805, 0.0
      %vm3840 = vcmp.ge.f32.partialorder %v3806, 0.0
      %vm3841 = vcmp.ge.f32.partialorder %v3807, 0.0
      %vm3842 = vcmp.ge.f32.partialorder %v3808, 0.0
      %vm3843 = vcmp.ge.f32.partialorder %v3809, 0.0
      %vm3844 = vcmp.ge.f32.partialorder %v3810, 0.0
      %vm3845 = vcmp.ge.f32.partialorder %v3811, 0.0
      %vm3846 = vcmp.ge.f32.partialorder %v3812, 0.0
      %vm3847 = vcmp.ge.f32.partialorder %v3813, 0.0
      %vm3848 = vcmp.ge.f32.partialorder %v3814, 0.0
      %vm3849 = vcmp.ge.f32.partialorder %v3815, 0.0
      %vm3850 = vcmp.ge.f32.partialorder %v3816, 0.0
      %vm3851 = vcmp.ge.f32.partialorder %v3817, 0.0
      %vm3852 = vcmp.ge.f32.partialorder %v3818, 0.0
      %v3853 = vmul.f32 %v3785, 0.2
      %v3854 = vmul.f32 %v3786, 0.2
      %v3855 = vmul.f32 %v3787, 0.2
      %v3856 = vmul.f32 %v3788, 0.2
      %v3857 = vmul.f32 %v3789, 0.2
      %v3858 = vmul.f32 %v3790, 0.2
      %v3859 = vmul.f32 %v3791, 0.2
      %v3860 = vmul.f32 %v3792, 0.2
      %v3861 = vmul.f32 %v3793, 0.2
      %v3862 = vmul.f32 %v3794, 0.2
      %v3863 = vmul.f32 %v3795, 0.2
      %v3864 = vmul.f32 %v3796, 0.2
      %v3865 = vmul.f32 %v3797, 0.2
      %v3866 = vmul.f32 %v3798, 0.2
      %v3867 = vmul.f32 %v3799, 0.2
      %v3868 = vmul.f32 %v3800, 0.2
      %v3869 = vmul.f32 %v3801, 0.2
      %v3870 = vmul.f32 %v3802, 0.2
      %v3871 = vmul.f32 %v3803, 0.2
      %v3872 = vmul.f32 %v3804, 0.2
      %v3873 = vmul.f32 %v3805, 0.2
      %v3874 = vmul.f32 %v3806, 0.2
      %v3875 = vmul.f32 %v3807, 0.2
      %v3876 = vmul.f32 %v3808, 0.2
      %v3877 = vmul.f32 %v3809, 0.2
      %v3878 = vmul.f32 %v3810, 0.2
      %v3879 = vmul.f32 %v3811, 0.2
      %v3880 = vmul.f32 %v3812, 0.2
      %v3881 = vmul.f32 %v3813, 0.2
      %v3882 = vmul.f32 %v3814, 0.2
      %v3883 = vmul.f32 %v3815, 0.2
      %v3884 = vmul.f32 %v3816, 0.2
      %v3885 = vmul.f32 %v3817, 0.2
      %v3886 = vmul.f32 %v3818, 0.2
      %v3887 = vsel %vm3819, %v3785, %v3853
      %v3888 = vsel %vm3820, %v3786, %v3854
      %v3889 = vsel %vm3821, %v3787, %v3855
      %v3890 = vsel %vm3822, %v3788, %v3856
      %v3891 = vsel %vm3823, %v3789, %v3857
      %v3892 = vsel %vm3824, %v3790, %v3858
      %v3893 = vsel %vm3825, %v3791, %v3859
      %v3894 = vsel %vm3826, %v3792, %v3860
      %v3895 = vsel %vm3827, %v3793, %v3861
      %v3896 = vsel %vm3828, %v3794, %v3862
      %v3897 = vsel %vm3829, %v3795, %v3863
      %v3898 = vsel %vm3830, %v3796, %v3864
      %v3899 = vsel %vm3831, %v3797, %v3865
      %v3900 = vsel %vm3832, %v3798, %v3866
      %v3901 = vsel %vm3833, %v3799, %v3867
      %v3902 = vsel %vm3834, %v3800, %v3868
      %v3903 = vsel %vm3835, %v3801, %v3869
      %v3904 = vsel %vm3836, %v3802, %v3870
      %v3905 = vsel %vm3837, %v3803, %v3871
      %v3906 = vsel %vm3838, %v3804, %v3872
      %v3907 = vsel %vm3839, %v3805, %v3873
      %v3908 = vsel %vm3840, %v3806, %v3874
      %v3909 = vsel %vm3841, %v3807, %v3875
      %v3910 = vsel %vm3842, %v3808, %v3876
      %v3911 = vsel %vm3843, %v3809, %v3877
      %v3912 = vsel %vm3844, %v3810, %v3878
      %v3913 = vsel %vm3845, %v3811, %v3879
      %v3914 = vsel %vm3846, %v3812, %v3880
      %v3915 = vsel %vm3847, %v3813, %v3881
      %v3916 = vsel %vm3848, %v3814, %v3882
      %v3917 = vsel %vm3849, %v3815, %v3883
      %v3918 = vsel %vm3850, %v3816, %v3884
      %v3919 = vsel %vm3851, %v3817, %v3885
      %v3920 = vsel %vm3852, %v3818, %v3886
      %vm3921 = vcmask 130048
      %3922 = vst.msk [vmem:[%s170] sm:$0xff] %vm3921, %v3887
      %3923 = vst.msk [vmem:[%s170 + $0x8] sm:$0xff] %vm3921, %v3888
      %3924 = vst.msk [vmem:[%s170 + $0x10] sm:$0xff] %vm3921, %v3889
      %3925 = vst.msk [vmem:[%s170 + $0x18] sm:$0xff] %vm3921, %v3890
      %3926 = vst.msk [vmem:[%s170 + $0x20] sm:$0xff] %vm3921, %v3891
      %3927 = vst.msk [vmem:[%s170 + $0x28] sm:$0xff] %vm3921, %v3892
      %3928 = vst.msk [vmem:[%s170 + $0x30] sm:$0xff] %vm3921, %v3893
      %3929 = vst.msk [vmem:[%s170 + $0x38] sm:$0xff] %vm3921, %v3894
      %3930 = vst.msk [vmem:[%s170 + $0x40] sm:$0xff] %vm3921, %v3895
      %3931 = vst.msk [vmem:[%s170 + $0x48] sm:$0xff] %vm3921, %v3896
      %3932 = vst.msk [vmem:[%s170 + $0x50] sm:$0xff] %vm3921, %v3897
      %3933 = vst.msk [vmem:[%s170 + $0x58] sm:$0xff] %vm3921, %v3898
      %3934 = vst.msk [vmem:[%s170 + $0x60] sm:$0xff] %vm3921, %v3899
      %3935 = vst.msk [vmem:[%s170 + $0x68] sm:$0xff] %vm3921, %v3900
      %3936 = vst.msk [vmem:[%s170 + $0x70] sm:$0xff] %vm3921, %v3901
      %3937 = vst.msk [vmem:[%s170 + $0x78] sm:$0xff] %vm3921, %v3902
      %3938 = vst.msk [vmem:[%s170 + $0x80] sm:$0xff] %vm3921, %v3903
      %3939 = vst.msk [vmem:[%s170 + $0x88] sm:$0xff] %vm3921, %v3904
      %3940 = vst.msk [vmem:[%s170 + $0x90] sm:$0xff] %vm3921, %v3905
      %3941 = vst.msk [vmem:[%s170 + $0x98] sm:$0xff] %vm3921, %v3906
      %3942 = vst.msk [vmem:[%s170 + $0xa0] sm:$0xff] %vm3921, %v3907
      %3943 = vst.msk [vmem:[%s170 + $0xa8] sm:$0xff] %vm3921, %v3908
      %3944 = vst.msk [vmem:[%s170 + $0xb0] sm:$0xff] %vm3921, %v3909
      %3945 = vst.msk [vmem:[%s170 + $0xb8] sm:$0xff] %vm3921, %v3910
      %3946 = vst.msk [vmem:[%s170 + $0xc0] sm:$0xff] %vm3921, %v3911
      %3947 = vst.msk [vmem:[%s170 + $0xc8] sm:$0xff] %vm3921, %v3912
      %3948 = vst.msk [vmem:[%s170 + $0xd0] sm:$0xff] %vm3921, %v3913
      %3949 = vst.msk [vmem:[%s170 + $0xd8] sm:$0xff] %vm3921, %v3914
      %3950 = vst.msk [vmem:[%s170 + $0xe0] sm:$0xff] %vm3921, %v3915
      %3951 = vst.msk [vmem:[%s170 + $0xe8] sm:$0xff] %vm3921, %v3916
      %3952 = vst.msk [vmem:[%s170 + $0xf0] sm:$0xff] %vm3921, %v3917
      %3953 = vst.msk [vmem:[%s170 + $0xf8] sm:$0xff] %vm3921, %v3918
      %3954 = vst.msk [vmem:[%s170 + $0x100] sm:$0xff] %vm3921, %v3919
      %3955 = vst.msk [vmem:[%s170 + $0x108] sm:$0xff] %vm3921, %v3920
      %p3956 = scmp.lt.s32.totalorder %s14, 1
      %s3957 = scalar_select %p3956, %s14, 1
      %s3958 = smul.addr %s3957, 34
      %s3959 = smul.addr %s3958, 8
      %s3960 = scalar_lea.vmem %s3, %s3959
      // Predicated region
      $region33: #{pallas_forward.4} parent=31 // pred_check
        %p3961 = pneg %p100
      $region34: #{pallas_forward.4} parent=31 // pred_check_branch
        %3963 = sbr.rel (%p3961) target = $region36
      $region35: #{pallas_forward.4} parent=31 // pred_region
        _
      $region36: #{pallas_forward.4} parent=31 // pred_fallthru
        _
    $region32: #{pallas_forward.4} parent=5 // pred_fallthru
      _
    %p3964 = scmp.le.s32.totalorder 2, %s9
    // Predicated region
    $region37: #{pallas_forward.4} parent=5 // pred_check
      %p3965 = pneg %p3964
    $region38: #{pallas_forward.4} parent=5 // pred_check_branch
      %3967 = sbr.rel (%p3965) target = $region40
    $region39: #{pallas_forward.4} parent=5 // pred_region
      %s3968 = ssub.s32 %s9, 2
      // Predicated region
      $region41: #{pallas_forward.4} parent=39 // pred_check
        %p3969 = pneg %p106
      $region42: #{pallas_forward.4} parent=39 // pred_check_branch
        %3971 = sbr.rel (%p3969) target = $region44
      $region43: #{pallas_forward.4} parent=39 // pred_region
        %p3972 = scmp.lt.s32.totalorder %s15, 1
        %s3973 = scalar_select %p3972, %s15, 1
        %s3974 = smul.addr %s3973, 34
        %s3975 = smul.addr %s3974, 8
        %s3976 = scalar_lea.vmem %s3, %s3975
      $region44: #{pallas_forward.4} parent=39 // pred_fallthru
        _
    $region40: #{pallas_forward.4} parent=5 // pred_fallthru
      _
  $region6: #{pallas_forward.4} parent=0 // loop_footer
    %s13 = sadd.s32 1, %s9
  $region7: #{pallas_forward.4} parent=0 // loop_footer_branch
    %8 = sbr.rel target = $region3
  $region8: #{pallas_forward.4} parent=0 // loop_exit
    _

// kernel: pallas_forward.5
$region0: #{pallas_forward.5}
  #allocation0 [shape = 'u32[]', space=smem, size = 0x4, offset = 0x4, fixed_abs, tag = 'smem constant byte address 0x4 - core index']
  #allocation1 [shape = 'u32[144,128]{1,0:T(1,128)}', space=vmem, size = 0x12000, scoped, tag = 'internal scratch']
  %s0 = inlined_call_operand.vmem [shape: f32[2,88,64], index: 0, kind: input, shape index: {}]
  %s1 = inlined_call_operand.vmem [shape: bf16[2,2,64,32], index: 1, kind: input, shape index: {}]
  %s2 = inlined_call_operand.vmem [shape: f32[1,32], index: 2, kind: input, shape index: {}]
  %s3 = inlined_call_operand.vmem [shape: f32[2,72,32], index: 3, kind: output, shape index: {}]
  %s4 = sld [smem:[#allocation0]]
  $region45: #{pallas_forward.5} parent=0
    _
  %s6 = ssub.s32 1, %s4
  %s7 = scalar_select 0, %s6, %s4
  loop: start=0, step=1, limit=4
  $region2: #{pallas_forward.5} parent=0 // loop_pre_header
    _
  $region3: #{pallas_forward.5} parent=0 // loop_header
    %s9 = sphi 0, %s13
    %p10 = scmp.ge.s32.totalorder %s9, 4
    %s19 = sphi 0, %s21
    %s22 = sphi 0, %s19
    %s23 = sphi 0, %s22
    %s39 = sphi 0, %s23
    %s43 = sphi 0, %s43
    %s45 = sphi 0, %s43
    %s46 = sphi 0, %s45
    %s60 = sphi 0, %s46
    %s64 = sphi 0, %s64
    %s66 = sphi 0, %s64
    %s67 = sphi 0, %s66
    %s81 = sphi 0, %s67
    %s87 = sphi 0, %s89
    %s90 = sphi 0, %s87
    %s91 = sphi 0, %s90
    %s107 = sphi 0, %s91
  $region4: #{pallas_forward.5} parent=0 // loop_header_branch
    %12 = sbr.rel (%p10) target = $region8
  $region5: #{pallas_forward.5} parent=0 // loop_body
    %s14 = ssub.s32 %s9, 1
    %s15 = ssub.s32 %s9, 2
    %s16 = sadd.s32 %s9, 1
    %s17 = ssub.s32 %s9, %s16
    %p18 = scmp.eq.s32.totalorder %s17, 0
    %s20 = sadd.s32 %s19, 1
    %s21 = scalar_select %p18, %s19, %s20
    %p24 = pneg %p18
    %p25 = scmp.eq.s32.totalorder %s9, 1
    %p26 = por %p24, %p25
    %p27 = scmp.ne.s32.totalorder %s19, %s22
    %p28 = scmp.eq.s32.totalorder %s9, 0
    %p29 = por %p27, %p28
    %p30 = scmp.ne.s32.totalorder %s19, %s22
    %p31 = scmp.eq.s32.totalorder %s14, 1
    %p32 = por %p30, %p31
    %p33 = scmp.ne.s32.totalorder %s22, %s23
    %p34 = scmp.eq.s32.totalorder %s14, 0
    %p35 = por %p33, %p34
    %p36 = scmp.ne.s32.totalorder %s22, %s23
    %p37 = scmp.eq.s32.totalorder %s15, 1
    %p38 = por %p36, %p37
    %p40 = scmp.ne.s32.totalorder %s23, %s39
    %p41 = scmp.eq.s32.totalorder %s15, 0
    %p42 = por %p40, %p41
    %s44 = sadd.s32 %s43, 1
    %p47 = scmp.eq.s32.totalorder %s9, 1
    %p48 = scmp.ne.s32.totalorder %s43, %s45
    %p49 = scmp.eq.s32.totalorder %s9, 0
    %p50 = por %p48, %p49
    %p51 = scmp.ne.s32.totalorder %s43, %s45
    %p52 = scmp.eq.s32.totalorder %s14, 1
    %p53 = por %p51, %p52
    %p54 = scmp.ne.s32.totalorder %s45, %s46
    %p55 = scmp.eq.s32.totalorder %s14, 0
    %p56 = por %p54, %p55
    %p57 = scmp.ne.s32.totalorder %s45, %s46
    %p58 = scmp.eq.s32.totalorder %s15, 1
    %p59 = por %p57, %p58
    %p61 = scmp.ne.s32.totalorder %s46, %s60
    %p62 = scmp.eq.s32.totalorder %s15, 0
    %p63 = por %p61, %p62
    %s65 = sadd.s32 %s64, 1
    %p68 = scmp.eq.s32.totalorder %s9, 1
    %p69 = scmp.ne.s32.totalorder %s64, %s66
    %p70 = scmp.eq.s32.totalorder %s9, 0
    %p71 = por %p69, %p70
    %p72 = scmp.ne.s32.totalorder %s64, %s66
    %p73 = scmp.eq.s32.totalorder %s14, 1
    %p74 = por %p72, %p73
    %p75 = scmp.ne.s32.totalorder %s66, %s67
    %p76 = scmp.eq.s32.totalorder %s14, 0
    %p77 = por %p75, %p76
    %p78 = scmp.ne.s32.totalorder %s66, %s67
    %p79 = scmp.eq.s32.totalorder %s15, 1
    %p80 = por %p78, %p79
    %p82 = scmp.ne.s32.totalorder %s67, %s81
    %p83 = scmp.eq.s32.totalorder %s15, 0
    %p84 = por %p82, %p83
    %s85 = ssub.s32 %s9, %s16
    %p86 = scmp.eq.s32.totalorder %s85, 0
    %s88 = sadd.s32 %s87, 1
    %s89 = scalar_select %p86, %s87, %s88
    %p92 = pneg %p86
    %p93 = scmp.eq.s32.totalorder %s9, 1
    %p94 = por %p92, %p93
    %p95 = scmp.ne.s32.totalorder %s87, %s90
    %p96 = scmp.eq.s32.totalorder %s9, 0
    %p97 = por %p95, %p96
    %p98 = scmp.ne.s32.totalorder %s87, %s90
    %p99 = scmp.eq.s32.totalorder %s14, 1
    %p100 = por %p98, %p99
    %p101 = scmp.ne.s32.totalorder %s90, %s91
    %p102 = scmp.eq.s32.totalorder %s14, 0
    %p103 = por %p101, %p102
    %p104 = scmp.ne.s32.totalorder %s90, %s91
    %p105 = scmp.eq.s32.totalorder %s15, 1
    %p106 = por %p104, %p105
    %p108 = scmp.ne.s32.totalorder %s91, %s107
    %p109 = scmp.eq.s32.totalorder %s15, 0
    %p110 = por %p108, %p109
    %p111 = scmp.le.s32.totalorder 1, %s9
    %p112 = scmp.lt.s32.totalorder %s9, 3
    %p113 = pnand %p111, %p112
    %p114 = pneg %p113
    // Predicated region
    $region9: #{pallas_forward.5} parent=5 // pred_check
      _
    $region10: #{pallas_forward.5} parent=5 // pred_check_branch
      %116 = sbr.rel (%p113) target = $region12
    $region11: #{pallas_forward.5} parent=5 // pred_region
      %s117 = ssub.s32 %s9, 1
      // Predicated region
      $region13: #{pallas_forward.5} parent=11 // pred_check
        %p118 = pneg %p56
      $region14: #{pallas_forward.5} parent=11 // pred_check_branch
        %120 = sbr.rel (%p118) target = $region16
      $region15: #{pallas_forward.5} parent=11 // pred_region
        _
      $region16: #{pallas_forward.5} parent=11 // pred_fallthru
        _
      // Predicated region
      $region17: #{pallas_forward.5} parent=11 // pred_check
        %p121 = pneg %p77
      $region18: #{pallas_forward.5} parent=11 // pred_check_branch
        %123 = sbr.rel (%p121) target = $region20
      $region19: #{pallas_forward.5} parent=11 // pred_region
        _
      $region20: #{pallas_forward.5} parent=11 // pred_fallthru
        _
    $region12: #{pallas_forward.5} parent=5 // pred_fallthru
      _
    %p124 = scmp.lt.s32.totalorder %s9, 2
    // Predicated region
    $region21: #{pallas_forward.5} parent=5 // pred_check
      %p125 = pneg %p124
    $region22: #{pallas_forward.5} parent=5 // pred_check_branch
      %127 = sbr.rel (%p125) target = $region24
    $region23: #{pallas_forward.5} parent=5 // pred_region
      // Predicated region
      $region25: #{pallas_forward.5} parent=23 // pred_check
        %p128 = pneg %p29
      $region26: #{pallas_forward.5} parent=23 // pred_check_branch
        %130 = sbr.rel (%p128) target = $region28
      $region27: #{pallas_forward.5} parent=23 // pred_region
        %p131 = scmp.lt.s32.totalorder %s9, 1
        %s132 = scalar_select %p131, %s9, 1
        %s133 = smul.addr %s132, 11
        %s134 = smul.addr %s133, 8
        %s135 = scalar_lea.vmem %s0, %s134
      $region28: #{pallas_forward.5} parent=23 // pred_fallthru
        _
    $region24: #{pallas_forward.5} parent=5 // pred_fallthru
      _
    %p136 = scmp.le.s32.totalorder 1, %s9
    %p137 = scmp.lt.s32.totalorder %s9, 3
    %p138 = pnand %p136, %p137
    %p139 = pneg %p138
    // Predicated region
    $region29: #{pallas_forward.5} parent=5 // pred_check
      _
    $region30: #{pallas_forward.5} parent=5 // pred_check_branch
      %141 = sbr.rel (%p138) target = $region32
    $region31: #{pallas_forward.5} parent=5 // pred_region
      %s142 = ssub.s32 %s9, 1
      %p143 = scmp.lt.s32.totalorder %s14, 1
      %s144 = scalar_select %p143, %s14, 1
      %s145 = smul.addr %s144, 11
      %s146 = smul.addr %s145, 8
      %s147 = scalar_lea.vmem %s0, %s146
      %p148 = pneg %p35
      %p149 = pneg %p32
      %p150 = pneg %p56
      %p151 = pneg %p53
      %p152 = pneg %p77
      %p153 = pneg %p74
      %p154 = pneg %p103
      %p155 = pneg %p100
      %p156 = scmp.lt.s32.totalorder %s14, 1
      %s157 = scalar_select %p156, %s14, 1
      %s158 = smul.addr %s157, 9
      %s159 = smul.addr %s158, 8
      %s160 = scalar_lea.vmem %s3, %s159
      %p161 = scmp.lt.s32.totalorder %s14, 1
      %s162 = scalar_select %p161, %s14, 1
      %s163 = smul.addr %s162, 11
      %s164 = smul.addr %s163, 8
      %s165 = scalar_lea.vmem %s0, %s164
      %p166 = scmp.lt.s32.totalorder %s14, 1
      %s167 = scalar_select %p166, %s14, 1
      %s168 = smul.addr %s167, 9
      %s169 = smul.addr %s168, 8
      %s170 = scalar_lea.vmem %s3, %s169
      %v172 = vld [vmem:[%s165] sm:$0xff]
      %v173 = vld [vmem:[%s165 + $0x8] sm:$0xff]
      %v174 = vld [vmem:[%s165 + $0x10] sm:$0xff]
      %v175 = vld [vmem:[%s165 + $0x18] sm:$0xff]
      %v176 = vld [vmem:[%s165 + $0x20] sm:$0xff]
      %v177 = vld [vmem:[%s165 + $0x28] sm:$0xff]
      %v178 = vld [vmem:[%s165 + $0x30] sm:$0xff]
      %v179 = vld [vmem:[%s165 + $0x38] sm:$0xff]
      %v180 = vld [vmem:[%s165 + $0x40] sm:$0xff]
      %v181 = vld [vmem:[%s1] sm:$0xf]
      %v182 = vld [vmem:[%s1 + $0x4] sm:$0xf]
      %v183 = vld [vmem:[%s1 + $0x8] sm:$0xf]
      %v184 = vld [vmem:[%s1 + $0xc] sm:$0xf]
      %v185 = vld [vmem:[%s1 + $0x10] sm:$0xf]
      %v186 = vld [vmem:[%s1 + $0x14] sm:$0xf]
      %v187 = vld [vmem:[%s1 + $0x18] sm:$0xf]
      %v188 = vld [vmem:[%s1 + $0x1c] sm:$0xf]
      %v189 = vpack.c.bf16 %v173, %v172
      %v190 = vpack.c.bf16 %v175, %v174
      %v191 = vpack.c.bf16 %v177, %v176
      %v192 = vpack.c.bf16 %v179, %v178
      %v193 = vpack.c.bf16 %v180, %v180
      %v194 = vld [vmem:[%s165 + $0x1] sm:$0xff]
      %v195 = vld [vmem:[%s165 + $0x9] sm:$0xff]
      %v196 = vld [vmem:[%s165 + $0x11] sm:$0xff]
      %v197 = vld [vmem:[%s165 + $0x19] sm:$0xff]
      %v198 = vld [vmem:[%s165 + $0x21] sm:$0xff]
      %v199 = vld [vmem:[%s165 + $0x29] sm:$0xff]
      %v200 = vld [vmem:[%s165 + $0x31] sm:$0xff]
      %v201 = vld [vmem:[%s165 + $0x39] sm:$0xff]
      %v202 = vld [vmem:[%s165 + $0x41] sm:$0xff]
      %s203 = scalar_lea.vmem %s1, 32
      %v204 = vld [vmem:[%s203] sm:$0xf]
      %v205 = vld [vmem:[%s203 + $0x4] sm:$0xf]
      %v206 = vld [vmem:[%s203 + $0x8] sm:$0xf]
      %v207 = vld [vmem:[%s203 + $0xc] sm:$0xf]
      %v208 = vld [vmem:[%s203 + $0x10] sm:$0xf]
      %v209 = vld [vmem:[%s203 + $0x14] sm:$0xf]
      %v210 = vld [vmem:[%s203 + $0x18] sm:$0xf]
      %v211 = vld [vmem:[%s203 + $0x1c] sm:$0xf]
      %v212 = vpack.c.bf16 %v195, %v194
      %v213 = vpack.c.bf16 %v197, %v196
      %v214 = vpack.c.bf16 %v199, %v198
      %v215 = vpack.c.bf16 %v201, %v200
      %v216 = vpack.c.bf16 %v202, %v202
      %v225 = vunpack.c.l.b16 %v204
      %v226 = vunpack.c.l.b16 %v205
      %v227 = vunpack.c.l.b16 %v206
      %v228 = vunpack.c.l.b16 %v207
      %v229 = vunpack.c.l.b16 %v208
      %v230 = vunpack.c.l.b16 %v209
      %v231 = vunpack.c.l.b16 %v210
      %v232 = vunpack.c.l.b16 %v211
      %v233 = vpack.c.b16 %v226, %v225
      %v234 = vpack.c.b16 %v228, %v227
      %v235 = vpack.c.b16 %v230, %v229
      %v236 = vpack.c.b16 %v232, %v231
      %vm241 = vcmask 523264
      %v243 = vsel %vm241, %v212, 0
      %v246 = vsel %vm241, %v213, 0
      %v249 = vsel %vm241, %v214, 0
      %v252 = vsel %vm241, %v215, 0
      %v255 = vsel %vm241, %v216, 0
      %257 = vmatprep.subr.bf16.mxu0 0
      %258 = vmatpush1.bf16.msra.mxu0 0
      %259 = vmatprep.subr.bf16.mxu0 0
      %260 = vmatpush1.bf16.msra.mxu0 0
      %261 = vmatprep.subr.bf16.mxu0 0
      %262 = vmatpush1.bf16.msra.mxu0 0
      %263 = vmatprep.subr.bf16.mxu0 0
      %264 = vmatpush1.bf16.msra.mxu0 0
      %265 = vmatprep.subr.bf16.mxu0 0
      %266 = vmatpush1.bf16.msra.mxu0 %v236
      %267 = vmatprep.subr.bf16.mxu0 0
      %268 = vmatpush1.bf16.msra.mxu0 %v235
      %269 = vmatprep.subr.bf16.mxu0 0
      %270 = vmatpush1.bf16.msra.mxu0 %v234
      %271 = vmatprep.subr.bf16.mxu0 0
      %272 = vmatpush1.bf16.msra.mxu0 %v233
      %273 = vmatprep.subr.bf16.mxu0 0
      %274 = vmatpush2.bf16.msra.mxu0 0
      %275 = vmatprep.subr.bf16.mxu0 0
      %276 = vmatpush2.bf16.msra.mxu0 0
      %277 = vmatprep.subr.bf16.mxu0 0
      %278 = vmatpush2.bf16.msra.mxu0 0
      %279 = vmatprep.subr.bf16.mxu0 0
      %280 = vmatpush2.bf16.msra.mxu0 0
      %281 = vmatprep.subr.bf16.mxu0 0
      %282 = vmatpush2.bf16.msra.mxu0 0
      %283 = vmatprep.subr.bf16.mxu0 0
      %284 = vmatpush2.bf16.msra.mxu0 0
      %285 = vmatprep.subr.bf16.mxu0 0
      %286 = vmatpush2.bf16.msra.mxu0 0
      %287 = vmatprep.subr.bf16.mxu0 0
      %288 = vmatpush2.bf16.msra.mxu0 0
      %289 = vmatprep.mubr.bf16.mxu0 0
      %290 = vmatmul.mubr.bf16.gmra.mxu0 %v243
      %v291 = vpop.f32.mrf.mxu0
      %v292 = vadd.f32 0.0, %v291
      %v293 = vpop.f32.mrf.mxu0
      %v294 = vpop.f32.mrf.mxu0
      %v295 = vadd.f32 0.0, %v294
      %v296 = vpop.f32.mrf.mxu0
      %297 = vmatprep.mubr.bf16.mxu0 0
      %298 = vmatmul.mubr.bf16.gmra.mxu0 %v246
      %v299 = vpop.f32.mrf.mxu0
      %v300 = vadd.f32 0.0, %v299
      %v301 = vpop.f32.mrf.mxu0
      %v302 = vpop.f32.mrf.mxu0
      %v303 = vadd.f32 0.0, %v302
      %v304 = vpop.f32.mrf.mxu0
      %305 = vmatprep.mubr.bf16.mxu0 0
      %306 = vmatmul.mubr.bf16.gmra.mxu0 %v249
      %v307 = vpop.f32.mrf.mxu0
      %v308 = vadd.f32 0.0, %v307
      %v309 = vpop.f32.mrf.mxu0
      %v310 = vpop.f32.mrf.mxu0
      %v311 = vadd.f32 0.0, %v310
      %v312 = vpop.f32.mrf.mxu0
      %313 = vmatprep.mubr.bf16.mxu0 0
      %314 = vmatmul.mubr.bf16.gmra.mxu0 %v252
      %v315 = vpop.f32.mrf.mxu0
      %v316 = vadd.f32 0.0, %v315
      %v317 = vpop.f32.mrf.mxu0
      %v318 = vpop.f32.mrf.mxu0
      %v319 = vadd.f32 0.0, %v318
      %v320 = vpop.f32.mrf.mxu0
      %321 = vmatprep.mubr.bf16.mxu0 0
      %322 = vmatmul.mubr.bf16.gmra.mxu0 %v255
      %v323 = vpop.f32.mrf.mxu0
      %v324 = vadd.f32 0.0, %v323
      %v325 = vpop.f32.mrf.mxu0
      %v326 = vpop.f32.mrf.mxu0
      %v327 = vpop.f32.mrf.mxu0
      %328 = vdwg.mxu0
      %v337 = vunpack.c.l.b16 %v181
      %v338 = vunpack.c.l.b16 %v182
      %v339 = vunpack.c.l.b16 %v183
      %v340 = vunpack.c.l.b16 %v184
      %v341 = vunpack.c.l.b16 %v185
      %v342 = vunpack.c.l.b16 %v186
      %v343 = vunpack.c.l.b16 %v187
      %v344 = vunpack.c.l.b16 %v188
      %v345 = vpack.c.b16 %v338, %v337
      %v346 = vpack.c.b16 %v340, %v339
      %v347 = vpack.c.b16 %v342, %v341
      %v348 = vpack.c.b16 %v344, %v343
      %v354 = vsel %vm241, %v189, 0
      %v357 = vsel %vm241, %v190, 0
      %v360 = vsel %vm241, %v191, 0
      %v363 = vsel %vm241, %v192, 0
      %v366 = vsel %vm241, %v193, 0
      %368 = vmatprep.subr.bf16.mxu0 0
      %369 = vmatpush1.bf16.msra.mxu0 0
      %370 = vmatprep.subr.bf16.mxu0 0
      %371 = vmatpush1.bf16.msra.mxu0 0
      %372 = vmatprep.subr.bf16.mxu0 0
      %373 = vmatpush1.bf16.msra.mxu0 0
      %374 = vmatprep.subr.bf16.mxu0 0
      %375 = vmatpush1.bf16.msra.mxu0 0
      %376 = vmatprep.subr.bf16.mxu0 0
      %377 = vmatpush1.bf16.msra.mxu0 %v348
      %378 = vmatprep.subr.bf16.mxu0 0
      %379 = vmatpush1.bf16.msra.mxu0 %v347
      %380 = vmatprep.subr.bf16.mxu0 0
      %381 = vmatpush1.bf16.msra.mxu0 %v346
      %382 = vmatprep.subr.bf16.mxu0 0
      %383 = vmatpush1.bf16.msra.mxu0 %v345
      %384 = vmatprep.subr.bf16.mxu0 0
      %385 = vmatpush2.bf16.msra.mxu0 0
      %386 = vmatprep.subr.bf16.mxu0 0
      %387 = vmatpush2.bf16.msra.mxu0 0
      %388 = vmatprep.subr.bf16.mxu0 0
      %389 = vmatpush2.bf16.msra.mxu0 0
      %390 = vmatprep.subr.bf16.mxu0 0
      %391 = vmatpush2.bf16.msra.mxu0 0
      %392 = vmatprep.subr.bf16.mxu0 0
      %393 = vmatpush2.bf16.msra.mxu0 0
      %394 = vmatprep.subr.bf16.mxu0 0
      %395 = vmatpush2.bf16.msra.mxu0 0
      %396 = vmatprep.subr.bf16.mxu0 0
      %397 = vmatpush2.bf16.msra.mxu0 0
      %398 = vmatprep.subr.bf16.mxu0 0
      %399 = vmatpush2.bf16.msra.mxu0 0
      %400 = vmatprep.mubr.bf16.mxu0 0
      %401 = vmatmul.mubr.bf16.gmra.mxu0 %v354
      %v402 = vpop.f32.mrf.mxu0
      %v403 = vadd.f32 %v292, %v402
      %v404 = vpop.f32.mrf.mxu0
      %v405 = vpop.f32.mrf.mxu0
      %v406 = vadd.f32 %v295, %v405
      %v407 = vpop.f32.mrf.mxu0
      %408 = vmatprep.mubr.bf16.mxu0 0
      %409 = vmatmul.mubr.bf16.gmra.mxu0 %v357
      %v410 = vpop.f32.mrf.mxu0
      %v411 = vadd.f32 %v300, %v410
      %v412 = vpop.f32.mrf.mxu0
      %v413 = vpop.f32.mrf.mxu0
      %v414 = vadd.f32 %v303, %v413
      %v415 = vpop.f32.mrf.mxu0
      %416 = vmatprep.mubr.bf16.mxu0 0
      %417 = vmatmul.mubr.bf16.gmra.mxu0 %v360
      %v418 = vpop.f32.mrf.mxu0
      %v419 = vadd.f32 %v308, %v418
      %v420 = vpop.f32.mrf.mxu0
      %v421 = vpop.f32.mrf.mxu0
      %v422 = vadd.f32 %v311, %v421
      %v423 = vpop.f32.mrf.mxu0
      %424 = vmatprep.mubr.bf16.mxu0 0
      %425 = vmatmul.mubr.bf16.gmra.mxu0 %v363
      %v426 = vpop.f32.mrf.mxu0
      %v427 = vadd.f32 %v316, %v426
      %v428 = vpop.f32.mrf.mxu0
      %v429 = vpop.f32.mrf.mxu0
      %v430 = vadd.f32 %v319, %v429
      %v431 = vpop.f32.mrf.mxu0
      %432 = vmatprep.mubr.bf16.mxu0 0
      %433 = vmatmul.mubr.bf16.gmra.mxu0 %v366
      %v434 = vpop.f32.mrf.mxu0
      %v435 = vadd.f32 %v324, %v434
      %v436 = vpop.f32.mrf.mxu0
      %v437 = vpop.f32.mrf.mxu0
      %v438 = vpop.f32.mrf.mxu0
      %439 = vdwg.mxu0
      %v440 = vld [vmem:[%s165 + $0x9] sm:$0xff]
      %v441 = vld [vmem:[%s165 + $0x11] sm:$0xff]
      %v442 = vld [vmem:[%s165 + $0x19] sm:$0xff]
      %v443 = vld [vmem:[%s165 + $0x21] sm:$0xff]
      %v444 = vld [vmem:[%s165 + $0x29] sm:$0xff]
      %v445 = vld [vmem:[%s165 + $0x31] sm:$0xff]
      %v446 = vld [vmem:[%s165 + $0x39] sm:$0xff]
      %v447 = vld [vmem:[%s165 + $0x41] sm:$0xff]
      %v448 = vld [vmem:[%s165 + $0x49] sm:$0xff]
      %s449 = scalar_lea.vmem %s1, 64
      %v450 = vld [vmem:[%s449] sm:$0xf]
      %v451 = vld [vmem:[%s449 + $0x4] sm:$0xf]
      %v452 = vld [vmem:[%s449 + $0x8] sm:$0xf]
      %v453 = vld [vmem:[%s449 + $0xc] sm:$0xf]
      %v454 = vld [vmem:[%s449 + $0x10] sm:$0xf]
      %v455 = vld [vmem:[%s449 + $0x14] sm:$0xf]
      %v456 = vld [vmem:[%s449 + $0x18] sm:$0xf]
      %v457 = vld [vmem:[%s449 + $0x1c] sm:$0xf]
      %v458 = vpack.c.bf16 %v441, %v440
      %v459 = vpack.c.bf16 %v443, %v442
      %v460 = vpack.c.bf16 %v445, %v444
      %v461 = vpack.c.bf16 %v447, %v446
      %v462 = vpack.c.bf16 %v448, %v448
      %v471 = vunpack.c.l.b16 %v450
      %v472 = vunpack.c.l.b16 %v451
      %v473 = vunpack.c.l.b16 %v452
      %v474 = vunpack.c.l.b16 %v453
      %v475 = vunpack.c.l.b16 %v454
      %v476 = vunpack.c.l.b16 %v455
      %v477 = vunpack.c.l.b16 %v456
      %v478 = vunpack.c.l.b16 %v457
      %v479 = vpack.c.b16 %v472, %v471
      %v480 = vpack.c.b16 %v474, %v473
      %v481 = vpack.c.b16 %v476, %v475
      %v482 = vpack.c.b16 %v478, %v477
      %v488 = vsel %vm241, %v458, 0
      %v491 = vsel %vm241, %v459, 0
      %v494 = vsel %vm241, %v460, 0
      %v497 = vsel %vm241, %v461, 0
      %v500 = vsel %vm241, %v462, 0
      %502 = vmatprep.subr.bf16.mxu0 0
      %503 = vmatpush1.bf16.msra.mxu0 0
      %504 = vmatprep.subr.bf16.mxu0 0
      %505 = vmatpush1.bf16.msra.mxu0 0
      %506 = vmatprep.subr.bf16.mxu0 0
      %507 = vmatpush1.bf16.msra.mxu0 0
      %508 = vmatprep.subr.bf16.mxu0 0
      %509 = vmatpush1.bf16.msra.mxu0 0
      %510 = vmatprep.subr.bf16.mxu0 0
      %511 = vmatpush1.bf16.msra.mxu0 %v482
      %512 = vmatprep.subr.bf16.mxu0 0
      %513 = vmatpush1.bf16.msra.mxu0 %v481
      %514 = vmatprep.subr.bf16.mxu0 0
      %515 = vmatpush1.bf16.msra.mxu0 %v480
      %516 = vmatprep.subr.bf16.mxu0 0
      %517 = vmatpush1.bf16.msra.mxu0 %v479
      %518 = vmatprep.subr.bf16.mxu0 0
      %519 = vmatpush2.bf16.msra.mxu0 0
      %520 = vmatprep.subr.bf16.mxu0 0
      %521 = vmatpush2.bf16.msra.mxu0 0
      %522 = vmatprep.subr.bf16.mxu0 0
      %523 = vmatpush2.bf16.msra.mxu0 0
      %524 = vmatprep.subr.bf16.mxu0 0
      %525 = vmatpush2.bf16.msra.mxu0 0
      %526 = vmatprep.subr.bf16.mxu0 0
      %527 = vmatpush2.bf16.msra.mxu0 0
      %528 = vmatprep.subr.bf16.mxu0 0
      %529 = vmatpush2.bf16.msra.mxu0 0
      %530 = vmatprep.subr.bf16.mxu0 0
      %531 = vmatpush2.bf16.msra.mxu0 0
      %532 = vmatprep.subr.bf16.mxu0 0
      %533 = vmatpush2.bf16.msra.mxu0 0
      %534 = vmatprep.mubr.bf16.mxu0 0
      %535 = vmatmul.mubr.bf16.gmra.mxu0 %v488
      %v536 = vpop.f32.mrf.mxu0
      %v537 = vadd.f32 0.0, %v536
      %v538 = vpop.f32.mrf.mxu0
      %v539 = vpop.f32.mrf.mxu0
      %v540 = vadd.f32 0.0, %v539
      %v541 = vpop.f32.mrf.mxu0
      %542 = vmatprep.mubr.bf16.mxu0 0
      %543 = vmatmul.mubr.bf16.gmra.mxu0 %v491
      %v544 = vpop.f32.mrf.mxu0
      %v545 = vadd.f32 0.0, %v544
      %v546 = vpop.f32.mrf.mxu0
      %v547 = vpop.f32.mrf.mxu0
      %v548 = vadd.f32 0.0, %v547
      %v549 = vpop.f32.mrf.mxu0
      %550 = vmatprep.mubr.bf16.mxu0 0
      %551 = vmatmul.mubr.bf16.gmra.mxu0 %v494
      %v552 = vpop.f32.mrf.mxu0
      %v553 = vadd.f32 0.0, %v552
      %v554 = vpop.f32.mrf.mxu0
      %v555 = vpop.f32.mrf.mxu0
      %v556 = vadd.f32 0.0, %v555
      %v557 = vpop.f32.mrf.mxu0
      %558 = vmatprep.mubr.bf16.mxu0 0
      %559 = vmatmul.mubr.bf16.gmra.mxu0 %v497
      %v560 = vpop.f32.mrf.mxu0
      %v561 = vadd.f32 0.0, %v560
      %v562 = vpop.f32.mrf.mxu0
      %v563 = vpop.f32.mrf.mxu0
      %v564 = vadd.f32 0.0, %v563
      %v565 = vpop.f32.mrf.mxu0
      %566 = vmatprep.mubr.bf16.mxu0 0
      %567 = vmatmul.mubr.bf16.gmra.mxu0 %v500
      %v568 = vpop.f32.mrf.mxu0
      %v569 = vadd.f32 0.0, %v568
      %v570 = vpop.f32.mrf.mxu0
      %v571 = vpop.f32.mrf.mxu0
      %v572 = vpop.f32.mrf.mxu0
      %573 = vdwg.mxu0
      %v574 = vadd.f32 %v403, %v537
      %v575 = vadd.f32 %v406, %v540
      %v576 = vadd.f32 %v411, %v545
      %v577 = vadd.f32 %v414, %v548
      %v578 = vadd.f32 %v419, %v553
      %v579 = vadd.f32 %v422, %v556
      %v580 = vadd.f32 %v427, %v561
      %v581 = vadd.f32 %v430, %v564
      %v582 = vadd.f32 %v435, %v569
      %v583 = vld [vmem:[%s165 + $0xa] sm:$0xff]
      %v584 = vld [vmem:[%s165 + $0x12] sm:$0xff]
      %v585 = vld [vmem:[%s165 + $0x1a] sm:$0xff]
      %v586 = vld [vmem:[%s165 + $0x22] sm:$0xff]
      %v587 = vld [vmem:[%s165 + $0x2a] sm:$0xff]
      %v588 = vld [vmem:[%s165 + $0x32] sm:$0xff]
      %v589 = vld [vmem:[%s165 + $0x3a] sm:$0xff]
      %v590 = vld [vmem:[%s165 + $0x42] sm:$0xff]
      %v591 = vld [vmem:[%s165 + $0x4a] sm:$0xff]
      %s592 = scalar_lea.vmem %s1, 96
      %v593 = vld [vmem:[%s592] sm:$0xf]
      %v594 = vld [vmem:[%s592 + $0x4] sm:$0xf]
      %v595 = vld [vmem:[%s592 + $0x8] sm:$0xf]
      %v596 = vld [vmem:[%s592 + $0xc] sm:$0xf]
      %v597 = vld [vmem:[%s592 + $0x10] sm:$0xf]
      %v598 = vld [vmem:[%s592 + $0x14] sm:$0xf]
      %v599 = vld [vmem:[%s592 + $0x18] sm:$0xf]
      %v600 = vld [vmem:[%s592 + $0x1c] sm:$0xf]
      %v601 = vpack.c.bf16 %v584, %v583
      %v602 = vpack.c.bf16 %v586, %v585
      %v603 = vpack.c.bf16 %v588, %v587
      %v604 = vpack.c.bf16 %v590, %v589
      %v605 = vpack.c.bf16 %v591, %v591
      %v614 = vunpack.c.l.b16 %v593
      %v615 = vunpack.c.l.b16 %v594
      %v616 = vunpack.c.l.b16 %v595
      %v617 = vunpack.c.l.b16 %v596
      %v618 = vunpack.c.l.b16 %v597
      %v619 = vunpack.c.l.b16 %v598
      %v620 = vunpack.c.l.b16 %v599
      %v621 = vunpack.c.l.b16 %v600
      %v622 = vpack.c.b16 %v615, %v614
      %v623 = vpack.c.b16 %v617, %v616
      %v624 = vpack.c.b16 %v619, %v618
      %v625 = vpack.c.b16 %v621, %v620
      %v631 = vsel %vm241, %v601, 0
      %v634 = vsel %vm241, %v602, 0
      %v637 = vsel %vm241, %v603, 0
      %v640 = vsel %vm241, %v604, 0
      %v643 = vsel %vm241, %v605, 0
      %645 = vmatprep.subr.bf16.mxu0 0
      %646 = vmatpush1.bf16.msra.mxu0 0
      %647 = vmatprep.subr.bf16.mxu0 0
      %648 = vmatpush1.bf16.msra.mxu0 0
      %649 = vmatprep.subr.bf16.mxu0 0
      %650 = vmatpush1.bf16.msra.mxu0 0
      %651 = vmatprep.subr.bf16.mxu0 0
      %652 = vmatpush1.bf16.msra.mxu0 0
      %653 = vmatprep.subr.bf16.mxu0 0
      %654 = vmatpush1.bf16.msra.mxu0 %v625
      %655 = vmatprep.subr.bf16.mxu0 0
      %656 = vmatpush1.bf16.msra.mxu0 %v624
      %657 = vmatprep.subr.bf16.mxu0 0
      %658 = vmatpush1.bf16.msra.mxu0 %v623
      %659 = vmatprep.subr.bf16.mxu0 0
      %660 = vmatpush1.bf16.msra.mxu0 %v622
      %661 = vmatprep.subr.bf16.mxu0 0
      %662 = vmatpush2.bf16.msra.mxu0 0
      %663 = vmatprep.subr.bf16.mxu0 0
      %664 = vmatpush2.bf16.msra.mxu0 0
      %665 = vmatprep.subr.bf16.mxu0 0
      %666 = vmatpush2.bf16.msra.mxu0 0
      %667 = vmatprep.subr.bf16.mxu0 0
      %668 = vmatpush2.bf16.msra.mxu0 0
      %669 = vmatprep.subr.bf16.mxu0 0
      %670 = vmatpush2.bf16.msra.mxu0 0
      %671 = vmatprep.subr.bf16.mxu0 0
      %672 = vmatpush2.bf16.msra.mxu0 0
      %673 = vmatprep.subr.bf16.mxu0 0
      %674 = vmatpush2.bf16.msra.mxu0 0
      %675 = vmatprep.subr.bf16.mxu0 0
      %676 = vmatpush2.bf16.msra.mxu0 0
      %677 = vmatprep.mubr.bf16.mxu0 0
      %678 = vmatmul.mubr.bf16.gmra.mxu0 %v631
      %v679 = vpop.f32.mrf.mxu0
      %v680 = vadd.f32 0.0, %v679
      %v681 = vpop.f32.mrf.mxu0
      %v682 = vpop.f32.mrf.mxu0
      %v683 = vadd.f32 0.0, %v682
      %v684 = vpop.f32.mrf.mxu0
      %685 = vmatprep.mubr.bf16.mxu0 0
      %686 = vmatmul.mubr.bf16.gmra.mxu0 %v634
      %v687 = vpop.f32.mrf.mxu0
      %v688 = vadd.f32 0.0, %v687
      %v689 = vpop.f32.mrf.mxu0
      %v690 = vpop.f32.mrf.mxu0
      %v691 = vadd.f32 0.0, %v690
      %v692 = vpop.f32.mrf.mxu0
      %693 = vmatprep.mubr.bf16.mxu0 0
      %694 = vmatmul.mubr.bf16.gmra.mxu0 %v637
      %v695 = vpop.f32.mrf.mxu0
      %v696 = vadd.f32 0.0, %v695
      %v697 = vpop.f32.mrf.mxu0
      %v698 = vpop.f32.mrf.mxu0
      %v699 = vadd.f32 0.0, %v698
      %v700 = vpop.f32.mrf.mxu0
      %701 = vmatprep.mubr.bf16.mxu0 0
      %702 = vmatmul.mubr.bf16.gmra.mxu0 %v640
      %v703 = vpop.f32.mrf.mxu0
      %v704 = vadd.f32 0.0, %v703
      %v705 = vpop.f32.mrf.mxu0
      %v706 = vpop.f32.mrf.mxu0
      %v707 = vadd.f32 0.0, %v706
      %v708 = vpop.f32.mrf.mxu0
      %709 = vmatprep.mubr.bf16.mxu0 0
      %710 = vmatmul.mubr.bf16.gmra.mxu0 %v643
      %v711 = vpop.f32.mrf.mxu0
      %v712 = vadd.f32 0.0, %v711
      %v713 = vpop.f32.mrf.mxu0
      %v714 = vpop.f32.mrf.mxu0
      %v715 = vpop.f32.mrf.mxu0
      %716 = vdwg.mxu0
      %v717 = vadd.f32 %v574, %v680
      %v718 = vadd.f32 %v575, %v683
      %v719 = vadd.f32 %v576, %v688
      %v720 = vadd.f32 %v577, %v691
      %v721 = vadd.f32 %v578, %v696
      %v722 = vadd.f32 %v579, %v699
      %v723 = vadd.f32 %v580, %v704
      %v724 = vadd.f32 %v581, %v707
      %v725 = vadd.f32 %v582, %v712
      %v726 = vld [vmem:[%s2] sm:$0x1]
      %v728 = vlaneseq
      %v729 = vshrl.u32 %v728, 7
      %v730 = vsub.s32 0, %v729
      %v731 = vrot.slane %v726, %v730
      %v733 = vadd.f32 %v717, %v731
      %v734 = vadd.f32 %v718, %v731
      %v735 = vadd.f32 %v719, %v731
      %v736 = vadd.f32 %v720, %v731
      %v737 = vadd.f32 %v721, %v731
      %v738 = vadd.f32 %v722, %v731
      %v739 = vadd.f32 %v723, %v731
      %v740 = vadd.f32 %v724, %v731
      %v741 = vadd.f32 %v725, %v731
      %vm742 = vcmp.ge.f32.partialorder %v733, 0.0
      %vm743 = vcmp.ge.f32.partialorder %v734, 0.0
      %vm744 = vcmp.ge.f32.partialorder %v735, 0.0
      %vm745 = vcmp.ge.f32.partialorder %v736, 0.0
      %vm746 = vcmp.ge.f32.partialorder %v737, 0.0
      %vm747 = vcmp.ge.f32.partialorder %v738, 0.0
      %vm748 = vcmp.ge.f32.partialorder %v739, 0.0
      %vm749 = vcmp.ge.f32.partialorder %v740, 0.0
      %vm750 = vcmp.ge.f32.partialorder %v741, 0.0
      %v751 = vmul.f32 %v733, 0.2
      %v752 = vmul.f32 %v734, 0.2
      %v753 = vmul.f32 %v735, 0.2
      %v754 = vmul.f32 %v736, 0.2
      %v755 = vmul.f32 %v737, 0.2
      %v756 = vmul.f32 %v738, 0.2
      %v757 = vmul.f32 %v739, 0.2
      %v758 = vmul.f32 %v740, 0.2
      %v759 = vmul.f32 %v741, 0.2
      %v760 = vsel %vm742, %v733, %v751
      %v761 = vsel %vm743, %v734, %v752
      %v762 = vsel %vm744, %v735, %v753
      %v763 = vsel %vm745, %v736, %v754
      %v764 = vsel %vm746, %v737, %v755
      %v765 = vsel %vm747, %v738, %v756
      %v766 = vsel %vm748, %v739, %v757
      %v767 = vsel %vm749, %v740, %v758
      %v768 = vsel %vm750, %v741, %v759
      %vm769 = vcmask 261120
      %770 = vst.msk [vmem:[%s170] sm:$0xff] %vm769, %v760
      %771 = vst.msk [vmem:[%s170 + $0x8] sm:$0xff] %vm769, %v761
      %772 = vst.msk [vmem:[%s170 + $0x10] sm:$0xff] %vm769, %v762
      %773 = vst.msk [vmem:[%s170 + $0x18] sm:$0xff] %vm769, %v763
      %774 = vst.msk [vmem:[%s170 + $0x20] sm:$0xff] %vm769, %v764
      %775 = vst.msk [vmem:[%s170 + $0x28] sm:$0xff] %vm769, %v765
      %776 = vst.msk [vmem:[%s170 + $0x30] sm:$0xff] %vm769, %v766
      %777 = vst.msk [vmem:[%s170 + $0x38] sm:$0xff] %vm769, %v767
      %778 = vst.msk [vmem:[%s170 + $0x40] sm:$0xff] %vm769, %v768
      %p779 = scmp.lt.s32.totalorder %s14, 1
      %s780 = scalar_select %p779, %s14, 1
      %s781 = smul.addr %s780, 9
      %s782 = smul.addr %s781, 8
      %s783 = scalar_lea.vmem %s3, %s782
      // Predicated region
      $region33: #{pallas_forward.5} parent=31 // pred_check
        %p784 = pneg %p100
      $region34: #{pallas_forward.5} parent=31 // pred_check_branch
        %786 = sbr.rel (%p784) target = $region36
      $region35: #{pallas_forward.5} parent=31 // pred_region
        _
      $region36: #{pallas_forward.5} parent=31 // pred_fallthru
        _
    $region32: #{pallas_forward.5} parent=5 // pred_fallthru
      _
    %p787 = scmp.le.s32.totalorder 2, %s9
    // Predicated region
    $region37: #{pallas_forward.5} parent=5 // pred_check
      %p788 = pneg %p787
    $region38: #{pallas_forward.5} parent=5 // pred_check_branch
      %790 = sbr.rel (%p788) target = $region40
    $region39: #{pallas_forward.5} parent=5 // pred_region
      %s791 = ssub.s32 %s9, 2
      // Predicated region
      $region41: #{pallas_forward.5} parent=39 // pred_check
        %p792 = pneg %p106
      $region42: #{pallas_forward.5} parent=39 // pred_check_branch
        %794 = sbr.rel (%p792) target = $region44
      $region43: #{pallas_forward.5} parent=39 // pred_region
        %p795 = scmp.lt.s32.totalorder %s15, 1
        %s796 = scalar_select %p795, %s15, 1
        %s797 = smul.addr %s796, 9
        %s798 = smul.addr %s797, 8
        %s799 = scalar_lea.vmem %s3, %s798
      $region44: #{pallas_forward.5} parent=39 // pred_fallthru
        _
    $region40: #{pallas_forward.5} parent=5 // pred_fallthru
      _
  $region6: #{pallas_forward.5} parent=0 // loop_footer
    %s13 = sadd.s32 1, %s9
  $region7: #{pallas_forward.5} parent=0 // loop_footer_branch
    %8 = sbr.rel target = $region3
  $region8: #{pallas_forward.5} parent=0 // loop_exit
    _

// kernel: pallas_forward.6
$region0: #{pallas_forward.6}
  #allocation0 [shape = 'u32[]', space=smem, size = 0x4, offset = 0x4, fixed_abs, tag = 'smem constant byte address 0x4 - core index']
  #allocation1 [shape = 'u32[144,128]{1,0:T(1,128)}', space=vmem, size = 0x12000, scoped, tag = 'internal scratch']
  %s0 = inlined_call_operand.vmem [shape: f32[2,32,128], index: 0, kind: input, shape index: {}]
  %s1 = inlined_call_operand.vmem [shape: bf16[2,2,128,64], index: 1, kind: input, shape index: {}]
  %s2 = inlined_call_operand.vmem [shape: f32[1,64], index: 2, kind: input, shape index: {}]
  %s3 = inlined_call_operand.vmem [shape: f32[2,20,64], index: 3, kind: output, shape index: {}]
  %s4 = sld [smem:[#allocation0]]
  $region45: #{pallas_forward.6} parent=0
    _
  %s6 = ssub.s32 1, %s4
  %s7 = scalar_select 0, %s6, %s4
  loop: start=0, step=1, limit=4
  $region2: #{pallas_forward.6} parent=0 // loop_pre_header
    _
  $region3: #{pallas_forward.6} parent=0 // loop_header
    %s9 = sphi 0, %s13
    %p10 = scmp.ge.s32.totalorder %s9, 4
    %s19 = sphi 0, %s21
    %s22 = sphi 0, %s19
    %s23 = sphi 0, %s22
    %s39 = sphi 0, %s23
    %s43 = sphi 0, %s43
    %s45 = sphi 0, %s43
    %s46 = sphi 0, %s45
    %s60 = sphi 0, %s46
    %s64 = sphi 0, %s64
    %s66 = sphi 0, %s64
    %s67 = sphi 0, %s66
    %s81 = sphi 0, %s67
    %s87 = sphi 0, %s89
    %s90 = sphi 0, %s87
    %s91 = sphi 0, %s90
    %s107 = sphi 0, %s91
  $region4: #{pallas_forward.6} parent=0 // loop_header_branch
    %12 = sbr.rel (%p10) target = $region8
  $region5: #{pallas_forward.6} parent=0 // loop_body
    %s14 = ssub.s32 %s9, 1
    %s15 = ssub.s32 %s9, 2
    %s16 = sadd.s32 %s9, 1
    %s17 = ssub.s32 %s9, %s16
    %p18 = scmp.eq.s32.totalorder %s17, 0
    %s20 = sadd.s32 %s19, 1
    %s21 = scalar_select %p18, %s19, %s20
    %p24 = pneg %p18
    %p25 = scmp.eq.s32.totalorder %s9, 1
    %p26 = por %p24, %p25
    %p27 = scmp.ne.s32.totalorder %s19, %s22
    %p28 = scmp.eq.s32.totalorder %s9, 0
    %p29 = por %p27, %p28
    %p30 = scmp.ne.s32.totalorder %s19, %s22
    %p31 = scmp.eq.s32.totalorder %s14, 1
    %p32 = por %p30, %p31
    %p33 = scmp.ne.s32.totalorder %s22, %s23
    %p34 = scmp.eq.s32.totalorder %s14, 0
    %p35 = por %p33, %p34
    %p36 = scmp.ne.s32.totalorder %s22, %s23
    %p37 = scmp.eq.s32.totalorder %s15, 1
    %p38 = por %p36, %p37
    %p40 = scmp.ne.s32.totalorder %s23, %s39
    %p41 = scmp.eq.s32.totalorder %s15, 0
    %p42 = por %p40, %p41
    %s44 = sadd.s32 %s43, 1
    %p47 = scmp.eq.s32.totalorder %s9, 1
    %p48 = scmp.ne.s32.totalorder %s43, %s45
    %p49 = scmp.eq.s32.totalorder %s9, 0
    %p50 = por %p48, %p49
    %p51 = scmp.ne.s32.totalorder %s43, %s45
    %p52 = scmp.eq.s32.totalorder %s14, 1
    %p53 = por %p51, %p52
    %p54 = scmp.ne.s32.totalorder %s45, %s46
    %p55 = scmp.eq.s32.totalorder %s14, 0
    %p56 = por %p54, %p55
    %p57 = scmp.ne.s32.totalorder %s45, %s46
    %p58 = scmp.eq.s32.totalorder %s15, 1
    %p59 = por %p57, %p58
    %p61 = scmp.ne.s32.totalorder %s46, %s60
    %p62 = scmp.eq.s32.totalorder %s15, 0
    %p63 = por %p61, %p62
    %s65 = sadd.s32 %s64, 1
    %p68 = scmp.eq.s32.totalorder %s9, 1
    %p69 = scmp.ne.s32.totalorder %s64, %s66
    %p70 = scmp.eq.s32.totalorder %s9, 0
    %p71 = por %p69, %p70
    %p72 = scmp.ne.s32.totalorder %s64, %s66
    %p73 = scmp.eq.s32.totalorder %s14, 1
    %p74 = por %p72, %p73
    %p75 = scmp.ne.s32.totalorder %s66, %s67
    %p76 = scmp.eq.s32.totalorder %s14, 0
    %p77 = por %p75, %p76
    %p78 = scmp.ne.s32.totalorder %s66, %s67
    %p79 = scmp.eq.s32.totalorder %s15, 1
    %p80 = por %p78, %p79
    %p82 = scmp.ne.s32.totalorder %s67, %s81
    %p83 = scmp.eq.s32.totalorder %s15, 0
    %p84 = por %p82, %p83
    %s85 = ssub.s32 %s9, %s16
    %p86 = scmp.eq.s32.totalorder %s85, 0
    %s88 = sadd.s32 %s87, 1
    %s89 = scalar_select %p86, %s87, %s88
    %p92 = pneg %p86
    %p93 = scmp.eq.s32.totalorder %s9, 1
    %p94 = por %p92, %p93
    %p95 = scmp.ne.s32.totalorder %s87, %s90
    %p96 = scmp.eq.s32.totalorder %s9, 0
    %p97 = por %p95, %p96
    %p98 = scmp.ne.s32.totalorder %s87, %s90
    %p99 = scmp.eq.s32.totalorder %s14, 1
    %p100 = por %p98, %p99
    %p101 = scmp.ne.s32.totalorder %s90, %s91
    %p102 = scmp.eq.s32.totalorder %s14, 0
    %p103 = por %p101, %p102
    %p104 = scmp.ne.s32.totalorder %s90, %s91
    %p105 = scmp.eq.s32.totalorder %s15, 1
    %p106 = por %p104, %p105
    %p108 = scmp.ne.s32.totalorder %s91, %s107
    %p109 = scmp.eq.s32.totalorder %s15, 0
    %p110 = por %p108, %p109
    %p111 = scmp.le.s32.totalorder 1, %s9
    %p112 = scmp.lt.s32.totalorder %s9, 3
    %p113 = pnand %p111, %p112
    %p114 = pneg %p113
    // Predicated region
    $region9: #{pallas_forward.6} parent=5 // pred_check
      _
    $region10: #{pallas_forward.6} parent=5 // pred_check_branch
      %116 = sbr.rel (%p113) target = $region12
    $region11: #{pallas_forward.6} parent=5 // pred_region
      %s117 = ssub.s32 %s9, 1
      // Predicated region
      $region13: #{pallas_forward.6} parent=11 // pred_check
        %p118 = pneg %p56
      $region14: #{pallas_forward.6} parent=11 // pred_check_branch
        %120 = sbr.rel (%p118) target = $region16
      $region15: #{pallas_forward.6} parent=11 // pred_region
        _
      $region16: #{pallas_forward.6} parent=11 // pred_fallthru
        _
      // Predicated region
      $region17: #{pallas_forward.6} parent=11 // pred_check
        %p121 = pneg %p77
      $region18: #{pallas_forward.6} parent=11 // pred_check_branch
        %123 = sbr.rel (%p121) target = $region20
      $region19: #{pallas_forward.6} parent=11 // pred_region
        _
      $region20: #{pallas_forward.6} parent=11 // pred_fallthru
        _
    $region12: #{pallas_forward.6} parent=5 // pred_fallthru
      _
    %p124 = scmp.lt.s32.totalorder %s9, 2
    // Predicated region
    $region21: #{pallas_forward.6} parent=5 // pred_check
      %p125 = pneg %p124
    $region22: #{pallas_forward.6} parent=5 // pred_check_branch
      %127 = sbr.rel (%p125) target = $region24
    $region23: #{pallas_forward.6} parent=5 // pred_region
      // Predicated region
      $region25: #{pallas_forward.6} parent=23 // pred_check
        %p128 = pneg %p29
      $region26: #{pallas_forward.6} parent=23 // pred_check_branch
        %130 = sbr.rel (%p128) target = $region28
      $region27: #{pallas_forward.6} parent=23 // pred_region
        %p131 = scmp.lt.s32.totalorder %s9, 1
        %s132 = scalar_select %p131, %s9, 1
        %s133 = smul.addr %s132, 4
        %s134 = smul.addr %s133, 8
        %s135 = scalar_lea.vmem %s0, %s134
      $region28: #{pallas_forward.6} parent=23 // pred_fallthru
        _
    $region24: #{pallas_forward.6} parent=5 // pred_fallthru
      _
    %p136 = scmp.le.s32.totalorder 1, %s9
    %p137 = scmp.lt.s32.totalorder %s9, 3
    %p138 = pnand %p136, %p137
    %p139 = pneg %p138
    // Predicated region
    $region29: #{pallas_forward.6} parent=5 // pred_check
      _
    $region30: #{pallas_forward.6} parent=5 // pred_check_branch
      %141 = sbr.rel (%p138) target = $region32
    $region31: #{pallas_forward.6} parent=5 // pred_region
      %s142 = ssub.s32 %s9, 1
      %p143 = scmp.lt.s32.totalorder %s14, 1
      %s144 = scalar_select %p143, %s14, 1
      %s145 = smul.addr %s144, 4
      %s146 = smul.addr %s145, 8
      %s147 = scalar_lea.vmem %s0, %s146
      %p148 = pneg %p35
      %p149 = pneg %p32
      %p150 = pneg %p56
      %p151 = pneg %p53
      %p152 = pneg %p77
      %p153 = pneg %p74
      %p154 = pneg %p103
      %p155 = pneg %p100
      %p156 = scmp.lt.s32.totalorder %s14, 1
      %s157 = scalar_select %p156, %s14, 1
      %s158 = smul.addr %s157, 3
      %s159 = smul.addr %s158, 8
      %s160 = scalar_lea.vmem %s3, %s159
      %p161 = scmp.lt.s32.totalorder %s14, 1
      %s162 = scalar_select %p161, %s14, 1
      %s163 = smul.addr %s162, 4
      %s164 = smul.addr %s163, 8
      %s165 = scalar_lea.vmem %s0, %s164
      %p166 = scmp.lt.s32.totalorder %s14, 1
      %s167 = scalar_select %p166, %s14, 1
      %s168 = smul.addr %s167, 3
      %s169 = smul.addr %s168, 8
      %s170 = scalar_lea.vmem %s3, %s169
      %v172 = vld [vmem:[%s165] sm:$0xff]
      %v173 = vld [vmem:[%s165 + $0x8] sm:$0xff]
      %v174 = vld [vmem:[%s165 + $0x10] sm:$0xf]
      %v175 = vld [vmem:[%s1] sm:$0xf]
      %v176 = vld [vmem:[%s1 + $0x4] sm:$0xf]
      %v177 = vld [vmem:[%s1 + $0x8] sm:$0xf]
      %v178 = vld [vmem:[%s1 + $0xc] sm:$0xf]
      %v179 = vld [vmem:[%s1 + $0x10] sm:$0xf]
      %v180 = vld [vmem:[%s1 + $0x14] sm:$0xf]
      %v181 = vld [vmem:[%s1 + $0x18] sm:$0xf]
      %v182 = vld [vmem:[%s1 + $0x1c] sm:$0xf]
      %v183 = vld [vmem:[%s1 + $0x20] sm:$0xf]
      %v184 = vld [vmem:[%s1 + $0x24] sm:$0xf]
      %v185 = vld [vmem:[%s1 + $0x28] sm:$0xf]
      %v186 = vld [vmem:[%s1 + $0x2c] sm:$0xf]
      %v187 = vld [vmem:[%s1 + $0x30] sm:$0xf]
      %v188 = vld [vmem:[%s1 + $0x34] sm:$0xf]
      %v189 = vld [vmem:[%s1 + $0x38] sm:$0xf]
      %v190 = vld [vmem:[%s1 + $0x3c] sm:$0xf]
      %v191 = vpack.c.bf16 %v173, %v172
      %v192 = vpack.c.bf16 %v174, %v174
      %v193 = vld [vmem:[%s165 + $0x1] sm:$0xff]
      %v194 = vld [vmem:[%s165 + $0x9] sm:$0xff]
      %v195 = vld [vmem:[%s165 + $0x11] sm:$0xf]
      %s196 = scalar_lea.vmem %s1, 64
      %v197 = vld [vmem:[%s196] sm:$0xf]
      %v198 = vld [vmem:[%s196 + $0x4] sm:$0xf]
      %v199 = vld [vmem:[%s196 + $0x8] sm:$0xf]
      %v200 = vld [vmem:[%s196 + $0xc] sm:$0xf]
      %v201 = vld [vmem:[%s196 + $0x10] sm:$0xf]
      %v202 = vld [vmem:[%s196 + $0x14] sm:$0xf]
      %v203 = vld [vmem:[%s196 + $0x18] sm:$0xf]
      %v204 = vld [vmem:[%s196 + $0x1c] sm:$0xf]
      %v205 = vld [vmem:[%s196 + $0x20] sm:$0xf]
      %v206 = vld [vmem:[%s196 + $0x24] sm:$0xf]
      %v207 = vld [vmem:[%s196 + $0x28] sm:$0xf]
      %v208 = vld [vmem:[%s196 + $0x2c] sm:$0xf]
      %v209 = vld [vmem:[%s196 + $0x30] sm:$0xf]
      %v210 = vld [vmem:[%s196 + $0x34] sm:$0xf]
      %v211 = vld [vmem:[%s196 + $0x38] sm:$0xf]
      %v212 = vld [vmem:[%s196 + $0x3c] sm:$0xf]
      %v213 = vpack.c.bf16 %v194, %v193
      %v214 = vpack.c.bf16 %v195, %v195
      %v231 = vunpack.c.l.b16 %v197
      %v232 = vunpack.c.l.b16 %v198
      %v233 = vunpack.c.l.b16 %v199
      %v234 = vunpack.c.l.b16 %v200
      %v235 = vunpack.c.l.b16 %v201
      %v236 = vunpack.c.l.b16 %v202
      %v237 = vunpack.c.l.b16 %v203
      %v238 = vunpack.c.l.b16 %v204
      %v239 = vunpack.c.l.b16 %v205
      %v240 = vunpack.c.l.b16 %v206
      %v241 = vunpack.c.l.b16 %v207
      %v242 = vunpack.c.l.b16 %v208
      %v243 = vunpack.c.l.b16 %v209
      %v244 = vunpack.c.l.b16 %v210
      %v245 = vunpack.c.l.b16 %v211
      %v246 = vunpack.c.l.b16 %v212
      %v247 = vpack.c.b16 %v232, %v231
      %v248 = vpack.c.b16 %v234, %v233
      %v249 = vpack.c.b16 %v236, %v235
      %v250 = vpack.c.b16 %v238, %v237
      %v251 = vpack.c.b16 %v240, %v239
      %v252 = vpack.c.b16 %v242, %v241
      %v253 = vpack.c.b16 %v244, %v243
      %v254 = vpack.c.b16 %v246, %v245
      %263 = vmatprep.subr.bf16.mxu0 0
      %264 = vmatpush1.bf16.msra.mxu0 %v254
      %265 = vmatprep.subr.bf16.mxu0 0
      %266 = vmatpush1.bf16.msra.mxu0 %v253
      %267 = vmatprep.subr.bf16.mxu0 0
      %268 = vmatpush1.bf16.msra.mxu0 %v252
      %269 = vmatprep.subr.bf16.mxu0 0
      %270 = vmatpush1.bf16.msra.mxu0 %v251
      %271 = vmatprep.subr.bf16.mxu0 0
      %272 = vmatpush1.bf16.msra.mxu0 %v250
      %273 = vmatprep.subr.bf16.mxu0 0
      %274 = vmatpush1.bf16.msra.mxu0 %v249
      %275 = vmatprep.subr.bf16.mxu0 0
      %276 = vmatpush1.bf16.msra.mxu0 %v248
      %277 = vmatprep.subr.bf16.mxu0 0
      %278 = vmatpush1.bf16.msra.mxu0 %v247
      %279 = vmatprep.subr.bf16.mxu0 0
      %280 = vmatpush2.bf16.msra.mxu0 0
      %281 = vmatprep.subr.bf16.mxu0 0
      %282 = vmatpush2.bf16.msra.mxu0 0
      %283 = vmatprep.subr.bf16.mxu0 0
      %284 = vmatpush2.bf16.msra.mxu0 0
      %285 = vmatprep.subr.bf16.mxu0 0
      %286 = vmatpush2.bf16.msra.mxu0 0
      %287 = vmatprep.subr.bf16.mxu0 0
      %288 = vmatpush2.bf16.msra.mxu0 0
      %289 = vmatprep.subr.bf16.mxu0 0
      %290 = vmatpush2.bf16.msra.mxu0 0
      %291 = vmatprep.subr.bf16.mxu0 0
      %292 = vmatpush2.bf16.msra.mxu0 0
      %293 = vmatprep.subr.bf16.mxu0 0
      %294 = vmatpush2.bf16.msra.mxu0 0
      %295 = vmatprep.mubr.bf16.mxu0 0
      %296 = vmatmul.mubr.bf16.gmra.mxu0 %v213
      %v297 = vpop.f32.mrf.mxu0
      %v298 = vadd.f32 0.0, %v297
      %v299 = vpop.f32.mrf.mxu0
      %v300 = vpop.f32.mrf.mxu0
      %v301 = vadd.f32 0.0, %v300
      %v302 = vpop.f32.mrf.mxu0
      %303 = vmatprep.mubr.bf16.mxu0 0
      %304 = vmatmul.mubr.bf16.gmra.mxu0 %v214
      %v305 = vpop.f32.mrf.mxu0
      %v306 = vadd.f32 0.0, %v305
      %v307 = vpop.f32.mrf.mxu0
      %v308 = vpop.f32.mrf.mxu0
      %v309 = vpop.f32.mrf.mxu0
      %310 = vdwg.mxu0
      %v327 = vunpack.c.l.b16 %v175
      %v328 = vunpack.c.l.b16 %v176
      %v329 = vunpack.c.l.b16 %v177
      %v330 = vunpack.c.l.b16 %v178
      %v331 = vunpack.c.l.b16 %v179
      %v332 = vunpack.c.l.b16 %v180
      %v333 = vunpack.c.l.b16 %v181
      %v334 = vunpack.c.l.b16 %v182
      %v335 = vunpack.c.l.b16 %v183
      %v336 = vunpack.c.l.b16 %v184
      %v337 = vunpack.c.l.b16 %v185
      %v338 = vunpack.c.l.b16 %v186
      %v339 = vunpack.c.l.b16 %v187
      %v340 = vunpack.c.l.b16 %v188
      %v341 = vunpack.c.l.b16 %v189
      %v342 = vunpack.c.l.b16 %v190
      %v343 = vpack.c.b16 %v328, %v327
      %v344 = vpack.c.b16 %v330, %v329
      %v345 = vpack.c.b16 %v332, %v331
      %v346 = vpack.c.b16 %v334, %v333
      %v347 = vpack.c.b16 %v336, %v335
      %v348 = vpack.c.b16 %v338, %v337
      %v349 = vpack.c.b16 %v340, %v339
      %v350 = vpack.c.b16 %v342, %v341
      %359 = vmatprep.subr.bf16.mxu0 0
      %360 = vmatpush1.bf16.msra.mxu0 %v350
      %361 = vmatprep.subr.bf16.mxu0 0
      %362 = vmatpush1.bf16.msra.mxu0 %v349
      %363 = vmatprep.subr.bf16.mxu0 0
      %364 = vmatpush1.bf16.msra.mxu0 %v348
      %365 = vmatprep.subr.bf16.mxu0 0
      %366 = vmatpush1.bf16.msra.mxu0 %v347
      %367 = vmatprep.subr.bf16.mxu0 0
      %368 = vmatpush1.bf16.msra.mxu0 %v346
      %369 = vmatprep.subr.bf16.mxu0 0
      %370 = vmatpush1.bf16.msra.mxu0 %v345
      %371 = vmatprep.subr.bf16.mxu0 0
      %372 = vmatpush1.bf16.msra.mxu0 %v344
      %373 = vmatprep.subr.bf16.mxu0 0
      %374 = vmatpush1.bf16.msra.mxu0 %v343
      %375 = vmatprep.subr.bf16.mxu0 0
      %376 = vmatpush2.bf16.msra.mxu0 0
      %377 = vmatprep.subr.bf16.mxu0 0
      %378 = vmatpush2.bf16.msra.mxu0 0
      %379 = vmatprep.subr.bf16.mxu0 0
      %380 = vmatpush2.bf16.msra.mxu0 0
      %381 = vmatprep.subr.bf16.mxu0 0
      %382 = vmatpush2.bf16.msra.mxu0 0
      %383 = vmatprep.subr.bf16.mxu0 0
      %384 = vmatpush2.bf16.msra.mxu0 0
      %385 = vmatprep.subr.bf16.mxu0 0
      %386 = vmatpush2.bf16.msra.mxu0 0
      %387 = vmatprep.subr.bf16.mxu0 0
      %388 = vmatpush2.bf16.msra.mxu0 0
      %389 = vmatprep.subr.bf16.mxu0 0
      %390 = vmatpush2.bf16.msra.mxu0 0
      %391 = vmatprep.mubr.bf16.mxu0 0
      %392 = vmatmul.mubr.bf16.gmra.mxu0 %v191
      %v393 = vpop.f32.mrf.mxu0
      %v394 = vadd.f32 %v298, %v393
      %v395 = vpop.f32.mrf.mxu0
      %v396 = vpop.f32.mrf.mxu0
      %v397 = vadd.f32 %v301, %v396
      %v398 = vpop.f32.mrf.mxu0
      %399 = vmatprep.mubr.bf16.mxu0 0
      %400 = vmatmul.mubr.bf16.gmra.mxu0 %v192
      %v401 = vpop.f32.mrf.mxu0
      %v402 = vadd.f32 %v306, %v401
      %v403 = vpop.f32.mrf.mxu0
      %v404 = vpop.f32.mrf.mxu0
      %v405 = vpop.f32.mrf.mxu0
      %406 = vdwg.mxu0
      %v407 = vld [vmem:[%s165 + $0x5] sm:$0xff]
      %v408 = vld [vmem:[%s165 + $0xd] sm:$0xff]
      %v409 = vld [vmem:[%s165 + $0x15] sm:$0xf]
      %s410 = scalar_lea.vmem %s1, 128
      %v411 = vld [vmem:[%s410] sm:$0xf]
      %v412 = vld [vmem:[%s410 + $0x4] sm:$0xf]
      %v413 = vld [vmem:[%s410 + $0x8] sm:$0xf]
      %v414 = vld [vmem:[%s410 + $0xc] sm:$0xf]
      %v415 = vld [vmem:[%s410 + $0x10] sm:$0xf]
      %v416 = vld [vmem:[%s410 + $0x14] sm:$0xf]
      %v417 = vld [vmem:[%s410 + $0x18] sm:$0xf]
      %v418 = vld [vmem:[%s410 + $0x1c] sm:$0xf]
      %v419 = vld [vmem:[%s410 + $0x20] sm:$0xf]
      %v420 = vld [vmem:[%s410 + $0x24] sm:$0xf]
      %v421 = vld [vmem:[%s410 + $0x28] sm:$0xf]
      %v422 = vld [vmem:[%s410 + $0x2c] sm:$0xf]
      %v423 = vld [vmem:[%s410 + $0x30] sm:$0xf]
      %v424 = vld [vmem:[%s410 + $0x34] sm:$0xf]
      %v425 = vld [vmem:[%s410 + $0x38] sm:$0xf]
      %v426 = vld [vmem:[%s410 + $0x3c] sm:$0xf]
      %v427 = vpack.c.bf16 %v408, %v407
      %v428 = vpack.c.bf16 %v409, %v409
      %v445 = vunpack.c.l.b16 %v411
      %v446 = vunpack.c.l.b16 %v412
      %v447 = vunpack.c.l.b16 %v413
      %v448 = vunpack.c.l.b16 %v414
      %v449 = vunpack.c.l.b16 %v415
      %v450 = vunpack.c.l.b16 %v416
      %v451 = vunpack.c.l.b16 %v417
      %v452 = vunpack.c.l.b16 %v418
      %v453 = vunpack.c.l.b16 %v419
      %v454 = vunpack.c.l.b16 %v420
      %v455 = vunpack.c.l.b16 %v421
      %v456 = vunpack.c.l.b16 %v422
      %v457 = vunpack.c.l.b16 %v423
      %v458 = vunpack.c.l.b16 %v424
      %v459 = vunpack.c.l.b16 %v425
      %v460 = vunpack.c.l.b16 %v426
      %v461 = vpack.c.b16 %v446, %v445
      %v462 = vpack.c.b16 %v448, %v447
      %v463 = vpack.c.b16 %v450, %v449
      %v464 = vpack.c.b16 %v452, %v451
      %v465 = vpack.c.b16 %v454, %v453
      %v466 = vpack.c.b16 %v456, %v455
      %v467 = vpack.c.b16 %v458, %v457
      %v468 = vpack.c.b16 %v460, %v459
      %477 = vmatprep.subr.bf16.mxu0 0
      %478 = vmatpush1.bf16.msra.mxu0 %v468
      %479 = vmatprep.subr.bf16.mxu0 0
      %480 = vmatpush1.bf16.msra.mxu0 %v467
      %481 = vmatprep.subr.bf16.mxu0 0
      %482 = vmatpush1.bf16.msra.mxu0 %v466
      %483 = vmatprep.subr.bf16.mxu0 0
      %484 = vmatpush1.bf16.msra.mxu0 %v465
      %485 = vmatprep.subr.bf16.mxu0 0
      %486 = vmatpush1.bf16.msra.mxu0 %v464
      %487 = vmatprep.subr.bf16.mxu0 0
      %488 = vmatpush1.bf16.msra.mxu0 %v463
      %489 = vmatprep.subr.bf16.mxu0 0
      %490 = vmatpush1.bf16.msra.mxu0 %v462
      %491 = vmatprep.subr.bf16.mxu0 0
      %492 = vmatpush1.bf16.msra.mxu0 %v461
      %493 = vmatprep.subr.bf16.mxu0 0
      %494 = vmatpush2.bf16.msra.mxu0 0
      %495 = vmatprep.subr.bf16.mxu0 0
      %496 = vmatpush2.bf16.msra.mxu0 0
      %497 = vmatprep.subr.bf16.mxu0 0
      %498 = vmatpush2.bf16.msra.mxu0 0
      %499 = vmatprep.subr.bf16.mxu0 0
      %500 = vmatpush2.bf16.msra.mxu0 0
      %501 = vmatprep.subr.bf16.mxu0 0
      %502 = vmatpush2.bf16.msra.mxu0 0
      %503 = vmatprep.subr.bf16.mxu0 0
      %504 = vmatpush2.bf16.msra.mxu0 0
      %505 = vmatprep.subr.bf16.mxu0 0
      %506 = vmatpush2.bf16.msra.mxu0 0
      %507 = vmatprep.subr.bf16.mxu0 0
      %508 = vmatpush2.bf16.msra.mxu0 0
      %509 = vmatprep.mubr.bf16.mxu0 0
      %510 = vmatmul.mubr.bf16.gmra.mxu0 %v427
      %v511 = vpop.f32.mrf.mxu0
      %v512 = vadd.f32 0.0, %v511
      %v513 = vpop.f32.mrf.mxu0
      %v514 = vpop.f32.mrf.mxu0
      %v515 = vadd.f32 0.0, %v514
      %v516 = vpop.f32.mrf.mxu0
      %517 = vmatprep.mubr.bf16.mxu0 0
      %518 = vmatmul.mubr.bf16.gmra.mxu0 %v428
      %v519 = vpop.f32.mrf.mxu0
      %v520 = vadd.f32 0.0, %v519
      %v521 = vpop.f32.mrf.mxu0
      %v522 = vpop.f32.mrf.mxu0
      %v523 = vpop.f32.mrf.mxu0
      %524 = vdwg.mxu0
      %v525 = vadd.f32 %v394, %v512
      %v526 = vadd.f32 %v397, %v515
      %v527 = vadd.f32 %v402, %v520
      %v528 = vld [vmem:[%s165 + $0x6] sm:$0xff]
      %v529 = vld [vmem:[%s165 + $0xe] sm:$0xff]
      %v530 = vld [vmem:[%s165 + $0x16] sm:$0xf]
      %s531 = scalar_lea.vmem %s1, 192
      %v532 = vld [vmem:[%s531] sm:$0xf]
      %v533 = vld [vmem:[%s531 + $0x4] sm:$0xf]
      %v534 = vld [vmem:[%s531 + $0x8] sm:$0xf]
      %v535 = vld [vmem:[%s531 + $0xc] sm:$0xf]
      %v536 = vld [vmem:[%s531 + $0x10] sm:$0xf]
      %v537 = vld [vmem:[%s531 + $0x14] sm:$0xf]
      %v538 = vld [vmem:[%s531 + $0x18] sm:$0xf]
      %v539 = vld [vmem:[%s531 + $0x1c] sm:$0xf]
      %v540 = vld [vmem:[%s531 + $0x20] sm:$0xf]
      %v541 = vld [vmem:[%s531 + $0x24] sm:$0xf]
      %v542 = vld [vmem:[%s531 + $0x28] sm:$0xf]
      %v543 = vld [vmem:[%s531 + $0x2c] sm:$0xf]
      %v544 = vld [vmem:[%s531 + $0x30] sm:$0xf]
      %v545 = vld [vmem:[%s531 + $0x34] sm:$0xf]
      %v546 = vld [vmem:[%s531 + $0x38] sm:$0xf]
      %v547 = vld [vmem:[%s531 + $0x3c] sm:$0xf]
      %v548 = vpack.c.bf16 %v529, %v528
      %v549 = vpack.c.bf16 %v530, %v530
      %v566 = vunpack.c.l.b16 %v532
      %v567 = vunpack.c.l.b16 %v533
      %v568 = vunpack.c.l.b16 %v534
      %v569 = vunpack.c.l.b16 %v535
      %v570 = vunpack.c.l.b16 %v536
      %v571 = vunpack.c.l.b16 %v537
      %v572 = vunpack.c.l.b16 %v538
      %v573 = vunpack.c.l.b16 %v539
      %v574 = vunpack.c.l.b16 %v540
      %v575 = vunpack.c.l.b16 %v541
      %v576 = vunpack.c.l.b16 %v542
      %v577 = vunpack.c.l.b16 %v543
      %v578 = vunpack.c.l.b16 %v544
      %v579 = vunpack.c.l.b16 %v545
      %v580 = vunpack.c.l.b16 %v546
      %v581 = vunpack.c.l.b16 %v547
      %v582 = vpack.c.b16 %v567, %v566
      %v583 = vpack.c.b16 %v569, %v568
      %v584 = vpack.c.b16 %v571, %v570
      %v585 = vpack.c.b16 %v573, %v572
      %v586 = vpack.c.b16 %v575, %v574
      %v587 = vpack.c.b16 %v577, %v576
      %v588 = vpack.c.b16 %v579, %v578
      %v589 = vpack.c.b16 %v581, %v580
      %598 = vmatprep.subr.bf16.mxu0 0
      %599 = vmatpush1.bf16.msra.mxu0 %v589
      %600 = vmatprep.subr.bf16.mxu0 0
      %601 = vmatpush1.bf16.msra.mxu0 %v588
      %602 = vmatprep.subr.bf16.mxu0 0
      %603 = vmatpush1.bf16.msra.mxu0 %v587
      %604 = vmatprep.subr.bf16.mxu0 0
      %605 = vmatpush1.bf16.msra.mxu0 %v586
      %606 = vmatprep.subr.bf16.mxu0 0
      %607 = vmatpush1.bf16.msra.mxu0 %v585
      %608 = vmatprep.subr.bf16.mxu0 0
      %609 = vmatpush1.bf16.msra.mxu0 %v584
      %610 = vmatprep.subr.bf16.mxu0 0
      %611 = vmatpush1.bf16.msra.mxu0 %v583
      %612 = vmatprep.subr.bf16.mxu0 0
      %613 = vmatpush1.bf16.msra.mxu0 %v582
      %614 = vmatprep.subr.bf16.mxu0 0
      %615 = vmatpush2.bf16.msra.mxu0 0
      %616 = vmatprep.subr.bf16.mxu0 0
      %617 = vmatpush2.bf16.msra.mxu0 0
      %618 = vmatprep.subr.bf16.mxu0 0
      %619 = vmatpush2.bf16.msra.mxu0 0
      %620 = vmatprep.subr.bf16.mxu0 0
      %621 = vmatpush2.bf16.msra.mxu0 0
      %622 = vmatprep.subr.bf16.mxu0 0
      %623 = vmatpush2.bf16.msra.mxu0 0
      %624 = vmatprep.subr.bf16.mxu0 0
      %625 = vmatpush2.bf16.msra.mxu0 0
      %626 = vmatprep.subr.bf16.mxu0 0
      %627 = vmatpush2.bf16.msra.mxu0 0
      %628 = vmatprep.subr.bf16.mxu0 0
      %629 = vmatpush2.bf16.msra.mxu0 0
      %630 = vmatprep.mubr.bf16.mxu0 0
      %631 = vmatmul.mubr.bf16.gmra.mxu0 %v548
      %v632 = vpop.f32.mrf.mxu0
      %v633 = vadd.f32 0.0, %v632
      %v634 = vpop.f32.mrf.mxu0
      %v635 = vpop.f32.mrf.mxu0
      %v636 = vadd.f32 0.0, %v635
      %v637 = vpop.f32.mrf.mxu0
      %638 = vmatprep.mubr.bf16.mxu0 0
      %639 = vmatmul.mubr.bf16.gmra.mxu0 %v549
      %v640 = vpop.f32.mrf.mxu0
      %v641 = vadd.f32 0.0, %v640
      %v642 = vpop.f32.mrf.mxu0
      %v643 = vpop.f32.mrf.mxu0
      %v644 = vpop.f32.mrf.mxu0
      %645 = vdwg.mxu0
      %v646 = vadd.f32 %v525, %v633
      %v647 = vadd.f32 %v526, %v636
      %v648 = vadd.f32 %v527, %v641
      %v649 = vld [vmem:[%s2] sm:$0x1]
      %v651 = vlaneseq
      %v652 = vshrl.u32 %v651, 7
      %v653 = vsub.s32 0, %v652
      %v654 = vrot.slane %v649, %v653
      %v656 = vadd.f32 %v646, %v654
      %v657 = vadd.f32 %v647, %v654
      %v658 = vadd.f32 %v648, %v654
      %vm659 = vcmp.ge.f32.partialorder %v656, 0.0
      %vm660 = vcmp.ge.f32.partialorder %v657, 0.0
      %vm661 = vcmp.ge.f32.partialorder %v658, 0.0
      %v662 = vmul.f32 %v656, 0.2
      %v663 = vmul.f32 %v657, 0.2
      %v664 = vmul.f32 %v658, 0.2
      %v665 = vsel %vm659, %v656, %v662
      %v666 = vsel %vm660, %v657, %v663
      %v667 = vsel %vm661, %v658, %v664
      %vm668 = vcmask 523264
      %669 = vst.msk [vmem:[%s170] sm:$0xff] %vm668, %v665
      %670 = vst.msk [vmem:[%s170 + $0x8] sm:$0xff] %vm668, %v666
      %vm671 = vcmask 519168
      %672 = vst.msk [vmem:[%s170 + $0x10] sm:$0xf] %vm671, %v667
      %p673 = scmp.lt.s32.totalorder %s14, 1
      %s674 = scalar_select %p673, %s14, 1
      %s675 = smul.addr %s674, 3
      %s676 = smul.addr %s675, 8
      %s677 = scalar_lea.vmem %s3, %s676
      // Predicated region
      $region33: #{pallas_forward.6} parent=31 // pred_check
        %p678 = pneg %p100
      $region34: #{pallas_forward.6} parent=31 // pred_check_branch
        %680 = sbr.rel (%p678) target = $region36
      $region35: #{pallas_forward.6} parent=31 // pred_region
        _
      $region36: #{pallas_forward.6} parent=31 // pred_fallthru
        _
    $region32: #{pallas_forward.6} parent=5 // pred_fallthru
      _
    %p681 = scmp.le.s32.totalorder 2, %s9
    // Predicated region
    $region37: #{pallas_forward.6} parent=5 // pred_check
      %p682 = pneg %p681
    $region38: #{pallas_forward.6} parent=5 // pred_check_branch
      %684 = sbr.rel (%p682) target = $region40
    $region39: #{pallas_forward.6} parent=5 // pred_region
      %s685 = ssub.s32 %s9, 2
      // Predicated region
      $region41: #{pallas_forward.6} parent=39 // pred_check
        %p686 = pneg %p106
      $region42: #{pallas_forward.6} parent=39 // pred_check_branch
        %688 = sbr.rel (%p686) target = $region44
      $region43: #{pallas_forward.6} parent=39 // pred_region
        %p689 = scmp.lt.s32.totalorder %s15, 1
        %s690 = scalar_select %p689, %s15, 1
        %s691 = smul.addr %s690, 3
        %s692 = smul.addr %s691, 8
        %s693 = scalar_lea.vmem %s3, %s692
      $region44: #{pallas_forward.6} parent=39 // pred_fallthru
        _
    $region40: #{pallas_forward.6} parent=5 // pred_fallthru
      _
  $region6: #{pallas_forward.6} parent=0 // loop_footer
    %s13 = sadd.s32 1, %s9
  $region7: #{pallas_forward.6} parent=0 // loop_footer_branch
    %8 = sbr.rel target = $region3
  $region8: #{pallas_forward.6} parent=0 // loop_exit
    _

// kernel: pallas_forward.7
$region0: #{pallas_forward.7}
  #allocation0 [shape = 'u32[]', space=smem, size = 0x4, offset = 0x4, fixed_abs, tag = 'smem constant byte address 0x4 - core index']
  #allocation1 [shape = 'u32[144,128]{1,0:T(1,128)}', space=vmem, size = 0x12000, scoped, tag = 'internal scratch']
  #allocation2 [shape = 'f32[2,10,10,1]{3,2,1,0:T(8,128)}', space=vmem, size = 0x28000, scoped, tag = 'scratch operand']
  #allocation3 [shape = 'f32[1,1]{1,0:T(1,128)S(6)}', space=smem, size = 0x200, scoped, tag = 'scoped memory for pallas_forward.7']
  %s0 = inlined_call_operand.vmem [shape: f32[2,4,4,64], index: 0, kind: input, shape index: {}]
  %s1 = inlined_call_operand.vmem [shape: f32[64,4], index: 1, kind: input, shape index: {}]
  %s2 = inlined_call_operand.vmem [shape: f32[4,64], index: 2, kind: input, shape index: {}]
  %s3 = inlined_call_operand.vmem [shape: f32[2,49], index: 3, kind: input, shape index: {}]
  %s4 = inlined_call_operand.vmem [shape: f32[1,64], index: 4, kind: input, shape index: {}]
  %s5 = inlined_call_operand.<no memory space> [shape: f32[1,1], index: 5, kind: input, shape index: {}]
  %s6 = inlined_call_operand.vmem [shape: f32[2,4,4,1], index: 6, kind: output, shape index: {}]
  %s7 = sld [smem:[#allocation0]]
  $region61: #{pallas_forward.7} parent=0
    _
  %s9 = ssub.s32 1, %s7
  %s10 = scalar_select 0, %s9, %s7
  %11 = sst [smem:[#allocation3]] %s5
  $region1: #{pallas_forward.7} parent=0
    #allocation4 [shape = 'u8[1024]{0}', space=smem, size = 0x400, scoped, tag = 'input window, operand 3, single buffered']
    #allocation5 [shape = 's32[2]{0}', space=sflag, size = 0x8, scoped, tag = 'scoped memory for pallas_forward.7']
    %12 = vsyncpa [#allocation5], 0
    loop: start=0, step=1, limit=4
    $region2: #{pallas_forward.7} parent=1 // loop_pre_header
      _
    $region3: #{pallas_forward.7} parent=1 // loop_header
      %s14 = sphi 0, %s18
      %p15 = scmp.ge.s32.totalorder %s14, 4
      %s24 = sphi 0, %s26
      %s27 = sphi 0, %s24
      %s28 = sphi 0, %s27
      %s44 = sphi 0, %s28
      %s48 = sphi 0, %s48
      %s50 = sphi 0, %s48
      %s51 = sphi 0, %s50
      %s65 = sphi 0, %s51
      %s69 = sphi 0, %s69
      %s71 = sphi 0, %s69
      %s72 = sphi 0, %s71
      %s86 = sphi 0, %s72
      %s90 = sphi 0, %s90
      %s92 = sphi 0, %s90
      %s93 = sphi 0, %s92
      %s107 = sphi 0, %s93
      %s111 = sphi 0, %s111
      %s113 = sphi 0, %s111
      %s114 = sphi 0, %s113
      %s128 = sphi 0, %s114
      %s132 = sphi 0, %s132
      %s134 = sphi 0, %s132
      %s135 = sphi 0, %s134
      %s149 = sphi 0, %s135
      %s155 = sphi 0, %s157
      %s158 = sphi 0, %s155
      %s159 = sphi 0, %s158
      %s175 = sphi 0, %s159
    $region4: #{pallas_forward.7} parent=1 // loop_header_branch
      %17 = sbr.rel (%p15) target = $region8
    $region5: #{pallas_forward.7} parent=1 // loop_body
      %s19 = ssub.s32 %s14, 1
      %s20 = ssub.s32 %s14, 2
      %s21 = sadd.s32 %s14, 1
      %s22 = ssub.s32 %s14, %s21
      %p23 = scmp.eq.s32.totalorder %s22, 0
      %s25 = sadd.s32 %s24, 1
      %s26 = scalar_select %p23, %s24, %s25
      %p29 = pneg %p23
      %p30 = scmp.eq.s32.totalorder %s14, 1
      %p31 = por %p29, %p30
      %p32 = scmp.ne.s32.totalorder %s24, %s27
      %p33 = scmp.eq.s32.totalorder %s14, 0
      %p34 = por %p32, %p33
      %p35 = scmp.ne.s32.totalorder %s24, %s27
      %p36 = scmp.eq.s32.totalorder %s19, 1
      %p37 = por %p35, %p36
      %p38 = scmp.ne.s32.totalorder %s27, %s28
      %p39 = scmp.eq.s32.totalorder %s19, 0
      %p40 = por %p38, %p39
      %p41 = scmp.ne.s32.totalorder %s27, %s28
      %p42 = scmp.eq.s32.totalorder %s20, 1
      %p43 = por %p41, %p42
      %p45 = scmp.ne.s32.totalorder %s28, %s44
      %p46 = scmp.eq.s32.totalorder %s20, 0
      %p47 = por %p45, %p46
      %s49 = sadd.s32 %s48, 1
      %p52 = scmp.eq.s32.totalorder %s14, 1
      %p53 = scmp.ne.s32.totalorder %s48, %s50
      %p54 = scmp.eq.s32.totalorder %s14, 0
      %p55 = por %p53, %p54
      %p56 = scmp.ne.s32.totalorder %s48, %s50
      %p57 = scmp.eq.s32.totalorder %s19, 1
      %p58 = por %p56, %p57
      %p59 = scmp.ne.s32.totalorder %s50, %s51
      %p60 = scmp.eq.s32.totalorder %s19, 0
      %p61 = por %p59, %p60
      %p62 = scmp.ne.s32.totalorder %s50, %s51
      %p63 = scmp.eq.s32.totalorder %s20, 1
      %p64 = por %p62, %p63
      %p66 = scmp.ne.s32.totalorder %s51, %s65
      %p67 = scmp.eq.s32.totalorder %s20, 0
      %p68 = por %p66, %p67
      %s70 = sadd.s32 %s69, 1
      %p73 = scmp.eq.s32.totalorder %s14, 1
      %p74 = scmp.ne.s32.totalorder %s69, %s71
      %p75 = scmp.eq.s32.totalorder %s14, 0
      %p76 = por %p74, %p75
      %p77 = scmp.ne.s32.totalorder %s69, %s71
      %p78 = scmp.eq.s32.totalorder %s19, 1
      %p79 = por %p77, %p78
      %p80 = scmp.ne.s32.totalorder %s71, %s72
      %p81 = scmp.eq.s32.totalorder %s19, 0
      %p82 = por %p80, %p81
      %p83 = scmp.ne.s32.totalorder %s71, %s72
      %p84 = scmp.eq.s32.totalorder %s20, 1
      %p85 = por %p83, %p84
      %p87 = scmp.ne.s32.totalorder %s72, %s86
      %p88 = scmp.eq.s32.totalorder %s20, 0
      %p89 = por %p87, %p88
      %s91 = sadd.s32 %s90, 1
      %p94 = scmp.eq.s32.totalorder %s14, 1
      %p95 = scmp.ne.s32.totalorder %s90, %s92
      %p96 = scmp.eq.s32.totalorder %s14, 0
      %p97 = por %p95, %p96
      %p98 = scmp.ne.s32.totalorder %s90, %s92
      %p99 = scmp.eq.s32.totalorder %s19, 1
      %p100 = por %p98, %p99
      %p101 = scmp.ne.s32.totalorder %s92, %s93
      %p102 = scmp.eq.s32.totalorder %s19, 0
      %p103 = por %p101, %p102
      %p104 = scmp.ne.s32.totalorder %s92, %s93
      %p105 = scmp.eq.s32.totalorder %s20, 1
      %p106 = por %p104, %p105
      %p108 = scmp.ne.s32.totalorder %s93, %s107
      %p109 = scmp.eq.s32.totalorder %s20, 0
      %p110 = por %p108, %p109
      %s112 = sadd.s32 %s111, 1
      %p115 = scmp.eq.s32.totalorder %s14, 1
      %p116 = scmp.ne.s32.totalorder %s111, %s113
      %p117 = scmp.eq.s32.totalorder %s14, 0
      %p118 = por %p116, %p117
      %p119 = scmp.ne.s32.totalorder %s111, %s113
      %p120 = scmp.eq.s32.totalorder %s19, 1
      %p121 = por %p119, %p120
      %p122 = scmp.ne.s32.totalorder %s113, %s114
      %p123 = scmp.eq.s32.totalorder %s19, 0
      %p124 = por %p122, %p123
      %p125 = scmp.ne.s32.totalorder %s113, %s114
      %p126 = scmp.eq.s32.totalorder %s20, 1
      %p127 = por %p125, %p126
      %p129 = scmp.ne.s32.totalorder %s114, %s128
      %p130 = scmp.eq.s32.totalorder %s20, 0
      %p131 = por %p129, %p130
      %s133 = sadd.s32 %s132, 1
      %p136 = scmp.eq.s32.totalorder %s14, 1
      %p137 = scmp.ne.s32.totalorder %s132, %s134
      %p138 = scmp.eq.s32.totalorder %s14, 0
      %p139 = por %p137, %p138
      %p140 = scmp.ne.s32.totalorder %s132, %s134
      %p141 = scmp.eq.s32.totalorder %s19, 1
      %p142 = por %p140, %p141
      %p143 = scmp.ne.s32.totalorder %s134, %s135
      %p144 = scmp.eq.s32.totalorder %s19, 0
      %p145 = por %p143, %p144
      %p146 = scmp.ne.s32.totalorder %s134, %s135
      %p147 = scmp.eq.s32.totalorder %s20, 1
      %p148 = por %p146, %p147
      %p150 = scmp.ne.s32.totalorder %s135, %s149
      %p151 = scmp.eq.s32.totalorder %s20, 0
      %p152 = por %p150, %p151
      %s153 = ssub.s32 %s14, %s21
      %p154 = scmp.eq.s32.totalorder %s153, 0
      %s156 = sadd.s32 %s155, 1
      %s157 = scalar_select %p154, %s155, %s156
      %p160 = pneg %p154
      %p161 = scmp.eq.s32.totalorder %s14, 1
      %p162 = por %p160, %p161
      %p163 = scmp.ne.s32.totalorder %s155, %s158
      %p164 = scmp.eq.s32.totalorder %s14, 0
      %p165 = por %p163, %p164
      %p166 = scmp.ne.s32.totalorder %s155, %s158
      %p167 = scmp.eq.s32.totalorder %s19, 1
      %p168 = por %p166, %p167
      %p169 = scmp.ne.s32.totalorder %s158, %s159
      %p170 = scmp.eq.s32.totalorder %s19, 0
      %p171 = por %p169, %p170
      %p172 = scmp.ne.s32.totalorder %s158, %s159
      %p173 = scmp.eq.s32.totalorder %s20, 1
      %p174 = por %p172, %p173
      %p176 = scmp.ne.s32.totalorder %s159, %s175
      %p177 = scmp.eq.s32.totalorder %s20, 0
      %p178 = por %p176, %p177
      %p179 = scmp.le.s32.totalorder 1, %s14
      %p180 = scmp.lt.s32.totalorder %s14, 3
      %p181 = pnand %p179, %p180
      %p182 = pneg %p181
      // Predicated region
      $region9: #{pallas_forward.7} parent=5 // pred_check
        _
      $region10: #{pallas_forward.7} parent=5 // pred_check_branch
        %184 = sbr.rel (%p181) target = $region12
      $region11: #{pallas_forward.7} parent=5 // pred_region
        %s185 = ssub.s32 %s14, 1
        // Predicated region
        $region13: #{pallas_forward.7} parent=11 // pred_check
          %p186 = pneg %p61
        $region14: #{pallas_forward.7} parent=11 // pred_check_branch
          %188 = sbr.rel (%p186) target = $region16
        $region15: #{pallas_forward.7} parent=11 // pred_region
          _
        $region16: #{pallas_forward.7} parent=11 // pred_fallthru
          _
        // Predicated region
        $region17: #{pallas_forward.7} parent=11 // pred_check
          %p189 = pneg %p82
        $region18: #{pallas_forward.7} parent=11 // pred_check_branch
          %191 = sbr.rel (%p189) target = $region20
        $region19: #{pallas_forward.7} parent=11 // pred_region
          _
        $region20: #{pallas_forward.7} parent=11 // pred_fallthru
          _
        // Predicated region
        $region21: #{pallas_forward.7} parent=11 // pred_check
          %p192 = pneg %p103
        $region22: #{pallas_forward.7} parent=11 // pred_check_branch
          %194 = sbr.rel (%p192) target = $region24
        $region23: #{pallas_forward.7} parent=11 // pred_region
          %s196 = ssub.s32 32, 32
          %197 = vsyncadd [#allocation5], %s196
          %s199 = sshll.u32 %s3, 4
          %s200 = int_to_ptr.vmem [resolvable:$true] %s199
          %202 = dma.vmem_to_smem %s200, 32, [#allocation4], [#allocation5]
        $region24: #{pallas_forward.7} parent=11 // pred_fallthru
          _
        // Predicated region
        $region25: #{pallas_forward.7} parent=11 // pred_check
          %p203 = pneg %p124
        $region26: #{pallas_forward.7} parent=11 // pred_check_branch
          %205 = sbr.rel (%p203) target = $region28
        $region27: #{pallas_forward.7} parent=11 // pred_region
          _
        $region28: #{pallas_forward.7} parent=11 // pred_fallthru
          _
        // Predicated region
        $region29: #{pallas_forward.7} parent=11 // pred_check
          %p206 = pneg %p145
        $region30: #{pallas_forward.7} parent=11 // pred_check_branch
          %208 = sbr.rel (%p206) target = $region32
        $region31: #{pallas_forward.7} parent=11 // pred_region
          _
        $region32: #{pallas_forward.7} parent=11 // pred_fallthru
          _
      $region12: #{pallas_forward.7} parent=5 // pred_fallthru
        _
      %p209 = scmp.lt.s32.totalorder %s14, 2
      // Predicated region
      $region33: #{pallas_forward.7} parent=5 // pred_check
        %p210 = pneg %p209
      $region34: #{pallas_forward.7} parent=5 // pred_check_branch
        %212 = sbr.rel (%p210) target = $region36
      $region35: #{pallas_forward.7} parent=5 // pred_region
        // Predicated region
        $region37: #{pallas_forward.7} parent=35 // pred_check
          %p213 = pneg %p34
        $region38: #{pallas_forward.7} parent=35 // pred_check_branch
          %215 = sbr.rel (%p213) target = $region40
        $region39: #{pallas_forward.7} parent=35 // pred_region
          %p216 = scmp.lt.s32.totalorder %s14, 1
          %s217 = scalar_select %p216, %s14, 1
          %s218 = smul.addr %s217, 4
          %s219 = smul.addr %s218, 4
          %s220 = scalar_lea.vmem %s0, %s219
        $region40: #{pallas_forward.7} parent=35 // pred_fallthru
          _
      $region36: #{pallas_forward.7} parent=5 // pred_fallthru
        _
      %p221 = scmp.le.s32.totalorder 1, %s14
      %p222 = scmp.lt.s32.totalorder %s14, 3
      %p223 = pnand %p221, %p222
      %p224 = pneg %p223
      // Predicated region
      $region41: #{pallas_forward.7} parent=5 // pred_check
        _
      $region42: #{pallas_forward.7} parent=5 // pred_check_branch
        %226 = sbr.rel (%p223) target = $region44
      $region43: #{pallas_forward.7} parent=5 // pred_region
        %s227 = ssub.s32 %s14, 1
        // Predicated region
        $region45: #{pallas_forward.7} parent=43 // pred_check
          %p228 = pneg %p103
        $region46: #{pallas_forward.7} parent=43 // pred_check_branch
          %230 = sbr.rel (%p228) target = $region48
        $region47: #{pallas_forward.7} parent=43 // pred_region
          %231 = dma.done [#allocation5], 32
        $region48: #{pallas_forward.7} parent=43 // pred_fallthru
          _
        %232 = sfence
        %p233 = scmp.lt.s32.totalorder %s19, 1
        %s234 = scalar_select %p233, %s19, 1
        %s235 = smul.addr %s234, 4
        %s236 = smul.addr %s235, 4
        %s237 = scalar_lea.vmem %s0, %s236
        %p238 = pneg %p40
        %p239 = pneg %p37
        %p240 = pneg %p61
        %p241 = pneg %p58
        %p242 = pneg %p82
        %p243 = pneg %p79
        %p244 = pneg %p103
        %p245 = pneg %p100
        %p246 = pneg %p124
        %p247 = pneg %p121
        %p248 = pneg %p145
        %p249 = pneg %p142
        %p250 = pneg %p171
        %p251 = pneg %p168
        %p252 = scmp.lt.s32.totalorder %s19, 1
        %s253 = scalar_select %p252, %s19, 1
        %s254 = smul.addr %s253, 4
        %s255 = smul.addr %s254, 4
        %s256 = scalar_lea.vmem %s6, %s255
        %p257 = scmp.lt.s32.totalorder %s19, 1
        %s258 = scalar_select %p257, %s19, 1
        %s259 = smul.addr %s258, 4
        %s260 = smul.addr %s259, 4
        %s261 = scalar_lea.vmem %s0, %s260
        %p262 = scmp.lt.s32.totalorder %s19, 1
        %s263 = scalar_select %p262, %s19, 1
        %s264 = smul.addr %s263, 4
        %s265 = smul.addr %s264, 4
        %s266 = scalar_lea.vmem %s6, %s265
        %v267 = vld [vmem:[%s261] sm:$0xf]
        %v268 = vld [vmem:[%s261 + $0x4] sm:$0xf]
        %v269 = vld [vmem:[%s261 + $0x8] sm:$0xf]
        %v270 = vld [vmem:[%s261 + $0xc] sm:$0xf]
        %vm271 = vcmask 519168
        %v272 = vsel %vm271, %v267, -inf
        %v273 = vsel %vm271, %v268, -inf
        %v274 = vsel %vm271, %v269, -inf
        %v275 = vsel %vm271, %v270, -inf
        %v276 = vmax.f32 %v272, %v273
        %v277 = vmax.f32 %v274, %v275
        %v278 = vmax.f32 %v276, %v277
        %v279 = vsel %vm271, %v278, -inf
        %v280 = vrot.slane %v279, 4
        %v281 = vmax.f32 %v279, %v280
        %v282 = vrot.slane %v281, 2
        %v283 = vmax.f32 %v281, %v282
        %v284 = vrot.slane %v283, 1
        %v285 = vmax.f32 %v283, %v284
        %v286 = vsel %vm271, %v267, 0.0
        %v287 = vsel %vm271, %v268, 0.0
        %v288 = vadd.f32 %v286, %v287
        %v289 = vsel %vm271, %v269, 0.0
        %v290 = vadd.f32 %v288, %v289
        %v291 = vsel %vm271, %v270, 0.0
        %v292 = vadd.f32 %v290, %v291
        %v293 = vsel %vm271, %v292, 0.0
        %v294 = vrot.slane %v293, 4
        %v295 = vadd.f32 %v293, %v294
        %v296 = vrot.slane %v295, 2
        %v297 = vadd.f32 %v295, %v296
        %v298 = vrot.slane %v297, 1
        %v299 = vadd.f32 %v297, %v298
        %v300 = vmul.f32 %v299, 0.0625
        %v301 = vld [vmem:[%s1] sm:$0xff]
        %v302 = vld [vmem:[%s1 + $0x8] sm:$0xff]
        %v303 = vld [vmem:[%s1 + $0x10] sm:$0xff]
        %v304 = vld [vmem:[%s1 + $0x18] sm:$0xff]
        %v305 = vld [vmem:[%s1 + $0x20] sm:$0xff]
        %v306 = vld [vmem:[%s1 + $0x28] sm:$0xff]
        %v307 = vld [vmem:[%s1 + $0x30] sm:$0xff]
        %v308 = vld [vmem:[%s1 + $0x38] sm:$0xff]
        %vm309 = vcmask 523264
        %v311 = vsel %vm309, %v285, 0
        %313 = vmatprep.subr.mxu0 0.0
        %314 = vmatpush1.msra.mxu0 0.0
        %315 = vmatprep.subr.mxu0 0.0
        %316 = vmatpush1.msra.mxu0 0.0
        %317 = vmatprep.subr.mxu0 0.0
        %318 = vmatpush1.msra.mxu0 0.0
        %319 = vmatprep.subr.mxu0 0.0
        %320 = vmatpush1.msra.mxu0 0.0
        %321 = vmatprep.subr.mxu0 0.0
        %322 = vmatpush1.msra.mxu0 0.0
        %323 = vmatprep.subr.mxu0 0.0
        %324 = vmatpush1.msra.mxu0 0.0
        %325 = vmatprep.subr.mxu0 0.0
        %326 = vmatpush1.msra.mxu0 0.0
        %327 = vmatprep.subr.mxu0 0.0
        %328 = vmatpush1.msra.mxu0 0.0
        %329 = vmatprep.subr.mxu0 0.0
        %330 = vmatpush1.msra.mxu0 %v308
        %331 = vmatprep.subr.mxu0 0.0
        %332 = vmatpush1.msra.mxu0 %v307
        %333 = vmatprep.subr.mxu0 0.0
        %334 = vmatpush1.msra.mxu0 %v306
        %335 = vmatprep.subr.mxu0 0.0
        %336 = vmatpush1.msra.mxu0 %v305
        %337 = vmatprep.subr.mxu0 0.0
        %338 = vmatpush1.msra.mxu0 %v304
        %339 = vmatprep.subr.mxu0 0.0
        %340 = vmatpush1.msra.mxu0 %v303
        %341 = vmatprep.subr.mxu0 0.0
        %342 = vmatpush1.msra.mxu0 %v302
        %343 = vmatprep.subr.mxu0 0.0
        %344 = vmatpush1.msra.mxu0 %v301
        %345 = vmatprep.subr.mxu0 0.0
        %346 = vmatpush2.msra.mxu0 0.0
        %347 = vmatprep.subr.mxu0 0.0
        %348 = vmatpush2.msra.mxu0 0.0
        %349 = vmatprep.subr.mxu0 0.0
        %350 = vmatpush2.msra.mxu0 0.0
        %351 = vmatprep.subr.mxu0 0.0
        %352 = vmatpush2.msra.mxu0 0.0
        %353 = vmatprep.subr.mxu0 0.0
        %354 = vmatpush2.msra.mxu0 0.0
        %355 = vmatprep.subr.mxu0 0.0
        %356 = vmatpush2.msra.mxu0 0.0
        %357 = vmatprep.subr.mxu0 0.0
        %358 = vmatpush2.msra.mxu0 0.0
        %359 = vmatprep.subr.mxu0 0.0
        %360 = vmatpush2.msra.mxu0 0.0
        %361 = vmatprep.subr.mxu0 0.0
        %362 = vmatpush2.msra.mxu0 0.0
        %363 = vmatprep.subr.mxu0 0.0
        %364 = vmatpush2.msra.mxu0 0.0
        %365 = vmatprep.subr.mxu0 0.0
        %366 = vmatpush2.msra.mxu0 0.0
        %367 = vmatprep.subr.mxu0 0.0
        %368 = vmatpush2.msra.mxu0 0.0
        %369 = vmatprep.subr.mxu0 0.0
        %370 = vmatpush2.msra.mxu0 0.0
        %371 = vmatprep.subr.mxu0 0.0
        %372 = vmatpush2.msra.mxu0 0.0
        %373 = vmatprep.subr.mxu0 0.0
        %374 = vmatpush2.msra.mxu0 0.0
        %375 = vmatprep.subr.mxu0 0.0
        %376 = vmatpush2.msra.mxu0 0.0
        %377 = vmatprep.mubr.f32.mxu0 0.0
        %378 = vmatmul.mubr.f32.gmra.mxu0 %v311
        %v379 = vpop.f32.mrf.mxu0
        %v380 = vadd.f32 0.0, %v379
        %v381 = vpop.f32.mrf.mxu0
        %382 = vdwg.mxu0
        %v383 = vmax.f32 %v380, 0.0
        %v384 = vld [vmem:[%s2] sm:$0xf]
        %v386 = vsel %vm309, %v300, 0
        %388 = vmatprep.subr.mxu0 0.0
        %389 = vmatpush1.msra.mxu0 0.0
        %390 = vmatprep.subr.mxu0 0.0
        %391 = vmatpush1.msra.mxu0 0.0
        %392 = vmatprep.subr.mxu0 0.0
        %393 = vmatpush1.msra.mxu0 0.0
        %394 = vmatprep.subr.mxu0 0.0
        %395 = vmatpush1.msra.mxu0 0.0
        %396 = vmatprep.subr.mxu0 0.0
        %397 = vmatpush1.msra.mxu0 0.0
        %398 = vmatprep.subr.mxu0 0.0
        %399 = vmatpush1.msra.mxu0 0.0
        %400 = vmatprep.subr.mxu0 0.0
        %401 = vmatpush1.msra.mxu0 0.0
        %402 = vmatprep.subr.mxu0 0.0
        %403 = vmatpush1.msra.mxu0 0.0
        %404 = vmatprep.subr.mxu0 0.0
        %405 = vmatpush1.msra.mxu0 %v308
        %406 = vmatprep.subr.mxu0 0.0
        %407 = vmatpush1.msra.mxu0 %v307
        %408 = vmatprep.subr.mxu0 0.0
        %409 = vmatpush1.msra.mxu0 %v306
        %410 = vmatprep.subr.mxu0 0.0
        %411 = vmatpush1.msra.mxu0 %v305
        %412 = vmatprep.subr.mxu0 0.0
        %413 = vmatpush1.msra.mxu0 %v304
        %414 = vmatprep.subr.mxu0 0.0
        %415 = vmatpush1.msra.mxu0 %v303
        %416 = vmatprep.subr.mxu0 0.0
        %417 = vmatpush1.msra.mxu0 %v302
        %418 = vmatprep.subr.mxu0 0.0
        %419 = vmatpush1.msra.mxu0 %v301
        %420 = vmatprep.subr.mxu0 0.0
        %421 = vmatpush2.msra.mxu0 0.0
        %422 = vmatprep.subr.mxu0 0.0
        %423 = vmatpush2.msra.mxu0 0.0
        %424 = vmatprep.subr.mxu0 0.0
        %425 = vmatpush2.msra.mxu0 0.0
        %426 = vmatprep.subr.mxu0 0.0
        %427 = vmatpush2.msra.mxu0 0.0
        %428 = vmatprep.subr.mxu0 0.0
        %429 = vmatpush2.msra.mxu0 0.0
        %430 = vmatprep.subr.mxu0 0.0
        %431 = vmatpush2.msra.mxu0 0.0
        %432 = vmatprep.subr.mxu0 0.0
        %433 = vmatpush2.msra.mxu0 0.0
        %434 = vmatprep.subr.mxu0 0.0
        %435 = vmatpush2.msra.mxu0 0.0
        %436 = vmatprep.subr.mxu0 0.0
        %437 = vmatpush2.msra.mxu0 0.0
        %438 = vmatprep.subr.mxu0 0.0
        %439 = vmatpush2.msra.mxu0 0.0
        %440 = vmatprep.subr.mxu0 0.0
        %441 = vmatpush2.msra.mxu0 0.0
        %442 = vmatprep.subr.mxu0 0.0
        %443 = vmatpush2.msra.mxu0 0.0
        %444 = vmatprep.subr.mxu0 0.0
        %445 = vmatpush2.msra.mxu0 0.0
        %446 = vmatprep.subr.mxu0 0.0
        %447 = vmatpush2.msra.mxu0 0.0
        %448 = vmatprep.subr.mxu0 0.0
        %449 = vmatpush2.msra.mxu0 0.0
        %450 = vmatprep.subr.mxu0 0.0
        %451 = vmatpush2.msra.mxu0 0.0
        %452 = vmatprep.mubr.f32.mxu0 0.0
        %453 = vmatmul.mubr.f32.gmra.mxu0 %v386
        %v454 = vpop.f32.mrf.mxu0
        %v455 = vadd.f32 0.0, %v454
        %v456 = vpop.f32.mrf.mxu0
        %457 = vdwg.mxu0
        %v458 = vmax.f32 %v455, 0.0
        %vm459 = vcmask 31744
        %v461 = vsel %vm459, %v458, 0
        %vm463 = vcmask 1043456
        %v465 = vsel %vm463, %v384, 0
        %467 = vmatprep.subr.mxu0 0.0
        %468 = vmatpush1.msra.mxu0 0.0
        %469 = vmatprep.subr.mxu0 0.0
        %470 = vmatpush1.msra.mxu0 0.0
        %471 = vmatprep.subr.mxu0 0.0
        %472 = vmatpush1.msra.mxu0 0.0
        %473 = vmatprep.subr.mxu0 0.0
        %474 = vmatpush1.msra.mxu0 0.0
        %475 = vmatprep.subr.mxu0 0.0
        %476 = vmatpush1.msra.mxu0 0.0
        %477 = vmatprep.subr.mxu0 0.0
        %478 = vmatpush1.msra.mxu0 0.0
        %479 = vmatprep.subr.mxu0 0.0
        %480 = vmatpush1.msra.mxu0 0.0
        %481 = vmatprep.subr.mxu0 0.0
        %482 = vmatpush1.msra.mxu0 0.0
        %483 = vmatprep.subr.mxu0 0.0
        %484 = vmatpush1.msra.mxu0 0.0
        %485 = vmatprep.subr.mxu0 0.0
        %486 = vmatpush1.msra.mxu0 0.0
        %487 = vmatprep.subr.mxu0 0.0
        %488 = vmatpush1.msra.mxu0 0.0
        %489 = vmatprep.subr.mxu0 0.0
        %490 = vmatpush1.msra.mxu0 0.0
        %491 = vmatprep.subr.mxu0 0.0
        %492 = vmatpush1.msra.mxu0 0.0
        %493 = vmatprep.subr.mxu0 0.0
        %494 = vmatpush1.msra.mxu0 0.0
        %495 = vmatprep.subr.mxu0 0.0
        %496 = vmatpush1.msra.mxu0 0.0
        %497 = vmatprep.subr.mxu0 0.0
        %498 = vmatpush1.msra.mxu0 %v465
        %499 = vmatprep.subr.mxu0 0.0
        %500 = vmatpush2.msra.mxu0 0.0
        %501 = vmatprep.subr.mxu0 0.0
        %502 = vmatpush2.msra.mxu0 0.0
        %503 = vmatprep.subr.mxu0 0.0
        %504 = vmatpush2.msra.mxu0 0.0
        %505 = vmatprep.subr.mxu0 0.0
        %506 = vmatpush2.msra.mxu0 0.0
        %507 = vmatprep.subr.mxu0 0.0
        %508 = vmatpush2.msra.mxu0 0.0
        %509 = vmatprep.subr.mxu0 0.0
        %510 = vmatpush2.msra.mxu0 0.0
        %511 = vmatprep.subr.mxu0 0.0
        %512 = vmatpush2.msra.mxu0 0.0
        %513 = vmatprep.subr.mxu0 0.0
        %514 = vmatpush2.msra.mxu0 0.0
        %515 = vmatprep.subr.mxu0 0.0
        %516 = vmatpush2.msra.mxu0 0.0
        %517 = vmatprep.subr.mxu0 0.0
        %518 = vmatpush2.msra.mxu0 0.0
        %519 = vmatprep.subr.mxu0 0.0
        %520 = vmatpush2.msra.mxu0 0.0
        %521 = vmatprep.subr.mxu0 0.0
        %522 = vmatpush2.msra.mxu0 0.0
        %523 = vmatprep.subr.mxu0 0.0
        %524 = vmatpush2.msra.mxu0 0.0
        %525 = vmatprep.subr.mxu0 0.0
        %526 = vmatpush2.msra.mxu0 0.0
        %527 = vmatprep.subr.mxu0 0.0
        %528 = vmatpush2.msra.mxu0 0.0
        %529 = vmatprep.subr.mxu0 0.0
        %530 = vmatpush2.msra.mxu0 0.0
        %531 = vmatprep.mubr.f32.mxu0 0.0
        %532 = vmatmul.mubr.f32.gmra.mxu0 %v461
        %v533 = vpop.f32.mrf.mxu0
        %v534 = vadd.f32 0.0, %v533
        %v535 = vpop.f32.mrf.mxu0
        %536 = vdwg.mxu0
        %v538 = vsel %vm459, %v383, 0
        %540 = vmatprep.subr.mxu0 0.0
        %541 = vmatpush1.msra.mxu0 0.0
        %542 = vmatprep.subr.mxu0 0.0
        %543 = vmatpush1.msra.mxu0 0.0
        %544 = vmatprep.subr.mxu0 0.0
        %545 = vmatpush1.msra.mxu0 0.0
        %546 = vmatprep.subr.mxu0 0.0
        %547 = vmatpush1.msra.mxu0 0.0
        %548 = vmatprep.subr.mxu0 0.0
        %549 = vmatpush1.msra.mxu0 0.0
        %550 = vmatprep.subr.mxu0 0.0
        %551 = vmatpush1.msra.mxu0 0.0
        %552 = vmatprep.subr.mxu0 0.0
        %553 = vmatpush1.msra.mxu0 0.0
        %554 = vmatprep.subr.mxu0 0.0
        %555 = vmatpush1.msra.mxu0 0.0
        %556 = vmatprep.subr.mxu0 0.0
        %557 = vmatpush1.msra.mxu0 0.0
        %558 = vmatprep.subr.mxu0 0.0
        %559 = vmatpush1.msra.mxu0 0.0
        %560 = vmatprep.subr.mxu0 0.0
        %561 = vmatpush1.msra.mxu0 0.0
        %562 = vmatprep.subr.mxu0 0.0
        %563 = vmatpush1.msra.mxu0 0.0
        %564 = vmatprep.subr.mxu0 0.0
        %565 = vmatpush1.msra.mxu0 0.0
        %566 = vmatprep.subr.mxu0 0.0
        %567 = vmatpush1.msra.mxu0 0.0
        %568 = vmatprep.subr.mxu0 0.0
        %569 = vmatpush1.msra.mxu0 0.0
        %570 = vmatprep.subr.mxu0 0.0
        %571 = vmatpush1.msra.mxu0 %v465
        %572 = vmatprep.subr.mxu0 0.0
        %573 = vmatpush2.msra.mxu0 0.0
        %574 = vmatprep.subr.mxu0 0.0
        %575 = vmatpush2.msra.mxu0 0.0
        %576 = vmatprep.subr.mxu0 0.0
        %577 = vmatpush2.msra.mxu0 0.0
        %578 = vmatprep.subr.mxu0 0.0
        %579 = vmatpush2.msra.mxu0 0.0
        %580 = vmatprep.subr.mxu0 0.0
        %581 = vmatpush2.msra.mxu0 0.0
        %582 = vmatprep.subr.mxu0 0.0
        %583 = vmatpush2.msra.mxu0 0.0
        %584 = vmatprep.subr.mxu0 0.0
        %585 = vmatpush2.msra.mxu0 0.0
        %586 = vmatprep.subr.mxu0 0.0
        %587 = vmatpush2.msra.mxu0 0.0
        %588 = vmatprep.subr.mxu0 0.0
        %589 = vmatpush2.msra.mxu0 0.0
        %590 = vmatprep.subr.mxu0 0.0
        %591 = vmatpush2.msra.mxu0 0.0
        %592 = vmatprep.subr.mxu0 0.0
        %593 = vmatpush2.msra.mxu0 0.0
        %594 = vmatprep.subr.mxu0 0.0
        %595 = vmatpush2.msra.mxu0 0.0
        %596 = vmatprep.subr.mxu0 0.0
        %597 = vmatpush2.msra.mxu0 0.0
        %598 = vmatprep.subr.mxu0 0.0
        %599 = vmatpush2.msra.mxu0 0.0
        %600 = vmatprep.subr.mxu0 0.0
        %601 = vmatpush2.msra.mxu0 0.0
        %602 = vmatprep.subr.mxu0 0.0
        %603 = vmatpush2.msra.mxu0 0.0
        %604 = vmatprep.mubr.f32.mxu0 0.0
        %605 = vmatmul.mubr.f32.gmra.mxu0 %v538
        %v606 = vpop.f32.mrf.mxu0
        %v607 = vadd.f32 %v534, %v606
        %v608 = vpop.f32.mrf.mxu0
        %609 = vdwg.mxu0
        %v610 = vsub.f32 0.0, %v607
        %v611 = vmul.f32 %v610, 1.442695
        %v612 = vpow.pop %v611
        %v613 = vadd.f32 %v612, 1.0
        %v614 = vrcp.pop %v613
        %v615 = vlaneseq
        %v616 = vshrl.u32 %v615, 7
        %v617 = vsub.s32 0, %v616
        %v618 = vrot.slane %v614, %v617
        %v619 = vmul.f32 %v267, %v618
        %v620 = vmul.f32 %v268, %v618
        %v621 = vmul.f32 %v269, %v618
        %v622 = vmul.f32 %v270, %v618
        %v623 = vsel %vm271, %v619, -inf
        %624 = vmax.xlane.f32.xlu0 %v623
        %v625 = vpop.xlane.xlu0 %624
        %v626 = vsel %vm271, %v620, -inf
        %627 = vmax.xlane.f32.xlu0 %v626
        %v628 = vpop.xlane.xlu0 %627
        %v629 = vsel %vm271, %v621, -inf
        %630 = vmax.xlane.f32.xlu0 %v629
        %v631 = vpop.xlane.xlu0 %630
        %v632 = vsel %vm271, %v622, -inf
        %633 = vmax.xlane.f32.xlu0 %v632
        %v634 = vpop.xlane.xlu0 %633
        %v635 = vsel %vm271, %v619, 0.0
        %636 = vadd.xlane.f32.xlu0 %v635
        %v637 = vpop.xlane.xlu0 %636
        %v638 = vsel %vm271, %v620, 0.0
        %639 = vadd.xlane.f32.xlu0 %v638
        %v640 = vpop.xlane.xlu0 %639
        %v641 = vsel %vm271, %v621, 0.0
        %642 = vadd.xlane.f32.xlu0 %v641
        %v643 = vpop.xlane.xlu0 %642
        %v644 = vsel %vm271, %v622, 0.0
        %645 = vadd.xlane.f32.xlu0 %v644
        %v646 = vpop.xlane.xlu0 %645
        %v647 = vrcp.pop 64.0
        %v648 = vmul.f32 %v637, %v647
        %v649 = vmul.f32 %v640, %v647
        %v650 = vmul.f32 %v643, %v647
        %v651 = vmul.f32 %v646, %v647
        %vm652 = vcmask 7168
        %653 = vst.msk [vmem:[#allocation2] sm:$0xff] %vm652, 0.0
        %vm654 = vcmask 1024
        %655 = vst.msk [vmem:[#allocation2 + $0x8] sm:$0x3] %vm654, 0.0
        %656 = vst.msk [vmem:[#allocation2 + $0x10] sm:$0xff] %vm652, 0.0
        %657 = vst.msk [vmem:[#allocation2 + $0x18] sm:$0x3] %vm654, 0.0
        %658 = vst.msk [vmem:[#allocation2 + $0x20] sm:$0xff] %vm652, 0.0
        %659 = vst.msk [vmem:[#allocation2 + $0x28] sm:$0x3] %vm654, 0.0
        %660 = vst.msk [vmem:[#allocation2 + $0x30] sm:$0xff] %vm652, 0.0
        %661 = vst.msk [vmem:[#allocation2 + $0x38] sm:$0x3] %vm654, 0.0
        %662 = vst.msk [vmem:[#allocation2 + $0x40] sm:$0xff] %vm652, 0.0
        %663 = vst.msk [vmem:[#allocation2 + $0x48] sm:$0x3] %vm654, 0.0
        %664 = vst.msk [vmem:[#allocation2 + $0x50] sm:$0xff] %vm652, 0.0
        %665 = vst.msk [vmem:[#allocation2 + $0x58] sm:$0x3] %vm654, 0.0
        %666 = vst.msk [vmem:[#allocation2 + $0x60] sm:$0xff] %vm652, 0.0
        %667 = vst.msk [vmem:[#allocation2 + $0x68] sm:$0x3] %vm654, 0.0
        %668 = vst.msk [vmem:[#allocation2 + $0x70] sm:$0xff] %vm652, 0.0
        %669 = vst.msk [vmem:[#allocation2 + $0x78] sm:$0x3] %vm654, 0.0
        %670 = vst.msk [vmem:[#allocation2 + $0x80] sm:$0xff] %vm652, 0.0
        %671 = vst.msk [vmem:[#allocation2 + $0x88] sm:$0x3] %vm654, 0.0
        %672 = vst.msk [vmem:[#allocation2 + $0x90] sm:$0xff] %vm652, 0.0
        %673 = vst.msk [vmem:[#allocation2 + $0x98] sm:$0x3] %vm654, 0.0
        %674 = vst.msk [vmem:[#allocation2 + $0xa0] sm:$0xff] %vm652, 0.0
        %675 = vst.msk [vmem:[#allocation2 + $0xa8] sm:$0x3] %vm654, 0.0
        %676 = vst.msk [vmem:[#allocation2 + $0xb0] sm:$0xff] %vm652, 0.0
        %677 = vst.msk [vmem:[#allocation2 + $0xb8] sm:$0x3] %vm654, 0.0
        %678 = vst.msk [vmem:[#allocation2 + $0xc0] sm:$0xff] %vm652, 0.0
        %679 = vst.msk [vmem:[#allocation2 + $0xc8] sm:$0x3] %vm654, 0.0
        %680 = vst.msk [vmem:[#allocation2 + $0xd0] sm:$0xff] %vm652, 0.0
        %681 = vst.msk [vmem:[#allocation2 + $0xd8] sm:$0x3] %vm654, 0.0
        %682 = vst.msk [vmem:[#allocation2 + $0xe0] sm:$0xff] %vm652, 0.0
        %683 = vst.msk [vmem:[#allocation2 + $0xe8] sm:$0x3] %vm654, 0.0
        %684 = vst.msk [vmem:[#allocation2 + $0xf0] sm:$0xff] %vm652, 0.0
        %685 = vst.msk [vmem:[#allocation2 + $0xf8] sm:$0x3] %vm654, 0.0
        %686 = vst.msk [vmem:[#allocation2 + $0x100] sm:$0xff] %vm652, 0.0
        %687 = vst.msk [vmem:[#allocation2 + $0x108] sm:$0x3] %vm654, 0.0
        %688 = vst.msk [vmem:[#allocation2 + $0x110] sm:$0xff] %vm652, 0.0
        %689 = vst.msk [vmem:[#allocation2 + $0x118] sm:$0x3] %vm654, 0.0
        %690 = vst.msk [vmem:[#allocation2 + $0x120] sm:$0xff] %vm652, 0.0
        %691 = vst.msk [vmem:[#allocation2 + $0x128] sm:$0x3] %vm654, 0.0
        %692 = vst.msk [vmem:[#allocation2 + $0x130] sm:$0xff] %vm652, 0.0
        %693 = vst.msk [vmem:[#allocation2 + $0x138] sm:$0x3] %vm654, 0.0
        %s694 = scalar_lea.vmem [#allocation2], 48
        %vm695 = vcmask 3072
        %696 = vst.msk [vmem:[%s694 + $0x3] sm:$0xf] %vm695, %v625
        %697 = vst.msk [vmem:[%s694 + $0x13] sm:$0xf] %vm695, %v628
        %698 = vst.msk [vmem:[%s694 + $0x23] sm:$0xf] %vm695, %v631
        %699 = vst.msk [vmem:[%s694 + $0x33] sm:$0xf] %vm695, %v634
        %s700 = scalar_lea.vmem [#allocation2], 208
        %701 = vst.msk [vmem:[%s700 + $0x3] sm:$0xf] %vm695, %v648
        %702 = vst.msk [vmem:[%s700 + $0x13] sm:$0xf] %vm695, %v649
        %703 = vst.msk [vmem:[%s700 + $0x23] sm:$0xf] %vm695, %v650
        %704 = vst.msk [vmem:[%s700 + $0x33] sm:$0xf] %vm695, %v651
        %v705 = vld [vmem:[#allocation2] sm:$0xf]
        %v706 = vld [vmem:[#allocation2 + $0x10] sm:$0xf]
        %v707 = vld [vmem:[#allocation2 + $0x20] sm:$0xf]
        %v708 = vld [vmem:[#allocation2 + $0x30] sm:$0xf]
        %s709 = sld [smem:[#allocation4]]
        %v710 = vstv %s709
        %v711 = vmul.f32 %v705, %v710
        %v712 = vmul.f32 %v706, %v710
        %v713 = vmul.f32 %v707, %v710
        %v714 = vmul.f32 %v708, %v710
        %v715 = vadd.f32 %v711, 0.0
        %v716 = vadd.f32 %v712, 0.0
        %v717 = vadd.f32 %v713, 0.0
        %v718 = vadd.f32 %v714, 0.0
        %s719 = scalar_lea.vmem [#allocation2], 160
        %v720 = vld [vmem:[%s719] sm:$0xf]
        %v721 = vld [vmem:[%s719 + $0x10] sm:$0xf]
        %v722 = vld [vmem:[%s719 + $0x20] sm:$0xf]
        %v723 = vld [vmem:[%s719 + $0x30] sm:$0xf]
        %s724 = sld [smem:[#allocation4 + $0x80]]
        %v725 = vstv %s724
        %v726 = vmul.f32 %v720, %v725
        %v727 = vmul.f32 %v721, %v725
        %v728 = vmul.f32 %v722, %v725
        %v729 = vmul.f32 %v723, %v725
        %v730 = vadd.f32 %v715, %v726
        %v731 = vadd.f32 %v716, %v727
        %v732 = vadd.f32 %v717, %v728
        %v733 = vadd.f32 %v718, %v729
        %v734 = vld [vmem:[#allocation2 + $0x1] sm:$0xf]
        %v735 = vld [vmem:[#allocation2 + $0x11] sm:$0xf]
        %v736 = vld [vmem:[#allocation2 + $0x21] sm:$0xf]
        %v737 = vld [vmem:[#allocation2 + $0x31] sm:$0xf]
        %s738 = sld [smem:[#allocation4 + $0x1]]
        %v739 = vstv %s738
        %v740 = vmul.f32 %v734, %v739
        %v741 = vmul.f32 %v735, %v739
        %v742 = vmul.f32 %v736, %v739
        %v743 = vmul.f32 %v737, %v739
        %v744 = vadd.f32 %v730, %v740
        %v745 = vadd.f32 %v731, %v741
        %v746 = vadd.f32 %v732, %v742
        %v747 = vadd.f32 %v733, %v743
        %v748 = vld [vmem:[%s719 + $0x1] sm:$0xf]
        %v749 = vld [vmem:[%s719 + $0x11] sm:$0xf]
        %v750 = vld [vmem:[%s719 + $0x21] sm:$0xf]
        %v751 = vld [vmem:[%s719 + $0x31] sm:$0xf]
        %s752 = sld [smem:[#allocation4 + $0x81]]
        %v753 = vstv %s752
        %v754 = vmul.f32 %v748, %v753
        %v755 = vmul.f32 %v749, %v753
        %v756 = vmul.f32 %v750, %v753
        %v757 = vmul.f32 %v751, %v753
        %v758 = vadd.f32 %v744, %v754
        %v759 = vadd.f32 %v745, %v755
        %v760 = vadd.f32 %v746, %v756
        %v761 = vadd.f32 %v747, %v757
        %v762 = vld [vmem:[#allocation2 + $0x2] sm:$0xf]
        %v763 = vld [vmem:[#allocation2 + $0x12] sm:$0xf]
        %v764 = vld [vmem:[#allocation2 + $0x22] sm:$0xf]
        %v765 = vld [vmem:[#allocation2 + $0x32] sm:$0xf]
        %s766 = sld [smem:[#allocation4 + $0x2]]
        %v767 = vstv %s766
        %v768 = vmul.f32 %v762, %v767
        %v769 = vmul.f32 %v763, %v767
        %v770 = vmul.f32 %v764, %v767
        %v771 = vmul.f32 %v765, %v767
        %v772 = vadd.f32 %v758, %v768
        %v773 = vadd.f32 %v759, %v769
        %v774 = vadd.f32 %v760, %v770
        %v775 = vadd.f32 %v761, %v771
        %v776 = vld [vmem:[%s719 + $0x2] sm:$0xf]
        %v777 = vld [vmem:[%s719 + $0x12] sm:$0xf]
        %v778 = vld [vmem:[%s719 + $0x22] sm:$0xf]
        %v779 = vld [vmem:[%s719 + $0x32] sm:$0xf]
        %s780 = sld [smem:[#allocation4 + $0x82]]
        %v781 = vstv %s780
        %v782 = vmul.f32 %v776, %v781
        %v783 = vmul.f32 %v777, %v781
        %v784 = vmul.f32 %v778, %v781
        %v785 = vmul.f32 %v779, %v781
        %v786 = vadd.f32 %v772, %v782
        %v787 = vadd.f32 %v773, %v783
        %v788 = vadd.f32 %v774, %v784
        %v789 = vadd.f32 %v775, %v785
        %v790 = vld [vmem:[#allocation2 + $0x3] sm:$0xf]
        %v791 = vld [vmem:[#allocation2 + $0x13] sm:$0xf]
        %v792 = vld [vmem:[#allocation2 + $0x23] sm:$0xf]
        %v793 = vld [vmem:[#allocation2 + $0x33] sm:$0xf]
        %s794 = sld [smem:[#allocation4 + $0x3]]
        %v795 = vstv %s794
        %v796 = vmul.f32 %v790, %v795
        %v797 = vmul.f32 %v791, %v795
        %v798 = vmul.f32 %v792, %v795
        %v799 = vmul.f32 %v793, %v795
        %v800 = vadd.f32 %v786, %v796
        %v801 = vadd.f32 %v787, %v797
        %v802 = vadd.f32 %v788, %v798
        %v803 = vadd.f32 %v789, %v799
        %v804 = vld [vmem:[%s719 + $0x3] sm:$0xf]
        %v805 = vld [vmem:[%s719 + $0x13] sm:$0xf]
        %v806 = vld [vmem:[%s719 + $0x23] sm:$0xf]
        %v807 = vld [vmem:[%s719 + $0x33] sm:$0xf]
        %s808 = sld [smem:[#allocation4 + $0x83]]
        %v809 = vstv %s808
        %v810 = vmul.f32 %v804, %v809
        %v811 = vmul.f32 %v805, %v809
        %v812 = vmul.f32 %v806, %v809
        %v813 = vmul.f32 %v807, %v809
        %v814 = vadd.f32 %v800, %v810
        %v815 = vadd.f32 %v801, %v811
        %v816 = vadd.f32 %v802, %v812
        %v817 = vadd.f32 %v803, %v813
        %v818 = vld [vmem:[#allocation2 + $0x4] sm:$0xf]
        %v819 = vld [vmem:[#allocation2 + $0x14] sm:$0xf]
        %v820 = vld [vmem:[#allocation2 + $0x24] sm:$0xf]
        %v821 = vld [vmem:[#allocation2 + $0x34] sm:$0xf]
        %s822 = sld [smem:[#allocation4 + $0x4]]
        %v823 = vstv %s822
        %v824 = vmul.f32 %v818, %v823
        %v825 = vmul.f32 %v819, %v823
        %v826 = vmul.f32 %v820, %v823
        %v827 = vmul.f32 %v821, %v823
        %v828 = vadd.f32 %v814, %v824
        %v829 = vadd.f32 %v815, %v825
        %v830 = vadd.f32 %v816, %v826
        %v831 = vadd.f32 %v817, %v827
        %v832 = vld [vmem:[%s719 + $0x4] sm:$0xf]
        %v833 = vld [vmem:[%s719 + $0x14] sm:$0xf]
        %v834 = vld [vmem:[%s719 + $0x24] sm:$0xf]
        %v835 = vld [vmem:[%s719 + $0x34] sm:$0xf]
        %s836 = sld [smem:[#allocation4 + $0x84]]
        %v837 = vstv %s836
        %v838 = vmul.f32 %v832, %v837
        %v839 = vmul.f32 %v833, %v837
        %v840 = vmul.f32 %v834, %v837
        %v841 = vmul.f32 %v835, %v837
        %v842 = vadd.f32 %v828, %v838
        %v843 = vadd.f32 %v829, %v839
        %v844 = vadd.f32 %v830, %v840
        %v845 = vadd.f32 %v831, %v841
        %v846 = vld [vmem:[#allocation2 + $0x5] sm:$0xf]
        %v847 = vld [vmem:[#allocation2 + $0x15] sm:$0xf]
        %v848 = vld [vmem:[#allocation2 + $0x25] sm:$0xf]
        %v849 = vld [vmem:[#allocation2 + $0x35] sm:$0xf]
        %s850 = sld [smem:[#allocation4 + $0x5]]
        %v851 = vstv %s850
        %v852 = vmul.f32 %v846, %v851
        %v853 = vmul.f32 %v847, %v851
        %v854 = vmul.f32 %v848, %v851
        %v855 = vmul.f32 %v849, %v851
        %v856 = vadd.f32 %v842, %v852
        %v857 = vadd.f32 %v843, %v853
        %v858 = vadd.f32 %v844, %v854
        %v859 = vadd.f32 %v845, %v855
        %v860 = vld [vmem:[%s719 + $0x5] sm:$0xf]
        %v861 = vld [vmem:[%s719 + $0x15] sm:$0xf]
        %v862 = vld [vmem:[%s719 + $0x25] sm:$0xf]
        %v863 = vld [vmem:[%s719 + $0x35] sm:$0xf]
        %s864 = sld [smem:[#allocation4 + $0x85]]
        %v865 = vstv %s864
        %v866 = vmul.f32 %v860, %v865
        %v867 = vmul.f32 %v861, %v865
        %v868 = vmul.f32 %v862, %v865
        %v869 = vmul.f32 %v863, %v865
        %v870 = vadd.f32 %v856, %v866
        %v871 = vadd.f32 %v857, %v867
        %v872 = vadd.f32 %v858, %v868
        %v873 = vadd.f32 %v859, %v869
        %v874 = vld [vmem:[#allocation2 + $0x6] sm:$0xf]
        %v875 = vld [vmem:[#allocation2 + $0x16] sm:$0xf]
        %v876 = vld [vmem:[#allocation2 + $0x26] sm:$0xf]
        %v877 = vld [vmem:[#allocation2 + $0x36] sm:$0xf]
        %s878 = sld [smem:[#allocation4 + $0x6]]
        %v879 = vstv %s878
        %v880 = vmul.f32 %v874, %v879
        %v881 = vmul.f32 %v875, %v879
        %v882 = vmul.f32 %v876, %v879
        %v883 = vmul.f32 %v877, %v879
        %v884 = vadd.f32 %v870, %v880
        %v885 = vadd.f32 %v871, %v881
        %v886 = vadd.f32 %v872, %v882
        %v887 = vadd.f32 %v873, %v883
        %v888 = vld [vmem:[%s719 + $0x6] sm:$0xf]
        %v889 = vld [vmem:[%s719 + $0x16] sm:$0xf]
        %v890 = vld [vmem:[%s719 + $0x26] sm:$0xf]
        %v891 = vld [vmem:[%s719 + $0x36] sm:$0xf]
        %s892 = sld [smem:[#allocation4 + $0x86]]
        %v893 = vstv %s892
        %v894 = vmul.f32 %v888, %v893
        %v895 = vmul.f32 %v889, %v893
        %v896 = vmul.f32 %v890, %v893
        %v897 = vmul.f32 %v891, %v893
        %v898 = vadd.f32 %v884, %v894
        %v899 = vadd.f32 %v885, %v895
        %v900 = vadd.f32 %v886, %v896
        %v901 = vadd.f32 %v887, %v897
        %s902 = scalar_lea.vmem [#allocation2], 16
        %v903 = vld [vmem:[%s902] sm:$0xf]
        %v904 = vld [vmem:[%s902 + $0x10] sm:$0xf]
        %v905 = vld [vmem:[%s902 + $0x20] sm:$0xf]
        %v906 = vld [vmem:[%s902 + $0x30] sm:$0xf]
        %s907 = sld [smem:[#allocation4 + $0x7]]
        %v908 = vstv %s907
        %v909 = vmul.f32 %v903, %v908
        %v910 = vmul.f32 %v904, %v908
        %v911 = vmul.f32 %v905, %v908
        %v912 = vmul.f32 %v906, %v908
        %v913 = vadd.f32 %v898, %v909
        %v914 = vadd.f32 %v899, %v910
        %v915 = vadd.f32 %v900, %v911
        %v916 = vadd.f32 %v901, %v912
        %s917 = scalar_lea.vmem [#allocation2], 176
        %v918 = vld [vmem:[%s917] sm:$0xf]
        %v919 = vld [vmem:[%s917 + $0x10] sm:$0xf]
        %v920 = vld [vmem:[%s917 + $0x20] sm:$0xf]
        %v921 = vld [vmem:[%s917 + $0x30] sm:$0xf]
        %s922 = sld [smem:[#allocation4 + $0x87]]
        %v923 = vstv %s922
        %v924 = vmul.f32 %v918, %v923
        %v925 = vmul.f32 %v919, %v923
        %v926 = vmul.f32 %v920, %v923
        %v927 = vmul.f32 %v921, %v923
        %v928 = vadd.f32 %v913, %v924
        %v929 = vadd.f32 %v914, %v925
        %v930 = vadd.f32 %v915, %v926
        %v931 = vadd.f32 %v916, %v927
        %v932 = vld [vmem:[%s902 + $0x1] sm:$0xf]
        %v933 = vld [vmem:[%s902 + $0x11] sm:$0xf]
        %v934 = vld [vmem:[%s902 + $0x21] sm:$0xf]
        %v935 = vld [vmem:[%s902 + $0x31] sm:$0xf]
        %s936 = sld [smem:[#allocation4 + $0x8]]
        %v937 = vstv %s936
        %v938 = vmul.f32 %v932, %v937
        %v939 = vmul.f32 %v933, %v937
        %v940 = vmul.f32 %v934, %v937
        %v941 = vmul.f32 %v935, %v937
        %v942 = vadd.f32 %v928, %v938
        %v943 = vadd.f32 %v929, %v939
        %v944 = vadd.f32 %v930, %v940
        %v945 = vadd.f32 %v931, %v941
        %v946 = vld [vmem:[%s917 + $0x1] sm:$0xf]
        %v947 = vld [vmem:[%s917 + $0x11] sm:$0xf]
        %v948 = vld [vmem:[%s917 + $0x21] sm:$0xf]
        %v949 = vld [vmem:[%s917 + $0x31] sm:$0xf]
        %s950 = sld [smem:[#allocation4 + $0x88]]
        %v951 = vstv %s950
        %v952 = vmul.f32 %v946, %v951
        %v953 = vmul.f32 %v947, %v951
        %v954 = vmul.f32 %v948, %v951
        %v955 = vmul.f32 %v949, %v951
        %v956 = vadd.f32 %v942, %v952
        %v957 = vadd.f32 %v943, %v953
        %v958 = vadd.f32 %v944, %v954
        %v959 = vadd.f32 %v945, %v955
        %v960 = vld [vmem:[%s902 + $0x2] sm:$0xf]
        %v961 = vld [vmem:[%s902 + $0x12] sm:$0xf]
        %v962 = vld [vmem:[%s902 + $0x22] sm:$0xf]
        %v963 = vld [vmem:[%s902 + $0x32] sm:$0xf]
        %s964 = sld [smem:[#allocation4 + $0x9]]
        %v965 = vstv %s964
        %v966 = vmul.f32 %v960, %v965
        %v967 = vmul.f32 %v961, %v965
        %v968 = vmul.f32 %v962, %v965
        %v969 = vmul.f32 %v963, %v965
        %v970 = vadd.f32 %v956, %v966
        %v971 = vadd.f32 %v957, %v967
        %v972 = vadd.f32 %v958, %v968
        %v973 = vadd.f32 %v959, %v969
        %v974 = vld [vmem:[%s917 + $0x2] sm:$0xf]
        %v975 = vld [vmem:[%s917 + $0x12] sm:$0xf]
        %v976 = vld [vmem:[%s917 + $0x22] sm:$0xf]
        %v977 = vld [vmem:[%s917 + $0x32] sm:$0xf]
        %s978 = sld [smem:[#allocation4 + $0x89]]
        %v979 = vstv %s978
        %v980 = vmul.f32 %v974, %v979
        %v981 = vmul.f32 %v975, %v979
        %v982 = vmul.f32 %v976, %v979
        %v983 = vmul.f32 %v977, %v979
        %v984 = vadd.f32 %v970, %v980
        %v985 = vadd.f32 %v971, %v981
        %v986 = vadd.f32 %v972, %v982
        %v987 = vadd.f32 %v973, %v983
        %v988 = vld [vmem:[%s902 + $0x3] sm:$0xf]
        %v989 = vld [vmem:[%s902 + $0x13] sm:$0xf]
        %v990 = vld [vmem:[%s902 + $0x23] sm:$0xf]
        %v991 = vld [vmem:[%s902 + $0x33] sm:$0xf]
        %s992 = sld [smem:[#allocation4 + $0xa]]
        %v993 = vstv %s992
        %v994 = vmul.f32 %v988, %v993
        %v995 = vmul.f32 %v989, %v993
        %v996 = vmul.f32 %v990, %v993
        %v997 = vmul.f32 %v991, %v993
        %v998 = vadd.f32 %v984, %v994
        %v999 = vadd.f32 %v985, %v995
        %v1000 = vadd.f32 %v986, %v996
        %v1001 = vadd.f32 %v987, %v997
        %v1002 = vld [vmem:[%s917 + $0x3] sm:$0xf]
        %v1003 = vld [vmem:[%s917 + $0x13] sm:$0xf]
        %v1004 = vld [vmem:[%s917 + $0x23] sm:$0xf]
        %v1005 = vld [vmem:[%s917 + $0x33] sm:$0xf]
        %s1006 = sld [smem:[#allocation4 + $0x8a]]
        %v1007 = vstv %s1006
        %v1008 = vmul.f32 %v1002, %v1007
        %v1009 = vmul.f32 %v1003, %v1007
        %v1010 = vmul.f32 %v1004, %v1007
        %v1011 = vmul.f32 %v1005, %v1007
        %v1012 = vadd.f32 %v998, %v1008
        %v1013 = vadd.f32 %v999, %v1009
        %v1014 = vadd.f32 %v1000, %v1010
        %v1015 = vadd.f32 %v1001, %v1011
        %v1016 = vld [vmem:[%s902 + $0x4] sm:$0xf]
        %v1017 = vld [vmem:[%s902 + $0x14] sm:$0xf]
        %v1018 = vld [vmem:[%s902 + $0x24] sm:$0xf]
        %v1019 = vld [vmem:[%s902 + $0x34] sm:$0xf]
        %s1020 = sld [smem:[#allocation4 + $0xb]]
        %v1021 = vstv %s1020
        %v1022 = vmul.f32 %v1016, %v1021
        %v1023 = vmul.f32 %v1017, %v1021
        %v1024 = vmul.f32 %v1018, %v1021
        %v1025 = vmul.f32 %v1019, %v1021
        %v1026 = vadd.f32 %v1012, %v1022
        %v1027 = vadd.f32 %v1013, %v1023
        %v1028 = vadd.f32 %v1014, %v1024
        %v1029 = vadd.f32 %v1015, %v1025
        %v1030 = vld [vmem:[%s917 + $0x4] sm:$0xf]
        %v1031 = vld [vmem:[%s917 + $0x14] sm:$0xf]
        %v1032 = vld [vmem:[%s917 + $0x24] sm:$0xf]
        %v1033 = vld [vmem:[%s917 + $0x34] sm:$0xf]
        %s1034 = sld [smem:[#allocation4 + $0x8b]]
        %v1035 = vstv %s1034
        %v1036 = vmul.f32 %v1030, %v1035
        %v1037 = vmul.f32 %v1031, %v1035
        %v1038 = vmul.f32 %v1032, %v1035
        %v1039 = vmul.f32 %v1033, %v1035
        %v1040 = vadd.f32 %v1026, %v1036
        %v1041 = vadd.f32 %v1027, %v1037
        %v1042 = vadd.f32 %v1028, %v1038
        %v1043 = vadd.f32 %v1029, %v1039
        %v1044 = vld [vmem:[%s902 + $0x5] sm:$0xf]
        %v1045 = vld [vmem:[%s902 + $0x15] sm:$0xf]
        %v1046 = vld [vmem:[%s902 + $0x25] sm:$0xf]
        %v1047 = vld [vmem:[%s902 + $0x35] sm:$0xf]
        %s1048 = sld [smem:[#allocation4 + $0xc]]
        %v1049 = vstv %s1048
        %v1050 = vmul.f32 %v1044, %v1049
        %v1051 = vmul.f32 %v1045, %v1049
        %v1052 = vmul.f32 %v1046, %v1049
        %v1053 = vmul.f32 %v1047, %v1049
        %v1054 = vadd.f32 %v1040, %v1050
        %v1055 = vadd.f32 %v1041, %v1051
        %v1056 = vadd.f32 %v1042, %v1052
        %v1057 = vadd.f32 %v1043, %v1053
        %v1058 = vld [vmem:[%s917 + $0x5] sm:$0xf]
        %v1059 = vld [vmem:[%s917 + $0x15] sm:$0xf]
        %v1060 = vld [vmem:[%s917 + $0x25] sm:$0xf]
        %v1061 = vld [vmem:[%s917 + $0x35] sm:$0xf]
        %s1062 = sld [smem:[#allocation4 + $0x8c]]
        %v1063 = vstv %s1062
        %v1064 = vmul.f32 %v1058, %v1063
        %v1065 = vmul.f32 %v1059, %v1063
        %v1066 = vmul.f32 %v1060, %v1063
        %v1067 = vmul.f32 %v1061, %v1063
        %v1068 = vadd.f32 %v1054, %v1064
        %v1069 = vadd.f32 %v1055, %v1065
        %v1070 = vadd.f32 %v1056, %v1066
        %v1071 = vadd.f32 %v1057, %v1067
        %v1072 = vld [vmem:[%s902 + $0x6] sm:$0xf]
        %v1073 = vld [vmem:[%s902 + $0x16] sm:$0xf]
        %v1074 = vld [vmem:[%s902 + $0x26] sm:$0xf]
        %v1075 = vld [vmem:[%s902 + $0x36] sm:$0xf]
        %s1076 = sld [smem:[#allocation4 + $0xd]]
        %v1077 = vstv %s1076
        %v1078 = vmul.f32 %v1072, %v1077
        %v1079 = vmul.f32 %v1073, %v1077
        %v1080 = vmul.f32 %v1074, %v1077
        %v1081 = vmul.f32 %v1075, %v1077
        %v1082 = vadd.f32 %v1068, %v1078
        %v1083 = vadd.f32 %v1069, %v1079
        %v1084 = vadd.f32 %v1070, %v1080
        %v1085 = vadd.f32 %v1071, %v1081
        %v1086 = vld [vmem:[%s917 + $0x6] sm:$0xf]
        %v1087 = vld [vmem:[%s917 + $0x16] sm:$0xf]
        %v1088 = vld [vmem:[%s917 + $0x26] sm:$0xf]
        %v1089 = vld [vmem:[%s917 + $0x36] sm:$0xf]
        %s1090 = sld [smem:[#allocation4 + $0x8d]]
        %v1091 = vstv %s1090
        %v1092 = vmul.f32 %v1086, %v1091
        %v1093 = vmul.f32 %v1087, %v1091
        %v1094 = vmul.f32 %v1088, %v1091
        %v1095 = vmul.f32 %v1089, %v1091
        %v1096 = vadd.f32 %v1082, %v1092
        %v1097 = vadd.f32 %v1083, %v1093
        %v1098 = vadd.f32 %v1084, %v1094
        %v1099 = vadd.f32 %v1085, %v1095
        %s1100 = scalar_lea.vmem [#allocation2], 32
        %v1101 = vld [vmem:[%s1100] sm:$0xf]
        %v1102 = vld [vmem:[%s1100 + $0x10] sm:$0xf]
        %v1103 = vld [vmem:[%s1100 + $0x20] sm:$0xf]
        %v1104 = vld [vmem:[%s1100 + $0x30] sm:$0xf]
        %s1105 = sld [smem:[#allocation4 + $0xe]]
        %v1106 = vstv %s1105
        %v1107 = vmul.f32 %v1101, %v1106
        %v1108 = vmul.f32 %v1102, %v1106
        %v1109 = vmul.f32 %v1103, %v1106
        %v1110 = vmul.f32 %v1104, %v1106
        %v1111 = vadd.f32 %v1096, %v1107
        %v1112 = vadd.f32 %v1097, %v1108
        %v1113 = vadd.f32 %v1098, %v1109
        %v1114 = vadd.f32 %v1099, %v1110
        %s1115 = scalar_lea.vmem [#allocation2], 192
        %v1116 = vld [vmem:[%s1115] sm:$0xf]
        %v1117 = vld [vmem:[%s1115 + $0x10] sm:$0xf]
        %v1118 = vld [vmem:[%s1115 + $0x20] sm:$0xf]
        %v1119 = vld [vmem:[%s1115 + $0x30] sm:$0xf]
        %s1120 = sld [smem:[#allocation4 + $0x8e]]
        %v1121 = vstv %s1120
        %v1122 = vmul.f32 %v1116, %v1121
        %v1123 = vmul.f32 %v1117, %v1121
        %v1124 = vmul.f32 %v1118, %v1121
        %v1125 = vmul.f32 %v1119, %v1121
        %v1126 = vadd.f32 %v1111, %v1122
        %v1127 = vadd.f32 %v1112, %v1123
        %v1128 = vadd.f32 %v1113, %v1124
        %v1129 = vadd.f32 %v1114, %v1125
        %v1130 = vld [vmem:[%s1100 + $0x1] sm:$0xf]
        %v1131 = vld [vmem:[%s1100 + $0x11] sm:$0xf]
        %v1132 = vld [vmem:[%s1100 + $0x21] sm:$0xf]
        %v1133 = vld [vmem:[%s1100 + $0x31] sm:$0xf]
        %s1134 = sld [smem:[#allocation4 + $0xf]]
        %v1135 = vstv %s1134
        %v1136 = vmul.f32 %v1130, %v1135
        %v1137 = vmul.f32 %v1131, %v1135
        %v1138 = vmul.f32 %v1132, %v1135
        %v1139 = vmul.f32 %v1133, %v1135
        %v1140 = vadd.f32 %v1126, %v1136
        %v1141 = vadd.f32 %v1127, %v1137
        %v1142 = vadd.f32 %v1128, %v1138
        %v1143 = vadd.f32 %v1129, %v1139
        %v1144 = vld [vmem:[%s1115 + $0x1] sm:$0xf]
        %v1145 = vld [vmem:[%s1115 + $0x11] sm:$0xf]
        %v1146 = vld [vmem:[%s1115 + $0x21] sm:$0xf]
        %v1147 = vld [vmem:[%s1115 + $0x31] sm:$0xf]
        %s1148 = sld [smem:[#allocation4 + $0x8f]]
        %v1149 = vstv %s1148
        %v1150 = vmul.f32 %v1144, %v1149
        %v1151 = vmul.f32 %v1145, %v1149
        %v1152 = vmul.f32 %v1146, %v1149
        %v1153 = vmul.f32 %v1147, %v1149
        %v1154 = vadd.f32 %v1140, %v1150
        %v1155 = vadd.f32 %v1141, %v1151
        %v1156 = vadd.f32 %v1142, %v1152
        %v1157 = vadd.f32 %v1143, %v1153
        %v1158 = vld [vmem:[%s1100 + $0x2] sm:$0xf]
        %v1159 = vld [vmem:[%s1100 + $0x12] sm:$0xf]
        %v1160 = vld [vmem:[%s1100 + $0x22] sm:$0xf]
        %v1161 = vld [vmem:[%s1100 + $0x32] sm:$0xf]
        %s1162 = sld [smem:[#allocation4 + $0x10]]
        %v1163 = vstv %s1162
        %v1164 = vmul.f32 %v1158, %v1163
        %v1165 = vmul.f32 %v1159, %v1163
        %v1166 = vmul.f32 %v1160, %v1163
        %v1167 = vmul.f32 %v1161, %v1163
        %v1168 = vadd.f32 %v1154, %v1164
        %v1169 = vadd.f32 %v1155, %v1165
        %v1170 = vadd.f32 %v1156, %v1166
        %v1171 = vadd.f32 %v1157, %v1167
        %v1172 = vld [vmem:[%s1115 + $0x2] sm:$0xf]
        %v1173 = vld [vmem:[%s1115 + $0x12] sm:$0xf]
        %v1174 = vld [vmem:[%s1115 + $0x22] sm:$0xf]
        %v1175 = vld [vmem:[%s1115 + $0x32] sm:$0xf]
        %s1176 = sld [smem:[#allocation4 + $0x90]]
        %v1177 = vstv %s1176
        %v1178 = vmul.f32 %v1172, %v1177
        %v1179 = vmul.f32 %v1173, %v1177
        %v1180 = vmul.f32 %v1174, %v1177
        %v1181 = vmul.f32 %v1175, %v1177
        %v1182 = vadd.f32 %v1168, %v1178
        %v1183 = vadd.f32 %v1169, %v1179
        %v1184 = vadd.f32 %v1170, %v1180
        %v1185 = vadd.f32 %v1171, %v1181
        %v1186 = vld [vmem:[%s1100 + $0x3] sm:$0xf]
        %v1187 = vld [vmem:[%s1100 + $0x13] sm:$0xf]
        %v1188 = vld [vmem:[%s1100 + $0x23] sm:$0xf]
        %v1189 = vld [vmem:[%s1100 + $0x33] sm:$0xf]
        %s1190 = sld [smem:[#allocation4 + $0x11]]
        %v1191 = vstv %s1190
        %v1192 = vmul.f32 %v1186, %v1191
        %v1193 = vmul.f32 %v1187, %v1191
        %v1194 = vmul.f32 %v1188, %v1191
        %v1195 = vmul.f32 %v1189, %v1191
        %v1196 = vadd.f32 %v1182, %v1192
        %v1197 = vadd.f32 %v1183, %v1193
        %v1198 = vadd.f32 %v1184, %v1194
        %v1199 = vadd.f32 %v1185, %v1195
        %v1200 = vld [vmem:[%s1115 + $0x3] sm:$0xf]
        %v1201 = vld [vmem:[%s1115 + $0x13] sm:$0xf]
        %v1202 = vld [vmem:[%s1115 + $0x23] sm:$0xf]
        %v1203 = vld [vmem:[%s1115 + $0x33] sm:$0xf]
        %s1204 = sld [smem:[#allocation4 + $0x91]]
        %v1205 = vstv %s1204
        %v1206 = vmul.f32 %v1200, %v1205
        %v1207 = vmul.f32 %v1201, %v1205
        %v1208 = vmul.f32 %v1202, %v1205
        %v1209 = vmul.f32 %v1203, %v1205
        %v1210 = vadd.f32 %v1196, %v1206
        %v1211 = vadd.f32 %v1197, %v1207
        %v1212 = vadd.f32 %v1198, %v1208
        %v1213 = vadd.f32 %v1199, %v1209
        %v1214 = vld [vmem:[%s1100 + $0x4] sm:$0xf]
        %v1215 = vld [vmem:[%s1100 + $0x14] sm:$0xf]
        %v1216 = vld [vmem:[%s1100 + $0x24] sm:$0xf]
        %v1217 = vld [vmem:[%s1100 + $0x34] sm:$0xf]
        %s1218 = sld [smem:[#allocation4 + $0x12]]
        %v1219 = vstv %s1218
        %v1220 = vmul.f32 %v1214, %v1219
        %v1221 = vmul.f32 %v1215, %v1219
        %v1222 = vmul.f32 %v1216, %v1219
        %v1223 = vmul.f32 %v1217, %v1219
        %v1224 = vadd.f32 %v1210, %v1220
        %v1225 = vadd.f32 %v1211, %v1221
        %v1226 = vadd.f32 %v1212, %v1222
        %v1227 = vadd.f32 %v1213, %v1223
        %v1228 = vld [vmem:[%s1115 + $0x4] sm:$0xf]
        %v1229 = vld [vmem:[%s1115 + $0x14] sm:$0xf]
        %v1230 = vld [vmem:[%s1115 + $0x24] sm:$0xf]
        %v1231 = vld [vmem:[%s1115 + $0x34] sm:$0xf]
        %s1232 = sld [smem:[#allocation4 + $0x92]]
        %v1233 = vstv %s1232
        %v1234 = vmul.f32 %v1228, %v1233
        %v1235 = vmul.f32 %v1229, %v1233
        %v1236 = vmul.f32 %v1230, %v1233
        %v1237 = vmul.f32 %v1231, %v1233
        %v1238 = vadd.f32 %v1224, %v1234
        %v1239 = vadd.f32 %v1225, %v1235
        %v1240 = vadd.f32 %v1226, %v1236
        %v1241 = vadd.f32 %v1227, %v1237
        %v1242 = vld [vmem:[%s1100 + $0x5] sm:$0xf]
        %v1243 = vld [vmem:[%s1100 + $0x15] sm:$0xf]
        %v1244 = vld [vmem:[%s1100 + $0x25] sm:$0xf]
        %v1245 = vld [vmem:[%s1100 + $0x35] sm:$0xf]
        %s1246 = sld [smem:[#allocation4 + $0x13]]
        %v1247 = vstv %s1246
        %v1248 = vmul.f32 %v1242, %v1247
        %v1249 = vmul.f32 %v1243, %v1247
        %v1250 = vmul.f32 %v1244, %v1247
        %v1251 = vmul.f32 %v1245, %v1247
        %v1252 = vadd.f32 %v1238, %v1248
        %v1253 = vadd.f32 %v1239, %v1249
        %v1254 = vadd.f32 %v1240, %v1250
        %v1255 = vadd.f32 %v1241, %v1251
        %v1256 = vld [vmem:[%s1115 + $0x5] sm:$0xf]
        %v1257 = vld [vmem:[%s1115 + $0x15] sm:$0xf]
        %v1258 = vld [vmem:[%s1115 + $0x25] sm:$0xf]
        %v1259 = vld [vmem:[%s1115 + $0x35] sm:$0xf]
        %s1260 = sld [smem:[#allocation4 + $0x93]]
        %v1261 = vstv %s1260
        %v1262 = vmul.f32 %v1256, %v1261
        %v1263 = vmul.f32 %v1257, %v1261
        %v1264 = vmul.f32 %v1258, %v1261
        %v1265 = vmul.f32 %v1259, %v1261
        %v1266 = vadd.f32 %v1252, %v1262
        %v1267 = vadd.f32 %v1253, %v1263
        %v1268 = vadd.f32 %v1254, %v1264
        %v1269 = vadd.f32 %v1255, %v1265
        %v1270 = vld [vmem:[%s1100 + $0x6] sm:$0xf]
        %v1271 = vld [vmem:[%s1100 + $0x16] sm:$0xf]
        %v1272 = vld [vmem:[%s1100 + $0x26] sm:$0xf]
        %v1273 = vld [vmem:[%s1100 + $0x36] sm:$0xf]
        %s1274 = sld [smem:[#allocation4 + $0x14]]
        %v1275 = vstv %s1274
        %v1276 = vmul.f32 %v1270, %v1275
        %v1277 = vmul.f32 %v1271, %v1275
        %v1278 = vmul.f32 %v1272, %v1275
        %v1279 = vmul.f32 %v1273, %v1275
        %v1280 = vadd.f32 %v1266, %v1276
        %v1281 = vadd.f32 %v1267, %v1277
        %v1282 = vadd.f32 %v1268, %v1278
        %v1283 = vadd.f32 %v1269, %v1279
        %v1284 = vld [vmem:[%s1115 + $0x6] sm:$0xf]
        %v1285 = vld [vmem:[%s1115 + $0x16] sm:$0xf]
        %v1286 = vld [vmem:[%s1115 + $0x26] sm:$0xf]
        %v1287 = vld [vmem:[%s1115 + $0x36] sm:$0xf]
        %s1288 = sld [smem:[#allocation4 + $0x94]]
        %v1289 = vstv %s1288
        %v1290 = vmul.f32 %v1284, %v1289
        %v1291 = vmul.f32 %v1285, %v1289
        %v1292 = vmul.f32 %v1286, %v1289
        %v1293 = vmul.f32 %v1287, %v1289
        %v1294 = vadd.f32 %v1280, %v1290
        %v1295 = vadd.f32 %v1281, %v1291
        %v1296 = vadd.f32 %v1282, %v1292
        %v1297 = vadd.f32 %v1283, %v1293
        %v1298 = vld [vmem:[%s694] sm:$0xf]
        %v1299 = vld [vmem:[%s694 + $0x10] sm:$0xf]
        %v1300 = vld [vmem:[%s694 + $0x20] sm:$0xf]
        %v1301 = vld [vmem:[%s694 + $0x30] sm:$0xf]
        %s1302 = sld [smem:[#allocation4 + $0x15]]
        %v1303 = vstv %s1302
        %v1304 = vmul.f32 %v1298, %v1303
        %v1305 = vmul.f32 %v1299, %v1303
        %v1306 = vmul.f32 %v1300, %v1303
        %v1307 = vmul.f32 %v1301, %v1303
        %v1308 = vadd.f32 %v1294, %v1304
        %v1309 = vadd.f32 %v1295, %v1305
        %v1310 = vadd.f32 %v1296, %v1306
        %v1311 = vadd.f32 %v1297, %v1307
        %v1312 = vld [vmem:[%s700] sm:$0xf]
        %v1313 = vld [vmem:[%s700 + $0x10] sm:$0xf]
        %v1314 = vld [vmem:[%s700 + $0x20] sm:$0xf]
        %v1315 = vld [vmem:[%s700 + $0x30] sm:$0xf]
        %s1316 = sld [smem:[#allocation4 + $0x95]]
        %v1317 = vstv %s1316
        %v1318 = vmul.f32 %v1312, %v1317
        %v1319 = vmul.f32 %v1313, %v1317
        %v1320 = vmul.f32 %v1314, %v1317
        %v1321 = vmul.f32 %v1315, %v1317
        %v1322 = vadd.f32 %v1308, %v1318
        %v1323 = vadd.f32 %v1309, %v1319
        %v1324 = vadd.f32 %v1310, %v1320
        %v1325 = vadd.f32 %v1311, %v1321
        %v1326 = vld [vmem:[%s694 + $0x1] sm:$0xf]
        %v1327 = vld [vmem:[%s694 + $0x11] sm:$0xf]
        %v1328 = vld [vmem:[%s694 + $0x21] sm:$0xf]
        %v1329 = vld [vmem:[%s694 + $0x31] sm:$0xf]
        %s1330 = sld [smem:[#allocation4 + $0x16]]
        %v1331 = vstv %s1330
        %v1332 = vmul.f32 %v1326, %v1331
        %v1333 = vmul.f32 %v1327, %v1331
        %v1334 = vmul.f32 %v1328, %v1331
        %v1335 = vmul.f32 %v1329, %v1331
        %v1336 = vadd.f32 %v1322, %v1332
        %v1337 = vadd.f32 %v1323, %v1333
        %v1338 = vadd.f32 %v1324, %v1334
        %v1339 = vadd.f32 %v1325, %v1335
        %v1340 = vld [vmem:[%s700 + $0x1] sm:$0xf]
        %v1341 = vld [vmem:[%s700 + $0x11] sm:$0xf]
        %v1342 = vld [vmem:[%s700 + $0x21] sm:$0xf]
        %v1343 = vld [vmem:[%s700 + $0x31] sm:$0xf]
        %s1344 = sld [smem:[#allocation4 + $0x96]]
        %v1345 = vstv %s1344
        %v1346 = vmul.f32 %v1340, %v1345
        %v1347 = vmul.f32 %v1341, %v1345
        %v1348 = vmul.f32 %v1342, %v1345
        %v1349 = vmul.f32 %v1343, %v1345
        %v1350 = vadd.f32 %v1336, %v1346
        %v1351 = vadd.f32 %v1337, %v1347
        %v1352 = vadd.f32 %v1338, %v1348
        %v1353 = vadd.f32 %v1339, %v1349
        %v1354 = vld [vmem:[%s694 + $0x2] sm:$0xf]
        %v1355 = vld [vmem:[%s694 + $0x12] sm:$0xf]
        %v1356 = vld [vmem:[%s694 + $0x22] sm:$0xf]
        %v1357 = vld [vmem:[%s694 + $0x32] sm:$0xf]
        %s1358 = sld [smem:[#allocation4 + $0x17]]
        %v1359 = vstv %s1358
        %v1360 = vmul.f32 %v1354, %v1359
        %v1361 = vmul.f32 %v1355, %v1359
        %v1362 = vmul.f32 %v1356, %v1359
        %v1363 = vmul.f32 %v1357, %v1359
        %v1364 = vadd.f32 %v1350, %v1360
        %v1365 = vadd.f32 %v1351, %v1361
        %v1366 = vadd.f32 %v1352, %v1362
        %v1367 = vadd.f32 %v1353, %v1363
        %v1368 = vld [vmem:[%s700 + $0x2] sm:$0xf]
        %v1369 = vld [vmem:[%s700 + $0x12] sm:$0xf]
        %v1370 = vld [vmem:[%s700 + $0x22] sm:$0xf]
        %v1371 = vld [vmem:[%s700 + $0x32] sm:$0xf]
        %s1372 = sld [smem:[#allocation4 + $0x97]]
        %v1373 = vstv %s1372
        %v1374 = vmul.f32 %v1368, %v1373
        %v1375 = vmul.f32 %v1369, %v1373
        %v1376 = vmul.f32 %v1370, %v1373
        %v1377 = vmul.f32 %v1371, %v1373
        %v1378 = vadd.f32 %v1364, %v1374
        %v1379 = vadd.f32 %v1365, %v1375
        %v1380 = vadd.f32 %v1366, %v1376
        %v1381 = vadd.f32 %v1367, %v1377
        %v1382 = vld [vmem:[%s694 + $0x3] sm:$0xf]
        %v1383 = vld [vmem:[%s694 + $0x13] sm:$0xf]
        %v1384 = vld [vmem:[%s694 + $0x23] sm:$0xf]
        %v1385 = vld [vmem:[%s694 + $0x33] sm:$0xf]
        %s1386 = sld [smem:[#allocation4 + $0x18]]
        %v1387 = vstv %s1386
        %v1388 = vmul.f32 %v1382, %v1387
        %v1389 = vmul.f32 %v1383, %v1387
        %v1390 = vmul.f32 %v1384, %v1387
        %v1391 = vmul.f32 %v1385, %v1387
        %v1392 = vadd.f32 %v1378, %v1388
        %v1393 = vadd.f32 %v1379, %v1389
        %v1394 = vadd.f32 %v1380, %v1390
        %v1395 = vadd.f32 %v1381, %v1391
        %v1396 = vld [vmem:[%s700 + $0x3] sm:$0xf]
        %v1397 = vld [vmem:[%s700 + $0x13] sm:$0xf]
        %v1398 = vld [vmem:[%s700 + $0x23] sm:$0xf]
        %v1399 = vld [vmem:[%s700 + $0x33] sm:$0xf]
        %s1400 = sld [smem:[#allocation4 + $0x98]]
        %v1401 = vstv %s1400
        %v1402 = vmul.f32 %v1396, %v1401
        %v1403 = vmul.f32 %v1397, %v1401
        %v1404 = vmul.f32 %v1398, %v1401
        %v1405 = vmul.f32 %v1399, %v1401
        %v1406 = vadd.f32 %v1392, %v1402
        %v1407 = vadd.f32 %v1393, %v1403
        %v1408 = vadd.f32 %v1394, %v1404
        %v1409 = vadd.f32 %v1395, %v1405
        %v1410 = vld [vmem:[%s694 + $0x4] sm:$0xf]
        %v1411 = vld [vmem:[%s694 + $0x14] sm:$0xf]
        %v1412 = vld [vmem:[%s694 + $0x24] sm:$0xf]
        %v1413 = vld [vmem:[%s694 + $0x34] sm:$0xf]
        %s1414 = sld [smem:[#allocation4 + $0x19]]
        %v1415 = vstv %s1414
        %v1416 = vmul.f32 %v1410, %v1415
        %v1417 = vmul.f32 %v1411, %v1415
        %v1418 = vmul.f32 %v1412, %v1415
        %v1419 = vmul.f32 %v1413, %v1415
        %v1420 = vadd.f32 %v1406, %v1416
        %v1421 = vadd.f32 %v1407, %v1417
        %v1422 = vadd.f32 %v1408, %v1418
        %v1423 = vadd.f32 %v1409, %v1419
        %v1424 = vld [vmem:[%s700 + $0x4] sm:$0xf]
        %v1425 = vld [vmem:[%s700 + $0x14] sm:$0xf]
        %v1426 = vld [vmem:[%s700 + $0x24] sm:$0xf]
        %v1427 = vld [vmem:[%s700 + $0x34] sm:$0xf]
        %s1428 = sld [smem:[#allocation4 + $0x99]]
        %v1429 = vstv %s1428
        %v1430 = vmul.f32 %v1424, %v1429
        %v1431 = vmul.f32 %v1425, %v1429
        %v1432 = vmul.f32 %v1426, %v1429
        %v1433 = vmul.f32 %v1427, %v1429
        %v1434 = vadd.f32 %v1420, %v1430
        %v1435 = vadd.f32 %v1421, %v1431
        %v1436 = vadd.f32 %v1422, %v1432
        %v1437 = vadd.f32 %v1423, %v1433
        %v1438 = vld [vmem:[%s694 + $0x5] sm:$0xf]
        %v1439 = vld [vmem:[%s694 + $0x15] sm:$0xf]
        %v1440 = vld [vmem:[%s694 + $0x25] sm:$0xf]
        %v1441 = vld [vmem:[%s694 + $0x35] sm:$0xf]
        %s1442 = sld [smem:[#allocation4 + $0x1a]]
        %v1443 = vstv %s1442
        %v1444 = vmul.f32 %v1438, %v1443
        %v1445 = vmul.f32 %v1439, %v1443
        %v1446 = vmul.f32 %v1440, %v1443
        %v1447 = vmul.f32 %v1441, %v1443
        %v1448 = vadd.f32 %v1434, %v1444
        %v1449 = vadd.f32 %v1435, %v1445
        %v1450 = vadd.f32 %v1436, %v1446
        %v1451 = vadd.f32 %v1437, %v1447
        %v1452 = vld [vmem:[%s700 + $0x5] sm:$0xf]
        %v1453 = vld [vmem:[%s700 + $0x15] sm:$0xf]
        %v1454 = vld [vmem:[%s700 + $0x25] sm:$0xf]
        %v1455 = vld [vmem:[%s700 + $0x35] sm:$0xf]
        %s1456 = sld [smem:[#allocation4 + $0x9a]]
        %v1457 = vstv %s1456
        %v1458 = vmul.f32 %v1452, %v1457
        %v1459 = vmul.f32 %v1453, %v1457
        %v1460 = vmul.f32 %v1454, %v1457
        %v1461 = vmul.f32 %v1455, %v1457
        %v1462 = vadd.f32 %v1448, %v1458
        %v1463 = vadd.f32 %v1449, %v1459
        %v1464 = vadd.f32 %v1450, %v1460
        %v1465 = vadd.f32 %v1451, %v1461
        %v1466 = vld [vmem:[%s694 + $0x6] sm:$0xf]
        %v1467 = vld [vmem:[%s694 + $0x16] sm:$0xf]
        %v1468 = vld [vmem:[%s694 + $0x26] sm:$0xf]
        %v1469 = vld [vmem:[%s694 + $0x36] sm:$0xf]
        %s1470 = sld [smem:[#allocation4 + $0x1b]]
        %v1471 = vstv %s1470
        %v1472 = vmul.f32 %v1466, %v1471
        %v1473 = vmul.f32 %v1467, %v1471
        %v1474 = vmul.f32 %v1468, %v1471
        %v1475 = vmul.f32 %v1469, %v1471
        %v1476 = vadd.f32 %v1462, %v1472
        %v1477 = vadd.f32 %v1463, %v1473
        %v1478 = vadd.f32 %v1464, %v1474
        %v1479 = vadd.f32 %v1465, %v1475
        %v1480 = vld [vmem:[%s700 + $0x6] sm:$0xf]
        %v1481 = vld [vmem:[%s700 + $0x16] sm:$0xf]
        %v1482 = vld [vmem:[%s700 + $0x26] sm:$0xf]
        %v1483 = vld [vmem:[%s700 + $0x36] sm:$0xf]
        %s1484 = sld [smem:[#allocation4 + $0x9b]]
        %v1485 = vstv %s1484
        %v1486 = vmul.f32 %v1480, %v1485
        %v1487 = vmul.f32 %v1481, %v1485
        %v1488 = vmul.f32 %v1482, %v1485
        %v1489 = vmul.f32 %v1483, %v1485
        %v1490 = vadd.f32 %v1476, %v1486
        %v1491 = vadd.f32 %v1477, %v1487
        %v1492 = vadd.f32 %v1478, %v1488
        %v1493 = vadd.f32 %v1479, %v1489
        %s1494 = scalar_lea.vmem [#allocation2], 64
        %v1495 = vld [vmem:[%s1494] sm:$0xf]
        %v1496 = vld [vmem:[%s1494 + $0x10] sm:$0xf]
        %v1497 = vld [vmem:[%s1494 + $0x20] sm:$0xf]
        %v1498 = vld [vmem:[%s1494 + $0x30] sm:$0xf]
        %s1499 = sld [smem:[#allocation4 + $0x1c]]
        %v1500 = vstv %s1499
        %v1501 = vmul.f32 %v1495, %v1500
        %v1502 = vmul.f32 %v1496, %v1500
        %v1503 = vmul.f32 %v1497, %v1500
        %v1504 = vmul.f32 %v1498, %v1500
        %v1505 = vadd.f32 %v1490, %v1501
        %v1506 = vadd.f32 %v1491, %v1502
        %v1507 = vadd.f32 %v1492, %v1503
        %v1508 = vadd.f32 %v1493, %v1504
        %s1509 = scalar_lea.vmem [#allocation2], 224
        %v1510 = vld [vmem:[%s1509] sm:$0xf]
        %v1511 = vld [vmem:[%s1509 + $0x10] sm:$0xf]
        %v1512 = vld [vmem:[%s1509 + $0x20] sm:$0xf]
        %v1513 = vld [vmem:[%s1509 + $0x30] sm:$0xf]
        %s1514 = sld [smem:[#allocation4 + $0x9c]]
        %v1515 = vstv %s1514
        %v1516 = vmul.f32 %v1510, %v1515
        %v1517 = vmul.f32 %v1511, %v1515
        %v1518 = vmul.f32 %v1512, %v1515
        %v1519 = vmul.f32 %v1513, %v1515
        %v1520 = vadd.f32 %v1505, %v1516
        %v1521 = vadd.f32 %v1506, %v1517
        %v1522 = vadd.f32 %v1507, %v1518
        %v1523 = vadd.f32 %v1508, %v1519
        %v1524 = vld [vmem:[%s1494 + $0x1] sm:$0xf]
        %v1525 = vld [vmem:[%s1494 + $0x11] sm:$0xf]
        %v1526 = vld [vmem:[%s1494 + $0x21] sm:$0xf]
        %v1527 = vld [vmem:[%s1494 + $0x31] sm:$0xf]
        %s1528 = sld [smem:[#allocation4 + $0x1d]]
        %v1529 = vstv %s1528
        %v1530 = vmul.f32 %v1524, %v1529
        %v1531 = vmul.f32 %v1525, %v1529
        %v1532 = vmul.f32 %v1526, %v1529
        %v1533 = vmul.f32 %v1527, %v1529
        %v1534 = vadd.f32 %v1520, %v1530
        %v1535 = vadd.f32 %v1521, %v1531
        %v1536 = vadd.f32 %v1522, %v1532
        %v1537 = vadd.f32 %v1523, %v1533
        %v1538 = vld [vmem:[%s1509 + $0x1] sm:$0xf]
        %v1539 = vld [vmem:[%s1509 + $0x11] sm:$0xf]
        %v1540 = vld [vmem:[%s1509 + $0x21] sm:$0xf]
        %v1541 = vld [vmem:[%s1509 + $0x31] sm:$0xf]
        %s1542 = sld [smem:[#allocation4 + $0x9d]]
        %v1543 = vstv %s1542
        %v1544 = vmul.f32 %v1538, %v1543
        %v1545 = vmul.f32 %v1539, %v1543
        %v1546 = vmul.f32 %v1540, %v1543
        %v1547 = vmul.f32 %v1541, %v1543
        %v1548 = vadd.f32 %v1534, %v1544
        %v1549 = vadd.f32 %v1535, %v1545
        %v1550 = vadd.f32 %v1536, %v1546
        %v1551 = vadd.f32 %v1537, %v1547
        %v1552 = vld [vmem:[%s1494 + $0x2] sm:$0xf]
        %v1553 = vld [vmem:[%s1494 + $0x12] sm:$0xf]
        %v1554 = vld [vmem:[%s1494 + $0x22] sm:$0xf]
        %v1555 = vld [vmem:[%s1494 + $0x32] sm:$0xf]
        %s1556 = sld [smem:[#allocation4 + $0x1e]]
        %v1557 = vstv %s1556
        %v1558 = vmul.f32 %v1552, %v1557
        %v1559 = vmul.f32 %v1553, %v1557
        %v1560 = vmul.f32 %v1554, %v1557
        %v1561 = vmul.f32 %v1555, %v1557
        %v1562 = vadd.f32 %v1548, %v1558
        %v1563 = vadd.f32 %v1549, %v1559
        %v1564 = vadd.f32 %v1550, %v1560
        %v1565 = vadd.f32 %v1551, %v1561
        %v1566 = vld [vmem:[%s1509 + $0x2] sm:$0xf]
        %v1567 = vld [vmem:[%s1509 + $0x12] sm:$0xf]
        %v1568 = vld [vmem:[%s1509 + $0x22] sm:$0xf]
        %v1569 = vld [vmem:[%s1509 + $0x32] sm:$0xf]
        %s1570 = sld [smem:[#allocation4 + $0x9e]]
        %v1571 = vstv %s1570
        %v1572 = vmul.f32 %v1566, %v1571
        %v1573 = vmul.f32 %v1567, %v1571
        %v1574 = vmul.f32 %v1568, %v1571
        %v1575 = vmul.f32 %v1569, %v1571
        %v1576 = vadd.f32 %v1562, %v1572
        %v1577 = vadd.f32 %v1563, %v1573
        %v1578 = vadd.f32 %v1564, %v1574
        %v1579 = vadd.f32 %v1565, %v1575
        %v1580 = vld [vmem:[%s1494 + $0x3] sm:$0xf]
        %v1581 = vld [vmem:[%s1494 + $0x13] sm:$0xf]
        %v1582 = vld [vmem:[%s1494 + $0x23] sm:$0xf]
        %v1583 = vld [vmem:[%s1494 + $0x33] sm:$0xf]
        %s1584 = sld [smem:[#allocation4 + $0x1f]]
        %v1585 = vstv %s1584
        %v1586 = vmul.f32 %v1580, %v1585
        %v1587 = vmul.f32 %v1581, %v1585
        %v1588 = vmul.f32 %v1582, %v1585
        %v1589 = vmul.f32 %v1583, %v1585
        %v1590 = vadd.f32 %v1576, %v1586
        %v1591 = vadd.f32 %v1577, %v1587
        %v1592 = vadd.f32 %v1578, %v1588
        %v1593 = vadd.f32 %v1579, %v1589
        %v1594 = vld [vmem:[%s1509 + $0x3] sm:$0xf]
        %v1595 = vld [vmem:[%s1509 + $0x13] sm:$0xf]
        %v1596 = vld [vmem:[%s1509 + $0x23] sm:$0xf]
        %v1597 = vld [vmem:[%s1509 + $0x33] sm:$0xf]
        %s1598 = sld [smem:[#allocation4 + $0x9f]]
        %v1599 = vstv %s1598
        %v1600 = vmul.f32 %v1594, %v1599
        %v1601 = vmul.f32 %v1595, %v1599
        %v1602 = vmul.f32 %v1596, %v1599
        %v1603 = vmul.f32 %v1597, %v1599
        %v1604 = vadd.f32 %v1590, %v1600
        %v1605 = vadd.f32 %v1591, %v1601
        %v1606 = vadd.f32 %v1592, %v1602
        %v1607 = vadd.f32 %v1593, %v1603
        %v1608 = vld [vmem:[%s1494 + $0x4] sm:$0xf]
        %v1609 = vld [vmem:[%s1494 + $0x14] sm:$0xf]
        %v1610 = vld [vmem:[%s1494 + $0x24] sm:$0xf]
        %v1611 = vld [vmem:[%s1494 + $0x34] sm:$0xf]
        %s1612 = sld [smem:[#allocation4 + $0x20]]
        %v1613 = vstv %s1612
        %v1614 = vmul.f32 %v1608, %v1613
        %v1615 = vmul.f32 %v1609, %v1613
        %v1616 = vmul.f32 %v1610, %v1613
        %v1617 = vmul.f32 %v1611, %v1613
        %v1618 = vadd.f32 %v1604, %v1614
        %v1619 = vadd.f32 %v1605, %v1615
        %v1620 = vadd.f32 %v1606, %v1616
        %v1621 = vadd.f32 %v1607, %v1617
        %v1622 = vld [vmem:[%s1509 + $0x4] sm:$0xf]
        %v1623 = vld [vmem:[%s1509 + $0x14] sm:$0xf]
        %v1624 = vld [vmem:[%s1509 + $0x24] sm:$0xf]
        %v1625 = vld [vmem:[%s1509 + $0x34] sm:$0xf]
        %s1626 = sld [smem:[#allocation4 + $0xa0]]
        %v1627 = vstv %s1626
        %v1628 = vmul.f32 %v1622, %v1627
        %v1629 = vmul.f32 %v1623, %v1627
        %v1630 = vmul.f32 %v1624, %v1627
        %v1631 = vmul.f32 %v1625, %v1627
        %v1632 = vadd.f32 %v1618, %v1628
        %v1633 = vadd.f32 %v1619, %v1629
        %v1634 = vadd.f32 %v1620, %v1630
        %v1635 = vadd.f32 %v1621, %v1631
        %v1636 = vld [vmem:[%s1494 + $0x5] sm:$0xf]
        %v1637 = vld [vmem:[%s1494 + $0x15] sm:$0xf]
        %v1638 = vld [vmem:[%s1494 + $0x25] sm:$0xf]
        %v1639 = vld [vmem:[%s1494 + $0x35] sm:$0xf]
        %s1640 = sld [smem:[#allocation4 + $0x21]]
        %v1641 = vstv %s1640
        %v1642 = vmul.f32 %v1636, %v1641
        %v1643 = vmul.f32 %v1637, %v1641
        %v1644 = vmul.f32 %v1638, %v1641
        %v1645 = vmul.f32 %v1639, %v1641
        %v1646 = vadd.f32 %v1632, %v1642
        %v1647 = vadd.f32 %v1633, %v1643
        %v1648 = vadd.f32 %v1634, %v1644
        %v1649 = vadd.f32 %v1635, %v1645
        %v1650 = vld [vmem:[%s1509 + $0x5] sm:$0xf]
        %v1651 = vld [vmem:[%s1509 + $0x15] sm:$0xf]
        %v1652 = vld [vmem:[%s1509 + $0x25] sm:$0xf]
        %v1653 = vld [vmem:[%s1509 + $0x35] sm:$0xf]
        %s1654 = sld [smem:[#allocation4 + $0xa1]]
        %v1655 = vstv %s1654
        %v1656 = vmul.f32 %v1650, %v1655
        %v1657 = vmul.f32 %v1651, %v1655
        %v1658 = vmul.f32 %v1652, %v1655
        %v1659 = vmul.f32 %v1653, %v1655
        %v1660 = vadd.f32 %v1646, %v1656
        %v1661 = vadd.f32 %v1647, %v1657
        %v1662 = vadd.f32 %v1648, %v1658
        %v1663 = vadd.f32 %v1649, %v1659
        %v1664 = vld [vmem:[%s1494 + $0x6] sm:$0xf]
        %v1665 = vld [vmem:[%s1494 + $0x16] sm:$0xf]
        %v1666 = vld [vmem:[%s1494 + $0x26] sm:$0xf]
        %v1667 = vld [vmem:[%s1494 + $0x36] sm:$0xf]
        %s1668 = sld [smem:[#allocation4 + $0x22]]
        %v1669 = vstv %s1668
        %v1670 = vmul.f32 %v1664, %v1669
        %v1671 = vmul.f32 %v1665, %v1669
        %v1672 = vmul.f32 %v1666, %v1669
        %v1673 = vmul.f32 %v1667, %v1669
        %v1674 = vadd.f32 %v1660, %v1670
        %v1675 = vadd.f32 %v1661, %v1671
        %v1676 = vadd.f32 %v1662, %v1672
        %v1677 = vadd.f32 %v1663, %v1673
        %v1678 = vld [vmem:[%s1509 + $0x6] sm:$0xf]
        %v1679 = vld [vmem:[%s1509 + $0x16] sm:$0xf]
        %v1680 = vld [vmem:[%s1509 + $0x26] sm:$0xf]
        %v1681 = vld [vmem:[%s1509 + $0x36] sm:$0xf]
        %s1682 = sld [smem:[#allocation4 + $0xa2]]
        %v1683 = vstv %s1682
        %v1684 = vmul.f32 %v1678, %v1683
        %v1685 = vmul.f32 %v1679, %v1683
        %v1686 = vmul.f32 %v1680, %v1683
        %v1687 = vmul.f32 %v1681, %v1683
        %v1688 = vadd.f32 %v1674, %v1684
        %v1689 = vadd.f32 %v1675, %v1685
        %v1690 = vadd.f32 %v1676, %v1686
        %v1691 = vadd.f32 %v1677, %v1687
        %s1692 = scalar_lea.vmem [#allocation2], 80
        %v1693 = vld [vmem:[%s1692] sm:$0xf]
        %v1694 = vld [vmem:[%s1692 + $0x10] sm:$0xf]
        %v1695 = vld [vmem:[%s1692 + $0x20] sm:$0xf]
        %v1696 = vld [vmem:[%s1692 + $0x30] sm:$0xf]
        %s1697 = sld [smem:[#allocation4 + $0x23]]
        %v1698 = vstv %s1697
        %v1699 = vmul.f32 %v1693, %v1698
        %v1700 = vmul.f32 %v1694, %v1698
        %v1701 = vmul.f32 %v1695, %v1698
        %v1702 = vmul.f32 %v1696, %v1698
        %v1703 = vadd.f32 %v1688, %v1699
        %v1704 = vadd.f32 %v1689, %v1700
        %v1705 = vadd.f32 %v1690, %v1701
        %v1706 = vadd.f32 %v1691, %v1702
        %s1707 = scalar_lea.vmem [#allocation2], 240
        %v1708 = vld [vmem:[%s1707] sm:$0xf]
        %v1709 = vld [vmem:[%s1707 + $0x10] sm:$0xf]
        %v1710 = vld [vmem:[%s1707 + $0x20] sm:$0xf]
        %v1711 = vld [vmem:[%s1707 + $0x30] sm:$0xf]
        %s1712 = sld [smem:[#allocation4 + $0xa3]]
        %v1713 = vstv %s1712
        %v1714 = vmul.f32 %v1708, %v1713
        %v1715 = vmul.f32 %v1709, %v1713
        %v1716 = vmul.f32 %v1710, %v1713
        %v1717 = vmul.f32 %v1711, %v1713
        %v1718 = vadd.f32 %v1703, %v1714
        %v1719 = vadd.f32 %v1704, %v1715
        %v1720 = vadd.f32 %v1705, %v1716
        %v1721 = vadd.f32 %v1706, %v1717
        %v1722 = vld [vmem:[%s1692 + $0x1] sm:$0xf]
        %v1723 = vld [vmem:[%s1692 + $0x11] sm:$0xf]
        %v1724 = vld [vmem:[%s1692 + $0x21] sm:$0xf]
        %v1725 = vld [vmem:[%s1692 + $0x31] sm:$0xf]
        %s1726 = sld [smem:[#allocation4 + $0x24]]
        %v1727 = vstv %s1726
        %v1728 = vmul.f32 %v1722, %v1727
        %v1729 = vmul.f32 %v1723, %v1727
        %v1730 = vmul.f32 %v1724, %v1727
        %v1731 = vmul.f32 %v1725, %v1727
        %v1732 = vadd.f32 %v1718, %v1728
        %v1733 = vadd.f32 %v1719, %v1729
        %v1734 = vadd.f32 %v1720, %v1730
        %v1735 = vadd.f32 %v1721, %v1731
        %v1736 = vld [vmem:[%s1707 + $0x1] sm:$0xf]
        %v1737 = vld [vmem:[%s1707 + $0x11] sm:$0xf]
        %v1738 = vld [vmem:[%s1707 + $0x21] sm:$0xf]
        %v1739 = vld [vmem:[%s1707 + $0x31] sm:$0xf]
        %s1740 = sld [smem:[#allocation4 + $0xa4]]
        %v1741 = vstv %s1740
        %v1742 = vmul.f32 %v1736, %v1741
        %v1743 = vmul.f32 %v1737, %v1741
        %v1744 = vmul.f32 %v1738, %v1741
        %v1745 = vmul.f32 %v1739, %v1741
        %v1746 = vadd.f32 %v1732, %v1742
        %v1747 = vadd.f32 %v1733, %v1743
        %v1748 = vadd.f32 %v1734, %v1744
        %v1749 = vadd.f32 %v1735, %v1745
        %v1750 = vld [vmem:[%s1692 + $0x2] sm:$0xf]
        %v1751 = vld [vmem:[%s1692 + $0x12] sm:$0xf]
        %v1752 = vld [vmem:[%s1692 + $0x22] sm:$0xf]
        %v1753 = vld [vmem:[%s1692 + $0x32] sm:$0xf]
        %s1754 = sld [smem:[#allocation4 + $0x25]]
        %v1755 = vstv %s1754
        %v1756 = vmul.f32 %v1750, %v1755
        %v1757 = vmul.f32 %v1751, %v1755
        %v1758 = vmul.f32 %v1752, %v1755
        %v1759 = vmul.f32 %v1753, %v1755
        %v1760 = vadd.f32 %v1746, %v1756
        %v1761 = vadd.f32 %v1747, %v1757
        %v1762 = vadd.f32 %v1748, %v1758
        %v1763 = vadd.f32 %v1749, %v1759
        %v1764 = vld [vmem:[%s1707 + $0x2] sm:$0xf]
        %v1765 = vld [vmem:[%s1707 + $0x12] sm:$0xf]
        %v1766 = vld [vmem:[%s1707 + $0x22] sm:$0xf]
        %v1767 = vld [vmem:[%s1707 + $0x32] sm:$0xf]
        %s1768 = sld [smem:[#allocation4 + $0xa5]]
        %v1769 = vstv %s1768
        %v1770 = vmul.f32 %v1764, %v1769
        %v1771 = vmul.f32 %v1765, %v1769
        %v1772 = vmul.f32 %v1766, %v1769
        %v1773 = vmul.f32 %v1767, %v1769
        %v1774 = vadd.f32 %v1760, %v1770
        %v1775 = vadd.f32 %v1761, %v1771
        %v1776 = vadd.f32 %v1762, %v1772
        %v1777 = vadd.f32 %v1763, %v1773
        %v1778 = vld [vmem:[%s1692 + $0x3] sm:$0xf]
        %v1779 = vld [vmem:[%s1692 + $0x13] sm:$0xf]
        %v1780 = vld [vmem:[%s1692 + $0x23] sm:$0xf]
        %v1781 = vld [vmem:[%s1692 + $0x33] sm:$0xf]
        %s1782 = sld [smem:[#allocation4 + $0x26]]
        %v1783 = vstv %s1782
        %v1784 = vmul.f32 %v1778, %v1783
        %v1785 = vmul.f32 %v1779, %v1783
        %v1786 = vmul.f32 %v1780, %v1783
        %v1787 = vmul.f32 %v1781, %v1783
        %v1788 = vadd.f32 %v1774, %v1784
        %v1789 = vadd.f32 %v1775, %v1785
        %v1790 = vadd.f32 %v1776, %v1786
        %v1791 = vadd.f32 %v1777, %v1787
        %v1792 = vld [vmem:[%s1707 + $0x3] sm:$0xf]
        %v1793 = vld [vmem:[%s1707 + $0x13] sm:$0xf]
        %v1794 = vld [vmem:[%s1707 + $0x23] sm:$0xf]
        %v1795 = vld [vmem:[%s1707 + $0x33] sm:$0xf]
        %s1796 = sld [smem:[#allocation4 + $0xa6]]
        %v1797 = vstv %s1796
        %v1798 = vmul.f32 %v1792, %v1797
        %v1799 = vmul.f32 %v1793, %v1797
        %v1800 = vmul.f32 %v1794, %v1797
        %v1801 = vmul.f32 %v1795, %v1797
        %v1802 = vadd.f32 %v1788, %v1798
        %v1803 = vadd.f32 %v1789, %v1799
        %v1804 = vadd.f32 %v1790, %v1800
        %v1805 = vadd.f32 %v1791, %v1801
        %v1806 = vld [vmem:[%s1692 + $0x4] sm:$0xf]
        %v1807 = vld [vmem:[%s1692 + $0x14] sm:$0xf]
        %v1808 = vld [vmem:[%s1692 + $0x24] sm:$0xf]
        %v1809 = vld [vmem:[%s1692 + $0x34] sm:$0xf]
        %s1810 = sld [smem:[#allocation4 + $0x27]]
        %v1811 = vstv %s1810
        %v1812 = vmul.f32 %v1806, %v1811
        %v1813 = vmul.f32 %v1807, %v1811
        %v1814 = vmul.f32 %v1808, %v1811
        %v1815 = vmul.f32 %v1809, %v1811
        %v1816 = vadd.f32 %v1802, %v1812
        %v1817 = vadd.f32 %v1803, %v1813
        %v1818 = vadd.f32 %v1804, %v1814
        %v1819 = vadd.f32 %v1805, %v1815
        %v1820 = vld [vmem:[%s1707 + $0x4] sm:$0xf]
        %v1821 = vld [vmem:[%s1707 + $0x14] sm:$0xf]
        %v1822 = vld [vmem:[%s1707 + $0x24] sm:$0xf]
        %v1823 = vld [vmem:[%s1707 + $0x34] sm:$0xf]
        %s1824 = sld [smem:[#allocation4 + $0xa7]]
        %v1825 = vstv %s1824
        %v1826 = vmul.f32 %v1820, %v1825
        %v1827 = vmul.f32 %v1821, %v1825
        %v1828 = vmul.f32 %v1822, %v1825
        %v1829 = vmul.f32 %v1823, %v1825
        %v1830 = vadd.f32 %v1816, %v1826
        %v1831 = vadd.f32 %v1817, %v1827
        %v1832 = vadd.f32 %v1818, %v1828
        %v1833 = vadd.f32 %v1819, %v1829
        %v1834 = vld [vmem:[%s1692 + $0x5] sm:$0xf]
        %v1835 = vld [vmem:[%s1692 + $0x15] sm:$0xf]
        %v1836 = vld [vmem:[%s1692 + $0x25] sm:$0xf]
        %v1837 = vld [vmem:[%s1692 + $0x35] sm:$0xf]
        %s1838 = sld [smem:[#allocation4 + $0x28]]
        %v1839 = vstv %s1838
        %v1840 = vmul.f32 %v1834, %v1839
        %v1841 = vmul.f32 %v1835, %v1839
        %v1842 = vmul.f32 %v1836, %v1839
        %v1843 = vmul.f32 %v1837, %v1839
        %v1844 = vadd.f32 %v1830, %v1840
        %v1845 = vadd.f32 %v1831, %v1841
        %v1846 = vadd.f32 %v1832, %v1842
        %v1847 = vadd.f32 %v1833, %v1843
        %v1848 = vld [vmem:[%s1707 + $0x5] sm:$0xf]
        %v1849 = vld [vmem:[%s1707 + $0x15] sm:$0xf]
        %v1850 = vld [vmem:[%s1707 + $0x25] sm:$0xf]
        %v1851 = vld [vmem:[%s1707 + $0x35] sm:$0xf]
        %s1852 = sld [smem:[#allocation4 + $0xa8]]
        %v1853 = vstv %s1852
        %v1854 = vmul.f32 %v1848, %v1853
        %v1855 = vmul.f32 %v1849, %v1853
        %v1856 = vmul.f32 %v1850, %v1853
        %v1857 = vmul.f32 %v1851, %v1853
        %v1858 = vadd.f32 %v1844, %v1854
        %v1859 = vadd.f32 %v1845, %v1855
        %v1860 = vadd.f32 %v1846, %v1856
        %v1861 = vadd.f32 %v1847, %v1857
        %v1862 = vld [vmem:[%s1692 + $0x6] sm:$0xf]
        %v1863 = vld [vmem:[%s1692 + $0x16] sm:$0xf]
        %v1864 = vld [vmem:[%s1692 + $0x26] sm:$0xf]
        %v1865 = vld [vmem:[%s1692 + $0x36] sm:$0xf]
        %s1866 = sld [smem:[#allocation4 + $0x29]]
        %v1867 = vstv %s1866
        %v1868 = vmul.f32 %v1862, %v1867
        %v1869 = vmul.f32 %v1863, %v1867
        %v1870 = vmul.f32 %v1864, %v1867
        %v1871 = vmul.f32 %v1865, %v1867
        %v1872 = vadd.f32 %v1858, %v1868
        %v1873 = vadd.f32 %v1859, %v1869
        %v1874 = vadd.f32 %v1860, %v1870
        %v1875 = vadd.f32 %v1861, %v1871
        %v1876 = vld [vmem:[%s1707 + $0x6] sm:$0xf]
        %v1877 = vld [vmem:[%s1707 + $0x16] sm:$0xf]
        %v1878 = vld [vmem:[%s1707 + $0x26] sm:$0xf]
        %v1879 = vld [vmem:[%s1707 + $0x36] sm:$0xf]
        %s1880 = sld [smem:[#allocation4 + $0xa9]]
        %v1881 = vstv %s1880
        %v1882 = vmul.f32 %v1876, %v1881
        %v1883 = vmul.f32 %v1877, %v1881
        %v1884 = vmul.f32 %v1878, %v1881
        %v1885 = vmul.f32 %v1879, %v1881
        %v1886 = vadd.f32 %v1872, %v1882
        %v1887 = vadd.f32 %v1873, %v1883
        %v1888 = vadd.f32 %v1874, %v1884
        %v1889 = vadd.f32 %v1875, %v1885
        %s1890 = scalar_lea.vmem [#allocation2], 96
        %v1891 = vld [vmem:[%s1890] sm:$0xf]
        %v1892 = vld [vmem:[%s1890 + $0x10] sm:$0xf]
        %v1893 = vld [vmem:[%s1890 + $0x20] sm:$0xf]
        %v1894 = vld [vmem:[%s1890 + $0x30] sm:$0xf]
        %s1895 = sld [smem:[#allocation4 + $0x2a]]
        %v1896 = vstv %s1895
        %v1897 = vmul.f32 %v1891, %v1896
        %v1898 = vmul.f32 %v1892, %v1896
        %v1899 = vmul.f32 %v1893, %v1896
        %v1900 = vmul.f32 %v1894, %v1896
        %v1901 = vadd.f32 %v1886, %v1897
        %v1902 = vadd.f32 %v1887, %v1898
        %v1903 = vadd.f32 %v1888, %v1899
        %v1904 = vadd.f32 %v1889, %v1900
        %s1905 = scalar_lea.vmem [#allocation2], 256
        %v1906 = vld [vmem:[%s1905] sm:$0xf]
        %v1907 = vld [vmem:[%s1905 + $0x10] sm:$0xf]
        %v1908 = vld [vmem:[%s1905 + $0x20] sm:$0xf]
        %v1909 = vld [vmem:[%s1905 + $0x30] sm:$0xf]
        %s1910 = sld [smem:[#allocation4 + $0xaa]]
        %v1911 = vstv %s1910
        %v1912 = vmul.f32 %v1906, %v1911
        %v1913 = vmul.f32 %v1907, %v1911
        %v1914 = vmul.f32 %v1908, %v1911
        %v1915 = vmul.f32 %v1909, %v1911
        %v1916 = vadd.f32 %v1901, %v1912
        %v1917 = vadd.f32 %v1902, %v1913
        %v1918 = vadd.f32 %v1903, %v1914
        %v1919 = vadd.f32 %v1904, %v1915
        %v1920 = vld [vmem:[%s1890 + $0x1] sm:$0xf]
        %v1921 = vld [vmem:[%s1890 + $0x11] sm:$0xf]
        %v1922 = vld [vmem:[%s1890 + $0x21] sm:$0xf]
        %v1923 = vld [vmem:[%s1890 + $0x31] sm:$0xf]
        %s1924 = sld [smem:[#allocation4 + $0x2b]]
        %v1925 = vstv %s1924
        %v1926 = vmul.f32 %v1920, %v1925
        %v1927 = vmul.f32 %v1921, %v1925
        %v1928 = vmul.f32 %v1922, %v1925
        %v1929 = vmul.f32 %v1923, %v1925
        %v1930 = vadd.f32 %v1916, %v1926
        %v1931 = vadd.f32 %v1917, %v1927
        %v1932 = vadd.f32 %v1918, %v1928
        %v1933 = vadd.f32 %v1919, %v1929
        %v1934 = vld [vmem:[%s1905 + $0x1] sm:$0xf]
        %v1935 = vld [vmem:[%s1905 + $0x11] sm:$0xf]
        %v1936 = vld [vmem:[%s1905 + $0x21] sm:$0xf]
        %v1937 = vld [vmem:[%s1905 + $0x31] sm:$0xf]
        %s1938 = sld [smem:[#allocation4 + $0xab]]
        %v1939 = vstv %s1938
        %v1940 = vmul.f32 %v1934, %v1939
        %v1941 = vmul.f32 %v1935, %v1939
        %v1942 = vmul.f32 %v1936, %v1939
        %v1943 = vmul.f32 %v1937, %v1939
        %v1944 = vadd.f32 %v1930, %v1940
        %v1945 = vadd.f32 %v1931, %v1941
        %v1946 = vadd.f32 %v1932, %v1942
        %v1947 = vadd.f32 %v1933, %v1943
        %v1948 = vld [vmem:[%s1890 + $0x2] sm:$0xf]
        %v1949 = vld [vmem:[%s1890 + $0x12] sm:$0xf]
        %v1950 = vld [vmem:[%s1890 + $0x22] sm:$0xf]
        %v1951 = vld [vmem:[%s1890 + $0x32] sm:$0xf]
        %s1952 = sld [smem:[#allocation4 + $0x2c]]
        %v1953 = vstv %s1952
        %v1954 = vmul.f32 %v1948, %v1953
        %v1955 = vmul.f32 %v1949, %v1953
        %v1956 = vmul.f32 %v1950, %v1953
        %v1957 = vmul.f32 %v1951, %v1953
        %v1958 = vadd.f32 %v1944, %v1954
        %v1959 = vadd.f32 %v1945, %v1955
        %v1960 = vadd.f32 %v1946, %v1956
        %v1961 = vadd.f32 %v1947, %v1957
        %v1962 = vld [vmem:[%s1905 + $0x2] sm:$0xf]
        %v1963 = vld [vmem:[%s1905 + $0x12] sm:$0xf]
        %v1964 = vld [vmem:[%s1905 + $0x22] sm:$0xf]
        %v1965 = vld [vmem:[%s1905 + $0x32] sm:$0xf]
        %s1966 = sld [smem:[#allocation4 + $0xac]]
        %v1967 = vstv %s1966
        %v1968 = vmul.f32 %v1962, %v1967
        %v1969 = vmul.f32 %v1963, %v1967
        %v1970 = vmul.f32 %v1964, %v1967
        %v1971 = vmul.f32 %v1965, %v1967
        %v1972 = vadd.f32 %v1958, %v1968
        %v1973 = vadd.f32 %v1959, %v1969
        %v1974 = vadd.f32 %v1960, %v1970
        %v1975 = vadd.f32 %v1961, %v1971
        %v1976 = vld [vmem:[%s1890 + $0x3] sm:$0xf]
        %v1977 = vld [vmem:[%s1890 + $0x13] sm:$0xf]
        %v1978 = vld [vmem:[%s1890 + $0x23] sm:$0xf]
        %v1979 = vld [vmem:[%s1890 + $0x33] sm:$0xf]
        %s1980 = sld [smem:[#allocation4 + $0x2d]]
        %v1981 = vstv %s1980
        %v1982 = vmul.f32 %v1976, %v1981
        %v1983 = vmul.f32 %v1977, %v1981
        %v1984 = vmul.f32 %v1978, %v1981
        %v1985 = vmul.f32 %v1979, %v1981
        %v1986 = vadd.f32 %v1972, %v1982
        %v1987 = vadd.f32 %v1973, %v1983
        %v1988 = vadd.f32 %v1974, %v1984
        %v1989 = vadd.f32 %v1975, %v1985
        %v1990 = vld [vmem:[%s1905 + $0x3] sm:$0xf]
        %v1991 = vld [vmem:[%s1905 + $0x13] sm:$0xf]
        %v1992 = vld [vmem:[%s1905 + $0x23] sm:$0xf]
        %v1993 = vld [vmem:[%s1905 + $0x33] sm:$0xf]
        %s1994 = sld [smem:[#allocation4 + $0xad]]
        %v1995 = vstv %s1994
        %v1996 = vmul.f32 %v1990, %v1995
        %v1997 = vmul.f32 %v1991, %v1995
        %v1998 = vmul.f32 %v1992, %v1995
        %v1999 = vmul.f32 %v1993, %v1995
        %v2000 = vadd.f32 %v1986, %v1996
        %v2001 = vadd.f32 %v1987, %v1997
        %v2002 = vadd.f32 %v1988, %v1998
        %v2003 = vadd.f32 %v1989, %v1999
        %v2004 = vld [vmem:[%s1890 + $0x4] sm:$0xf]
        %v2005 = vld [vmem:[%s1890 + $0x14] sm:$0xf]
        %v2006 = vld [vmem:[%s1890 + $0x24] sm:$0xf]
        %v2007 = vld [vmem:[%s1890 + $0x34] sm:$0xf]
        %s2008 = sld [smem:[#allocation4 + $0x2e]]
        %v2009 = vstv %s2008
        %v2010 = vmul.f32 %v2004, %v2009
        %v2011 = vmul.f32 %v2005, %v2009
        %v2012 = vmul.f32 %v2006, %v2009
        %v2013 = vmul.f32 %v2007, %v2009
        %v2014 = vadd.f32 %v2000, %v2010
        %v2015 = vadd.f32 %v2001, %v2011
        %v2016 = vadd.f32 %v2002, %v2012
        %v2017 = vadd.f32 %v2003, %v2013
        %v2018 = vld [vmem:[%s1905 + $0x4] sm:$0xf]
        %v2019 = vld [vmem:[%s1905 + $0x14] sm:$0xf]
        %v2020 = vld [vmem:[%s1905 + $0x24] sm:$0xf]
        %v2021 = vld [vmem:[%s1905 + $0x34] sm:$0xf]
        %s2022 = sld [smem:[#allocation4 + $0xae]]
        %v2023 = vstv %s2022
        %v2024 = vmul.f32 %v2018, %v2023
        %v2025 = vmul.f32 %v2019, %v2023
        %v2026 = vmul.f32 %v2020, %v2023
        %v2027 = vmul.f32 %v2021, %v2023
        %v2028 = vadd.f32 %v2014, %v2024
        %v2029 = vadd.f32 %v2015, %v2025
        %v2030 = vadd.f32 %v2016, %v2026
        %v2031 = vadd.f32 %v2017, %v2027
        %v2032 = vld [vmem:[%s1890 + $0x5] sm:$0xf]
        %v2033 = vld [vmem:[%s1890 + $0x15] sm:$0xf]
        %v2034 = vld [vmem:[%s1890 + $0x25] sm:$0xf]
        %v2035 = vld [vmem:[%s1890 + $0x35] sm:$0xf]
        %s2036 = sld [smem:[#allocation4 + $0x2f]]
        %v2037 = vstv %s2036
        %v2038 = vmul.f32 %v2032, %v2037
        %v2039 = vmul.f32 %v2033, %v2037
        %v2040 = vmul.f32 %v2034, %v2037
        %v2041 = vmul.f32 %v2035, %v2037
        %v2042 = vadd.f32 %v2028, %v2038
        %v2043 = vadd.f32 %v2029, %v2039
        %v2044 = vadd.f32 %v2030, %v2040
        %v2045 = vadd.f32 %v2031, %v2041
        %v2046 = vld [vmem:[%s1905 + $0x5] sm:$0xf]
        %v2047 = vld [vmem:[%s1905 + $0x15] sm:$0xf]
        %v2048 = vld [vmem:[%s1905 + $0x25] sm:$0xf]
        %v2049 = vld [vmem:[%s1905 + $0x35] sm:$0xf]
        %s2050 = sld [smem:[#allocation4 + $0xaf]]
        %v2051 = vstv %s2050
        %v2052 = vmul.f32 %v2046, %v2051
        %v2053 = vmul.f32 %v2047, %v2051
        %v2054 = vmul.f32 %v2048, %v2051
        %v2055 = vmul.f32 %v2049, %v2051
        %v2056 = vadd.f32 %v2042, %v2052
        %v2057 = vadd.f32 %v2043, %v2053
        %v2058 = vadd.f32 %v2044, %v2054
        %v2059 = vadd.f32 %v2045, %v2055
        %v2060 = vld [vmem:[%s1890 + $0x6] sm:$0xf]
        %v2061 = vld [vmem:[%s1890 + $0x16] sm:$0xf]
        %v2062 = vld [vmem:[%s1890 + $0x26] sm:$0xf]
        %v2063 = vld [vmem:[%s1890 + $0x36] sm:$0xf]
        %s2064 = sld [smem:[#allocation4 + $0x30]]
        %v2065 = vstv %s2064
        %v2066 = vmul.f32 %v2060, %v2065
        %v2067 = vmul.f32 %v2061, %v2065
        %v2068 = vmul.f32 %v2062, %v2065
        %v2069 = vmul.f32 %v2063, %v2065
        %v2070 = vadd.f32 %v2056, %v2066
        %v2071 = vadd.f32 %v2057, %v2067
        %v2072 = vadd.f32 %v2058, %v2068
        %v2073 = vadd.f32 %v2059, %v2069
        %v2074 = vld [vmem:[%s1905 + $0x6] sm:$0xf]
        %v2075 = vld [vmem:[%s1905 + $0x16] sm:$0xf]
        %v2076 = vld [vmem:[%s1905 + $0x26] sm:$0xf]
        %v2077 = vld [vmem:[%s1905 + $0x36] sm:$0xf]
        %s2078 = sld [smem:[#allocation4 + $0xb0]]
        %v2079 = vstv %s2078
        %v2080 = vmul.f32 %v2074, %v2079
        %v2081 = vmul.f32 %v2075, %v2079
        %v2082 = vmul.f32 %v2076, %v2079
        %v2083 = vmul.f32 %v2077, %v2079
        %v2084 = vadd.f32 %v2070, %v2080
        %v2085 = vadd.f32 %v2071, %v2081
        %v2086 = vadd.f32 %v2072, %v2082
        %v2087 = vadd.f32 %v2073, %v2083
        %v2088 = vsub.f32 0.0, %v2084
        %v2089 = vsub.f32 0.0, %v2085
        %v2090 = vsub.f32 0.0, %v2086
        %v2091 = vsub.f32 0.0, %v2087
        %v2092 = vmul.f32 %v2088, 1.442695
        %v2093 = vpow.pop %v2092
        %v2094 = vmul.f32 %v2089, 1.442695
        %v2095 = vpow.pop %v2094
        %v2096 = vmul.f32 %v2090, 1.442695
        %v2097 = vpow.pop %v2096
        %v2098 = vmul.f32 %v2091, 1.442695
        %v2099 = vpow.pop %v2098
        %v2100 = vadd.f32 %v2093, 1.0
        %v2101 = vadd.f32 %v2095, 1.0
        %v2102 = vadd.f32 %v2097, 1.0
        %v2103 = vadd.f32 %v2099, 1.0
        %v2104 = vrcp.pop %v2100
        %v2105 = vrcp.pop %v2101
        %v2106 = vrcp.pop %v2102
        %v2107 = vrcp.pop %v2103
        %v2108 = vld [vmem:[%s4] sm:$0x1]
        %v2110 = vlaneseq
        %v2111 = vshrl.u32 %v2110, 7
        %v2112 = vsub.s32 0, %v2111
        %v2113 = vrot.slane %v2108, %v2112
        %v2115 = vmul.f32 %v619, %v2113
        %v2116 = vmul.f32 %v620, %v2113
        %v2117 = vmul.f32 %v621, %v2113
        %v2118 = vmul.f32 %v622, %v2113
        %v2119 = vsel %vm271, %v2115, 0.0
        %2120 = vadd.xlane.f32.xlu0 %v2119
        %v2121 = vpop.xlane.xlu0 %2120
        %v2122 = vsel %vm271, %v2116, 0.0
        %2123 = vadd.xlane.f32.xlu0 %v2122
        %v2124 = vpop.xlane.xlu0 %2123
        %v2125 = vsel %vm271, %v2117, 0.0
        %2126 = vadd.xlane.f32.xlu0 %v2125
        %v2127 = vpop.xlane.xlu0 %2126
        %v2128 = vsel %vm271, %v2118, 0.0
        %2129 = vadd.xlane.f32.xlu0 %v2128
        %v2130 = vpop.xlane.xlu0 %2129
        %v2131 = vmul.f32 %v2104, %v2121
        %v2132 = vmul.f32 %v2105, %v2124
        %v2133 = vmul.f32 %v2106, %v2127
        %v2134 = vmul.f32 %v2107, %v2130
        %s2135 = sld [smem:[#allocation3]]
        %v2136 = vstv %s2135
        %v2137 = vadd.f32 %v2131, %v2136
        %v2138 = vadd.f32 %v2132, %v2136
        %v2139 = vadd.f32 %v2133, %v2136
        %v2140 = vadd.f32 %v2134, %v2136
        %2141 = vst.msk [vmem:[%s266] sm:$0xf] %vm695, %v2137
        %2142 = vst.msk [vmem:[%s266 + $0x4] sm:$0xf] %vm695, %v2138
        %2143 = vst.msk [vmem:[%s266 + $0x8] sm:$0xf] %vm695, %v2139
        %2144 = vst.msk [vmem:[%s266 + $0xc] sm:$0xf] %vm695, %v2140
        %p2145 = scmp.lt.s32.totalorder %s19, 1
        %s2146 = scalar_select %p2145, %s19, 1
        %s2147 = smul.addr %s2146, 4
        %s2148 = smul.addr %s2147, 4
        %s2149 = scalar_lea.vmem %s6, %s2148
        // Predicated region
        $region49: #{pallas_forward.7} parent=43 // pred_check
          %p2150 = pneg %p168
        $region50: #{pallas_forward.7} parent=43 // pred_check_branch
          %2152 = sbr.rel (%p2150) target = $region52
        $region51: #{pallas_forward.7} parent=43 // pred_region
          _
        $region52: #{pallas_forward.7} parent=43 // pred_fallthru
          _
      $region44: #{pallas_forward.7} parent=5 // pred_fallthru
        _
      %p2153 = scmp.le.s32.totalorder 2, %s14
      // Predicated region
      $region53: #{pallas_forward.7} parent=5 // pred_check
        %p2154 = pneg %p2153
      $region54: #{pallas_forward.7} parent=5 // pred_check_branch
        %2156 = sbr.rel (%p2154) target = $region56
      $region55: #{pallas_forward.7} parent=5 // pred_region
        %s2157 = ssub.s32 %s14, 2
        // Predicated region
        $region57: #{pallas_forward.7} parent=55 // pred_check
          %p2158 = pneg %p174
        $region58: #{pallas_forward.7} parent=55 // pred_check_branch
          %2160 = sbr.rel (%p2158) target = $region60
        $region59: #{pallas_forward.7} parent=55 // pred_region
          %p2161 = scmp.lt.s32.totalorder %s20, 1
          %s2162 = scalar_select %p2161, %s20, 1
          %s2163 = smul.addr %s2162, 4
          %s2164 = smul.addr %s2163, 4
          %s2165 = scalar_lea.vmem %s6, %s2164
        $region60: #{pallas_forward.7} parent=55 // pred_fallthru
          _
      $region56: #{pallas_forward.7} parent=5 // pred_fallthru
        _
    $region6: #{pallas_forward.7} parent=1 // loop_footer
      %s18 = sadd.s32 1, %s14
    $region7: #{pallas_forward.7} parent=1 // loop_footer_branch
      %13 = sbr.rel target = $region3
    $region8: #{pallas_forward.7} parent=1 // loop_exit
      _
    %2166 = vsyncpa [#allocation5], 1
    %s2167 = scalar_lea.sflag [#allocation5], 1
    %2168 = vsyncpa %s2167, 1

</llo_original>
